<compile_context>
chip_gen: v6e
topology: v6e:2x2x1
jax: 0.10.0
libtpu: 0.0.40
codegen_flags: <defaults>
</compile_context>

<pallas_src>
import functools

import jax
import jax.numpy as jnp
from jax import lax
from jax.experimental import pallas as pl
from jax.experimental.pallas import tpu as pltpu


PAD_W = 8  # sublane-aligned spatial padding offset on each side of W


# ---------------------------------------------------------------------------
# Fused kernel (one grid step per sample)
# ---------------------------------------------------------------------------

def fused_forward_kernel(x_ref, w1_ref, b1_ref, w2_ref, b2_ref,
                         wf1_hbm, bf1_ref, wf2_ref, bf2_ref,
                         o_ref,
                         pad1_ref, patch1_ref, pad2_ref, patch2_ref,
                         rowp_ref, flat_ref, wf1_vmem, wf1_sem):
    """conv1+relu -> conv2+relu -> maxpool2x2 -> fc1+relu -> fc2, all in VMEM.

    x_ref    : (1, H, W, Cin) f32      one sample (NHWC)
    w1_ref   : (9*Cin, C1)    bf16     conv1 im2col weight, tap = kh*3+kw
    w2_ref   : (9*C1, C2)     bf16     conv2 im2col weight
    wf1_hbm  : (Hp*Wp*C2, N1) bf16     fc1 weight, left in HBM, manual DMA
    wf2_ref  : (N1, NCpad)    bf16     fc2 weight, output padded to 128 lanes
    o_ref    : (1, 1, NCpad)  f32
    pad*/patch* : zero-halo'd activation + im2col scratch buffers
    rowp_ref : (Hp, W, C2)    f32      H-pooled rows
    flat_ref : (1, Hp*Wp*C2)  f32      lane-dense flattened pooled activation
    wf1_vmem : VMEM destination for the prefetched fc1 weight
    """
    _, H, W, Cin = x_ref.shape
    C1 = w1_ref.shape[-1]
    C2 = w2_ref.shape[-1]
    Hp, Wp = H // 2, W // 2
    NROW = 2                      # conv M tiling: chunks of H//NROW output rows

    # Start the big fc1-weight DMA immediately; it overlaps both convs and the
    # pooling / flatten stages, and is waited on just before the fc1 dot.
    wf1_copy = pltpu.make_async_copy(wf1_hbm, wf1_vmem, wf1_sem)
    wf1_copy.start()

    def zero_halo(pad_ref, cin):
        # Only the halo actually read by the 3x3 taps needs zeroing:
        # rows 0 / H+1 (full width, aligned stores) and cols PAD_W-1 / PAD_W+W.
        zr = jnp.zeros((1, 1) + pad_ref.shape[2:], pad_ref.dtype)
        zc = jnp.zeros((1, H, 1, cin), pad_ref.dtype)
        pad_ref[:, 0:1, :, :] = zr
        pad_ref[:, H + 1:H + 2, :, :] = zr
        pad_ref[:, 1:H + 1, PAD_W - 1:PAD_W, :] = zc
        pad_ref[:, 1:H + 1, PAD_W + W:PAD_W + W + 1, :] = zc

    def conv3x3_relu(pad_ref, patch_ref, w_ref, b_ref, cin, emit):
        # im2col: lay the 9 shifted windows side by side along the lane
        # (channel) axis -> ONE K-dense MXU dot instead of 9 K=cin dots.
        for kh in range(3):
            for kw in range(3):
                t = kh * 3 + kw
                patch_ref[:, :, :, t * cin:(t + 1) * cin] = pad_ref[
                    :, kh:kh + H, PAD_W - 1 + kw:PAD_W - 1 + kw + W, :
                ].astype(patch_ref.dtype)
        rows = H // NROW
        for c in range(NROW):                    # bound the f32 accum live set
            lhs = patch_ref[:, c * rows:(c + 1) * rows, :, :]
            lhs = lhs.reshape(rows * W, 9 * cin)            # major collapse
            y = jnp.dot(lhs, w_ref[...], preferred_element_type=jnp.float32)
            emit(c, rows, jnp.maximum(y + b_ref[...], 0.0))  # bias+ReLU in f32

    # ---- conv1 + relu ------------------------------------------------------
    zero_halo(pad1_ref, Cin)
    zero_halo(pad2_ref, C1)
    pad1_ref[:, 1:H + 1, PAD_W:PAD_W + W, :] = x_ref[...]

    def emit_conv1(c, rows, y):                  # y: (rows*W, C1) f32
        pad2_ref[:, 1 + c * rows:1 + (c + 1) * rows, PAD_W:PAD_W + W, :] = (
            y.reshape(1, rows, W, C1))

    conv3x3_relu(pad1_ref, patch1_ref, w1_ref, b1_ref, Cin, emit_conv1)

    # ---- conv2 + relu, fused with the H direction of the 2x2 maxpool --------
    def emit_conv2(c, rows, y):                  # y: (rows*W, C2) f32
        hp = rows // 2
        rowp_ref[c * hp:(c + 1) * hp, :, :] = jnp.max(
            y.reshape(hp, 2, W, C2), axis=1)

    conv3x3_relu(pad2_ref, patch2_ref, w2_ref, b2_ref, C1, emit_conv2)

    # ---- W direction of the maxpool (strided sublane reads, proven path) ----
    pa = rowp_ref[:, pl.ds(0, Wp, stride=2), :]
    pb = rowp_ref[:, pl.ds(1, Wp, stride=2), :]
    pooled = jnp.maximum(pa, pb).reshape(Hp * Wp, C2)        # (64, C2) f32

    # ---- flatten into one lane-dense K = Hp*Wp*C2 row ------------------------
    # 64 small masked lane stores (VPU/store slots, pipelined) instead of 64
    # serial MXU dots; the matching permutation is folded into wf1 at pack time.
    for j in range(Hp * Wp):
        flat_ref[:, j * C2:(j + 1) * C2] = pooled[j:j + 1, :]

    # ---- fc1 + relu: single K-dense MXU dot ----------------------------------
    wf1_copy.wait()
    h = jnp.dot(flat_ref[...].astype(jnp.bfloat16), wf1_vmem[...],
                preferred_element_type=jnp.float32)
    h = jnp.maximum(h + bf1_ref[...], 0.0)                   # (1, N1) f32

    # ---- fc2 (lane-dense 128-wide output; wrapper slices the logits) ---------
    logits = jnp.dot(h.astype(jnp.bfloat16), wf2_ref[...],
                     preferred_element_type=jnp.float32) + bf2_ref[...]
    o_ref[...] = logits.reshape(o_ref.shape)


# ---------------------------------------------------------------------------
# Wrappers
# ---------------------------------------------------------------------------

def fused_forward(x_nhwc, p, num_classes):
    B, H, W, Cin = x_nhwc.shape
    C1 = p["w1"].shape[-1]
    C2 = p["w2"].shape[-1]
    N1 = p["wf1"].shape[-1]
    NCp = p["wf2"].shape[-1]
    Hp, Wp = H // 2, W // 2
    Wpad = W + 2 * PAD_W

    def const(shape):
        n = len(shape)
        return pl.BlockSpec(shape, lambda b, _n=n: (0,) * _n)

    out = pl.pallas_call(
        fused_forward_kernel,
        out_shape=jax.ShapeDtypeStruct((B, 1, NCp), jnp.float32),
        grid=(B,),
        in_specs=[
            pl.BlockSpec((1, H, W, Cin), lambda b: (b, 0, 0, 0)),
            const((9 * Cin, C1)), const((1, C1)),
            const((9 * C1, C2)), const((1, C2)),
            pl.BlockSpec(memory_space=pl.ANY),      # wf1 stays in HBM (manual DMA)
            const((1, N1)),
            const((N1, NCp)), const((1, NCp)),
        ],
        out_specs=pl.BlockSpec((1, 1, NCp), lambda b: (b, 0, 0)),
        scratch_shapes=[
            pltpu.VMEM((1, H + 2, Wpad, Cin), jnp.float32),   # pad1 (zero halo)
            pltpu.VMEM((1, H, W, 9 * Cin), jnp.bfloat16),     # conv1 im2col patches
            pltpu.VMEM((1, H + 2, Wpad, C1), jnp.float32),    # pad2
            pltpu.VMEM((1, H, W, 9 * C1), jnp.bfloat16),      # conv2 im2col patches
            pltpu.VMEM((Hp, W, C2), jnp.float32),             # H-pooled rows
            pltpu.VMEM((1, Hp * Wp * C2), jnp.float32),       # lane-dense flatten
            pltpu.VMEM(p["wf1"].shape, p["wf1"].dtype),       # prefetched fc1 weight
            pltpu.SemaphoreType.DMA,                          # fc1 weight DMA sem
        ],
        # Per-sample grid steps are independent -> megacore (v7x) can split B.
        compiler_params=pltpu.CompilerParams(
            dimension_semantics=("parallel",)),
    )(x_nhwc, p["w1"], p["b1"], p["w2"], p["b2"],
      p["wf1"], p["bf1"], p["wf2"], p["bf2"])
    return out[:, 0, :num_classes]


def simple_conv_model_forward(x_nchw, packed, *, num_classes):
    """Forward pass matching SimpleConvModel(in_size, n_channels).forward."""
    # Only boundary glue outside the kernel: tiny NCHW->NHWC input transpose
    # and the final logits slice of the 128-wide lane-dense output.
    x_nhwc = jnp.transpose(x_nchw, (0, 2, 3, 1))
    return fused_forward(x_nhwc, packed, num_classes)


def pack_params(params):
    """One-time repack of PyTorch-convention parameters into kernel layouts."""
    c1w = params["conv1_w"]             # (16, Cin, 3, 3)  OIHW
    c2w = params["conv2_w"]             # (32, 16, 3, 3)
    f1w = params["fc1_w"]               # (128, 32*Hp*Wp)  (out, in), NCHW flatten
    f2w = params["fc2_w"]               # (10, 128)
    C1, Cin = c1w.shape[0], c1w.shape[1]
    C2 = c2w.shape[0]
    N1, K1 = f1w.shape
    NC = f2w.shape[0]
    HpWp = K1 // C2
    NCp = 128                           # lane-dense fc2 output width

    # im2col weights: row index = (kh*3 + kw)*Cin + ci (matches the patch build).
    w1 = jnp.transpose(c1w, (2, 3, 1, 0)).reshape(9 * Cin, C1)
    w2 = jnp.transpose(c2w, (2, 3, 1, 0)).reshape(9 * C1, C2)
    # PyTorch flattens NCHW (c*HpWp + j); the kernel's flat lane index is
    # j*C2 + c with j = hp*Wp + wp -> fold the permutation into the weight.
    wf1 = jnp.transpose(f1w.reshape(N1, C2, HpWp), (2, 1, 0)).reshape(HpWp * C2, N1)
    wf2 = jnp.zeros((N1, NCp), jnp.float32).at[:, :NC].set(f2w.T)
    bf2 = jnp.zeros((NCp,), jnp.float32).at[:NC].set(params["fc2_b"])
    return {
        "w1": w1.astype(jnp.bfloat16), "b1": params["conv1_b"].reshape(1, C1),
        "w2": w2.astype(jnp.bfloat16), "b2": params["conv2_b"].reshape(1, C2),
        "wf1": wf1.astype(jnp.bfloat16), "bf1": params["fc1_b"].reshape(1, N1),
        "wf2": wf2.astype(jnp.bfloat16), "bf2": bf2.reshape(1, NCp),
    }


# ---------------------------------------------------------------------------
# Pure-JAX reference (PyTorch-layout params) for the correctness check
# ---------------------------------------------------------------------------

def reference_forward(x_nchw, params):
    dn = ("NCHW", "OIHW", "NCHW")
    y = lax.conv_general_dilated(x_nchw, params["conv1_w"], (1, 1), "SAME",
                                 dimension_numbers=dn,
                                 precision=lax.Precision.HIGHEST)
    y = jax.nn.relu(y + params["conv1_b"][None, :, None, None])
    y = lax.conv_general_dilated(y, params["conv2_w"], (1, 1), "SAME",
                                 dimension_numbers=dn,
                                 precision=lax.Precision.HIGHEST)
    y = jax.nn.relu(y + params["conv2_b"][None, :, None, None])
    y = lax.reduce_window(y, -jnp.inf, lax.max,
                          (1, 1, 2, 2), (1, 1, 2, 2), "VALID")
    y = y.reshape(x_nchw.shape[0], -1)           # NCHW flatten, like torch .view
    h = jax.nn.relu(jnp.dot(y, params["fc1_w"].T,
                            precision=lax.Precision.HIGHEST) + params["fc1_b"])
    return jnp.dot(h, params["fc2_w"].T,
                   precision=lax.Precision.HIGHEST) + params["fc2_b"]


# ---------------------------------------------------------------------------
# Main
# ---------------------------------------------------------------------------

if __name__ == "__main__":
    B, C_IN, IN_SIZE, NUM_CLASSES = 2, 4, 16, 10
    HIDDEN = 128
    FC_IN = 32 * (IN_SIZE // 2) * (IN_SIZE // 2)

    key = jax.random.PRNGKey(0)
    ks = jax.random.split(key, 9)

    # Deterministic synthetic parameters in PyTorch-convention layouts
    # (OIHW conv weights, (out, in) fc weights).
    params = {
        "conv1_w": 0.05 * jax.random.normal(ks[0], (16, C_IN, 3, 3), jnp.float32),
        "conv1_b": 0.05 * jax.random.normal(ks[1], (16,), jnp.float32),
        "conv2_w": 0.05 * jax.random.normal(ks[2], (32, 16, 3, 3), jnp.float32),
        "conv2_b": 0.05 * jax.random.normal(ks[3], (32,), jnp.float32),
        "fc1_w": 0.02 * jax.random.normal(ks[4], (HIDDEN, FC_IN), jnp.float32),
        "fc1_b": 0.02 * jax.random.normal(ks[5], (HIDDEN,), jnp.float32),
        "fc2_w": 0.05 * jax.random.normal(ks[6], (NUM_CLASSES, HIDDEN), jnp.float32),
        "fc2_b": 0.05 * jax.random.normal(ks[7], (NUM_CLASSES,), jnp.float32),
    }
    # PyTorch-convention NCHW input.
    x = jax.random.normal(ks[8], (B, C_IN, IN_SIZE, IN_SIZE), jnp.float32)

    packed = jax.tree_util.tree_map(jax.block_until_ready, pack_params(params))

    fwd = jax.jit(functools.partial(simple_conv_model_forward,
                                    num_classes=NUM_CLASSES))
    out = jax.block_until_ready(fwd(x, packed))
    assert out.shape == (B, NUM_CLASSES) and out.dtype == jnp.float32

    ref = jax.block_until_ready(reference_forward(x, params))
    # bf16 MXU operands vs f32 HIGHEST reference -> ~1e-2 scale tolerance.
    if not jnp.allclose(out, ref, rtol=2e-2, atol=2e-2):
        raise AssertionError(
            f"Pallas output mismatch: max abs err = {jnp.max(jnp.abs(out - ref))}")

    print("KERNEL_OK")
</pallas_src>

<mosaic_0001>
module attributes {stable_mosaic.version = 11 : i64} {
  func.func @fused_forward_kernel(%arg0: i32, %arg1: memref<1x16x16x4xf32, #tpu.memory_space<vmem>>, %arg2: memref<36x16xbf16, #tpu.memory_space<vmem>>, %arg3: memref<1x16xf32, #tpu.memory_space<vmem>>, %arg4: memref<144x32xbf16, #tpu.memory_space<vmem>>, %arg5: memref<1x32xf32, #tpu.memory_space<vmem>>, %arg6: memref<2048x128xbf16, #tpu.memory_space<any>>, %arg7: memref<1x128xf32, #tpu.memory_space<vmem>>, %arg8: memref<128x128xbf16, #tpu.memory_space<vmem>>, %arg9: memref<1x128xf32, #tpu.memory_space<vmem>>, %arg10: memref<1x1x128xf32, #tpu.memory_space<vmem>>, %arg11: memref<1x18x32x4xf32, #tpu.memory_space<vmem>>, %arg12: memref<1x16x16x36xbf16, #tpu.memory_space<vmem>>, %arg13: memref<1x18x32x16xf32, #tpu.memory_space<vmem>>, %arg14: memref<1x16x16x144xbf16, #tpu.memory_space<vmem>>, %arg15: memref<8x16x32xf32, #tpu.memory_space<vmem>>, %arg16: memref<1x2048xf32, #tpu.memory_space<vmem>>, %arg17: memref<2048x128xbf16, #tpu.memory_space<vmem>>, %arg18: memref<!tpu.dma_semaphore, #tpu.memory_space<semaphore_mem>>) attributes {dimension_semantics = [#tpu.dimension_semantics<parallel>], iteration_bounds = array<i64: 2>, scalar_prefetch = 0 : i64, scratch_operands = 8 : i64, tpu.core_type = #tpu.core_type<tc>, window_params = [{transform_indices = @transform_0, window_bounds = array<i64: 1, 16, 16, 4>}, {pipeline_mode = #tpu.pipeline_mode<synchronous>, transform_indices = @transform_1, window_bounds = array<i64: 36, 16>}, {pipeline_mode = #tpu.pipeline_mode<synchronous>, transform_indices = @transform_2, window_bounds = array<i64: 1, 16>}, {pipeline_mode = #tpu.pipeline_mode<synchronous>, transform_indices = @transform_3, window_bounds = array<i64: 144, 32>}, {pipeline_mode = #tpu.pipeline_mode<synchronous>, transform_indices = @transform_4, window_bounds = array<i64: 1, 32>}, {}, {pipeline_mode = #tpu.pipeline_mode<synchronous>, transform_indices = @transform_6, window_bounds = array<i64: 1, 128>}, {pipeline_mode = #tpu.pipeline_mode<synchronous>, transform_indices = @transform_7, window_bounds = array<i64: 128, 128>}, {pipeline_mode = #tpu.pipeline_mode<synchronous>, transform_indices = @transform_8, window_bounds = array<i64: 1, 128>}, {transform_indices = @transform_9, window_bounds = array<i64: 1, 1, 128>}]} {
    tpu.enqueue_dma source(%arg6 : memref<2048x128xbf16, #tpu.memory_space<any>>) target(%arg17 : memref<2048x128xbf16, #tpu.memory_space<vmem>>) target_semaphore(%arg18 : memref<!tpu.dma_semaphore, #tpu.memory_space<semaphore_mem>>)
    %cst = arith.constant 0.000000e+00 : f32
    %0 = vector.broadcast %cst : f32 to vector<1x1x32x4xf32>
    %cst_0 = arith.constant 0.000000e+00 : f32
    %1 = vector.broadcast %cst_0 : f32 to vector<1x16x1x4xf32>
    %c0 = arith.constant 0 : index
    %c0_1 = arith.constant 0 : index
    %c0_2 = arith.constant 0 : index
    %c0_3 = arith.constant 0 : index
    %2 = vector.load %arg11[%c0, %c0_1, %c0_2, %c0_3] : memref<1x18x32x4xf32, #tpu.memory_space<vmem>>, vector<1x1x32x4xf32>
    tpu.vector_store %arg11[%c0, %c0_1, %c0_2, %c0_3], %0 {strides = array<i32>} : memref<1x18x32x4xf32, #tpu.memory_space<vmem>>, vector<1x1x32x4xf32>,
    %c0_4 = arith.constant 0 : index
    %c17 = arith.constant 17 : index
    %c0_5 = arith.constant 0 : index
    %c0_6 = arith.constant 0 : index
    %3 = vector.load %arg11[%c0_4, %c17, %c0_5, %c0_6] : memref<1x18x32x4xf32, #tpu.memory_space<vmem>>, vector<1x1x32x4xf32>
    tpu.vector_store %arg11[%c0_4, %c17, %c0_5, %c0_6], %0 {strides = array<i32>} : memref<1x18x32x4xf32, #tpu.memory_space<vmem>>, vector<1x1x32x4xf32>,
    %c0_7 = arith.constant 0 : index
    %c1 = arith.constant 1 : index
    %c7 = arith.constant 7 : index
    %c0_8 = arith.constant 0 : index
    %4 = vector.load %arg11[%c0_7, %c1, %c7, %c0_8] : memref<1x18x32x4xf32, #tpu.memory_space<vmem>>, vector<1x16x1x4xf32>
    tpu.vector_store %arg11[%c0_7, %c1, %c7, %c0_8], %1 {strides = array<i32>} : memref<1x18x32x4xf32, #tpu.memory_space<vmem>>, vector<1x16x1x4xf32>,
    %c0_9 = arith.constant 0 : index
    %c1_10 = arith.constant 1 : index
    %c24 = arith.constant 24 : index
    %c0_11 = arith.constant 0 : index
    %5 = vector.load %arg11[%c0_9, %c1_10, %c24, %c0_11] : memref<1x18x32x4xf32, #tpu.memory_space<vmem>>, vector<1x16x1x4xf32>
    tpu.vector_store %arg11[%c0_9, %c1_10, %c24, %c0_11], %1 {strides = array<i32>} : memref<1x18x32x4xf32, #tpu.memory_space<vmem>>, vector<1x16x1x4xf32>,
    %cst_12 = arith.constant 0.000000e+00 : f32
    %6 = vector.broadcast %cst_12 : f32 to vector<1x1x32x16xf32>
    %cst_13 = arith.constant 0.000000e+00 : f32
    %7 = vector.broadcast %cst_13 : f32 to vector<1x16x1x16xf32>
    %c0_14 = arith.constant 0 : index
    %c0_15 = arith.constant 0 : index
    %c0_16 = arith.constant 0 : index
    %c0_17 = arith.constant 0 : index
    %8 = vector.load %arg13[%c0_14, %c0_15, %c0_16, %c0_17] : memref<1x18x32x16xf32, #tpu.memory_space<vmem>>, vector<1x1x32x16xf32>
    tpu.vector_store %arg13[%c0_14, %c0_15, %c0_16, %c0_17], %6 {strides = array<i32>} : memref<1x18x32x16xf32, #tpu.memory_space<vmem>>, vector<1x1x32x16xf32>,
    %c0_18 = arith.constant 0 : index
    %c17_19 = arith.constant 17 : index
    %c0_20 = arith.constant 0 : index
    %c0_21 = arith.constant 0 : index
    %9 = vector.load %arg13[%c0_18, %c17_19, %c0_20, %c0_21] : memref<1x18x32x16xf32, #tpu.memory_space<vmem>>, vector<1x1x32x16xf32>
    tpu.vector_store %arg13[%c0_18, %c17_19, %c0_20, %c0_21], %6 {strides = array<i32>} : memref<1x18x32x16xf32, #tpu.memory_space<vmem>>, vector<1x1x32x16xf32>,
    %c0_22 = arith.constant 0 : index
    %c1_23 = arith.constant 1 : index
    %c7_24 = arith.constant 7 : index
    %c0_25 = arith.constant 0 : index
    %10 = vector.load %arg13[%c0_22, %c1_23, %c7_24, %c0_25] : memref<1x18x32x16xf32, #tpu.memory_space<vmem>>, vector<1x16x1x16xf32>
    tpu.vector_store %arg13[%c0_22, %c1_23, %c7_24, %c0_25], %7 {strides = array<i32>} : memref<1x18x32x16xf32, #tpu.memory_space<vmem>>, vector<1x16x1x16xf32>,
    %c0_26 = arith.constant 0 : index
    %c1_27 = arith.constant 1 : index
    %c24_28 = arith.constant 24 : index
    %c0_29 = arith.constant 0 : index
    %11 = vector.load %arg13[%c0_26, %c1_27, %c24_28, %c0_29] : memref<1x18x32x16xf32, #tpu.memory_space<vmem>>, vector<1x16x1x16xf32>
    tpu.vector_store %arg13[%c0_26, %c1_27, %c24_28, %c0_29], %7 {strides = array<i32>} : memref<1x18x32x16xf32, #tpu.memory_space<vmem>>, vector<1x16x1x16xf32>,
    %c0_30 = arith.constant 0 : index
    %c0_31 = arith.constant 0 : index
    %c0_32 = arith.constant 0 : index
    %c0_33 = arith.constant 0 : index
    %12 = vector.load %arg1[%c0_30, %c0_31, %c0_32, %c0_33] : memref<1x16x16x4xf32, #tpu.memory_space<vmem>>, vector<1x16x16x4xf32>
    %c0_34 = arith.constant 0 : index
    %c1_35 = arith.constant 1 : index
    %c8 = arith.constant 8 : index
    %c0_36 = arith.constant 0 : index
    %13 = vector.load %arg11[%c0_34, %c1_35, %c8, %c0_36] : memref<1x18x32x4xf32, #tpu.memory_space<vmem>>, vector<1x16x16x4xf32>
    tpu.vector_store %arg11[%c0_34, %c1_35, %c8, %c0_36], %12 {strides = array<i32>} : memref<1x18x32x4xf32, #tpu.memory_space<vmem>>, vector<1x16x16x4xf32>,
    %c0_37 = arith.constant 0 : index
    %c0_38 = arith.constant 0 : index
    %c7_39 = arith.constant 7 : index
    %c0_40 = arith.constant 0 : index
    %14 = vector.load %arg11[%c0_37, %c0_38, %c7_39, %c0_40] : memref<1x18x32x4xf32, #tpu.memory_space<vmem>>, vector<1x16x16x4xf32>
    %15 = arith.truncf %14 : vector<1x16x16x4xf32> to vector<1x16x16x4xbf16>
    %c0_41 = arith.constant 0 : index
    %c0_42 = arith.constant 0 : index
    %c0_43 = arith.constant 0 : index
    %c0_44 = arith.constant 0 : index
    %16 = vector.load %arg12[%c0_41, %c0_42, %c0_43, %c0_44] : memref<1x16x16x36xbf16, #tpu.memory_space<vmem>>, vector<1x16x16x4xbf16>
    tpu.vector_store %arg12[%c0_41, %c0_42, %c0_43, %c0_44], %15 {strides = array<i32>} : memref<1x16x16x36xbf16, #tpu.memory_space<vmem>>, vector<1x16x16x4xbf16>,
    %c0_45 = arith.constant 0 : index
    %c0_46 = arith.constant 0 : index
    %c8_47 = arith.constant 8 : index
    %c0_48 = arith.constant 0 : index
    %17 = vector.load %arg11[%c0_45, %c0_46, %c8_47, %c0_48] : memref<1x18x32x4xf32, #tpu.memory_space<vmem>>, vector<1x16x16x4xf32>
    %18 = arith.truncf %17 : vector<1x16x16x4xf32> to vector<1x16x16x4xbf16>
    %c0_49 = arith.constant 0 : index
    %c0_50 = arith.constant 0 : index
    %c0_51 = arith.constant 0 : index
    %c4 = arith.constant 4 : index
    %19 = vector.load %arg12[%c0_49, %c0_50, %c0_51, %c4] : memref<1x16x16x36xbf16, #tpu.memory_space<vmem>>, vector<1x16x16x4xbf16>
    tpu.vector_store %arg12[%c0_49, %c0_50, %c0_51, %c4], %18 {strides = array<i32>} : memref<1x16x16x36xbf16, #tpu.memory_space<vmem>>, vector<1x16x16x4xbf16>,
    %c0_52 = arith.constant 0 : index
    %c0_53 = arith.constant 0 : index
    %c9 = arith.constant 9 : index
    %c0_54 = arith.constant 0 : index
    %20 = vector.load %arg11[%c0_52, %c0_53, %c9, %c0_54] : memref<1x18x32x4xf32, #tpu.memory_space<vmem>>, vector<1x16x16x4xf32>
    %21 = arith.truncf %20 : vector<1x16x16x4xf32> to vector<1x16x16x4xbf16>
    %c0_55 = arith.constant 0 : index
    %c0_56 = arith.constant 0 : index
    %c0_57 = arith.constant 0 : index
    %c8_58 = arith.constant 8 : index
    %22 = vector.load %arg12[%c0_55, %c0_56, %c0_57, %c8_58] : memref<1x16x16x36xbf16, #tpu.memory_space<vmem>>, vector<1x16x16x4xbf16>
    tpu.vector_store %arg12[%c0_55, %c0_56, %c0_57, %c8_58], %21 {strides = array<i32>} : memref<1x16x16x36xbf16, #tpu.memory_space<vmem>>, vector<1x16x16x4xbf16>,
    %c0_59 = arith.constant 0 : index
    %c1_60 = arith.constant 1 : index
    %c7_61 = arith.constant 7 : index
    %c0_62 = arith.constant 0 : index
    %23 = vector.load %arg11[%c0_59, %c1_60, %c7_61, %c0_62] : memref<1x18x32x4xf32, #tpu.memory_space<vmem>>, vector<1x16x16x4xf32>
    %24 = arith.truncf %23 : vector<1x16x16x4xf32> to vector<1x16x16x4xbf16>
    %c0_63 = arith.constant 0 : index
    %c0_64 = arith.constant 0 : index
    %c0_65 = arith.constant 0 : index
    %c12 = arith.constant 12 : index
    %25 = vector.load %arg12[%c0_63, %c0_64, %c0_65, %c12] : memref<1x16x16x36xbf16, #tpu.memory_space<vmem>>, vector<1x16x16x4xbf16>
    tpu.vector_store %arg12[%c0_63, %c0_64, %c0_65, %c12], %24 {strides = array<i32>} : memref<1x16x16x36xbf16, #tpu.memory_space<vmem>>, vector<1x16x16x4xbf16>,
    %c0_66 = arith.constant 0 : index
    %c1_67 = arith.constant 1 : index
    %c8_68 = arith.constant 8 : index
    %c0_69 = arith.constant 0 : index
    %26 = vector.load %arg11[%c0_66, %c1_67, %c8_68, %c0_69] : memref<1x18x32x4xf32, #tpu.memory_space<vmem>>, vector<1x16x16x4xf32>
    %27 = arith.truncf %26 : vector<1x16x16x4xf32> to vector<1x16x16x4xbf16>
    %c0_70 = arith.constant 0 : index
    %c0_71 = arith.constant 0 : index
    %c0_72 = arith.constant 0 : index
    %c16 = arith.constant 16 : index
    %28 = vector.load %arg12[%c0_70, %c0_71, %c0_72, %c16] : memref<1x16x16x36xbf16, #tpu.memory_space<vmem>>, vector<1x16x16x4xbf16>
    tpu.vector_store %arg12[%c0_70, %c0_71, %c0_72, %c16], %27 {strides = array<i32>} : memref<1x16x16x36xbf16, #tpu.memory_space<vmem>>, vector<1x16x16x4xbf16>,
    %c0_73 = arith.constant 0 : index
    %c1_74 = arith.constant 1 : index
    %c9_75 = arith.constant 9 : index
    %c0_76 = arith.constant 0 : index
    %29 = vector.load %arg11[%c0_73, %c1_74, %c9_75, %c0_76] : memref<1x18x32x4xf32, #tpu.memory_space<vmem>>, vector<1x16x16x4xf32>
    %30 = arith.truncf %29 : vector<1x16x16x4xf32> to vector<1x16x16x4xbf16>
    %c0_77 = arith.constant 0 : index
    %c0_78 = arith.constant 0 : index
    %c0_79 = arith.constant 0 : index
    %c20 = arith.constant 20 : index
    %31 = vector.load %arg12[%c0_77, %c0_78, %c0_79, %c20] : memref<1x16x16x36xbf16, #tpu.memory_space<vmem>>, vector<1x16x16x4xbf16>
    tpu.vector_store %arg12[%c0_77, %c0_78, %c0_79, %c20], %30 {strides = array<i32>} : memref<1x16x16x36xbf16, #tpu.memory_space<vmem>>, vector<1x16x16x4xbf16>,
    %c0_80 = arith.constant 0 : index
    %c2 = arith.constant 2 : index
    %c7_81 = arith.constant 7 : index
    %c0_82 = arith.constant 0 : index
    %32 = vector.load %arg11[%c0_80, %c2, %c7_81, %c0_82] : memref<1x18x32x4xf32, #tpu.memory_space<vmem>>, vector<1x16x16x4xf32>
    %33 = arith.truncf %32 : vector<1x16x16x4xf32> to vector<1x16x16x4xbf16>
    %c0_83 = arith.constant 0 : index
    %c0_84 = arith.constant 0 : index
    %c0_85 = arith.constant 0 : index
    %c24_86 = arith.constant 24 : index
    %34 = vector.load %arg12[%c0_83, %c0_84, %c0_85, %c24_86] : memref<1x16x16x36xbf16, #tpu.memory_space<vmem>>, vector<1x16x16x4xbf16>
    tpu.vector_store %arg12[%c0_83, %c0_84, %c0_85, %c24_86], %33 {strides = array<i32>} : memref<1x16x16x36xbf16, #tpu.memory_space<vmem>>, vector<1x16x16x4xbf16>,
    %c0_87 = arith.constant 0 : index
    %c2_88 = arith.constant 2 : index
    %c8_89 = arith.constant 8 : index
    %c0_90 = arith.constant 0 : index
    %35 = vector.load %arg11[%c0_87, %c2_88, %c8_89, %c0_90] : memref<1x18x32x4xf32, #tpu.memory_space<vmem>>, vector<1x16x16x4xf32>
    %36 = arith.truncf %35 : vector<1x16x16x4xf32> to vector<1x16x16x4xbf16>
    %c0_91 = arith.constant 0 : index
    %c0_92 = arith.constant 0 : index
    %c0_93 = arith.constant 0 : index
    %c28 = arith.constant 28 : index
    %37 = vector.load %arg12[%c0_91, %c0_92, %c0_93, %c28] : memref<1x16x16x36xbf16, #tpu.memory_space<vmem>>, vector<1x16x16x4xbf16>
    tpu.vector_store %arg12[%c0_91, %c0_92, %c0_93, %c28], %36 {strides = array<i32>} : memref<1x16x16x36xbf16, #tpu.memory_space<vmem>>, vector<1x16x16x4xbf16>,
    %c0_94 = arith.constant 0 : index
    %c2_95 = arith.constant 2 : index
    %c9_96 = arith.constant 9 : index
    %c0_97 = arith.constant 0 : index
    %38 = vector.load %arg11[%c0_94, %c2_95, %c9_96, %c0_97] : memref<1x18x32x4xf32, #tpu.memory_space<vmem>>, vector<1x16x16x4xf32>
    %39 = arith.truncf %38 : vector<1x16x16x4xf32> to vector<1x16x16x4xbf16>
    %c0_98 = arith.constant 0 : index
    %c0_99 = arith.constant 0 : index
    %c0_100 = arith.constant 0 : index
    %c32 = arith.constant 32 : index
    %40 = vector.load %arg12[%c0_98, %c0_99, %c0_100, %c32] : memref<1x16x16x36xbf16, #tpu.memory_space<vmem>>, vector<1x16x16x4xbf16>
    tpu.vector_store %arg12[%c0_98, %c0_99, %c0_100, %c32], %39 {strides = array<i32>} : memref<1x16x16x36xbf16, #tpu.memory_space<vmem>>, vector<1x16x16x4xbf16>,
    %c0_101 = arith.constant 0 : index
    %c0_102 = arith.constant 0 : index
    %c0_103 = arith.constant 0 : index
    %c0_104 = arith.constant 0 : index
    %41 = vector.load %arg12[%c0_101, %c0_102, %c0_103, %c0_104] : memref<1x16x16x36xbf16, #tpu.memory_space<vmem>>, vector<1x8x16x36xbf16>
    %42 = vector.shape_cast %41 : vector<1x8x16x36xbf16> to vector<128x36xbf16>
    %c0_105 = arith.constant 0 : index
    %c0_106 = arith.constant 0 : index
    %43 = vector.load %arg2[%c0_105, %c0_106] : memref<36x16xbf16, #tpu.memory_space<vmem>>, vector<36x16xbf16>
    %cst_107 = arith.constant dense<0.000000e+00> : vector<128x16xf32>
    %44 = tpu.matmul %42, %43, %cst_107 {dimension_numbers = #tpu.dot_dimension_numbers<[1], [0], [0], [1], [0, 0, 1, 1], [], []>} : vector<128x36xbf16>, vector<36x16xbf16>, vector<128x16xf32> -> vector<128x16xf32>
    %c0_108 = arith.constant 0 : index
    %c0_109 = arith.constant 0 : index
    %45 = vector.load %arg3[%c0_108, %c0_109] : memref<1x16xf32, #tpu.memory_space<vmem>>, vector<1x16xf32>
    %46 = vector.broadcast %45 : vector<1x16xf32> to vector<128x16xf32>
    %47 = arith.addf %44, %46 : vector<128x16xf32>
    %cst_110 = arith.constant 0.000000e+00 : f32
    %48 = vector.broadcast %cst_110 : f32 to vector<128x16xf32>
    %49 = arith.maximumf %47, %48 : vector<128x16xf32>
    %50 = vector.shape_cast %49 : vector<128x16xf32> to vector<1x8x16x16xf32>
    %c0_111 = arith.constant 0 : index
    %c1_112 = arith.constant 1 : index
    %c8_113 = arith.constant 8 : index
    %c0_114 = arith.constant 0 : index
    %51 = vector.load %arg13[%c0_111, %c1_112, %c8_113, %c0_114] : memref<1x18x32x16xf32, #tpu.memory_space<vmem>>, vector<1x8x16x16xf32>
    tpu.vector_store %arg13[%c0_111, %c1_112, %c8_113, %c0_114], %50 {strides = array<i32>} : memref<1x18x32x16xf32, #tpu.memory_space<vmem>>, vector<1x8x16x16xf32>,
    %c0_115 = arith.constant 0 : index
    %c8_116 = arith.constant 8 : index
    %c0_117 = arith.constant 0 : index
    %c0_118 = arith.constant 0 : index
    %52 = vector.load %arg12[%c0_115, %c8_116, %c0_117, %c0_118] : memref<1x16x16x36xbf16, #tpu.memory_space<vmem>>, vector<1x8x16x36xbf16>
    %53 = vector.shape_cast %52 : vector<1x8x16x36xbf16> to vector<128x36xbf16>
    %c0_119 = arith.constant 0 : index
    %c0_120 = arith.constant 0 : index
    %54 = vector.load %arg2[%c0_119, %c0_120] : memref<36x16xbf16, #tpu.memory_space<vmem>>, vector<36x16xbf16>
    %cst_121 = arith.constant dense<0.000000e+00> : vector<128x16xf32>
    %55 = tpu.matmul %53, %54, %cst_121 {dimension_numbers = #tpu.dot_dimension_numbers<[1], [0], [0], [1], [0, 0, 1, 1], [], []>} : vector<128x36xbf16>, vector<36x16xbf16>, vector<128x16xf32> -> vector<128x16xf32>
    %c0_122 = arith.constant 0 : index
    %c0_123 = arith.constant 0 : index
    %56 = vector.load %arg3[%c0_122, %c0_123] : memref<1x16xf32, #tpu.memory_space<vmem>>, vector<1x16xf32>
    %57 = vector.broadcast %56 : vector<1x16xf32> to vector<128x16xf32>
    %58 = arith.addf %55, %57 : vector<128x16xf32>
    %cst_124 = arith.constant 0.000000e+00 : f32
    %59 = vector.broadcast %cst_124 : f32 to vector<128x16xf32>
    %60 = arith.maximumf %58, %59 : vector<128x16xf32>
    %61 = vector.shape_cast %60 : vector<128x16xf32> to vector<1x8x16x16xf32>
    %c0_125 = arith.constant 0 : index
    %c9_126 = arith.constant 9 : index
    %c8_127 = arith.constant 8 : index
    %c0_128 = arith.constant 0 : index
    %62 = vector.load %arg13[%c0_125, %c9_126, %c8_127, %c0_128] : memref<1x18x32x16xf32, #tpu.memory_space<vmem>>, vector<1x8x16x16xf32>
    tpu.vector_store %arg13[%c0_125, %c9_126, %c8_127, %c0_128], %61 {strides = array<i32>} : memref<1x18x32x16xf32, #tpu.memory_space<vmem>>, vector<1x8x16x16xf32>,
    %c0_129 = arith.constant 0 : index
    %c0_130 = arith.constant 0 : index
    %c7_131 = arith.constant 7 : index
    %c0_132 = arith.constant 0 : index
    %63 = vector.load %arg13[%c0_129, %c0_130, %c7_131, %c0_132] : memref<1x18x32x16xf32, #tpu.memory_space<vmem>>, vector<1x16x16x16xf32>
    %64 = arith.truncf %63 : vector<1x16x16x16xf32> to vector<1x16x16x16xbf16>
    %c0_133 = arith.constant 0 : index
    %c0_134 = arith.constant 0 : index
    %c0_135 = arith.constant 0 : index
    %c0_136 = arith.constant 0 : index
    %65 = vector.load %arg14[%c0_133, %c0_134, %c0_135, %c0_136] : memref<1x16x16x144xbf16, #tpu.memory_space<vmem>>, vector<1x16x16x16xbf16>
    tpu.vector_store %arg14[%c0_133, %c0_134, %c0_135, %c0_136], %64 {strides = array<i32>} : memref<1x16x16x144xbf16, #tpu.memory_space<vmem>>, vector<1x16x16x16xbf16>,
    %c0_137 = arith.constant 0 : index
    %c0_138 = arith.constant 0 : index
    %c8_139 = arith.constant 8 : index
    %c0_140 = arith.constant 0 : index
    %66 = vector.load %arg13[%c0_137, %c0_138, %c8_139, %c0_140] : memref<1x18x32x16xf32, #tpu.memory_space<vmem>>, vector<1x16x16x16xf32>
    %67 = arith.truncf %66 : vector<1x16x16x16xf32> to vector<1x16x16x16xbf16>
    %c0_141 = arith.constant 0 : index
    %c0_142 = arith.constant 0 : index
    %c0_143 = arith.constant 0 : index
    %c16_144 = arith.constant 16 : index
    %68 = vector.load %arg14[%c0_141, %c0_142, %c0_143, %c16_144] : memref<1x16x16x144xbf16, #tpu.memory_space<vmem>>, vector<1x16x16x16xbf16>
    tpu.vector_store %arg14[%c0_141, %c0_142, %c0_143, %c16_144], %67 {strides = array<i32>} : memref<1x16x16x144xbf16, #tpu.memory_space<vmem>>, vector<1x16x16x16xbf16>,
    %c0_145 = arith.constant 0 : index
    %c0_146 = arith.constant 0 : index
    %c9_147 = arith.constant 9 : index
    %c0_148 = arith.constant 0 : index
    %69 = vector.load %arg13[%c0_145, %c0_146, %c9_147, %c0_148] : memref<1x18x32x16xf32, #tpu.memory_space<vmem>>, vector<1x16x16x16xf32>
    %70 = arith.truncf %69 : vector<1x16x16x16xf32> to vector<1x16x16x16xbf16>
    %c0_149 = arith.constant 0 : index
    %c0_150 = arith.constant 0 : index
    %c0_151 = arith.constant 0 : index
    %c32_152 = arith.constant 32 : index
    %71 = vector.load %arg14[%c0_149, %c0_150, %c0_151, %c32_152] : memref<1x16x16x144xbf16, #tpu.memory_space<vmem>>, vector<1x16x16x16xbf16>
    tpu.vector_store %arg14[%c0_149, %c0_150, %c0_151, %c32_152], %70 {strides = array<i32>} : memref<1x16x16x144xbf16, #tpu.memory_space<vmem>>, vector<1x16x16x16xbf16>,
    %c0_153 = arith.constant 0 : index
    %c1_154 = arith.constant 1 : index
    %c7_155 = arith.constant 7 : index
    %c0_156 = arith.constant 0 : index
    %72 = vector.load %arg13[%c0_153, %c1_154, %c7_155, %c0_156] : memref<1x18x32x16xf32, #tpu.memory_space<vmem>>, vector<1x16x16x16xf32>
    %73 = arith.truncf %72 : vector<1x16x16x16xf32> to vector<1x16x16x16xbf16>
    %c0_157 = arith.constant 0 : index
    %c0_158 = arith.constant 0 : index
    %c0_159 = arith.constant 0 : index
    %c48 = arith.constant 48 : index
    %74 = vector.load %arg14[%c0_157, %c0_158, %c0_159, %c48] : memref<1x16x16x144xbf16, #tpu.memory_space<vmem>>, vector<1x16x16x16xbf16>
    tpu.vector_store %arg14[%c0_157, %c0_158, %c0_159, %c48], %73 {strides = array<i32>} : memref<1x16x16x144xbf16, #tpu.memory_space<vmem>>, vector<1x16x16x16xbf16>,
    %c0_160 = arith.constant 0 : index
    %c1_161 = arith.constant 1 : index
    %c8_162 = arith.constant 8 : index
    %c0_163 = arith.constant 0 : index
    %75 = vector.load %arg13[%c0_160, %c1_161, %c8_162, %c0_163] : memref<1x18x32x16xf32, #tpu.memory_space<vmem>>, vector<1x16x16x16xf32>
    %76 = arith.truncf %75 : vector<1x16x16x16xf32> to vector<1x16x16x16xbf16>
    %c0_164 = arith.constant 0 : index
    %c0_165 = arith.constant 0 : index
    %c0_166 = arith.constant 0 : index
    %c64 = arith.constant 64 : index
    %77 = vector.load %arg14[%c0_164, %c0_165, %c0_166, %c64] : memref<1x16x16x144xbf16, #tpu.memory_space<vmem>>, vector<1x16x16x16xbf16>
    tpu.vector_store %arg14[%c0_164, %c0_165, %c0_166, %c64], %76 {strides = array<i32>} : memref<1x16x16x144xbf16, #tpu.memory_space<vmem>>, vector<1x16x16x16xbf16>,
    %c0_167 = arith.constant 0 : index
    %c1_168 = arith.constant 1 : index
    %c9_169 = arith.constant 9 : index
    %c0_170 = arith.constant 0 : index
    %78 = vector.load %arg13[%c0_167, %c1_168, %c9_169, %c0_170] : memref<1x18x32x16xf32, #tpu.memory_space<vmem>>, vector<1x16x16x16xf32>
    %79 = arith.truncf %78 : vector<1x16x16x16xf32> to vector<1x16x16x16xbf16>
    %c0_171 = arith.constant 0 : index
    %c0_172 = arith.constant 0 : index
    %c0_173 = arith.constant 0 : index
    %c80 = arith.constant 80 : index
    %80 = vector.load %arg14[%c0_171, %c0_172, %c0_173, %c80] : memref<1x16x16x144xbf16, #tpu.memory_space<vmem>>, vector<1x16x16x16xbf16>
    tpu.vector_store %arg14[%c0_171, %c0_172, %c0_173, %c80], %79 {strides = array<i32>} : memref<1x16x16x144xbf16, #tpu.memory_space<vmem>>, vector<1x16x16x16xbf16>,
    %c0_174 = arith.constant 0 : index
    %c2_175 = arith.constant 2 : index
    %c7_176 = arith.constant 7 : index
    %c0_177 = arith.constant 0 : index
    %81 = vector.load %arg13[%c0_174, %c2_175, %c7_176, %c0_177] : memref<1x18x32x16xf32, #tpu.memory_space<vmem>>, vector<1x16x16x16xf32>
    %82 = arith.truncf %81 : vector<1x16x16x16xf32> to vector<1x16x16x16xbf16>
    %c0_178 = arith.constant 0 : index
    %c0_179 = arith.constant 0 : index
    %c0_180 = arith.constant 0 : index
    %c96 = arith.constant 96 : index
    %83 = vector.load %arg14[%c0_178, %c0_179, %c0_180, %c96] : memref<1x16x16x144xbf16, #tpu.memory_space<vmem>>, vector<1x16x16x16xbf16>
    tpu.vector_store %arg14[%c0_178, %c0_179, %c0_180, %c96], %82 {strides = array<i32>} : memref<1x16x16x144xbf16, #tpu.memory_space<vmem>>, vector<1x16x16x16xbf16>,
    %c0_181 = arith.constant 0 : index
    %c2_182 = arith.constant 2 : index
    %c8_183 = arith.constant 8 : index
    %c0_184 = arith.constant 0 : index
    %84 = vector.load %arg13[%c0_181, %c2_182, %c8_183, %c0_184] : memref<1x18x32x16xf32, #tpu.memory_space<vmem>>, vector<1x16x16x16xf32>
    %85 = arith.truncf %84 : vector<1x16x16x16xf32> to vector<1x16x16x16xbf16>
    %c0_185 = arith.constant 0 : index
    %c0_186 = arith.constant 0 : index
    %c0_187 = arith.constant 0 : index
    %c112 = arith.constant 112 : index
    %86 = vector.load %arg14[%c0_185, %c0_186, %c0_187, %c112] : memref<1x16x16x144xbf16, #tpu.memory_space<vmem>>, vector<1x16x16x16xbf16>
    tpu.vector_store %arg14[%c0_185, %c0_186, %c0_187, %c112], %85 {strides = array<i32>} : memref<1x16x16x144xbf16, #tpu.memory_space<vmem>>, vector<1x16x16x16xbf16>,
    %c0_188 = arith.constant 0 : index
    %c2_189 = arith.constant 2 : index
    %c9_190 = arith.constant 9 : index
    %c0_191 = arith.constant 0 : index
    %87 = vector.load %arg13[%c0_188, %c2_189, %c9_190, %c0_191] : memref<1x18x32x16xf32, #tpu.memory_space<vmem>>, vector<1x16x16x16xf32>
    %88 = arith.truncf %87 : vector<1x16x16x16xf32> to vector<1x16x16x16xbf16>
    %c0_192 = arith.constant 0 : index
    %c0_193 = arith.constant 0 : index
    %c0_194 = arith.constant 0 : index
    %c128 = arith.constant 128 : index
    %89 = vector.load %arg14[%c0_192, %c0_193, %c0_194, %c128] : memref<1x16x16x144xbf16, #tpu.memory_space<vmem>>, vector<1x16x16x16xbf16>
    tpu.vector_store %arg14[%c0_192, %c0_193, %c0_194, %c128], %88 {strides = array<i32>} : memref<1x16x16x144xbf16, #tpu.memory_space<vmem>>, vector<1x16x16x16xbf16>,
    %c0_195 = arith.constant 0 : index
    %c0_196 = arith.constant 0 : index
    %c0_197 = arith.constant 0 : index
    %c0_198 = arith.constant 0 : index
    %90 = vector.load %arg14[%c0_195, %c0_196, %c0_197, %c0_198] : memref<1x16x16x144xbf16, #tpu.memory_space<vmem>>, vector<1x8x16x144xbf16>
    %91 = vector.shape_cast %90 : vector<1x8x16x144xbf16> to vector<128x144xbf16>
    %c0_199 = arith.constant 0 : index
    %c0_200 = arith.constant 0 : index
    %92 = vector.load %arg4[%c0_199, %c0_200] : memref<144x32xbf16, #tpu.memory_space<vmem>>, vector<144x32xbf16>
    %cst_201 = arith.constant dense<0.000000e+00> : vector<128x32xf32>
    %93 = tpu.matmul %91, %92, %cst_201 {dimension_numbers = #tpu.dot_dimension_numbers<[1], [0], [0], [1], [0, 0, 1, 1], [], []>} : vector<128x144xbf16>, vector<144x32xbf16>, vector<128x32xf32> -> vector<128x32xf32>
    %c0_202 = arith.constant 0 : index
    %c0_203 = arith.constant 0 : index
    %94 = vector.load %arg5[%c0_202, %c0_203] : memref<1x32xf32, #tpu.memory_space<vmem>>, vector<1x32xf32>
    %95 = vector.broadcast %94 : vector<1x32xf32> to vector<128x32xf32>
    %96 = arith.addf %93, %95 : vector<128x32xf32>
    %cst_204 = arith.constant 0.000000e+00 : f32
    %97 = vector.broadcast %cst_204 : f32 to vector<128x32xf32>
    %98 = arith.maximumf %96, %97 : vector<128x32xf32>
    %99 = vector.shape_cast %98 : vector<128x32xf32> to vector<4x2x16x32xf32>
    %cst_205 = arith.constant dense<0xFF800000> : vector<4x16x32xf32>
    %100 = vector.multi_reduction <maximumf>, %99, %cst_205 [1] : vector<4x2x16x32xf32> to vector<4x16x32xf32>
    %c0_206 = arith.constant 0 : index
    %c0_207 = arith.constant 0 : index
    %c0_208 = arith.constant 0 : index
    %101 = vector.load %arg15[%c0_206, %c0_207, %c0_208] : memref<8x16x32xf32, #tpu.memory_space<vmem>>, vector<4x16x32xf32>
    tpu.vector_store %arg15[%c0_206, %c0_207, %c0_208], %100 {strides = array<i32>} : memref<8x16x32xf32, #tpu.memory_space<vmem>>, vector<4x16x32xf32>,
    %c0_209 = arith.constant 0 : index
    %c8_210 = arith.constant 8 : index
    %c0_211 = arith.constant 0 : index
    %c0_212 = arith.constant 0 : index
    %102 = vector.load %arg14[%c0_209, %c8_210, %c0_211, %c0_212] : memref<1x16x16x144xbf16, #tpu.memory_space<vmem>>, vector<1x8x16x144xbf16>
    %103 = vector.shape_cast %102 : vector<1x8x16x144xbf16> to vector<128x144xbf16>
    %c0_213 = arith.constant 0 : index
    %c0_214 = arith.constant 0 : index
    %104 = vector.load %arg4[%c0_213, %c0_214] : memref<144x32xbf16, #tpu.memory_space<vmem>>, vector<144x32xbf16>
    %cst_215 = arith.constant dense<0.000000e+00> : vector<128x32xf32>
    %105 = tpu.matmul %103, %104, %cst_215 {dimension_numbers = #tpu.dot_dimension_numbers<[1], [0], [0], [1], [0, 0, 1, 1], [], []>} : vector<128x144xbf16>, vector<144x32xbf16>, vector<128x32xf32> -> vector<128x32xf32>
    %c0_216 = arith.constant 0 : index
    %c0_217 = arith.constant 0 : index
    %106 = vector.load %arg5[%c0_216, %c0_217] : memref<1x32xf32, #tpu.memory_space<vmem>>, vector<1x32xf32>
    %107 = vector.broadcast %106 : vector<1x32xf32> to vector<128x32xf32>
    %108 = arith.addf %105, %107 : vector<128x32xf32>
    %cst_218 = arith.constant 0.000000e+00 : f32
    %109 = vector.broadcast %cst_218 : f32 to vector<128x32xf32>
    %110 = arith.maximumf %108, %109 : vector<128x32xf32>
    %111 = vector.shape_cast %110 : vector<128x32xf32> to vector<4x2x16x32xf32>
    %cst_219 = arith.constant dense<0xFF800000> : vector<4x16x32xf32>
    %112 = vector.multi_reduction <maximumf>, %111, %cst_219 [1] : vector<4x2x16x32xf32> to vector<4x16x32xf32>
    %c4_220 = arith.constant 4 : index
    %c0_221 = arith.constant 0 : index
    %c0_222 = arith.constant 0 : index
    %113 = vector.load %arg15[%c4_220, %c0_221, %c0_222] : memref<8x16x32xf32, #tpu.memory_space<vmem>>, vector<4x16x32xf32>
    tpu.vector_store %arg15[%c4_220, %c0_221, %c0_222], %112 {strides = array<i32>} : memref<8x16x32xf32, #tpu.memory_space<vmem>>, vector<4x16x32xf32>,
    %c0_223 = arith.constant 0 : index
    %c0_224 = arith.constant 0 : index
    %c0_225 = arith.constant 0 : index
    %114 = tpu.strided_load %arg15[%c0_223, %c0_224, %c0_225] {strides = array<i32: 1, 2, 1>} : memref<8x16x32xf32, #tpu.memory_space<vmem>>, vector<8x8x32xf32>
    %c0_226 = arith.constant 0 : index
    %c1_227 = arith.constant 1 : index
    %c0_228 = arith.constant 0 : index
    %115 = tpu.strided_load %arg15[%c0_226, %c1_227, %c0_228] {strides = array<i32: 1, 2, 1>} : memref<8x16x32xf32, #tpu.memory_space<vmem>>, vector<8x8x32xf32>
    %116 = arith.maximumf %114, %115 : vector<8x8x32xf32>
    %117 = vector.shape_cast %116 : vector<8x8x32xf32> to vector<64x32xf32>
    %118 = vector.extract_strided_slice %117 {offsets = [0, 0], sizes = [1, 32], strides = [1, 1]} : vector<64x32xf32> to vector<1x32xf32>
    %c0_229 = arith.constant 0 : index
    %c0_230 = arith.constant 0 : index
    %119 = vector.load %arg16[%c0_229, %c0_230] : memref<1x2048xf32, #tpu.memory_space<vmem>>, vector<1x32xf32>
    tpu.vector_store %arg16[%c0_229, %c0_230], %118 {strides = array<i32>} : memref<1x2048xf32, #tpu.memory_space<vmem>>, vector<1x32xf32>,
    %120 = vector.extract_strided_slice %117 {offsets = [1, 0], sizes = [1, 32], strides = [1, 1]} : vector<64x32xf32> to vector<1x32xf32>
    %c0_231 = arith.constant 0 : index
    %c32_232 = arith.constant 32 : index
    %121 = vector.load %arg16[%c0_231, %c32_232] : memref<1x2048xf32, #tpu.memory_space<vmem>>, vector<1x32xf32>
    tpu.vector_store %arg16[%c0_231, %c32_232], %120 {strides = array<i32>} : memref<1x2048xf32, #tpu.memory_space<vmem>>, vector<1x32xf32>,
    %122 = vector.extract_strided_slice %117 {offsets = [2, 0], sizes = [1, 32], strides = [1, 1]} : vector<64x32xf32> to vector<1x32xf32>
    %c0_233 = arith.constant 0 : index
    %c64_234 = arith.constant 64 : index
    %123 = vector.load %arg16[%c0_233, %c64_234] : memref<1x2048xf32, #tpu.memory_space<vmem>>, vector<1x32xf32>
    tpu.vector_store %arg16[%c0_233, %c64_234], %122 {strides = array<i32>} : memref<1x2048xf32, #tpu.memory_space<vmem>>, vector<1x32xf32>,
    %124 = vector.extract_strided_slice %117 {offsets = [3, 0], sizes = [1, 32], strides = [1, 1]} : vector<64x32xf32> to vector<1x32xf32>
    %c0_235 = arith.constant 0 : index
    %c96_236 = arith.constant 96 : index
    %125 = vector.load %arg16[%c0_235, %c96_236] : memref<1x2048xf32, #tpu.memory_space<vmem>>, vector<1x32xf32>
    tpu.vector_store %arg16[%c0_235, %c96_236], %124 {strides = array<i32>} : memref<1x2048xf32, #tpu.memory_space<vmem>>, vector<1x32xf32>,
    %126 = vector.extract_strided_slice %117 {offsets = [4, 0], sizes = [1, 32], strides = [1, 1]} : vector<64x32xf32> to vector<1x32xf32>
    %c0_237 = arith.constant 0 : index
    %c128_238 = arith.constant 128 : index
    %127 = vector.load %arg16[%c0_237, %c128_238] : memref<1x2048xf32, #tpu.memory_space<vmem>>, vector<1x32xf32>
    tpu.vector_store %arg16[%c0_237, %c128_238], %126 {strides = array<i32>} : memref<1x2048xf32, #tpu.memory_space<vmem>>, vector<1x32xf32>,
    %128 = vector.extract_strided_slice %117 {offsets = [5, 0], sizes = [1, 32], strides = [1, 1]} : vector<64x32xf32> to vector<1x32xf32>
    %c0_239 = arith.constant 0 : index
    %c160 = arith.constant 160 : index
    %129 = vector.load %arg16[%c0_239, %c160] : memref<1x2048xf32, #tpu.memory_space<vmem>>, vector<1x32xf32>
    tpu.vector_store %arg16[%c0_239, %c160], %128 {strides = array<i32>} : memref<1x2048xf32, #tpu.memory_space<vmem>>, vector<1x32xf32>,
    %130 = vector.extract_strided_slice %117 {offsets = [6, 0], sizes = [1, 32], strides = [1, 1]} : vector<64x32xf32> to vector<1x32xf32>
    %c0_240 = arith.constant 0 : index
    %c192 = arith.constant 192 : index
    %131 = vector.load %arg16[%c0_240, %c192] : memref<1x2048xf32, #tpu.memory_space<vmem>>, vector<1x32xf32>
    tpu.vector_store %arg16[%c0_240, %c192], %130 {strides = array<i32>} : memref<1x2048xf32, #tpu.memory_space<vmem>>, vector<1x32xf32>,
    %132 = vector.extract_strided_slice %117 {offsets = [7, 0], sizes = [1, 32], strides = [1, 1]} : vector<64x32xf32> to vector<1x32xf32>
    %c0_241 = arith.constant 0 : index
    %c224 = arith.constant 224 : index
    %133 = vector.load %arg16[%c0_241, %c224] : memref<1x2048xf32, #tpu.memory_space<vmem>>, vector<1x32xf32>
    tpu.vector_store %arg16[%c0_241, %c224], %132 {strides = array<i32>} : memref<1x2048xf32, #tpu.memory_space<vmem>>, vector<1x32xf32>,
    %134 = vector.extract_strided_slice %117 {offsets = [8, 0], sizes = [1, 32], strides = [1, 1]} : vector<64x32xf32> to vector<1x32xf32>
    %c0_242 = arith.constant 0 : index
    %c256 = arith.constant 256 : index
    %135 = vector.load %arg16[%c0_242, %c256] : memref<1x2048xf32, #tpu.memory_space<vmem>>, vector<1x32xf32>
    tpu.vector_store %arg16[%c0_242, %c256], %134 {strides = array<i32>} : memref<1x2048xf32, #tpu.memory_space<vmem>>, vector<1x32xf32>,
    %136 = vector.extract_strided_slice %117 {offsets = [9, 0], sizes = [1, 32], strides = [1, 1]} : vector<64x32xf32> to vector<1x32xf32>
    %c0_243 = arith.constant 0 : index
    %c288 = arith.constant 288 : index
    %137 = vector.load %arg16[%c0_243, %c288] : memref<1x2048xf32, #tpu.memory_space<vmem>>, vector<1x32xf32>
    tpu.vector_store %arg16[%c0_243, %c288], %136 {strides = array<i32>} : memref<1x2048xf32, #tpu.memory_space<vmem>>, vector<1x32xf32>,
    %138 = vector.extract_strided_slice %117 {offsets = [10, 0], sizes = [1, 32], strides = [1, 1]} : vector<64x32xf32> to vector<1x32xf32>
    %c0_244 = arith.constant 0 : index
    %c320 = arith.constant 320 : index
    %139 = vector.load %arg16[%c0_244, %c320] : memref<1x2048xf32, #tpu.memory_space<vmem>>, vector<1x32xf32>
    tpu.vector_store %arg16[%c0_244, %c320], %138 {strides = array<i32>} : memref<1x2048xf32, #tpu.memory_space<vmem>>, vector<1x32xf32>,
    %140 = vector.extract_strided_slice %117 {offsets = [11, 0], sizes = [1, 32], strides = [1, 1]} : vector<64x32xf32> to vector<1x32xf32>
    %c0_245 = arith.constant 0 : index
    %c352 = arith.constant 352 : index
    %141 = vector.load %arg16[%c0_245, %c352] : memref<1x2048xf32, #tpu.memory_space<vmem>>, vector<1x32xf32>
    tpu.vector_store %arg16[%c0_245, %c352], %140 {strides = array<i32>} : memref<1x2048xf32, #tpu.memory_space<vmem>>, vector<1x32xf32>,
    %142 = vector.extract_strided_slice %117 {offsets = [12, 0], sizes = [1, 32], strides = [1, 1]} : vector<64x32xf32> to vector<1x32xf32>
    %c0_246 = arith.constant 0 : index
    %c384 = arith.constant 384 : index
    %143 = vector.load %arg16[%c0_246, %c384] : memref<1x2048xf32, #tpu.memory_space<vmem>>, vector<1x32xf32>
    tpu.vector_store %arg16[%c0_246, %c384], %142 {strides = array<i32>} : memref<1x2048xf32, #tpu.memory_space<vmem>>, vector<1x32xf32>,
    %144 = vector.extract_strided_slice %117 {offsets = [13, 0], sizes = [1, 32], strides = [1, 1]} : vector<64x32xf32> to vector<1x32xf32>
    %c0_247 = arith.constant 0 : index
    %c416 = arith.constant 416 : index
    %145 = vector.load %arg16[%c0_247, %c416] : memref<1x2048xf32, #tpu.memory_space<vmem>>, vector<1x32xf32>
    tpu.vector_store %arg16[%c0_247, %c416], %144 {strides = array<i32>} : memref<1x2048xf32, #tpu.memory_space<vmem>>, vector<1x32xf32>,
    %146 = vector.extract_strided_slice %117 {offsets = [14, 0], sizes = [1, 32], strides = [1, 1]} : vector<64x32xf32> to vector<1x32xf32>
    %c0_248 = arith.constant 0 : index
    %c448 = arith.constant 448 : index
    %147 = vector.load %arg16[%c0_248, %c448] : memref<1x2048xf32, #tpu.memory_space<vmem>>, vector<1x32xf32>
    tpu.vector_store %arg16[%c0_248, %c448], %146 {strides = array<i32>} : memref<1x2048xf32, #tpu.memory_space<vmem>>, vector<1x32xf32>,
    %148 = vector.extract_strided_slice %117 {offsets = [15, 0], sizes = [1, 32], strides = [1, 1]} : vector<64x32xf32> to vector<1x32xf32>
    %c0_249 = arith.constant 0 : index
    %c480 = arith.constant 480 : index
    %149 = vector.load %arg16[%c0_249, %c480] : memref<1x2048xf32, #tpu.memory_space<vmem>>, vector<1x32xf32>
    tpu.vector_store %arg16[%c0_249, %c480], %148 {strides = array<i32>} : memref<1x2048xf32, #tpu.memory_space<vmem>>, vector<1x32xf32>,
    %150 = vector.extract_strided_slice %117 {offsets = [16, 0], sizes = [1, 32], strides = [1, 1]} : vector<64x32xf32> to vector<1x32xf32>
    %c0_250 = arith.constant 0 : index
    %c512 = arith.constant 512 : index
    %151 = vector.load %arg16[%c0_250, %c512] : memref<1x2048xf32, #tpu.memory_space<vmem>>, vector<1x32xf32>
    tpu.vector_store %arg16[%c0_250, %c512], %150 {strides = array<i32>} : memref<1x2048xf32, #tpu.memory_space<vmem>>, vector<1x32xf32>,
    %152 = vector.extract_strided_slice %117 {offsets = [17, 0], sizes = [1, 32], strides = [1, 1]} : vector<64x32xf32> to vector<1x32xf32>
    %c0_251 = arith.constant 0 : index
    %c544 = arith.constant 544 : index
    %153 = vector.load %arg16[%c0_251, %c544] : memref<1x2048xf32, #tpu.memory_space<vmem>>, vector<1x32xf32>
    tpu.vector_store %arg16[%c0_251, %c544], %152 {strides = array<i32>} : memref<1x2048xf32, #tpu.memory_space<vmem>>, vector<1x32xf32>,
    %154 = vector.extract_strided_slice %117 {offsets = [18, 0], sizes = [1, 32], strides = [1, 1]} : vector<64x32xf32> to vector<1x32xf32>
    %c0_252 = arith.constant 0 : index
    %c576 = arith.constant 576 : index
    %155 = vector.load %arg16[%c0_252, %c576] : memref<1x2048xf32, #tpu.memory_space<vmem>>, vector<1x32xf32>
    tpu.vector_store %arg16[%c0_252, %c576], %154 {strides = array<i32>} : memref<1x2048xf32, #tpu.memory_space<vmem>>, vector<1x32xf32>,
    %156 = vector.extract_strided_slice %117 {offsets = [19, 0], sizes = [1, 32], strides = [1, 1]} : vector<64x32xf32> to vector<1x32xf32>
    %c0_253 = arith.constant 0 : index
    %c608 = arith.constant 608 : index
    %157 = vector.load %arg16[%c0_253, %c608] : memref<1x2048xf32, #tpu.memory_space<vmem>>, vector<1x32xf32>
    tpu.vector_store %arg16[%c0_253, %c608], %156 {strides = array<i32>} : memref<1x2048xf32, #tpu.memory_space<vmem>>, vector<1x32xf32>,
    %158 = vector.extract_strided_slice %117 {offsets = [20, 0], sizes = [1, 32], strides = [1, 1]} : vector<64x32xf32> to vector<1x32xf32>
    %c0_254 = arith.constant 0 : index
    %c640 = arith.constant 640 : index
    %159 = vector.load %arg16[%c0_254, %c640] : memref<1x2048xf32, #tpu.memory_space<vmem>>, vector<1x32xf32>
    tpu.vector_store %arg16[%c0_254, %c640], %158 {strides = array<i32>} : memref<1x2048xf32, #tpu.memory_space<vmem>>, vector<1x32xf32>,
    %160 = vector.extract_strided_slice %117 {offsets = [21, 0], sizes = [1, 32], strides = [1, 1]} : vector<64x32xf32> to vector<1x32xf32>
    %c0_255 = arith.constant 0 : index
    %c672 = arith.constant 672 : index
    %161 = vector.load %arg16[%c0_255, %c672] : memref<1x2048xf32, #tpu.memory_space<vmem>>, vector<1x32xf32>
    tpu.vector_store %arg16[%c0_255, %c672], %160 {strides = array<i32>} : memref<1x2048xf32, #tpu.memory_space<vmem>>, vector<1x32xf32>,
    %162 = vector.extract_strided_slice %117 {offsets = [22, 0], sizes = [1, 32], strides = [1, 1]} : vector<64x32xf32> to vector<1x32xf32>
    %c0_256 = arith.constant 0 : index
    %c704 = arith.constant 704 : index
    %163 = vector.load %arg16[%c0_256, %c704] : memref<1x2048xf32, #tpu.memory_space<vmem>>, vector<1x32xf32>
    tpu.vector_store %arg16[%c0_256, %c704], %162 {strides = array<i32>} : memref<1x2048xf32, #tpu.memory_space<vmem>>, vector<1x32xf32>,
    %164 = vector.extract_strided_slice %117 {offsets = [23, 0], sizes = [1, 32], strides = [1, 1]} : vector<64x32xf32> to vector<1x32xf32>
    %c0_257 = arith.constant 0 : index
    %c736 = arith.constant 736 : index
    %165 = vector.load %arg16[%c0_257, %c736] : memref<1x2048xf32, #tpu.memory_space<vmem>>, vector<1x32xf32>
    tpu.vector_store %arg16[%c0_257, %c736], %164 {strides = array<i32>} : memref<1x2048xf32, #tpu.memory_space<vmem>>, vector<1x32xf32>,
    %166 = vector.extract_strided_slice %117 {offsets = [24, 0], sizes = [1, 32], strides = [1, 1]} : vector<64x32xf32> to vector<1x32xf32>
    %c0_258 = arith.constant 0 : index
    %c768 = arith.constant 768 : index
    %167 = vector.load %arg16[%c0_258, %c768] : memref<1x2048xf32, #tpu.memory_space<vmem>>, vector<1x32xf32>
    tpu.vector_store %arg16[%c0_258, %c768], %166 {strides = array<i32>} : memref<1x2048xf32, #tpu.memory_space<vmem>>, vector<1x32xf32>,
    %168 = vector.extract_strided_slice %117 {offsets = [25, 0], sizes = [1, 32], strides = [1, 1]} : vector<64x32xf32> to vector<1x32xf32>
    %c0_259 = arith.constant 0 : index
    %c800 = arith.constant 800 : index
    %169 = vector.load %arg16[%c0_259, %c800] : memref<1x2048xf32, #tpu.memory_space<vmem>>, vector<1x32xf32>
    tpu.vector_store %arg16[%c0_259, %c800], %168 {strides = array<i32>} : memref<1x2048xf32, #tpu.memory_space<vmem>>, vector<1x32xf32>,
    %170 = vector.extract_strided_slice %117 {offsets = [26, 0], sizes = [1, 32], strides = [1, 1]} : vector<64x32xf32> to vector<1x32xf32>
    %c0_260 = arith.constant 0 : index
    %c832 = arith.constant 832 : index
    %171 = vector.load %arg16[%c0_260, %c832] : memref<1x2048xf32, #tpu.memory_space<vmem>>, vector<1x32xf32>
    tpu.vector_store %arg16[%c0_260, %c832], %170 {strides = array<i32>} : memref<1x2048xf32, #tpu.memory_space<vmem>>, vector<1x32xf32>,
    %172 = vector.extract_strided_slice %117 {offsets = [27, 0], sizes = [1, 32], strides = [1, 1]} : vector<64x32xf32> to vector<1x32xf32>
    %c0_261 = arith.constant 0 : index
    %c864 = arith.constant 864 : index
    %173 = vector.load %arg16[%c0_261, %c864] : memref<1x2048xf32, #tpu.memory_space<vmem>>, vector<1x32xf32>
    tpu.vector_store %arg16[%c0_261, %c864], %172 {strides = array<i32>} : memref<1x2048xf32, #tpu.memory_space<vmem>>, vector<1x32xf32>,
    %174 = vector.extract_strided_slice %117 {offsets = [28, 0], sizes = [1, 32], strides = [1, 1]} : vector<64x32xf32> to vector<1x32xf32>
    %c0_262 = arith.constant 0 : index
    %c896 = arith.constant 896 : index
    %175 = vector.load %arg16[%c0_262, %c896] : memref<1x2048xf32, #tpu.memory_space<vmem>>, vector<1x32xf32>
    tpu.vector_store %arg16[%c0_262, %c896], %174 {strides = array<i32>} : memref<1x2048xf32, #tpu.memory_space<vmem>>, vector<1x32xf32>,
    %176 = vector.extract_strided_slice %117 {offsets = [29, 0], sizes = [1, 32], strides = [1, 1]} : vector<64x32xf32> to vector<1x32xf32>
    %c0_263 = arith.constant 0 : index
    %c928 = arith.constant 928 : index
    %177 = vector.load %arg16[%c0_263, %c928] : memref<1x2048xf32, #tpu.memory_space<vmem>>, vector<1x32xf32>
    tpu.vector_store %arg16[%c0_263, %c928], %176 {strides = array<i32>} : memref<1x2048xf32, #tpu.memory_space<vmem>>, vector<1x32xf32>,
    %178 = vector.extract_strided_slice %117 {offsets = [30, 0], sizes = [1, 32], strides = [1, 1]} : vector<64x32xf32> to vector<1x32xf32>
    %c0_264 = arith.constant 0 : index
    %c960 = arith.constant 960 : index
    %179 = vector.load %arg16[%c0_264, %c960] : memref<1x2048xf32, #tpu.memory_space<vmem>>, vector<1x32xf32>
    tpu.vector_store %arg16[%c0_264, %c960], %178 {strides = array<i32>} : memref<1x2048xf32, #tpu.memory_space<vmem>>, vector<1x32xf32>,
    %180 = vector.extract_strided_slice %117 {offsets = [31, 0], sizes = [1, 32], strides = [1, 1]} : vector<64x32xf32> to vector<1x32xf32>
    %c0_265 = arith.constant 0 : index
    %c992 = arith.constant 992 : index
    %181 = vector.load %arg16[%c0_265, %c992] : memref<1x2048xf32, #tpu.memory_space<vmem>>, vector<1x32xf32>
    tpu.vector_store %arg16[%c0_265, %c992], %180 {strides = array<i32>} : memref<1x2048xf32, #tpu.memory_space<vmem>>, vector<1x32xf32>,
    %182 = vector.extract_strided_slice %117 {offsets = [32, 0], sizes = [1, 32], strides = [1, 1]} : vector<64x32xf32> to vector<1x32xf32>
    %c0_266 = arith.constant 0 : index
    %c1024 = arith.constant 1024 : index
    %183 = vector.load %arg16[%c0_266, %c1024] : memref<1x2048xf32, #tpu.memory_space<vmem>>, vector<1x32xf32>
    tpu.vector_store %arg16[%c0_266, %c1024], %182 {strides = array<i32>} : memref<1x2048xf32, #tpu.memory_space<vmem>>, vector<1x32xf32>,
    %184 = vector.extract_strided_slice %117 {offsets = [33, 0], sizes = [1, 32], strides = [1, 1]} : vector<64x32xf32> to vector<1x32xf32>
    %c0_267 = arith.constant 0 : index
    %c1056 = arith.constant 1056 : index
    %185 = vector.load %arg16[%c0_267, %c1056] : memref<1x2048xf32, #tpu.memory_space<vmem>>, vector<1x32xf32>
    tpu.vector_store %arg16[%c0_267, %c1056], %184 {strides = array<i32>} : memref<1x2048xf32, #tpu.memory_space<vmem>>, vector<1x32xf32>,
    %186 = vector.extract_strided_slice %117 {offsets = [34, 0], sizes = [1, 32], strides = [1, 1]} : vector<64x32xf32> to vector<1x32xf32>
    %c0_268 = arith.constant 0 : index
    %c1088 = arith.constant 1088 : index
    %187 = vector.load %arg16[%c0_268, %c1088] : memref<1x2048xf32, #tpu.memory_space<vmem>>, vector<1x32xf32>
    tpu.vector_store %arg16[%c0_268, %c1088], %186 {strides = array<i32>} : memref<1x2048xf32, #tpu.memory_space<vmem>>, vector<1x32xf32>,
    %188 = vector.extract_strided_slice %117 {offsets = [35, 0], sizes = [1, 32], strides = [1, 1]} : vector<64x32xf32> to vector<1x32xf32>
    %c0_269 = arith.constant 0 : index
    %c1120 = arith.constant 1120 : index
    %189 = vector.load %arg16[%c0_269, %c1120] : memref<1x2048xf32, #tpu.memory_space<vmem>>, vector<1x32xf32>
    tpu.vector_store %arg16[%c0_269, %c1120], %188 {strides = array<i32>} : memref<1x2048xf32, #tpu.memory_space<vmem>>, vector<1x32xf32>,
    %190 = vector.extract_strided_slice %117 {offsets = [36, 0], sizes = [1, 32], strides = [1, 1]} : vector<64x32xf32> to vector<1x32xf32>
    %c0_270 = arith.constant 0 : index
    %c1152 = arith.constant 1152 : index
    %191 = vector.load %arg16[%c0_270, %c1152] : memref<1x2048xf32, #tpu.memory_space<vmem>>, vector<1x32xf32>
    tpu.vector_store %arg16[%c0_270, %c1152], %190 {strides = array<i32>} : memref<1x2048xf32, #tpu.memory_space<vmem>>, vector<1x32xf32>,
    %192 = vector.extract_strided_slice %117 {offsets = [37, 0], sizes = [1, 32], strides = [1, 1]} : vector<64x32xf32> to vector<1x32xf32>
    %c0_271 = arith.constant 0 : index
    %c1184 = arith.constant 1184 : index
    %193 = vector.load %arg16[%c0_271, %c1184] : memref<1x2048xf32, #tpu.memory_space<vmem>>, vector<1x32xf32>
    tpu.vector_store %arg16[%c0_271, %c1184], %192 {strides = array<i32>} : memref<1x2048xf32, #tpu.memory_space<vmem>>, vector<1x32xf32>,
    %194 = vector.extract_strided_slice %117 {offsets = [38, 0], sizes = [1, 32], strides = [1, 1]} : vector<64x32xf32> to vector<1x32xf32>
    %c0_272 = arith.constant 0 : index
    %c1216 = arith.constant 1216 : index
    %195 = vector.load %arg16[%c0_272, %c1216] : memref<1x2048xf32, #tpu.memory_space<vmem>>, vector<1x32xf32>
    tpu.vector_store %arg16[%c0_272, %c1216], %194 {strides = array<i32>} : memref<1x2048xf32, #tpu.memory_space<vmem>>, vector<1x32xf32>,
    %196 = vector.extract_strided_slice %117 {offsets = [39, 0], sizes = [1, 32], strides = [1, 1]} : vector<64x32xf32> to vector<1x32xf32>
    %c0_273 = arith.constant 0 : index
    %c1248 = arith.constant 1248 : index
    %197 = vector.load %arg16[%c0_273, %c1248] : memref<1x2048xf32, #tpu.memory_space<vmem>>, vector<1x32xf32>
    tpu.vector_store %arg16[%c0_273, %c1248], %196 {strides = array<i32>} : memref<1x2048xf32, #tpu.memory_space<vmem>>, vector<1x32xf32>,
    %198 = vector.extract_strided_slice %117 {offsets = [40, 0], sizes = [1, 32], strides = [1, 1]} : vector<64x32xf32> to vector<1x32xf32>
    %c0_274 = arith.constant 0 : index
    %c1280 = arith.constant 1280 : index
    %199 = vector.load %arg16[%c0_274, %c1280] : memref<1x2048xf32, #tpu.memory_space<vmem>>, vector<1x32xf32>
    tpu.vector_store %arg16[%c0_274, %c1280], %198 {strides = array<i32>} : memref<1x2048xf32, #tpu.memory_space<vmem>>, vector<1x32xf32>,
    %200 = vector.extract_strided_slice %117 {offsets = [41, 0], sizes = [1, 32], strides = [1, 1]} : vector<64x32xf32> to vector<1x32xf32>
    %c0_275 = arith.constant 0 : index
    %c1312 = arith.constant 1312 : index
    %201 = vector.load %arg16[%c0_275, %c1312] : memref<1x2048xf32, #tpu.memory_space<vmem>>, vector<1x32xf32>
    tpu.vector_store %arg16[%c0_275, %c1312], %200 {strides = array<i32>} : memref<1x2048xf32, #tpu.memory_space<vmem>>, vector<1x32xf32>,
    %202 = vector.extract_strided_slice %117 {offsets = [42, 0], sizes = [1, 32], strides = [1, 1]} : vector<64x32xf32> to vector<1x32xf32>
    %c0_276 = arith.constant 0 : index
    %c1344 = arith.constant 1344 : index
    %203 = vector.load %arg16[%c0_276, %c1344] : memref<1x2048xf32, #tpu.memory_space<vmem>>, vector<1x32xf32>
    tpu.vector_store %arg16[%c0_276, %c1344], %202 {strides = array<i32>} : memref<1x2048xf32, #tpu.memory_space<vmem>>, vector<1x32xf32>,
    %204 = vector.extract_strided_slice %117 {offsets = [43, 0], sizes = [1, 32], strides = [1, 1]} : vector<64x32xf32> to vector<1x32xf32>
    %c0_277 = arith.constant 0 : index
    %c1376 = arith.constant 1376 : index
    %205 = vector.load %arg16[%c0_277, %c1376] : memref<1x2048xf32, #tpu.memory_space<vmem>>, vector<1x32xf32>
    tpu.vector_store %arg16[%c0_277, %c1376], %204 {strides = array<i32>} : memref<1x2048xf32, #tpu.memory_space<vmem>>, vector<1x32xf32>,
    %206 = vector.extract_strided_slice %117 {offsets = [44, 0], sizes = [1, 32], strides = [1, 1]} : vector<64x32xf32> to vector<1x32xf32>
    %c0_278 = arith.constant 0 : index
    %c1408 = arith.constant 1408 : index
    %207 = vector.load %arg16[%c0_278, %c1408] : memref<1x2048xf32, #tpu.memory_space<vmem>>, vector<1x32xf32>
    tpu.vector_store %arg16[%c0_278, %c1408], %206 {strides = array<i32>} : memref<1x2048xf32, #tpu.memory_space<vmem>>, vector<1x32xf32>,
    %208 = vector.extract_strided_slice %117 {offsets = [45, 0], sizes = [1, 32], strides = [1, 1]} : vector<64x32xf32> to vector<1x32xf32>
    %c0_279 = arith.constant 0 : index
    %c1440 = arith.constant 1440 : index
    %209 = vector.load %arg16[%c0_279, %c1440] : memref<1x2048xf32, #tpu.memory_space<vmem>>, vector<1x32xf32>
    tpu.vector_store %arg16[%c0_279, %c1440], %208 {strides = array<i32>} : memref<1x2048xf32, #tpu.memory_space<vmem>>, vector<1x32xf32>,
    %210 = vector.extract_strided_slice %117 {offsets = [46, 0], sizes = [1, 32], strides = [1, 1]} : vector<64x32xf32> to vector<1x32xf32>
    %c0_280 = arith.constant 0 : index
    %c1472 = arith.constant 1472 : index
    %211 = vector.load %arg16[%c0_280, %c1472] : memref<1x2048xf32, #tpu.memory_space<vmem>>, vector<1x32xf32>
    tpu.vector_store %arg16[%c0_280, %c1472], %210 {strides = array<i32>} : memref<1x2048xf32, #tpu.memory_space<vmem>>, vector<1x32xf32>,
    %212 = vector.extract_strided_slice %117 {offsets = [47, 0], sizes = [1, 32], strides = [1, 1]} : vector<64x32xf32> to vector<1x32xf32>
    %c0_281 = arith.constant 0 : index
    %c1504 = arith.constant 1504 : index
    %213 = vector.load %arg16[%c0_281, %c1504] : memref<1x2048xf32, #tpu.memory_space<vmem>>, vector<1x32xf32>
    tpu.vector_store %arg16[%c0_281, %c1504], %212 {strides = array<i32>} : memref<1x2048xf32, #tpu.memory_space<vmem>>, vector<1x32xf32>,
    %214 = vector.extract_strided_slice %117 {offsets = [48, 0], sizes = [1, 32], strides = [1, 1]} : vector<64x32xf32> to vector<1x32xf32>
    %c0_282 = arith.constant 0 : index
    %c1536 = arith.constant 1536 : index
    %215 = vector.load %arg16[%c0_282, %c1536] : memref<1x2048xf32, #tpu.memory_space<vmem>>, vector<1x32xf32>
    tpu.vector_store %arg16[%c0_282, %c1536], %214 {strides = array<i32>} : memref<1x2048xf32, #tpu.memory_space<vmem>>, vector<1x32xf32>,
    %216 = vector.extract_strided_slice %117 {offsets = [49, 0], sizes = [1, 32], strides = [1, 1]} : vector<64x32xf32> to vector<1x32xf32>
    %c0_283 = arith.constant 0 : index
    %c1568 = arith.constant 1568 : index
    %217 = vector.load %arg16[%c0_283, %c1568] : memref<1x2048xf32, #tpu.memory_space<vmem>>, vector<1x32xf32>
    tpu.vector_store %arg16[%c0_283, %c1568], %216 {strides = array<i32>} : memref<1x2048xf32, #tpu.memory_space<vmem>>, vector<1x32xf32>,
    %218 = vector.extract_strided_slice %117 {offsets = [50, 0], sizes = [1, 32], strides = [1, 1]} : vector<64x32xf32> to vector<1x32xf32>
    %c0_284 = arith.constant 0 : index
    %c1600 = arith.constant 1600 : index
    %219 = vector.load %arg16[%c0_284, %c1600] : memref<1x2048xf32, #tpu.memory_space<vmem>>, vector<1x32xf32>
    tpu.vector_store %arg16[%c0_284, %c1600], %218 {strides = array<i32>} : memref<1x2048xf32, #tpu.memory_space<vmem>>, vector<1x32xf32>,
    %220 = vector.extract_strided_slice %117 {offsets = [51, 0], sizes = [1, 32], strides = [1, 1]} : vector<64x32xf32> to vector<1x32xf32>
    %c0_285 = arith.constant 0 : index
    %c1632 = arith.constant 1632 : index
    %221 = vector.load %arg16[%c0_285, %c1632] : memref<1x2048xf32, #tpu.memory_space<vmem>>, vector<1x32xf32>
    tpu.vector_store %arg16[%c0_285, %c1632], %220 {strides = array<i32>} : memref<1x2048xf32, #tpu.memory_space<vmem>>, vector<1x32xf32>,
    %222 = vector.extract_strided_slice %117 {offsets = [52, 0], sizes = [1, 32], strides = [1, 1]} : vector<64x32xf32> to vector<1x32xf32>
    %c0_286 = arith.constant 0 : index
    %c1664 = arith.constant 1664 : index
    %223 = vector.load %arg16[%c0_286, %c1664] : memref<1x2048xf32, #tpu.memory_space<vmem>>, vector<1x32xf32>
    tpu.vector_store %arg16[%c0_286, %c1664], %222 {strides = array<i32>} : memref<1x2048xf32, #tpu.memory_space<vmem>>, vector<1x32xf32>,
    %224 = vector.extract_strided_slice %117 {offsets = [53, 0], sizes = [1, 32], strides = [1, 1]} : vector<64x32xf32> to vector<1x32xf32>
    %c0_287 = arith.constant 0 : index
    %c1696 = arith.constant 1696 : index
    %225 = vector.load %arg16[%c0_287, %c1696] : memref<1x2048xf32, #tpu.memory_space<vmem>>, vector<1x32xf32>
    tpu.vector_store %arg16[%c0_287, %c1696], %224 {strides = array<i32>} : memref<1x2048xf32, #tpu.memory_space<vmem>>, vector<1x32xf32>,
    %226 = vector.extract_strided_slice %117 {offsets = [54, 0], sizes = [1, 32], strides = [1, 1]} : vector<64x32xf32> to vector<1x32xf32>
    %c0_288 = arith.constant 0 : index
    %c1728 = arith.constant 1728 : index
    %227 = vector.load %arg16[%c0_288, %c1728] : memref<1x2048xf32, #tpu.memory_space<vmem>>, vector<1x32xf32>
    tpu.vector_store %arg16[%c0_288, %c1728], %226 {strides = array<i32>} : memref<1x2048xf32, #tpu.memory_space<vmem>>, vector<1x32xf32>,
    %228 = vector.extract_strided_slice %117 {offsets = [55, 0], sizes = [1, 32], strides = [1, 1]} : vector<64x32xf32> to vector<1x32xf32>
    %c0_289 = arith.constant 0 : index
    %c1760 = arith.constant 1760 : index
    %229 = vector.load %arg16[%c0_289, %c1760] : memref<1x2048xf32, #tpu.memory_space<vmem>>, vector<1x32xf32>
    tpu.vector_store %arg16[%c0_289, %c1760], %228 {strides = array<i32>} : memref<1x2048xf32, #tpu.memory_space<vmem>>, vector<1x32xf32>,
    %230 = vector.extract_strided_slice %117 {offsets = [56, 0], sizes = [1, 32], strides = [1, 1]} : vector<64x32xf32> to vector<1x32xf32>
    %c0_290 = arith.constant 0 : index
    %c1792 = arith.constant 1792 : index
    %231 = vector.load %arg16[%c0_290, %c1792] : memref<1x2048xf32, #tpu.memory_space<vmem>>, vector<1x32xf32>
    tpu.vector_store %arg16[%c0_290, %c1792], %230 {strides = array<i32>} : memref<1x2048xf32, #tpu.memory_space<vmem>>, vector<1x32xf32>,
    %232 = vector.extract_strided_slice %117 {offsets = [57, 0], sizes = [1, 32], strides = [1, 1]} : vector<64x32xf32> to vector<1x32xf32>
    %c0_291 = arith.constant 0 : index
    %c1824 = arith.constant 1824 : index
    %233 = vector.load %arg16[%c0_291, %c1824] : memref<1x2048xf32, #tpu.memory_space<vmem>>, vector<1x32xf32>
    tpu.vector_store %arg16[%c0_291, %c1824], %232 {strides = array<i32>} : memref<1x2048xf32, #tpu.memory_space<vmem>>, vector<1x32xf32>,
    %234 = vector.extract_strided_slice %117 {offsets = [58, 0], sizes = [1, 32], strides = [1, 1]} : vector<64x32xf32> to vector<1x32xf32>
    %c0_292 = arith.constant 0 : index
    %c1856 = arith.constant 1856 : index
    %235 = vector.load %arg16[%c0_292, %c1856] : memref<1x2048xf32, #tpu.memory_space<vmem>>, vector<1x32xf32>
    tpu.vector_store %arg16[%c0_292, %c1856], %234 {strides = array<i32>} : memref<1x2048xf32, #tpu.memory_space<vmem>>, vector<1x32xf32>,
    %236 = vector.extract_strided_slice %117 {offsets = [59, 0], sizes = [1, 32], strides = [1, 1]} : vector<64x32xf32> to vector<1x32xf32>
    %c0_293 = arith.constant 0 : index
    %c1888 = arith.constant 1888 : index
    %237 = vector.load %arg16[%c0_293, %c1888] : memref<1x2048xf32, #tpu.memory_space<vmem>>, vector<1x32xf32>
    tpu.vector_store %arg16[%c0_293, %c1888], %236 {strides = array<i32>} : memref<1x2048xf32, #tpu.memory_space<vmem>>, vector<1x32xf32>,
    %238 = vector.extract_strided_slice %117 {offsets = [60, 0], sizes = [1, 32], strides = [1, 1]} : vector<64x32xf32> to vector<1x32xf32>
    %c0_294 = arith.constant 0 : index
    %c1920 = arith.constant 1920 : index
    %239 = vector.load %arg16[%c0_294, %c1920] : memref<1x2048xf32, #tpu.memory_space<vmem>>, vector<1x32xf32>
    tpu.vector_store %arg16[%c0_294, %c1920], %238 {strides = array<i32>} : memref<1x2048xf32, #tpu.memory_space<vmem>>, vector<1x32xf32>,
    %240 = vector.extract_strided_slice %117 {offsets = [61, 0], sizes = [1, 32], strides = [1, 1]} : vector<64x32xf32> to vector<1x32xf32>
    %c0_295 = arith.constant 0 : index
    %c1952 = arith.constant 1952 : index
    %241 = vector.load %arg16[%c0_295, %c1952] : memref<1x2048xf32, #tpu.memory_space<vmem>>, vector<1x32xf32>
    tpu.vector_store %arg16[%c0_295, %c1952], %240 {strides = array<i32>} : memref<1x2048xf32, #tpu.memory_space<vmem>>, vector<1x32xf32>,
    %242 = vector.extract_strided_slice %117 {offsets = [62, 0], sizes = [1, 32], strides = [1, 1]} : vector<64x32xf32> to vector<1x32xf32>
    %c0_296 = arith.constant 0 : index
    %c1984 = arith.constant 1984 : index
    %243 = vector.load %arg16[%c0_296, %c1984] : memref<1x2048xf32, #tpu.memory_space<vmem>>, vector<1x32xf32>
    tpu.vector_store %arg16[%c0_296, %c1984], %242 {strides = array<i32>} : memref<1x2048xf32, #tpu.memory_space<vmem>>, vector<1x32xf32>,
    %244 = vector.extract_strided_slice %117 {offsets = [63, 0], sizes = [1, 32], strides = [1, 1]} : vector<64x32xf32> to vector<1x32xf32>
    %c0_297 = arith.constant 0 : index
    %c2016 = arith.constant 2016 : index
    %245 = vector.load %arg16[%c0_297, %c2016] : memref<1x2048xf32, #tpu.memory_space<vmem>>, vector<1x32xf32>
    tpu.vector_store %arg16[%c0_297, %c2016], %244 {strides = array<i32>} : memref<1x2048xf32, #tpu.memory_space<vmem>>, vector<1x32xf32>,
    tpu.wait_dma2 semaphore(%arg18 : memref<!tpu.dma_semaphore, #tpu.memory_space<semaphore_mem>>) src(%arg6 : memref<2048x128xbf16, #tpu.memory_space<any>>) dst(%arg17 : memref<2048x128xbf16, #tpu.memory_space<vmem>>)
    %c0_298 = arith.constant 0 : index
    %c0_299 = arith.constant 0 : index
    %246 = vector.load %arg16[%c0_298, %c0_299] : memref<1x2048xf32, #tpu.memory_space<vmem>>, vector<1x2048xf32>
    %247 = arith.truncf %246 : vector<1x2048xf32> to vector<1x2048xbf16>
    %c0_300 = arith.constant 0 : index
    %c0_301 = arith.constant 0 : index
    %248 = vector.load %arg17[%c0_300, %c0_301] : memref<2048x128xbf16, #tpu.memory_space<vmem>>, vector<2048x128xbf16>
    %cst_302 = arith.constant dense<0.000000e+00> : vector<1x128xf32>
    %249 = tpu.matmul %247, %248, %cst_302 {dimension_numbers = #tpu.dot_dimension_numbers<[1], [0], [0], [1], [0, 0, 1, 1], [], []>} : vector<1x2048xbf16>, vector<2048x128xbf16>, vector<1x128xf32> -> vector<1x128xf32>
    %c0_303 = arith.constant 0 : index
    %c0_304 = arith.constant 0 : index
    %250 = vector.load %arg7[%c0_303, %c0_304] : memref<1x128xf32, #tpu.memory_space<vmem>>, vector<1x128xf32>
    %251 = arith.addf %249, %250 : vector<1x128xf32>
    %cst_305 = arith.constant 0.000000e+00 : f32
    %252 = vector.broadcast %cst_305 : f32 to vector<1x128xf32>
    %253 = arith.maximumf %251, %252 : vector<1x128xf32>
    %254 = arith.truncf %253 : vector<1x128xf32> to vector<1x128xbf16>
    %c0_306 = arith.constant 0 : index
    %c0_307 = arith.constant 0 : index
    %255 = vector.load %arg8[%c0_306, %c0_307] : memref<128x128xbf16, #tpu.memory_space<vmem>>, vector<128x128xbf16>
    %cst_308 = arith.constant dense<0.000000e+00> : vector<1x128xf32>
    %256 = tpu.matmul %254, %255, %cst_308 {dimension_numbers = #tpu.dot_dimension_numbers<[1], [0], [0], [1], [0, 0, 1, 1], [], []>} : vector<1x128xbf16>, vector<128x128xbf16>, vector<1x128xf32> -> vector<1x128xf32>
    %c0_309 = arith.constant 0 : index
    %c0_310 = arith.constant 0 : index
    %257 = vector.load %arg9[%c0_309, %c0_310] : memref<1x128xf32, #tpu.memory_space<vmem>>, vector<1x128xf32>
    %258 = arith.addf %256, %257 : vector<1x128xf32>
    %259 = vector.shape_cast %258 : vector<1x128xf32> to vector<1x1x128xf32>
    %c0_311 = arith.constant 0 : index
    %c0_312 = arith.constant 0 : index
    %c0_313 = arith.constant 0 : index
    %260 = vector.load %arg10[%c0_311, %c0_312, %c0_313] : memref<1x1x128xf32, #tpu.memory_space<vmem>>, vector<1x1x128xf32>
    tpu.vector_store %arg10[%c0_311, %c0_312, %c0_313], %259 {strides = array<i32>} : memref<1x1x128xf32, #tpu.memory_space<vmem>>, vector<1x1x128xf32>,
    return
  }
  func.func @transform_0(%arg0: i32) -> (i32, i32, i32, i32) {
    %c0_i32 = arith.constant 0 : i32
    %c0_i32_0 = arith.constant 0 : i32
    %c0_i32_1 = arith.constant 0 : i32
    %c0_i32_2 = arith.constant 0 : i32
    return %arg0, %c0_i32, %c0_i32_0, %c0_i32_1 : i32, i32, i32, i32
  }
  func.func @transform_1(%arg0: i32) -> (i32, i32) {
    %c0_i32 = arith.constant 0 : i32
    %c0_i32_0 = arith.constant 0 : i32
    %c0_i32_1 = arith.constant 0 : i32
    return %c0_i32, %c0_i32_0 : i32, i32
  }
  func.func @transform_2(%arg0: i32) -> (i32, i32) {
    %c0_i32 = arith.constant 0 : i32
    %c0_i32_0 = arith.constant 0 : i32
    %c0_i32_1 = arith.constant 0 : i32
    return %c0_i32, %c0_i32_0 : i32, i32
  }
  func.func @transform_3(%arg0: i32) -> (i32, i32) {
    %c0_i32 = arith.constant 0 : i32
    %c0_i32_0 = arith.constant 0 : i32
    %c0_i32_1 = arith.constant 0 : i32
    return %c0_i32, %c0_i32_0 : i32, i32
  }
  func.func @transform_4(%arg0: i32) -> (i32, i32) {
    %c0_i32 = arith.constant 0 : i32
    %c0_i32_0 = arith.constant 0 : i32
    %c0_i32_1 = arith.constant 0 : i32
    return %c0_i32, %c0_i32_0 : i32, i32
  }
  func.func @transform_6(%arg0: i32) -> (i32, i32) {
    %c0_i32 = arith.constant 0 : i32
    %c0_i32_0 = arith.constant 0 : i32
    %c0_i32_1 = arith.constant 0 : i32
    return %c0_i32, %c0_i32_0 : i32, i32
  }
  func.func @transform_7(%arg0: i32) -> (i32, i32) {
    %c0_i32 = arith.constant 0 : i32
    %c0_i32_0 = arith.constant 0 : i32
    %c0_i32_1 = arith.constant 0 : i32
    return %c0_i32, %c0_i32_0 : i32, i32
  }
  func.func @transform_8(%arg0: i32) -> (i32, i32) {
    %c0_i32 = arith.constant 0 : i32
    %c0_i32_0 = arith.constant 0 : i32
    %c0_i32_1 = arith.constant 0 : i32
    return %c0_i32, %c0_i32_0 : i32, i32
  }
  func.func @transform_9(%arg0: i32) -> (i32, i32, i32) {
    %c0_i32 = arith.constant 0 : i32
    %c0_i32_0 = arith.constant 0 : i32
    %c0_i32_1 = arith.constant 0 : i32
    return %arg0, %c0_i32, %c0_i32_0 : i32, i32, i32
  }
}

</mosaic_0001>

<llo_original>
// kernel: simple_conv_model_forward.1
$region0: #{simple_conv_model_forward.1}
  #allocation0 [shape = 'u32[]', space=smem, size = 0x4, offset = 0x4, fixed_abs, tag = 'smem constant byte address 0x4 - core index']
  #allocation1 [shape = 'u32[144,128]{1,0:T(1,128)}', space=vmem, size = 0x12000, scoped, tag = 'internal scratch']
  #allocation2 [shape = 'f32[1,18,32,4]{3,2,1,0:T(8,128)}', space=vmem, size = 0x48000, scoped, tag = 'scratch operand']
  #allocation3 [shape = 'bf16[1,16,16,36]{3,2,1,0:T(8,128)(2,1)}', space=vmem, size = 0x10000, scoped, tag = 'scratch operand']
  #allocation4 [shape = 'f32[1,18,32,16]{3,2,1,0:T(8,128)}', space=vmem, size = 0x48000, scoped, tag = 'scratch operand']
  #allocation5 [shape = 'bf16[1,16,16,144]{3,2,1,0:T(8,128)(2,1)}', space=vmem, size = 0x20000, scoped, tag = 'scratch operand']
  #allocation6 [shape = 'f32[8,16,32]{2,1,0:T(8,128)}', space=vmem, size = 0x10000, scoped, tag = 'scratch operand']
  #allocation7 [shape = 'f32[1,2048]{1,0:T(1,128)}', space=vmem, size = 0x2000, scoped, tag = 'scratch operand']
  #allocation8 [shape = 'bf16[2048,128]{1,0:T(8,128)(2,1)}', space=vmem, size = 0x80000, scoped, tag = 'scratch operand']
  #allocation9 [shape = 's32[1]{0}', space=sflag, size = 0x4, scoped, tag = 'scratch operand']
  #allocation12 [shape = 's32[]', space=sflag, size = 0x4, offset = 0, fixed_abs, tag = 'sflag constant byte address 0x0 - dummy sync flag']
  #allocation13 [shape = 's32[]', space=sflag, size = 0x4, offset = 0, fixed_abs, tag = 'sflag constant byte address 0x0 - dummy sync flag']
  #allocation14 [shape = 'u32[]', space=smem, size = 0x4, offset = 0x44, fixed_abs, tag = 'smem constant byte address 0x44 - assertion arg 0']
  #allocation15 [shape = 'u32[]', space=smem, size = 0x4, offset = 0x48, fixed_abs, tag = 'smem constant byte address 0x48 - assertion arg 1']
  %s0 = inlined_call_operand.vmem [shape: f32[2,16,16,4], index: 0, kind: input, shape index: {}]
  %s1 = inlined_call_operand.vmem [shape: bf16[36,16], index: 1, kind: input, shape index: {}]
  %s2 = inlined_call_operand.vmem [shape: f32[1,16], index: 2, kind: input, shape index: {}]
  %s3 = inlined_call_operand.vmem [shape: bf16[144,32], index: 3, kind: input, shape index: {}]
  %s4 = inlined_call_operand.vmem [shape: f32[1,32], index: 4, kind: input, shape index: {}]
  %s5 = inlined_call_operand.hbm [shape: bf16[2048,128], index: 5, kind: input, shape index: {}]
  %s6 = inlined_call_operand.vmem [shape: f32[1,128], index: 6, kind: input, shape index: {}]
  %s7 = inlined_call_operand.vmem [shape: bf16[128,128], index: 7, kind: input, shape index: {}]
  %s8 = inlined_call_operand.vmem [shape: f32[1,128], index: 8, kind: input, shape index: {}]
  %s9 = inlined_call_operand.hbm [shape: f32[2,1,128], index: 9, kind: output, shape index: {}]
  %s10 = sld [smem:[#allocation0]]
  $region69: #{simple_conv_model_forward.1} parent=0
    _
  %s12 = ssub.s32 1, %s10
  %s13 = scalar_select 0, %s12, %s10
  $region1: #{simple_conv_model_forward.1} parent=0
    #allocation10 [shape = 'u8[1024]{0}', space=vmem, size = 0x400, scoped, tag = 'output window, operand 0']
    #allocation11 [shape = 's32[2]{0}', space=sflag, size = 0x8, scoped, tag = 'scoped memory for simple_conv_model_forward.1']
    %14 = vsyncpa [#allocation11], 0
    %s15 = scalar_lea.sflag [#allocation11], 1
    %16 = vsyncpa %s15, 0
    loop: start=0, step=1, limit=4
    $region2: #{simple_conv_model_forward.1} parent=1 // loop_pre_header
      _
    $region3: #{simple_conv_model_forward.1} parent=1 // loop_header
      %s18 = sphi 0, %s22
      %p19 = scmp.ge.s32.totalorder %s18, 4
      %s28 = sphi 0, %s30
      %s31 = sphi 0, %s28
      %s32 = sphi 0, %s31
      %s48 = sphi 0, %s32
      %s52 = sphi 0, %s52
      %s54 = sphi 0, %s52
      %s55 = sphi 0, %s54
      %s69 = sphi 0, %s55
      %s73 = sphi 0, %s73
      %s75 = sphi 0, %s73
      %s76 = sphi 0, %s75
      %s90 = sphi 0, %s76
      %s94 = sphi 0, %s94
      %s96 = sphi 0, %s94
      %s97 = sphi 0, %s96
      %s111 = sphi 0, %s97
      %s115 = sphi 0, %s115
      %s117 = sphi 0, %s115
      %s118 = sphi 0, %s117
      %s132 = sphi 0, %s118
      %s136 = sphi 0, %s136
      %s138 = sphi 0, %s136
      %s139 = sphi 0, %s138
      %s153 = sphi 0, %s139
      %s157 = sphi 0, %s157
      %s159 = sphi 0, %s157
      %s160 = sphi 0, %s159
      %s174 = sphi 0, %s160
      %s178 = sphi 0, %s178
      %s180 = sphi 0, %s178
      %s181 = sphi 0, %s180
      %s195 = sphi 0, %s181
      %s201 = sphi 0, %s203
      %s204 = sphi 0, %s201
      %s205 = sphi 0, %s204
      %s221 = sphi 0, %s205
    $region4: #{simple_conv_model_forward.1} parent=1 // loop_header_branch
      %21 = sbr.rel (%p19) target = $region8
    $region5: #{simple_conv_model_forward.1} parent=1 // loop_body
      %s23 = ssub.s32 %s18, 1
      %s24 = ssub.s32 %s18, 2
      %s25 = sadd.s32 %s18, 1
      %s26 = ssub.s32 %s18, %s25
      %p27 = scmp.eq.s32.totalorder %s26, 0
      %s29 = sadd.s32 %s28, 1
      %s30 = scalar_select %p27, %s28, %s29
      %p33 = pneg %p27
      %p34 = scmp.eq.s32.totalorder %s18, 1
      %p35 = por %p33, %p34
      %p36 = scmp.ne.s32.totalorder %s28, %s31
      %p37 = scmp.eq.s32.totalorder %s18, 0
      %p38 = por %p36, %p37
      %p39 = scmp.ne.s32.totalorder %s28, %s31
      %p40 = scmp.eq.s32.totalorder %s23, 1
      %p41 = por %p39, %p40
      %p42 = scmp.ne.s32.totalorder %s31, %s32
      %p43 = scmp.eq.s32.totalorder %s23, 0
      %p44 = por %p42, %p43
      %p45 = scmp.ne.s32.totalorder %s31, %s32
      %p46 = scmp.eq.s32.totalorder %s24, 1
      %p47 = por %p45, %p46
      %p49 = scmp.ne.s32.totalorder %s32, %s48
      %p50 = scmp.eq.s32.totalorder %s24, 0
      %p51 = por %p49, %p50
      %s53 = sadd.s32 %s52, 1
      %p56 = scmp.eq.s32.totalorder %s18, 1
      %p57 = scmp.ne.s32.totalorder %s52, %s54
      %p58 = scmp.eq.s32.totalorder %s18, 0
      %p59 = por %p57, %p58
      %p60 = scmp.ne.s32.totalorder %s52, %s54
      %p61 = scmp.eq.s32.totalorder %s23, 1
      %p62 = por %p60, %p61
      %p63 = scmp.ne.s32.totalorder %s54, %s55
      %p64 = scmp.eq.s32.totalorder %s23, 0
      %p65 = por %p63, %p64
      %p66 = scmp.ne.s32.totalorder %s54, %s55
      %p67 = scmp.eq.s32.totalorder %s24, 1
      %p68 = por %p66, %p67
      %p70 = scmp.ne.s32.totalorder %s55, %s69
      %p71 = scmp.eq.s32.totalorder %s24, 0
      %p72 = por %p70, %p71
      %s74 = sadd.s32 %s73, 1
      %p77 = scmp.eq.s32.totalorder %s18, 1
      %p78 = scmp.ne.s32.totalorder %s73, %s75
      %p79 = scmp.eq.s32.totalorder %s18, 0
      %p80 = por %p78, %p79
      %p81 = scmp.ne.s32.totalorder %s73, %s75
      %p82 = scmp.eq.s32.totalorder %s23, 1
      %p83 = por %p81, %p82
      %p84 = scmp.ne.s32.totalorder %s75, %s76
      %p85 = scmp.eq.s32.totalorder %s23, 0
      %p86 = por %p84, %p85
      %p87 = scmp.ne.s32.totalorder %s75, %s76
      %p88 = scmp.eq.s32.totalorder %s24, 1
      %p89 = por %p87, %p88
      %p91 = scmp.ne.s32.totalorder %s76, %s90
      %p92 = scmp.eq.s32.totalorder %s24, 0
      %p93 = por %p91, %p92
      %s95 = sadd.s32 %s94, 1
      %p98 = scmp.eq.s32.totalorder %s18, 1
      %p99 = scmp.ne.s32.totalorder %s94, %s96
      %p100 = scmp.eq.s32.totalorder %s18, 0
      %p101 = por %p99, %p100
      %p102 = scmp.ne.s32.totalorder %s94, %s96
      %p103 = scmp.eq.s32.totalorder %s23, 1
      %p104 = por %p102, %p103
      %p105 = scmp.ne.s32.totalorder %s96, %s97
      %p106 = scmp.eq.s32.totalorder %s23, 0
      %p107 = por %p105, %p106
      %p108 = scmp.ne.s32.totalorder %s96, %s97
      %p109 = scmp.eq.s32.totalorder %s24, 1
      %p110 = por %p108, %p109
      %p112 = scmp.ne.s32.totalorder %s97, %s111
      %p113 = scmp.eq.s32.totalorder %s24, 0
      %p114 = por %p112, %p113
      %s116 = sadd.s32 %s115, 1
      %p119 = scmp.eq.s32.totalorder %s18, 1
      %p120 = scmp.ne.s32.totalorder %s115, %s117
      %p121 = scmp.eq.s32.totalorder %s18, 0
      %p122 = por %p120, %p121
      %p123 = scmp.ne.s32.totalorder %s115, %s117
      %p124 = scmp.eq.s32.totalorder %s23, 1
      %p125 = por %p123, %p124
      %p126 = scmp.ne.s32.totalorder %s117, %s118
      %p127 = scmp.eq.s32.totalorder %s23, 0
      %p128 = por %p126, %p127
      %p129 = scmp.ne.s32.totalorder %s117, %s118
      %p130 = scmp.eq.s32.totalorder %s24, 1
      %p131 = por %p129, %p130
      %p133 = scmp.ne.s32.totalorder %s118, %s132
      %p134 = scmp.eq.s32.totalorder %s24, 0
      %p135 = por %p133, %p134
      %s137 = sadd.s32 %s136, 1
      %p140 = scmp.eq.s32.totalorder %s18, 1
      %p141 = scmp.ne.s32.totalorder %s136, %s138
      %p142 = scmp.eq.s32.totalorder %s18, 0
      %p143 = por %p141, %p142
      %p144 = scmp.ne.s32.totalorder %s136, %s138
      %p145 = scmp.eq.s32.totalorder %s23, 1
      %p146 = por %p144, %p145
      %p147 = scmp.ne.s32.totalorder %s138, %s139
      %p148 = scmp.eq.s32.totalorder %s23, 0
      %p149 = por %p147, %p148
      %p150 = scmp.ne.s32.totalorder %s138, %s139
      %p151 = scmp.eq.s32.totalorder %s24, 1
      %p152 = por %p150, %p151
      %p154 = scmp.ne.s32.totalorder %s139, %s153
      %p155 = scmp.eq.s32.totalorder %s24, 0
      %p156 = por %p154, %p155
      %s158 = sadd.s32 %s157, 1
      %p161 = scmp.eq.s32.totalorder %s18, 1
      %p162 = scmp.ne.s32.totalorder %s157, %s159
      %p163 = scmp.eq.s32.totalorder %s18, 0
      %p164 = por %p162, %p163
      %p165 = scmp.ne.s32.totalorder %s157, %s159
      %p166 = scmp.eq.s32.totalorder %s23, 1
      %p167 = por %p165, %p166
      %p168 = scmp.ne.s32.totalorder %s159, %s160
      %p169 = scmp.eq.s32.totalorder %s23, 0
      %p170 = por %p168, %p169
      %p171 = scmp.ne.s32.totalorder %s159, %s160
      %p172 = scmp.eq.s32.totalorder %s24, 1
      %p173 = por %p171, %p172
      %p175 = scmp.ne.s32.totalorder %s160, %s174
      %p176 = scmp.eq.s32.totalorder %s24, 0
      %p177 = por %p175, %p176
      %s179 = sadd.s32 %s178, 1
      %p182 = scmp.eq.s32.totalorder %s18, 1
      %p183 = scmp.ne.s32.totalorder %s178, %s180
      %p184 = scmp.eq.s32.totalorder %s18, 0
      %p185 = por %p183, %p184
      %p186 = scmp.ne.s32.totalorder %s178, %s180
      %p187 = scmp.eq.s32.totalorder %s23, 1
      %p188 = por %p186, %p187
      %p189 = scmp.ne.s32.totalorder %s180, %s181
      %p190 = scmp.eq.s32.totalorder %s23, 0
      %p191 = por %p189, %p190
      %p192 = scmp.ne.s32.totalorder %s180, %s181
      %p193 = scmp.eq.s32.totalorder %s24, 1
      %p194 = por %p192, %p193
      %p196 = scmp.ne.s32.totalorder %s181, %s195
      %p197 = scmp.eq.s32.totalorder %s24, 0
      %p198 = por %p196, %p197
      %s199 = ssub.s32 %s18, %s25
      %p200 = scmp.eq.s32.totalorder %s199, 0
      %s202 = sadd.s32 %s201, 1
      %s203 = scalar_select %p200, %s201, %s202
      %p206 = pneg %p200
      %p207 = scmp.eq.s32.totalorder %s18, 1
      %p208 = por %p206, %p207
      %p209 = scmp.ne.s32.totalorder %s201, %s204
      %p210 = scmp.eq.s32.totalorder %s18, 0
      %p211 = por %p209, %p210
      %p212 = scmp.ne.s32.totalorder %s201, %s204
      %p213 = scmp.eq.s32.totalorder %s23, 1
      %p214 = por %p212, %p213
      %p215 = scmp.ne.s32.totalorder %s204, %s205
      %p216 = scmp.eq.s32.totalorder %s23, 0
      %p217 = por %p215, %p216
      %p218 = scmp.ne.s32.totalorder %s204, %s205
      %p219 = scmp.eq.s32.totalorder %s24, 1
      %p220 = por %p218, %p219
      %p222 = scmp.ne.s32.totalorder %s205, %s221
      %p223 = scmp.eq.s32.totalorder %s24, 0
      %p224 = por %p222, %p223
      %p225 = scmp.le.s32.totalorder 1, %s18
      %p226 = scmp.lt.s32.totalorder %s18, 3
      %p227 = pnand %p225, %p226
      %p228 = pneg %p227
      // Predicated region
      $region9: #{simple_conv_model_forward.1} parent=5 // pred_check
        _
      $region10: #{simple_conv_model_forward.1} parent=5 // pred_check_branch
        %230 = sbr.rel (%p227) target = $region12
      $region11: #{simple_conv_model_forward.1} parent=5 // pred_region
        %s231 = ssub.s32 %s18, 1
        // Predicated region
        $region13: #{simple_conv_model_forward.1} parent=11 // pred_check
          %p232 = pneg %p65
        $region14: #{simple_conv_model_forward.1} parent=11 // pred_check_branch
          %234 = sbr.rel (%p232) target = $region16
        $region15: #{simple_conv_model_forward.1} parent=11 // pred_region
          _
        $region16: #{simple_conv_model_forward.1} parent=11 // pred_fallthru
          _
        // Predicated region
        $region17: #{simple_conv_model_forward.1} parent=11 // pred_check
          %p235 = pneg %p86
        $region18: #{simple_conv_model_forward.1} parent=11 // pred_check_branch
          %237 = sbr.rel (%p235) target = $region20
        $region19: #{simple_conv_model_forward.1} parent=11 // pred_region
          _
        $region20: #{simple_conv_model_forward.1} parent=11 // pred_fallthru
          _
        // Predicated region
        $region21: #{simple_conv_model_forward.1} parent=11 // pred_check
          %p238 = pneg %p107
        $region22: #{simple_conv_model_forward.1} parent=11 // pred_check_branch
          %240 = sbr.rel (%p238) target = $region24
        $region23: #{simple_conv_model_forward.1} parent=11 // pred_region
          _
        $region24: #{simple_conv_model_forward.1} parent=11 // pred_fallthru
          _
        // Predicated region
        $region25: #{simple_conv_model_forward.1} parent=11 // pred_check
          %p241 = pneg %p128
        $region26: #{simple_conv_model_forward.1} parent=11 // pred_check_branch
          %243 = sbr.rel (%p241) target = $region28
        $region27: #{simple_conv_model_forward.1} parent=11 // pred_region
          _
        $region28: #{simple_conv_model_forward.1} parent=11 // pred_fallthru
          _
        // Predicated region
        $region29: #{simple_conv_model_forward.1} parent=11 // pred_check
          %p244 = pneg %p149
        $region30: #{simple_conv_model_forward.1} parent=11 // pred_check_branch
          %246 = sbr.rel (%p244) target = $region32
        $region31: #{simple_conv_model_forward.1} parent=11 // pred_region
          _
        $region32: #{simple_conv_model_forward.1} parent=11 // pred_fallthru
          _
        // Predicated region
        $region33: #{simple_conv_model_forward.1} parent=11 // pred_check
          %p247 = pneg %p170
        $region34: #{simple_conv_model_forward.1} parent=11 // pred_check_branch
          %249 = sbr.rel (%p247) target = $region36
        $region35: #{simple_conv_model_forward.1} parent=11 // pred_region
          _
        $region36: #{simple_conv_model_forward.1} parent=11 // pred_fallthru
          _
        // Predicated region
        $region37: #{simple_conv_model_forward.1} parent=11 // pred_check
          %p250 = pneg %p191
        $region38: #{simple_conv_model_forward.1} parent=11 // pred_check_branch
          %252 = sbr.rel (%p250) target = $region40
        $region39: #{simple_conv_model_forward.1} parent=11 // pred_region
          _
        $region40: #{simple_conv_model_forward.1} parent=11 // pred_fallthru
          _
      $region12: #{simple_conv_model_forward.1} parent=5 // pred_fallthru
        _
      %p253 = scmp.lt.s32.totalorder %s18, 2
      // Predicated region
      $region41: #{simple_conv_model_forward.1} parent=5 // pred_check
        %p254 = pneg %p253
      $region42: #{simple_conv_model_forward.1} parent=5 // pred_check_branch
        %256 = sbr.rel (%p254) target = $region44
      $region43: #{simple_conv_model_forward.1} parent=5 // pred_region
        // Predicated region
        $region45: #{simple_conv_model_forward.1} parent=43 // pred_check
          %p257 = pneg %p38
        $region46: #{simple_conv_model_forward.1} parent=43 // pred_check_branch
          %259 = sbr.rel (%p257) target = $region48
        $region47: #{simple_conv_model_forward.1} parent=43 // pred_region
          %p260 = scmp.lt.s32.totalorder %s18, 1
          %s261 = scalar_select %p260, %s18, 1
          %s262 = smul.addr %s261, 32
          %s263 = smul.addr %s262, 8
          %s264 = scalar_lea.vmem %s0, %s263
        $region48: #{simple_conv_model_forward.1} parent=43 // pred_fallthru
          _
      $region44: #{simple_conv_model_forward.1} parent=5 // pred_fallthru
        _
      %p265 = scmp.le.s32.totalorder 1, %s18
      %p266 = scmp.lt.s32.totalorder %s18, 3
      %p267 = pnand %p265, %p266
      %p268 = pneg %p267
      // Predicated region
      $region49: #{simple_conv_model_forward.1} parent=5 // pred_check
        _
      $region50: #{simple_conv_model_forward.1} parent=5 // pred_check_branch
        %270 = sbr.rel (%p267) target = $region52
      $region51: #{simple_conv_model_forward.1} parent=5 // pred_region
        %s271 = ssub.s32 %s18, 1
        %p272 = scmp.lt.s32.totalorder %s23, 1
        %s273 = scalar_select %p272, %s23, 1
        %s274 = smul.addr %s273, 32
        %s275 = smul.addr %s274, 8
        %s276 = scalar_lea.vmem %s0, %s275
        %p277 = pneg %p44
        %p278 = pneg %p41
        %p279 = pneg %p65
        %p280 = pneg %p62
        %p281 = pneg %p86
        %p282 = pneg %p83
        %p283 = pneg %p107
        %p284 = pneg %p104
        %p285 = pneg %p128
        %p286 = pneg %p125
        %p287 = pneg %p149
        %p288 = pneg %p146
        %p289 = pneg %p170
        %p290 = pneg %p167
        %p291 = pneg %p191
        %p292 = pneg %p188
        %p293 = pneg %p217
        %p294 = pneg %p214
        %s295 = sand.u32 %s204, 1
        %s296 = scalar_lea.sflag [#allocation11], %s295
        %s297 = sand.u32 %s204, 1
        %s298 = scalar_lea.vmem [#allocation10], %s297
        %p299 = scmp.lt.s32.totalorder %s23, 1
        %s300 = scalar_select %p299, %s23, 1
        %s301 = smul.addr %s300, 32
        %s302 = smul.addr %s301, 8
        %s303 = scalar_lea.vmem %s0, %s302
        // Predicated region
        $region53: #{simple_conv_model_forward.1} parent=51 // pred_check
          _
        $region54: #{simple_conv_model_forward.1} parent=51 // pred_check_branch
          %306 = sbr.rel target = $region56
        $region55: #{simple_conv_model_forward.1} parent=51 // pred_region
          %307 = sst [smem:[#allocation14]] [#allocation13]
          %308 = sst [smem:[#allocation15]] [#allocation12]
        $region56: #{simple_conv_model_forward.1} parent=51 // pred_fallthru
          _
        %310 = shalt.err (0)
        %s312 = sshll.u32 [#allocation8], 4
        %s313 = int_to_ptr.vmem [resolvable:$true] %s312
        %315 = dma.hbm_to_vmem [thread:$0]  %s5, 16384, %s313, [#allocation9]
        %vm316 = vcmask 31744
        %317 = vst.msk [vmem:[#allocation2] sm:$0xff] %vm316, 0.0
        %318 = vst.msk [vmem:[#allocation2 + $0x8] sm:$0xff] %vm316, 0.0
        %319 = vst.msk [vmem:[#allocation2 + $0x10] sm:$0xff] %vm316, 0.0
        %320 = vst.msk [vmem:[#allocation2 + $0x18] sm:$0xff] %vm316, 0.0
        %s321 = scalar_lea.vmem [#allocation2], 544
        %322 = vst.msk [vmem:[%s321] sm:$0xff] %vm316, 0.0
        %323 = vst.msk [vmem:[%s321 + $0x8] sm:$0xff] %vm316, 0.0
        %324 = vst.msk [vmem:[%s321 + $0x10] sm:$0xff] %vm316, 0.0
        %325 = vst.msk [vmem:[%s321 + $0x18] sm:$0xff] %vm316, 0.0
        %s326 = scalar_lea.vmem [#allocation2], 32
        %vm327 = vcmask 24576
        %328 = vst.msk [vmem:[%s326 + $0x7] sm:$0x1] %vm327, 0.0
        %329 = vst.msk [vmem:[%s326 + $0x27] sm:$0x1] %vm327, 0.0
        %330 = vst.msk [vmem:[%s326 + $0x47] sm:$0x1] %vm327, 0.0
        %331 = vst.msk [vmem:[%s326 + $0x67] sm:$0x1] %vm327, 0.0
        %332 = vst.msk [vmem:[%s326 + $0x87] sm:$0x1] %vm327, 0.0
        %333 = vst.msk [vmem:[%s326 + $0xa7] sm:$0x1] %vm327, 0.0
        %334 = vst.msk [vmem:[%s326 + $0xc7] sm:$0x1] %vm327, 0.0
        %335 = vst.msk [vmem:[%s326 + $0xe7] sm:$0x1] %vm327, 0.0
        %336 = vst.msk [vmem:[%s326 + $0x107] sm:$0x1] %vm327, 0.0
        %337 = vst.msk [vmem:[%s326 + $0x127] sm:$0x1] %vm327, 0.0
        %338 = vst.msk [vmem:[%s326 + $0x147] sm:$0x1] %vm327, 0.0
        %339 = vst.msk [vmem:[%s326 + $0x167] sm:$0x1] %vm327, 0.0
        %340 = vst.msk [vmem:[%s326 + $0x187] sm:$0x1] %vm327, 0.0
        %341 = vst.msk [vmem:[%s326 + $0x1a7] sm:$0x1] %vm327, 0.0
        %342 = vst.msk [vmem:[%s326 + $0x1c7] sm:$0x1] %vm327, 0.0
        %343 = vst.msk [vmem:[%s326 + $0x1e7] sm:$0x1] %vm327, 0.0
        %344 = vst.msk [vmem:[%s326 + $0x18] sm:$0x1] %vm327, 0.0
        %345 = vst.msk [vmem:[%s326 + $0x38] sm:$0x1] %vm327, 0.0
        %346 = vst.msk [vmem:[%s326 + $0x58] sm:$0x1] %vm327, 0.0
        %347 = vst.msk [vmem:[%s326 + $0x78] sm:$0x1] %vm327, 0.0
        %348 = vst.msk [vmem:[%s326 + $0x98] sm:$0x1] %vm327, 0.0
        %349 = vst.msk [vmem:[%s326 + $0xb8] sm:$0x1] %vm327, 0.0
        %350 = vst.msk [vmem:[%s326 + $0xd8] sm:$0x1] %vm327, 0.0
        %351 = vst.msk [vmem:[%s326 + $0xf8] sm:$0x1] %vm327, 0.0
        %352 = vst.msk [vmem:[%s326 + $0x118] sm:$0x1] %vm327, 0.0
        %353 = vst.msk [vmem:[%s326 + $0x138] sm:$0x1] %vm327, 0.0
        %354 = vst.msk [vmem:[%s326 + $0x158] sm:$0x1] %vm327, 0.0
        %355 = vst.msk [vmem:[%s326 + $0x178] sm:$0x1] %vm327, 0.0
        %356 = vst.msk [vmem:[%s326 + $0x198] sm:$0x1] %vm327, 0.0
        %357 = vst.msk [vmem:[%s326 + $0x1b8] sm:$0x1] %vm327, 0.0
        %358 = vst.msk [vmem:[%s326 + $0x1d8] sm:$0x1] %vm327, 0.0
        %359 = vst.msk [vmem:[%s326 + $0x1f8] sm:$0x1] %vm327, 0.0
        %vm360 = vcmask 130048
        %361 = vst.msk [vmem:[#allocation4] sm:$0xff] %vm360, 0.0
        %362 = vst.msk [vmem:[#allocation4 + $0x8] sm:$0xff] %vm360, 0.0
        %363 = vst.msk [vmem:[#allocation4 + $0x10] sm:$0xff] %vm360, 0.0
        %364 = vst.msk [vmem:[#allocation4 + $0x18] sm:$0xff] %vm360, 0.0
        %s365 = scalar_lea.vmem [#allocation4], 544
        %366 = vst.msk [vmem:[%s365] sm:$0xff] %vm360, 0.0
        %367 = vst.msk [vmem:[%s365 + $0x8] sm:$0xff] %vm360, 0.0
        %368 = vst.msk [vmem:[%s365 + $0x10] sm:$0xff] %vm360, 0.0
        %369 = vst.msk [vmem:[%s365 + $0x18] sm:$0xff] %vm360, 0.0
        %s370 = scalar_lea.vmem [#allocation4], 32
        %vm371 = vcmask 122880
        %372 = vst.msk [vmem:[%s370 + $0x7] sm:$0x1] %vm371, 0.0
        %373 = vst.msk [vmem:[%s370 + $0x27] sm:$0x1] %vm371, 0.0
        %374 = vst.msk [vmem:[%s370 + $0x47] sm:$0x1] %vm371, 0.0
        %375 = vst.msk [vmem:[%s370 + $0x67] sm:$0x1] %vm371, 0.0
        %376 = vst.msk [vmem:[%s370 + $0x87] sm:$0x1] %vm371, 0.0
        %377 = vst.msk [vmem:[%s370 + $0xa7] sm:$0x1] %vm371, 0.0
        %378 = vst.msk [vmem:[%s370 + $0xc7] sm:$0x1] %vm371, 0.0
        %379 = vst.msk [vmem:[%s370 + $0xe7] sm:$0x1] %vm371, 0.0
        %380 = vst.msk [vmem:[%s370 + $0x107] sm:$0x1] %vm371, 0.0
        %381 = vst.msk [vmem:[%s370 + $0x127] sm:$0x1] %vm371, 0.0
        %382 = vst.msk [vmem:[%s370 + $0x147] sm:$0x1] %vm371, 0.0
        %383 = vst.msk [vmem:[%s370 + $0x167] sm:$0x1] %vm371, 0.0
        %384 = vst.msk [vmem:[%s370 + $0x187] sm:$0x1] %vm371, 0.0
        %385 = vst.msk [vmem:[%s370 + $0x1a7] sm:$0x1] %vm371, 0.0
        %386 = vst.msk [vmem:[%s370 + $0x1c7] sm:$0x1] %vm371, 0.0
        %387 = vst.msk [vmem:[%s370 + $0x1e7] sm:$0x1] %vm371, 0.0
        %388 = vst.msk [vmem:[%s370 + $0x18] sm:$0x1] %vm371, 0.0
        %389 = vst.msk [vmem:[%s370 + $0x38] sm:$0x1] %vm371, 0.0
        %390 = vst.msk [vmem:[%s370 + $0x58] sm:$0x1] %vm371, 0.0
        %391 = vst.msk [vmem:[%s370 + $0x78] sm:$0x1] %vm371, 0.0
        %392 = vst.msk [vmem:[%s370 + $0x98] sm:$0x1] %vm371, 0.0
        %393 = vst.msk [vmem:[%s370 + $0xb8] sm:$0x1] %vm371, 0.0
        %394 = vst.msk [vmem:[%s370 + $0xd8] sm:$0x1] %vm371, 0.0
        %395 = vst.msk [vmem:[%s370 + $0xf8] sm:$0x1] %vm371, 0.0
        %396 = vst.msk [vmem:[%s370 + $0x118] sm:$0x1] %vm371, 0.0
        %397 = vst.msk [vmem:[%s370 + $0x138] sm:$0x1] %vm371, 0.0
        %398 = vst.msk [vmem:[%s370 + $0x158] sm:$0x1] %vm371, 0.0
        %399 = vst.msk [vmem:[%s370 + $0x178] sm:$0x1] %vm371, 0.0
        %400 = vst.msk [vmem:[%s370 + $0x198] sm:$0x1] %vm371, 0.0
        %401 = vst.msk [vmem:[%s370 + $0x1b8] sm:$0x1] %vm371, 0.0
        %402 = vst.msk [vmem:[%s370 + $0x1d8] sm:$0x1] %vm371, 0.0
        %403 = vst.msk [vmem:[%s370 + $0x1f8] sm:$0x1] %vm371, 0.0
        %v404 = vld [vmem:[%s303] sm:$0xff]
        %v405 = vld [vmem:[%s303 + $0x8] sm:$0xff]
        %v406 = vld [vmem:[%s303 + $0x10] sm:$0xff]
        %v407 = vld [vmem:[%s303 + $0x18] sm:$0xff]
        %v408 = vld [vmem:[%s303 + $0x20] sm:$0xff]
        %v409 = vld [vmem:[%s303 + $0x28] sm:$0xff]
        %v410 = vld [vmem:[%s303 + $0x30] sm:$0xff]
        %v411 = vld [vmem:[%s303 + $0x38] sm:$0xff]
        %v412 = vld [vmem:[%s303 + $0x40] sm:$0xff]
        %v413 = vld [vmem:[%s303 + $0x48] sm:$0xff]
        %v414 = vld [vmem:[%s303 + $0x50] sm:$0xff]
        %v415 = vld [vmem:[%s303 + $0x58] sm:$0xff]
        %v416 = vld [vmem:[%s303 + $0x60] sm:$0xff]
        %v417 = vld [vmem:[%s303 + $0x68] sm:$0xff]
        %v418 = vld [vmem:[%s303 + $0x70] sm:$0xff]
        %v419 = vld [vmem:[%s303 + $0x78] sm:$0xff]
        %v420 = vld [vmem:[%s303 + $0x80] sm:$0xff]
        %v421 = vld [vmem:[%s303 + $0x88] sm:$0xff]
        %v422 = vld [vmem:[%s303 + $0x90] sm:$0xff]
        %v423 = vld [vmem:[%s303 + $0x98] sm:$0xff]
        %v424 = vld [vmem:[%s303 + $0xa0] sm:$0xff]
        %v425 = vld [vmem:[%s303 + $0xa8] sm:$0xff]
        %v426 = vld [vmem:[%s303 + $0xb0] sm:$0xff]
        %v427 = vld [vmem:[%s303 + $0xb8] sm:$0xff]
        %v428 = vld [vmem:[%s303 + $0xc0] sm:$0xff]
        %v429 = vld [vmem:[%s303 + $0xc8] sm:$0xff]
        %v430 = vld [vmem:[%s303 + $0xd0] sm:$0xff]
        %v431 = vld [vmem:[%s303 + $0xd8] sm:$0xff]
        %v432 = vld [vmem:[%s303 + $0xe0] sm:$0xff]
        %v433 = vld [vmem:[%s303 + $0xe8] sm:$0xff]
        %v434 = vld [vmem:[%s303 + $0xf0] sm:$0xff]
        %v435 = vld [vmem:[%s303 + $0xf8] sm:$0xff]
        %436 = vst.msk [vmem:[%s326 + $0x8] sm:$0xff] %vm316, %v404
        %437 = vst.msk [vmem:[%s326 + $0x10] sm:$0xff] %vm316, %v405
        %438 = vst.msk [vmem:[%s326 + $0x28] sm:$0xff] %vm316, %v406
        %439 = vst.msk [vmem:[%s326 + $0x30] sm:$0xff] %vm316, %v407
        %440 = vst.msk [vmem:[%s326 + $0x48] sm:$0xff] %vm316, %v408
        %441 = vst.msk [vmem:[%s326 + $0x50] sm:$0xff] %vm316, %v409
        %442 = vst.msk [vmem:[%s326 + $0x68] sm:$0xff] %vm316, %v410
        %443 = vst.msk [vmem:[%s326 + $0x70] sm:$0xff] %vm316, %v411
        %444 = vst.msk [vmem:[%s326 + $0x88] sm:$0xff] %vm316, %v412
        %445 = vst.msk [vmem:[%s326 + $0x90] sm:$0xff] %vm316, %v413
        %446 = vst.msk [vmem:[%s326 + $0xa8] sm:$0xff] %vm316, %v414
        %447 = vst.msk [vmem:[%s326 + $0xb0] sm:$0xff] %vm316, %v415
        %448 = vst.msk [vmem:[%s326 + $0xc8] sm:$0xff] %vm316, %v416
        %449 = vst.msk [vmem:[%s326 + $0xd0] sm:$0xff] %vm316, %v417
        %450 = vst.msk [vmem:[%s326 + $0xe8] sm:$0xff] %vm316, %v418
        %451 = vst.msk [vmem:[%s326 + $0xf0] sm:$0xff] %vm316, %v419
        %452 = vst.msk [vmem:[%s326 + $0x108] sm:$0xff] %vm316, %v420
        %453 = vst.msk [vmem:[%s326 + $0x110] sm:$0xff] %vm316, %v421
        %454 = vst.msk [vmem:[%s326 + $0x128] sm:$0xff] %vm316, %v422
        %455 = vst.msk [vmem:[%s326 + $0x130] sm:$0xff] %vm316, %v423
        %456 = vst.msk [vmem:[%s326 + $0x148] sm:$0xff] %vm316, %v424
        %457 = vst.msk [vmem:[%s326 + $0x150] sm:$0xff] %vm316, %v425
        %458 = vst.msk [vmem:[%s326 + $0x168] sm:$0xff] %vm316, %v426
        %459 = vst.msk [vmem:[%s326 + $0x170] sm:$0xff] %vm316, %v427
        %460 = vst.msk [vmem:[%s326 + $0x188] sm:$0xff] %vm316, %v428
        %461 = vst.msk [vmem:[%s326 + $0x190] sm:$0xff] %vm316, %v429
        %462 = vst.msk [vmem:[%s326 + $0x1a8] sm:$0xff] %vm316, %v430
        %463 = vst.msk [vmem:[%s326 + $0x1b0] sm:$0xff] %vm316, %v431
        %464 = vst.msk [vmem:[%s326 + $0x1c8] sm:$0xff] %vm316, %v432
        %465 = vst.msk [vmem:[%s326 + $0x1d0] sm:$0xff] %vm316, %v433
        %466 = vst.msk [vmem:[%s326 + $0x1e8] sm:$0xff] %vm316, %v434
        %467 = vst.msk [vmem:[%s326 + $0x1f0] sm:$0xff] %vm316, %v435
        %v468 = vld [vmem:[#allocation2 + $0x7] sm:$0xff]
        %v469 = vld [vmem:[#allocation2 + $0xf] sm:$0xff]
        %v470 = vld [vmem:[#allocation2 + $0x27] sm:$0xff]
        %v471 = vld [vmem:[#allocation2 + $0x2f] sm:$0xff]
        %v472 = vld [vmem:[#allocation2 + $0x47] sm:$0xff]
        %v473 = vld [vmem:[#allocation2 + $0x4f] sm:$0xff]
        %v474 = vld [vmem:[#allocation2 + $0x67] sm:$0xff]
        %v475 = vld [vmem:[#allocation2 + $0x6f] sm:$0xff]
        %v476 = vld [vmem:[#allocation2 + $0x87] sm:$0xff]
        %v477 = vld [vmem:[#allocation2 + $0x8f] sm:$0xff]
        %v478 = vld [vmem:[#allocation2 + $0xa7] sm:$0xff]
        %v479 = vld [vmem:[#allocation2 + $0xaf] sm:$0xff]
        %v480 = vld [vmem:[#allocation2 + $0xc7] sm:$0xff]
        %v481 = vld [vmem:[#allocation2 + $0xcf] sm:$0xff]
        %v482 = vld [vmem:[#allocation2 + $0xe7] sm:$0xff]
        %v483 = vld [vmem:[#allocation2 + $0xef] sm:$0xff]
        %v484 = vld [vmem:[#allocation2 + $0x107] sm:$0xff]
        %v485 = vld [vmem:[#allocation2 + $0x10f] sm:$0xff]
        %v486 = vld [vmem:[#allocation2 + $0x127] sm:$0xff]
        %v487 = vld [vmem:[#allocation2 + $0x12f] sm:$0xff]
        %v488 = vld [vmem:[#allocation2 + $0x147] sm:$0xff]
        %v489 = vld [vmem:[#allocation2 + $0x14f] sm:$0xff]
        %v490 = vld [vmem:[#allocation2 + $0x167] sm:$0xff]
        %v491 = vld [vmem:[#allocation2 + $0x16f] sm:$0xff]
        %v492 = vld [vmem:[#allocation2 + $0x187] sm:$0xff]
        %v493 = vld [vmem:[#allocation2 + $0x18f] sm:$0xff]
        %v494 = vld [vmem:[#allocation2 + $0x1a7] sm:$0xff]
        %v495 = vld [vmem:[#allocation2 + $0x1af] sm:$0xff]
        %v496 = vld [vmem:[#allocation2 + $0x1c7] sm:$0xff]
        %v497 = vld [vmem:[#allocation2 + $0x1cf] sm:$0xff]
        %v498 = vld [vmem:[#allocation2 + $0x1e7] sm:$0xff]
        %v499 = vld [vmem:[#allocation2 + $0x1ef] sm:$0xff]
        %v500 = vpack.c.bf16 %v469, %v468
        %v501 = vpack.c.bf16 %v471, %v470
        %v502 = vpack.c.bf16 %v473, %v472
        %v503 = vpack.c.bf16 %v475, %v474
        %v504 = vpack.c.bf16 %v477, %v476
        %v505 = vpack.c.bf16 %v479, %v478
        %v506 = vpack.c.bf16 %v481, %v480
        %v507 = vpack.c.bf16 %v483, %v482
        %v508 = vpack.c.bf16 %v485, %v484
        %v509 = vpack.c.bf16 %v487, %v486
        %v510 = vpack.c.bf16 %v489, %v488
        %v511 = vpack.c.bf16 %v491, %v490
        %v512 = vpack.c.bf16 %v493, %v492
        %v513 = vpack.c.bf16 %v495, %v494
        %v514 = vpack.c.bf16 %v497, %v496
        %v515 = vpack.c.bf16 %v499, %v498
        %v532 = vunpack.c.l.b16 %v500
        %v533 = vunpack.c.h.b16 %v500
        %v534 = vunpack.c.l.b16 %v501
        %v535 = vunpack.c.h.b16 %v501
        %v536 = vunpack.c.l.b16 %v502
        %v537 = vunpack.c.h.b16 %v502
        %v538 = vunpack.c.l.b16 %v503
        %v539 = vunpack.c.h.b16 %v503
        %v540 = vunpack.c.l.b16 %v504
        %v541 = vunpack.c.h.b16 %v504
        %v542 = vunpack.c.l.b16 %v505
        %v543 = vunpack.c.h.b16 %v505
        %v544 = vunpack.c.l.b16 %v506
        %v545 = vunpack.c.h.b16 %v506
        %v546 = vunpack.c.l.b16 %v507
        %v547 = vunpack.c.h.b16 %v507
        %v548 = vunpack.c.l.b16 %v508
        %v549 = vunpack.c.h.b16 %v508
        %v550 = vunpack.c.l.b16 %v509
        %v551 = vunpack.c.h.b16 %v509
        %v552 = vunpack.c.l.b16 %v510
        %v553 = vunpack.c.h.b16 %v510
        %v554 = vunpack.c.l.b16 %v511
        %v555 = vunpack.c.h.b16 %v511
        %v556 = vunpack.c.l.b16 %v512
        %v557 = vunpack.c.h.b16 %v512
        %v558 = vunpack.c.l.b16 %v513
        %v559 = vunpack.c.h.b16 %v513
        %v560 = vunpack.c.l.b16 %v514
        %v561 = vunpack.c.h.b16 %v514
        %v562 = vunpack.c.l.b16 %v515
        %v563 = vunpack.c.h.b16 %v515
        %v564 = vpack.c.b16 %v532, %v532
        %v565 = vpack.c.b16 %v533, %v533
        %v566 = vpack.c.b16 %v534, %v534
        %v567 = vpack.c.b16 %v535, %v535
        %v568 = vpack.c.b16 %v536, %v536
        %v569 = vpack.c.b16 %v537, %v537
        %v570 = vpack.c.b16 %v538, %v538
        %v571 = vpack.c.b16 %v539, %v539
        %v572 = vpack.c.b16 %v540, %v540
        %v573 = vpack.c.b16 %v541, %v541
        %v574 = vpack.c.b16 %v542, %v542
        %v575 = vpack.c.b16 %v543, %v543
        %v576 = vpack.c.b16 %v544, %v544
        %v577 = vpack.c.b16 %v545, %v545
        %v578 = vpack.c.b16 %v546, %v546
        %v579 = vpack.c.b16 %v547, %v547
        %v580 = vpack.c.b16 %v548, %v548
        %v581 = vpack.c.b16 %v549, %v549
        %v582 = vpack.c.b16 %v550, %v550
        %v583 = vpack.c.b16 %v551, %v551
        %v584 = vpack.c.b16 %v552, %v552
        %v585 = vpack.c.b16 %v553, %v553
        %v586 = vpack.c.b16 %v554, %v554
        %v587 = vpack.c.b16 %v555, %v555
        %v588 = vpack.c.b16 %v556, %v556
        %v589 = vpack.c.b16 %v557, %v557
        %v590 = vpack.c.b16 %v558, %v558
        %v591 = vpack.c.b16 %v559, %v559
        %v592 = vpack.c.b16 %v560, %v560
        %v593 = vpack.c.b16 %v561, %v561
        %v594 = vpack.c.b16 %v562, %v562
        %v595 = vpack.c.b16 %v563, %v563
        %vm628 = vcmask 27648
        %629 = vst.msk [vmem:[#allocation3] sm:$0xf] %vm628, %v564
        %630 = vst.msk [vmem:[#allocation3 + $0x4] sm:$0xf] %vm628, %v565
        %631 = vst.msk [vmem:[#allocation3 + $0x8] sm:$0xf] %vm628, %v566
        %632 = vst.msk [vmem:[#allocation3 + $0xc] sm:$0xf] %vm628, %v567
        %633 = vst.msk [vmem:[#allocation3 + $0x10] sm:$0xf] %vm628, %v568
        %634 = vst.msk [vmem:[#allocation3 + $0x14] sm:$0xf] %vm628, %v569
        %635 = vst.msk [vmem:[#allocation3 + $0x18] sm:$0xf] %vm628, %v570
        %636 = vst.msk [vmem:[#allocation3 + $0x1c] sm:$0xf] %vm628, %v571
        %637 = vst.msk [vmem:[#allocation3 + $0x20] sm:$0xf] %vm628, %v572
        %638 = vst.msk [vmem:[#allocation3 + $0x24] sm:$0xf] %vm628, %v573
        %639 = vst.msk [vmem:[#allocation3 + $0x28] sm:$0xf] %vm628, %v574
        %640 = vst.msk [vmem:[#allocation3 + $0x2c] sm:$0xf] %vm628, %v575
        %641 = vst.msk [vmem:[#allocation3 + $0x30] sm:$0xf] %vm628, %v576
        %642 = vst.msk [vmem:[#allocation3 + $0x34] sm:$0xf] %vm628, %v577
        %643 = vst.msk [vmem:[#allocation3 + $0x38] sm:$0xf] %vm628, %v578
        %644 = vst.msk [vmem:[#allocation3 + $0x3c] sm:$0xf] %vm628, %v579
        %645 = vst.msk [vmem:[#allocation3 + $0x40] sm:$0xf] %vm628, %v580
        %646 = vst.msk [vmem:[#allocation3 + $0x44] sm:$0xf] %vm628, %v581
        %647 = vst.msk [vmem:[#allocation3 + $0x48] sm:$0xf] %vm628, %v582
        %648 = vst.msk [vmem:[#allocation3 + $0x4c] sm:$0xf] %vm628, %v583
        %649 = vst.msk [vmem:[#allocation3 + $0x50] sm:$0xf] %vm628, %v584
        %650 = vst.msk [vmem:[#allocation3 + $0x54] sm:$0xf] %vm628, %v585
        %651 = vst.msk [vmem:[#allocation3 + $0x58] sm:$0xf] %vm628, %v586
        %652 = vst.msk [vmem:[#allocation3 + $0x5c] sm:$0xf] %vm628, %v587
        %653 = vst.msk [vmem:[#allocation3 + $0x60] sm:$0xf] %vm628, %v588
        %654 = vst.msk [vmem:[#allocation3 + $0x64] sm:$0xf] %vm628, %v589
        %655 = vst.msk [vmem:[#allocation3 + $0x68] sm:$0xf] %vm628, %v590
        %656 = vst.msk [vmem:[#allocation3 + $0x6c] sm:$0xf] %vm628, %v591
        %657 = vst.msk [vmem:[#allocation3 + $0x70] sm:$0xf] %vm628, %v592
        %658 = vst.msk [vmem:[#allocation3 + $0x74] sm:$0xf] %vm628, %v593
        %659 = vst.msk [vmem:[#allocation3 + $0x78] sm:$0xf] %vm628, %v594
        %660 = vst.msk [vmem:[#allocation3 + $0x7c] sm:$0xf] %vm628, %v595
        %v661 = vld [vmem:[#allocation2 + $0x8] sm:$0xff]
        %v662 = vld [vmem:[#allocation2 + $0x10] sm:$0xff]
        %v663 = vld [vmem:[#allocation2 + $0x28] sm:$0xff]
        %v664 = vld [vmem:[#allocation2 + $0x30] sm:$0xff]
        %v665 = vld [vmem:[#allocation2 + $0x48] sm:$0xff]
        %v666 = vld [vmem:[#allocation2 + $0x50] sm:$0xff]
        %v667 = vld [vmem:[#allocation2 + $0x68] sm:$0xff]
        %v668 = vld [vmem:[#allocation2 + $0x70] sm:$0xff]
        %v669 = vld [vmem:[#allocation2 + $0x88] sm:$0xff]
        %v670 = vld [vmem:[#allocation2 + $0x90] sm:$0xff]
        %v671 = vld [vmem:[#allocation2 + $0xa8] sm:$0xff]
        %v672 = vld [vmem:[#allocation2 + $0xb0] sm:$0xff]
        %v673 = vld [vmem:[#allocation2 + $0xc8] sm:$0xff]
        %v674 = vld [vmem:[#allocation2 + $0xd0] sm:$0xff]
        %v675 = vld [vmem:[#allocation2 + $0xe8] sm:$0xff]
        %v676 = vld [vmem:[#allocation2 + $0xf0] sm:$0xff]
        %v677 = vld [vmem:[#allocation2 + $0x108] sm:$0xff]
        %v678 = vld [vmem:[#allocation2 + $0x110] sm:$0xff]
        %v679 = vld [vmem:[#allocation2 + $0x128] sm:$0xff]
        %v680 = vld [vmem:[#allocation2 + $0x130] sm:$0xff]
        %v681 = vld [vmem:[#allocation2 + $0x148] sm:$0xff]
        %v682 = vld [vmem:[#allocation2 + $0x150] sm:$0xff]
        %v683 = vld [vmem:[#allocation2 + $0x168] sm:$0xff]
        %v684 = vld [vmem:[#allocation2 + $0x170] sm:$0xff]
        %v685 = vld [vmem:[#allocation2 + $0x188] sm:$0xff]
        %v686 = vld [vmem:[#allocation2 + $0x190] sm:$0xff]
        %v687 = vld [vmem:[#allocation2 + $0x1a8] sm:$0xff]
        %v688 = vld [vmem:[#allocation2 + $0x1b0] sm:$0xff]
        %v689 = vld [vmem:[#allocation2 + $0x1c8] sm:$0xff]
        %v690 = vld [vmem:[#allocation2 + $0x1d0] sm:$0xff]
        %v691 = vld [vmem:[#allocation2 + $0x1e8] sm:$0xff]
        %v692 = vld [vmem:[#allocation2 + $0x1f0] sm:$0xff]
        %v693 = vpack.c.bf16 %v662, %v661
        %v694 = vpack.c.bf16 %v664, %v663
        %v695 = vpack.c.bf16 %v666, %v665
        %v696 = vpack.c.bf16 %v668, %v667
        %v697 = vpack.c.bf16 %v670, %v669
        %v698 = vpack.c.bf16 %v672, %v671
        %v699 = vpack.c.bf16 %v674, %v673
        %v700 = vpack.c.bf16 %v676, %v675
        %v701 = vpack.c.bf16 %v678, %v677
        %v702 = vpack.c.bf16 %v680, %v679
        %v703 = vpack.c.bf16 %v682, %v681
        %v704 = vpack.c.bf16 %v684, %v683
        %v705 = vpack.c.bf16 %v686, %v685
        %v706 = vpack.c.bf16 %v688, %v687
        %v707 = vpack.c.bf16 %v690, %v689
        %v708 = vpack.c.bf16 %v692, %v691
        %v725 = vunpack.c.l.b16 %v693
        %v726 = vunpack.c.h.b16 %v693
        %v727 = vunpack.c.l.b16 %v694
        %v728 = vunpack.c.h.b16 %v694
        %v729 = vunpack.c.l.b16 %v695
        %v730 = vunpack.c.h.b16 %v695
        %v731 = vunpack.c.l.b16 %v696
        %v732 = vunpack.c.h.b16 %v696
        %v733 = vunpack.c.l.b16 %v697
        %v734 = vunpack.c.h.b16 %v697
        %v735 = vunpack.c.l.b16 %v698
        %v736 = vunpack.c.h.b16 %v698
        %v737 = vunpack.c.l.b16 %v699
        %v738 = vunpack.c.h.b16 %v699
        %v739 = vunpack.c.l.b16 %v700
        %v740 = vunpack.c.h.b16 %v700
        %v741 = vunpack.c.l.b16 %v701
        %v742 = vunpack.c.h.b16 %v701
        %v743 = vunpack.c.l.b16 %v702
        %v744 = vunpack.c.h.b16 %v702
        %v745 = vunpack.c.l.b16 %v703
        %v746 = vunpack.c.h.b16 %v703
        %v747 = vunpack.c.l.b16 %v704
        %v748 = vunpack.c.h.b16 %v704
        %v749 = vunpack.c.l.b16 %v705
        %v750 = vunpack.c.h.b16 %v705
        %v751 = vunpack.c.l.b16 %v706
        %v752 = vunpack.c.h.b16 %v706
        %v753 = vunpack.c.l.b16 %v707
        %v754 = vunpack.c.h.b16 %v707
        %v755 = vunpack.c.l.b16 %v708
        %v756 = vunpack.c.h.b16 %v708
        %v757 = vpack.c.b16 %v725, %v725
        %v758 = vpack.c.b16 %v726, %v726
        %v759 = vpack.c.b16 %v727, %v727
        %v760 = vpack.c.b16 %v728, %v728
        %v761 = vpack.c.b16 %v729, %v729
        %v762 = vpack.c.b16 %v730, %v730
        %v763 = vpack.c.b16 %v731, %v731
        %v764 = vpack.c.b16 %v732, %v732
        %v765 = vpack.c.b16 %v733, %v733
        %v766 = vpack.c.b16 %v734, %v734
        %v767 = vpack.c.b16 %v735, %v735
        %v768 = vpack.c.b16 %v736, %v736
        %v769 = vpack.c.b16 %v737, %v737
        %v770 = vpack.c.b16 %v738, %v738
        %v771 = vpack.c.b16 %v739, %v739
        %v772 = vpack.c.b16 %v740, %v740
        %v773 = vpack.c.b16 %v741, %v741
        %v774 = vpack.c.b16 %v742, %v742
        %v775 = vpack.c.b16 %v743, %v743
        %v776 = vpack.c.b16 %v744, %v744
        %v777 = vpack.c.b16 %v745, %v745
        %v778 = vpack.c.b16 %v746, %v746
        %v779 = vpack.c.b16 %v747, %v747
        %v780 = vpack.c.b16 %v748, %v748
        %v781 = vpack.c.b16 %v749, %v749
        %v782 = vpack.c.b16 %v750, %v750
        %v783 = vpack.c.b16 %v751, %v751
        %v784 = vpack.c.b16 %v752, %v752
        %v785 = vpack.c.b16 %v753, %v753
        %v786 = vpack.c.b16 %v754, %v754
        %v787 = vpack.c.b16 %v755, %v755
        %v788 = vpack.c.b16 %v756, %v756
        %789 = vrot.lane.b32.xlu0 %v757, 4
        %v790 = vpop.permute.xlu0 %789
        %791 = vrot.lane.b32.xlu0 %v758, 4
        %v792 = vpop.permute.xlu0 %791
        %793 = vrot.lane.b32.xlu0 %v759, 4
        %v794 = vpop.permute.xlu0 %793
        %795 = vrot.lane.b32.xlu0 %v760, 4
        %v796 = vpop.permute.xlu0 %795
        %797 = vrot.lane.b32.xlu0 %v761, 4
        %v798 = vpop.permute.xlu0 %797
        %799 = vrot.lane.b32.xlu0 %v762, 4
        %v800 = vpop.permute.xlu0 %799
        %801 = vrot.lane.b32.xlu0 %v763, 4
        %v802 = vpop.permute.xlu0 %801
        %803 = vrot.lane.b32.xlu0 %v764, 4
        %v804 = vpop.permute.xlu0 %803
        %805 = vrot.lane.b32.xlu0 %v765, 4
        %v806 = vpop.permute.xlu0 %805
        %807 = vrot.lane.b32.xlu0 %v766, 4
        %v808 = vpop.permute.xlu0 %807
        %809 = vrot.lane.b32.xlu0 %v767, 4
        %v810 = vpop.permute.xlu0 %809
        %811 = vrot.lane.b32.xlu0 %v768, 4
        %v812 = vpop.permute.xlu0 %811
        %813 = vrot.lane.b32.xlu0 %v769, 4
        %v814 = vpop.permute.xlu0 %813
        %815 = vrot.lane.b32.xlu0 %v770, 4
        %v816 = vpop.permute.xlu0 %815
        %817 = vrot.lane.b32.xlu0 %v771, 4
        %v818 = vpop.permute.xlu0 %817
        %819 = vrot.lane.b32.xlu0 %v772, 4
        %v820 = vpop.permute.xlu0 %819
        %821 = vrot.lane.b32.xlu0 %v773, 4
        %v822 = vpop.permute.xlu0 %821
        %823 = vrot.lane.b32.xlu0 %v774, 4
        %v824 = vpop.permute.xlu0 %823
        %825 = vrot.lane.b32.xlu0 %v775, 4
        %v826 = vpop.permute.xlu0 %825
        %827 = vrot.lane.b32.xlu0 %v776, 4
        %v828 = vpop.permute.xlu0 %827
        %829 = vrot.lane.b32.xlu0 %v777, 4
        %v830 = vpop.permute.xlu0 %829
        %831 = vrot.lane.b32.xlu0 %v778, 4
        %v832 = vpop.permute.xlu0 %831
        %833 = vrot.lane.b32.xlu0 %v779, 4
        %v834 = vpop.permute.xlu0 %833
        %835 = vrot.lane.b32.xlu0 %v780, 4
        %v836 = vpop.permute.xlu0 %835
        %837 = vrot.lane.b32.xlu0 %v781, 4
        %v838 = vpop.permute.xlu0 %837
        %839 = vrot.lane.b32.xlu0 %v782, 4
        %v840 = vpop.permute.xlu0 %839
        %841 = vrot.lane.b32.xlu0 %v783, 4
        %v842 = vpop.permute.xlu0 %841
        %843 = vrot.lane.b32.xlu0 %v784, 4
        %v844 = vpop.permute.xlu0 %843
        %845 = vrot.lane.b32.xlu0 %v785, 4
        %v846 = vpop.permute.xlu0 %845
        %847 = vrot.lane.b32.xlu0 %v786, 4
        %v848 = vpop.permute.xlu0 %847
        %849 = vrot.lane.b32.xlu0 %v787, 4
        %v850 = vpop.permute.xlu0 %849
        %851 = vrot.lane.b32.xlu0 %v788, 4
        %v852 = vpop.permute.xlu0 %851
        %vm885 = vcmask 60448
        %886 = vst.msk [vmem:[#allocation3] sm:$0xf] %vm885, %v790
        %887 = vst.msk [vmem:[#allocation3 + $0x4] sm:$0xf] %vm885, %v792
        %888 = vst.msk [vmem:[#allocation3 + $0x8] sm:$0xf] %vm885, %v794
        %889 = vst.msk [vmem:[#allocation3 + $0xc] sm:$0xf] %vm885, %v796
        %890 = vst.msk [vmem:[#allocation3 + $0x10] sm:$0xf] %vm885, %v798
        %891 = vst.msk [vmem:[#allocation3 + $0x14] sm:$0xf] %vm885, %v800
        %892 = vst.msk [vmem:[#allocation3 + $0x18] sm:$0xf] %vm885, %v802
        %893 = vst.msk [vmem:[#allocation3 + $0x1c] sm:$0xf] %vm885, %v804
        %894 = vst.msk [vmem:[#allocation3 + $0x20] sm:$0xf] %vm885, %v806
        %895 = vst.msk [vmem:[#allocation3 + $0x24] sm:$0xf] %vm885, %v808
        %896 = vst.msk [vmem:[#allocation3 + $0x28] sm:$0xf] %vm885, %v810
        %897 = vst.msk [vmem:[#allocation3 + $0x2c] sm:$0xf] %vm885, %v812
        %898 = vst.msk [vmem:[#allocation3 + $0x30] sm:$0xf] %vm885, %v814
        %899 = vst.msk [vmem:[#allocation3 + $0x34] sm:$0xf] %vm885, %v816
        %900 = vst.msk [vmem:[#allocation3 + $0x38] sm:$0xf] %vm885, %v818
        %901 = vst.msk [vmem:[#allocation3 + $0x3c] sm:$0xf] %vm885, %v820
        %902 = vst.msk [vmem:[#allocation3 + $0x40] sm:$0xf] %vm885, %v822
        %903 = vst.msk [vmem:[#allocation3 + $0x44] sm:$0xf] %vm885, %v824
        %904 = vst.msk [vmem:[#allocation3 + $0x48] sm:$0xf] %vm885, %v826
        %905 = vst.msk [vmem:[#allocation3 + $0x4c] sm:$0xf] %vm885, %v828
        %906 = vst.msk [vmem:[#allocation3 + $0x50] sm:$0xf] %vm885, %v830
        %907 = vst.msk [vmem:[#allocation3 + $0x54] sm:$0xf] %vm885, %v832
        %908 = vst.msk [vmem:[#allocation3 + $0x58] sm:$0xf] %vm885, %v834
        %909 = vst.msk [vmem:[#allocation3 + $0x5c] sm:$0xf] %vm885, %v836
        %910 = vst.msk [vmem:[#allocation3 + $0x60] sm:$0xf] %vm885, %v838
        %911 = vst.msk [vmem:[#allocation3 + $0x64] sm:$0xf] %vm885, %v840
        %912 = vst.msk [vmem:[#allocation3 + $0x68] sm:$0xf] %vm885, %v842
        %913 = vst.msk [vmem:[#allocation3 + $0x6c] sm:$0xf] %vm885, %v844
        %914 = vst.msk [vmem:[#allocation3 + $0x70] sm:$0xf] %vm885, %v846
        %915 = vst.msk [vmem:[#allocation3 + $0x74] sm:$0xf] %vm885, %v848
        %916 = vst.msk [vmem:[#allocation3 + $0x78] sm:$0xf] %vm885, %v850
        %917 = vst.msk [vmem:[#allocation3 + $0x7c] sm:$0xf] %vm885, %v852
        %v918 = vld [vmem:[#allocation2 + $0x9] sm:$0xff]
        %v919 = vld [vmem:[#allocation2 + $0x11] sm:$0xff]
        %v920 = vld [vmem:[#allocation2 + $0x29] sm:$0xff]
        %v921 = vld [vmem:[#allocation2 + $0x31] sm:$0xff]
        %v922 = vld [vmem:[#allocation2 + $0x49] sm:$0xff]
        %v923 = vld [vmem:[#allocation2 + $0x51] sm:$0xff]
        %v924 = vld [vmem:[#allocation2 + $0x69] sm:$0xff]
        %v925 = vld [vmem:[#allocation2 + $0x71] sm:$0xff]
        %v926 = vld [vmem:[#allocation2 + $0x89] sm:$0xff]
        %v927 = vld [vmem:[#allocation2 + $0x91] sm:$0xff]
        %v928 = vld [vmem:[#allocation2 + $0xa9] sm:$0xff]
        %v929 = vld [vmem:[#allocation2 + $0xb1] sm:$0xff]
        %v930 = vld [vmem:[#allocation2 + $0xc9] sm:$0xff]
        %v931 = vld [vmem:[#allocation2 + $0xd1] sm:$0xff]
        %v932 = vld [vmem:[#allocation2 + $0xe9] sm:$0xff]
        %v933 = vld [vmem:[#allocation2 + $0xf1] sm:$0xff]
        %v934 = vld [vmem:[#allocation2 + $0x109] sm:$0xff]
        %v935 = vld [vmem:[#allocation2 + $0x111] sm:$0xff]
        %v936 = vld [vmem:[#allocation2 + $0x129] sm:$0xff]
        %v937 = vld [vmem:[#allocation2 + $0x131] sm:$0xff]
        %v938 = vld [vmem:[#allocation2 + $0x149] sm:$0xff]
        %v939 = vld [vmem:[#allocation2 + $0x151] sm:$0xff]
        %v940 = vld [vmem:[#allocation2 + $0x169] sm:$0xff]
        %v941 = vld [vmem:[#allocation2 + $0x171] sm:$0xff]
        %v942 = vld [vmem:[#allocation2 + $0x189] sm:$0xff]
        %v943 = vld [vmem:[#allocation2 + $0x191] sm:$0xff]
        %v944 = vld [vmem:[#allocation2 + $0x1a9] sm:$0xff]
        %v945 = vld [vmem:[#allocation2 + $0x1b1] sm:$0xff]
        %v946 = vld [vmem:[#allocation2 + $0x1c9] sm:$0xff]
        %v947 = vld [vmem:[#allocation2 + $0x1d1] sm:$0xff]
        %v948 = vld [vmem:[#allocation2 + $0x1e9] sm:$0xff]
        %v949 = vld [vmem:[#allocation2 + $0x1f1] sm:$0xff]
        %v950 = vpack.c.bf16 %v919, %v918
        %v951 = vpack.c.bf16 %v921, %v920
        %v952 = vpack.c.bf16 %v923, %v922
        %v953 = vpack.c.bf16 %v925, %v924
        %v954 = vpack.c.bf16 %v927, %v926
        %v955 = vpack.c.bf16 %v929, %v928
        %v956 = vpack.c.bf16 %v931, %v930
        %v957 = vpack.c.bf16 %v933, %v932
        %v958 = vpack.c.bf16 %v935, %v934
        %v959 = vpack.c.bf16 %v937, %v936
        %v960 = vpack.c.bf16 %v939, %v938
        %v961 = vpack.c.bf16 %v941, %v940
        %v962 = vpack.c.bf16 %v943, %v942
        %v963 = vpack.c.bf16 %v945, %v944
        %v964 = vpack.c.bf16 %v947, %v946
        %v965 = vpack.c.bf16 %v949, %v948
        %v982 = vunpack.c.l.b16 %v950
        %v983 = vunpack.c.h.b16 %v950
        %v984 = vunpack.c.l.b16 %v951
        %v985 = vunpack.c.h.b16 %v951
        %v986 = vunpack.c.l.b16 %v952
        %v987 = vunpack.c.h.b16 %v952
        %v988 = vunpack.c.l.b16 %v953
        %v989 = vunpack.c.h.b16 %v953
        %v990 = vunpack.c.l.b16 %v954
        %v991 = vunpack.c.h.b16 %v954
        %v992 = vunpack.c.l.b16 %v955
        %v993 = vunpack.c.h.b16 %v955
        %v994 = vunpack.c.l.b16 %v956
        %v995 = vunpack.c.h.b16 %v956
        %v996 = vunpack.c.l.b16 %v957
        %v997 = vunpack.c.h.b16 %v957
        %v998 = vunpack.c.l.b16 %v958
        %v999 = vunpack.c.h.b16 %v958
        %v1000 = vunpack.c.l.b16 %v959
        %v1001 = vunpack.c.h.b16 %v959
        %v1002 = vunpack.c.l.b16 %v960
        %v1003 = vunpack.c.h.b16 %v960
        %v1004 = vunpack.c.l.b16 %v961
        %v1005 = vunpack.c.h.b16 %v961
        %v1006 = vunpack.c.l.b16 %v962
        %v1007 = vunpack.c.h.b16 %v962
        %v1008 = vunpack.c.l.b16 %v963
        %v1009 = vunpack.c.h.b16 %v963
        %v1010 = vunpack.c.l.b16 %v964
        %v1011 = vunpack.c.h.b16 %v964
        %v1012 = vunpack.c.l.b16 %v965
        %v1013 = vunpack.c.h.b16 %v965
        %v1014 = vpack.c.b16 %v982, %v982
        %v1015 = vpack.c.b16 %v983, %v983
        %v1016 = vpack.c.b16 %v984, %v984
        %v1017 = vpack.c.b16 %v985, %v985
        %v1018 = vpack.c.b16 %v986, %v986
        %v1019 = vpack.c.b16 %v987, %v987
        %v1020 = vpack.c.b16 %v988, %v988
        %v1021 = vpack.c.b16 %v989, %v989
        %v1022 = vpack.c.b16 %v990, %v990
        %v1023 = vpack.c.b16 %v991, %v991
        %v1024 = vpack.c.b16 %v992, %v992
        %v1025 = vpack.c.b16 %v993, %v993
        %v1026 = vpack.c.b16 %v994, %v994
        %v1027 = vpack.c.b16 %v995, %v995
        %v1028 = vpack.c.b16 %v996, %v996
        %v1029 = vpack.c.b16 %v997, %v997
        %v1030 = vpack.c.b16 %v998, %v998
        %v1031 = vpack.c.b16 %v999, %v999
        %v1032 = vpack.c.b16 %v1000, %v1000
        %v1033 = vpack.c.b16 %v1001, %v1001
        %v1034 = vpack.c.b16 %v1002, %v1002
        %v1035 = vpack.c.b16 %v1003, %v1003
        %v1036 = vpack.c.b16 %v1004, %v1004
        %v1037 = vpack.c.b16 %v1005, %v1005
        %v1038 = vpack.c.b16 %v1006, %v1006
        %v1039 = vpack.c.b16 %v1007, %v1007
        %v1040 = vpack.c.b16 %v1008, %v1008
        %v1041 = vpack.c.b16 %v1009, %v1009
        %v1042 = vpack.c.b16 %v1010, %v1010
        %v1043 = vpack.c.b16 %v1011, %v1011
        %v1044 = vpack.c.b16 %v1012, %v1012
        %v1045 = vpack.c.b16 %v1013, %v1013
        %1046 = vrot.lane.b32.xlu0 %v1014, 8
        %v1047 = vpop.permute.xlu0 %1046
        %1048 = vrot.lane.b32.xlu0 %v1015, 8
        %v1049 = vpop.permute.xlu0 %1048
        %1050 = vrot.lane.b32.xlu0 %v1016, 8
        %v1051 = vpop.permute.xlu0 %1050
        %1052 = vrot.lane.b32.xlu0 %v1017, 8
        %v1053 = vpop.permute.xlu0 %1052
        %1054 = vrot.lane.b32.xlu0 %v1018, 8
        %v1055 = vpop.permute.xlu0 %1054
        %1056 = vrot.lane.b32.xlu0 %v1019, 8
        %v1057 = vpop.permute.xlu0 %1056
        %1058 = vrot.lane.b32.xlu0 %v1020, 8
        %v1059 = vpop.permute.xlu0 %1058
        %1060 = vrot.lane.b32.xlu0 %v1021, 8
        %v1061 = vpop.permute.xlu0 %1060
        %1062 = vrot.lane.b32.xlu0 %v1022, 8
        %v1063 = vpop.permute.xlu0 %1062
        %1064 = vrot.lane.b32.xlu0 %v1023, 8
        %v1065 = vpop.permute.xlu0 %1064
        %1066 = vrot.lane.b32.xlu0 %v1024, 8
        %v1067 = vpop.permute.xlu0 %1066
        %1068 = vrot.lane.b32.xlu0 %v1025, 8
        %v1069 = vpop.permute.xlu0 %1068
        %1070 = vrot.lane.b32.xlu0 %v1026, 8
        %v1071 = vpop.permute.xlu0 %1070
        %1072 = vrot.lane.b32.xlu0 %v1027, 8
        %v1073 = vpop.permute.xlu0 %1072
        %1074 = vrot.lane.b32.xlu0 %v1028, 8
        %v1075 = vpop.permute.xlu0 %1074
        %1076 = vrot.lane.b32.xlu0 %v1029, 8
        %v1077 = vpop.permute.xlu0 %1076
        %1078 = vrot.lane.b32.xlu0 %v1030, 8
        %v1079 = vpop.permute.xlu0 %1078
        %1080 = vrot.lane.b32.xlu0 %v1031, 8
        %v1081 = vpop.permute.xlu0 %1080
        %1082 = vrot.lane.b32.xlu0 %v1032, 8
        %v1083 = vpop.permute.xlu0 %1082
        %1084 = vrot.lane.b32.xlu0 %v1033, 8
        %v1085 = vpop.permute.xlu0 %1084
        %1086 = vrot.lane.b32.xlu0 %v1034, 8
        %v1087 = vpop.permute.xlu0 %1086
        %1088 = vrot.lane.b32.xlu0 %v1035, 8
        %v1089 = vpop.permute.xlu0 %1088
        %1090 = vrot.lane.b32.xlu0 %v1036, 8
        %v1091 = vpop.permute.xlu0 %1090
        %1092 = vrot.lane.b32.xlu0 %v1037, 8
        %v1093 = vpop.permute.xlu0 %1092
        %1094 = vrot.lane.b32.xlu0 %v1038, 8
        %v1095 = vpop.permute.xlu0 %1094
        %1096 = vrot.lane.b32.xlu0 %v1039, 8
        %v1097 = vpop.permute.xlu0 %1096
        %1098 = vrot.lane.b32.xlu0 %v1040, 8
        %v1099 = vpop.permute.xlu0 %1098
        %1100 = vrot.lane.b32.xlu0 %v1041, 8
        %v1101 = vpop.permute.xlu0 %1100
        %1102 = vrot.lane.b32.xlu0 %v1042, 8
        %v1103 = vpop.permute.xlu0 %1102
        %1104 = vrot.lane.b32.xlu0 %v1043, 8
        %v1105 = vpop.permute.xlu0 %1104
        %1106 = vrot.lane.b32.xlu0 %v1044, 8
        %v1107 = vpop.permute.xlu0 %1106
        %1108 = vrot.lane.b32.xlu0 %v1045, 8
        %v1109 = vpop.permute.xlu0 %1108
        %vm1142 = vcmask 93248
        %1143 = vst.msk [vmem:[#allocation3] sm:$0xf] %vm1142, %v1047
        %1144 = vst.msk [vmem:[#allocation3 + $0x4] sm:$0xf] %vm1142, %v1049
        %1145 = vst.msk [vmem:[#allocation3 + $0x8] sm:$0xf] %vm1142, %v1051
        %1146 = vst.msk [vmem:[#allocation3 + $0xc] sm:$0xf] %vm1142, %v1053
        %1147 = vst.msk [vmem:[#allocation3 + $0x10] sm:$0xf] %vm1142, %v1055
        %1148 = vst.msk [vmem:[#allocation3 + $0x14] sm:$0xf] %vm1142, %v1057
        %1149 = vst.msk [vmem:[#allocation3 + $0x18] sm:$0xf] %vm1142, %v1059
        %1150 = vst.msk [vmem:[#allocation3 + $0x1c] sm:$0xf] %vm1142, %v1061
        %1151 = vst.msk [vmem:[#allocation3 + $0x20] sm:$0xf] %vm1142, %v1063
        %1152 = vst.msk [vmem:[#allocation3 + $0x24] sm:$0xf] %vm1142, %v1065
        %1153 = vst.msk [vmem:[#allocation3 + $0x28] sm:$0xf] %vm1142, %v1067
        %1154 = vst.msk [vmem:[#allocation3 + $0x2c] sm:$0xf] %vm1142, %v1069
        %1155 = vst.msk [vmem:[#allocation3 + $0x30] sm:$0xf] %vm1142, %v1071
        %1156 = vst.msk [vmem:[#allocation3 + $0x34] sm:$0xf] %vm1142, %v1073
        %1157 = vst.msk [vmem:[#allocation3 + $0x38] sm:$0xf] %vm1142, %v1075
        %1158 = vst.msk [vmem:[#allocation3 + $0x3c] sm:$0xf] %vm1142, %v1077
        %1159 = vst.msk [vmem:[#allocation3 + $0x40] sm:$0xf] %vm1142, %v1079
        %1160 = vst.msk [vmem:[#allocation3 + $0x44] sm:$0xf] %vm1142, %v1081
        %1161 = vst.msk [vmem:[#allocation3 + $0x48] sm:$0xf] %vm1142, %v1083
        %1162 = vst.msk [vmem:[#allocation3 + $0x4c] sm:$0xf] %vm1142, %v1085
        %1163 = vst.msk [vmem:[#allocation3 + $0x50] sm:$0xf] %vm1142, %v1087
        %1164 = vst.msk [vmem:[#allocation3 + $0x54] sm:$0xf] %vm1142, %v1089
        %1165 = vst.msk [vmem:[#allocation3 + $0x58] sm:$0xf] %vm1142, %v1091
        %1166 = vst.msk [vmem:[#allocation3 + $0x5c] sm:$0xf] %vm1142, %v1093
        %1167 = vst.msk [vmem:[#allocation3 + $0x60] sm:$0xf] %vm1142, %v1095
        %1168 = vst.msk [vmem:[#allocation3 + $0x64] sm:$0xf] %vm1142, %v1097
        %1169 = vst.msk [vmem:[#allocation3 + $0x68] sm:$0xf] %vm1142, %v1099
        %1170 = vst.msk [vmem:[#allocation3 + $0x6c] sm:$0xf] %vm1142, %v1101
        %1171 = vst.msk [vmem:[#allocation3 + $0x70] sm:$0xf] %vm1142, %v1103
        %1172 = vst.msk [vmem:[#allocation3 + $0x74] sm:$0xf] %vm1142, %v1105
        %1173 = vst.msk [vmem:[#allocation3 + $0x78] sm:$0xf] %vm1142, %v1107
        %1174 = vst.msk [vmem:[#allocation3 + $0x7c] sm:$0xf] %vm1142, %v1109
        %v1175 = vld [vmem:[%s326 + $0x7] sm:$0xff]
        %v1176 = vld [vmem:[%s326 + $0xf] sm:$0xff]
        %v1177 = vld [vmem:[%s326 + $0x27] sm:$0xff]
        %v1178 = vld [vmem:[%s326 + $0x2f] sm:$0xff]
        %v1179 = vld [vmem:[%s326 + $0x47] sm:$0xff]
        %v1180 = vld [vmem:[%s326 + $0x4f] sm:$0xff]
        %v1181 = vld [vmem:[%s326 + $0x67] sm:$0xff]
        %v1182 = vld [vmem:[%s326 + $0x6f] sm:$0xff]
        %v1183 = vld [vmem:[%s326 + $0x87] sm:$0xff]
        %v1184 = vld [vmem:[%s326 + $0x8f] sm:$0xff]
        %v1185 = vld [vmem:[%s326 + $0xa7] sm:$0xff]
        %v1186 = vld [vmem:[%s326 + $0xaf] sm:$0xff]
        %v1187 = vld [vmem:[%s326 + $0xc7] sm:$0xff]
        %v1188 = vld [vmem:[%s326 + $0xcf] sm:$0xff]
        %v1189 = vld [vmem:[%s326 + $0xe7] sm:$0xff]
        %v1190 = vld [vmem:[%s326 + $0xef] sm:$0xff]
        %v1191 = vld [vmem:[%s326 + $0x107] sm:$0xff]
        %v1192 = vld [vmem:[%s326 + $0x10f] sm:$0xff]
        %v1193 = vld [vmem:[%s326 + $0x127] sm:$0xff]
        %v1194 = vld [vmem:[%s326 + $0x12f] sm:$0xff]
        %v1195 = vld [vmem:[%s326 + $0x147] sm:$0xff]
        %v1196 = vld [vmem:[%s326 + $0x14f] sm:$0xff]
        %v1197 = vld [vmem:[%s326 + $0x167] sm:$0xff]
        %v1198 = vld [vmem:[%s326 + $0x16f] sm:$0xff]
        %v1199 = vld [vmem:[%s326 + $0x187] sm:$0xff]
        %v1200 = vld [vmem:[%s326 + $0x18f] sm:$0xff]
        %v1201 = vld [vmem:[%s326 + $0x1a7] sm:$0xff]
        %v1202 = vld [vmem:[%s326 + $0x1af] sm:$0xff]
        %v1203 = vld [vmem:[%s326 + $0x1c7] sm:$0xff]
        %v1204 = vld [vmem:[%s326 + $0x1cf] sm:$0xff]
        %v1205 = vld [vmem:[%s326 + $0x1e7] sm:$0xff]
        %v1206 = vld [vmem:[%s326 + $0x1ef] sm:$0xff]
        %v1207 = vpack.c.bf16 %v1176, %v1175
        %v1208 = vpack.c.bf16 %v1178, %v1177
        %v1209 = vpack.c.bf16 %v1180, %v1179
        %v1210 = vpack.c.bf16 %v1182, %v1181
        %v1211 = vpack.c.bf16 %v1184, %v1183
        %v1212 = vpack.c.bf16 %v1186, %v1185
        %v1213 = vpack.c.bf16 %v1188, %v1187
        %v1214 = vpack.c.bf16 %v1190, %v1189
        %v1215 = vpack.c.bf16 %v1192, %v1191
        %v1216 = vpack.c.bf16 %v1194, %v1193
        %v1217 = vpack.c.bf16 %v1196, %v1195
        %v1218 = vpack.c.bf16 %v1198, %v1197
        %v1219 = vpack.c.bf16 %v1200, %v1199
        %v1220 = vpack.c.bf16 %v1202, %v1201
        %v1221 = vpack.c.bf16 %v1204, %v1203
        %v1222 = vpack.c.bf16 %v1206, %v1205
        %v1239 = vunpack.c.l.b16 %v1207
        %v1240 = vunpack.c.h.b16 %v1207
        %v1241 = vunpack.c.l.b16 %v1208
        %v1242 = vunpack.c.h.b16 %v1208
        %v1243 = vunpack.c.l.b16 %v1209
        %v1244 = vunpack.c.h.b16 %v1209
        %v1245 = vunpack.c.l.b16 %v1210
        %v1246 = vunpack.c.h.b16 %v1210
        %v1247 = vunpack.c.l.b16 %v1211
        %v1248 = vunpack.c.h.b16 %v1211
        %v1249 = vunpack.c.l.b16 %v1212
        %v1250 = vunpack.c.h.b16 %v1212
        %v1251 = vunpack.c.l.b16 %v1213
        %v1252 = vunpack.c.h.b16 %v1213
        %v1253 = vunpack.c.l.b16 %v1214
        %v1254 = vunpack.c.h.b16 %v1214
        %v1255 = vunpack.c.l.b16 %v1215
        %v1256 = vunpack.c.h.b16 %v1215
        %v1257 = vunpack.c.l.b16 %v1216
        %v1258 = vunpack.c.h.b16 %v1216
        %v1259 = vunpack.c.l.b16 %v1217
        %v1260 = vunpack.c.h.b16 %v1217
        %v1261 = vunpack.c.l.b16 %v1218
        %v1262 = vunpack.c.h.b16 %v1218
        %v1263 = vunpack.c.l.b16 %v1219
        %v1264 = vunpack.c.h.b16 %v1219
        %v1265 = vunpack.c.l.b16 %v1220
        %v1266 = vunpack.c.h.b16 %v1220
        %v1267 = vunpack.c.l.b16 %v1221
        %v1268 = vunpack.c.h.b16 %v1221
        %v1269 = vunpack.c.l.b16 %v1222
        %v1270 = vunpack.c.h.b16 %v1222
        %v1271 = vpack.c.b16 %v1239, %v1239
        %v1272 = vpack.c.b16 %v1240, %v1240
        %v1273 = vpack.c.b16 %v1241, %v1241
        %v1274 = vpack.c.b16 %v1242, %v1242
        %v1275 = vpack.c.b16 %v1243, %v1243
        %v1276 = vpack.c.b16 %v1244, %v1244
        %v1277 = vpack.c.b16 %v1245, %v1245
        %v1278 = vpack.c.b16 %v1246, %v1246
        %v1279 = vpack.c.b16 %v1247, %v1247
        %v1280 = vpack.c.b16 %v1248, %v1248
        %v1281 = vpack.c.b16 %v1249, %v1249
        %v1282 = vpack.c.b16 %v1250, %v1250
        %v1283 = vpack.c.b16 %v1251, %v1251
        %v1284 = vpack.c.b16 %v1252, %v1252
        %v1285 = vpack.c.b16 %v1253, %v1253
        %v1286 = vpack.c.b16 %v1254, %v1254
        %v1287 = vpack.c.b16 %v1255, %v1255
        %v1288 = vpack.c.b16 %v1256, %v1256
        %v1289 = vpack.c.b16 %v1257, %v1257
        %v1290 = vpack.c.b16 %v1258, %v1258
        %v1291 = vpack.c.b16 %v1259, %v1259
        %v1292 = vpack.c.b16 %v1260, %v1260
        %v1293 = vpack.c.b16 %v1261, %v1261
        %v1294 = vpack.c.b16 %v1262, %v1262
        %v1295 = vpack.c.b16 %v1263, %v1263
        %v1296 = vpack.c.b16 %v1264, %v1264
        %v1297 = vpack.c.b16 %v1265, %v1265
        %v1298 = vpack.c.b16 %v1266, %v1266
        %v1299 = vpack.c.b16 %v1267, %v1267
        %v1300 = vpack.c.b16 %v1268, %v1268
        %v1301 = vpack.c.b16 %v1269, %v1269
        %v1302 = vpack.c.b16 %v1270, %v1270
        %1303 = vrot.lane.b32.xlu0 %v1271, 12
        %v1304 = vpop.permute.xlu0 %1303
        %1305 = vrot.lane.b32.xlu0 %v1272, 12
        %v1306 = vpop.permute.xlu0 %1305
        %1307 = vrot.lane.b32.xlu0 %v1273, 12
        %v1308 = vpop.permute.xlu0 %1307
        %1309 = vrot.lane.b32.xlu0 %v1274, 12
        %v1310 = vpop.permute.xlu0 %1309
        %1311 = vrot.lane.b32.xlu0 %v1275, 12
        %v1312 = vpop.permute.xlu0 %1311
        %1313 = vrot.lane.b32.xlu0 %v1276, 12
        %v1314 = vpop.permute.xlu0 %1313
        %1315 = vrot.lane.b32.xlu0 %v1277, 12
        %v1316 = vpop.permute.xlu0 %1315
        %1317 = vrot.lane.b32.xlu0 %v1278, 12
        %v1318 = vpop.permute.xlu0 %1317
        %1319 = vrot.lane.b32.xlu0 %v1279, 12
        %v1320 = vpop.permute.xlu0 %1319
        %1321 = vrot.lane.b32.xlu0 %v1280, 12
        %v1322 = vpop.permute.xlu0 %1321
        %1323 = vrot.lane.b32.xlu0 %v1281, 12
        %v1324 = vpop.permute.xlu0 %1323
        %1325 = vrot.lane.b32.xlu0 %v1282, 12
        %v1326 = vpop.permute.xlu0 %1325
        %1327 = vrot.lane.b32.xlu0 %v1283, 12
        %v1328 = vpop.permute.xlu0 %1327
        %1329 = vrot.lane.b32.xlu0 %v1284, 12
        %v1330 = vpop.permute.xlu0 %1329
        %1331 = vrot.lane.b32.xlu0 %v1285, 12
        %v1332 = vpop.permute.xlu0 %1331
        %1333 = vrot.lane.b32.xlu0 %v1286, 12
        %v1334 = vpop.permute.xlu0 %1333
        %1335 = vrot.lane.b32.xlu0 %v1287, 12
        %v1336 = vpop.permute.xlu0 %1335
        %1337 = vrot.lane.b32.xlu0 %v1288, 12
        %v1338 = vpop.permute.xlu0 %1337
        %1339 = vrot.lane.b32.xlu0 %v1289, 12
        %v1340 = vpop.permute.xlu0 %1339
        %1341 = vrot.lane.b32.xlu0 %v1290, 12
        %v1342 = vpop.permute.xlu0 %1341
        %1343 = vrot.lane.b32.xlu0 %v1291, 12
        %v1344 = vpop.permute.xlu0 %1343
        %1345 = vrot.lane.b32.xlu0 %v1292, 12
        %v1346 = vpop.permute.xlu0 %1345
        %1347 = vrot.lane.b32.xlu0 %v1293, 12
        %v1348 = vpop.permute.xlu0 %1347
        %1349 = vrot.lane.b32.xlu0 %v1294, 12
        %v1350 = vpop.permute.xlu0 %1349
        %1351 = vrot.lane.b32.xlu0 %v1295, 12
        %v1352 = vpop.permute.xlu0 %1351
        %1353 = vrot.lane.b32.xlu0 %v1296, 12
        %v1354 = vpop.permute.xlu0 %1353
        %1355 = vrot.lane.b32.xlu0 %v1297, 12
        %v1356 = vpop.permute.xlu0 %1355
        %1357 = vrot.lane.b32.xlu0 %v1298, 12
        %v1358 = vpop.permute.xlu0 %1357
        %1359 = vrot.lane.b32.xlu0 %v1299, 12
        %v1360 = vpop.permute.xlu0 %1359
        %1361 = vrot.lane.b32.xlu0 %v1300, 12
        %v1362 = vpop.permute.xlu0 %1361
        %1363 = vrot.lane.b32.xlu0 %v1301, 12
        %v1364 = vpop.permute.xlu0 %1363
        %1365 = vrot.lane.b32.xlu0 %v1302, 12
        %v1366 = vpop.permute.xlu0 %1365
        %vm1399 = vcmask 126048
        %1400 = vst.msk [vmem:[#allocation3] sm:$0xf] %vm1399, %v1304
        %1401 = vst.msk [vmem:[#allocation3 + $0x4] sm:$0xf] %vm1399, %v1306
        %1402 = vst.msk [vmem:[#allocation3 + $0x8] sm:$0xf] %vm1399, %v1308
        %1403 = vst.msk [vmem:[#allocation3 + $0xc] sm:$0xf] %vm1399, %v1310
        %1404 = vst.msk [vmem:[#allocation3 + $0x10] sm:$0xf] %vm1399, %v1312
        %1405 = vst.msk [vmem:[#allocation3 + $0x14] sm:$0xf] %vm1399, %v1314
        %1406 = vst.msk [vmem:[#allocation3 + $0x18] sm:$0xf] %vm1399, %v1316
        %1407 = vst.msk [vmem:[#allocation3 + $0x1c] sm:$0xf] %vm1399, %v1318
        %1408 = vst.msk [vmem:[#allocation3 + $0x20] sm:$0xf] %vm1399, %v1320
        %1409 = vst.msk [vmem:[#allocation3 + $0x24] sm:$0xf] %vm1399, %v1322
        %1410 = vst.msk [vmem:[#allocation3 + $0x28] sm:$0xf] %vm1399, %v1324
        %1411 = vst.msk [vmem:[#allocation3 + $0x2c] sm:$0xf] %vm1399, %v1326
        %1412 = vst.msk [vmem:[#allocation3 + $0x30] sm:$0xf] %vm1399, %v1328
        %1413 = vst.msk [vmem:[#allocation3 + $0x34] sm:$0xf] %vm1399, %v1330
        %1414 = vst.msk [vmem:[#allocation3 + $0x38] sm:$0xf] %vm1399, %v1332
        %1415 = vst.msk [vmem:[#allocation3 + $0x3c] sm:$0xf] %vm1399, %v1334
        %1416 = vst.msk [vmem:[#allocation3 + $0x40] sm:$0xf] %vm1399, %v1336
        %1417 = vst.msk [vmem:[#allocation3 + $0x44] sm:$0xf] %vm1399, %v1338
        %1418 = vst.msk [vmem:[#allocation3 + $0x48] sm:$0xf] %vm1399, %v1340
        %1419 = vst.msk [vmem:[#allocation3 + $0x4c] sm:$0xf] %vm1399, %v1342
        %1420 = vst.msk [vmem:[#allocation3 + $0x50] sm:$0xf] %vm1399, %v1344
        %1421 = vst.msk [vmem:[#allocation3 + $0x54] sm:$0xf] %vm1399, %v1346
        %1422 = vst.msk [vmem:[#allocation3 + $0x58] sm:$0xf] %vm1399, %v1348
        %1423 = vst.msk [vmem:[#allocation3 + $0x5c] sm:$0xf] %vm1399, %v1350
        %1424 = vst.msk [vmem:[#allocation3 + $0x60] sm:$0xf] %vm1399, %v1352
        %1425 = vst.msk [vmem:[#allocation3 + $0x64] sm:$0xf] %vm1399, %v1354
        %1426 = vst.msk [vmem:[#allocation3 + $0x68] sm:$0xf] %vm1399, %v1356
        %1427 = vst.msk [vmem:[#allocation3 + $0x6c] sm:$0xf] %vm1399, %v1358
        %1428 = vst.msk [vmem:[#allocation3 + $0x70] sm:$0xf] %vm1399, %v1360
        %1429 = vst.msk [vmem:[#allocation3 + $0x74] sm:$0xf] %vm1399, %v1362
        %1430 = vst.msk [vmem:[#allocation3 + $0x78] sm:$0xf] %vm1399, %v1364
        %1431 = vst.msk [vmem:[#allocation3 + $0x7c] sm:$0xf] %vm1399, %v1366
        %v1432 = vld [vmem:[%s326 + $0x8] sm:$0xff]
        %v1433 = vld [vmem:[%s326 + $0x10] sm:$0xff]
        %v1434 = vld [vmem:[%s326 + $0x28] sm:$0xff]
        %v1435 = vld [vmem:[%s326 + $0x30] sm:$0xff]
        %v1436 = vld [vmem:[%s326 + $0x48] sm:$0xff]
        %v1437 = vld [vmem:[%s326 + $0x50] sm:$0xff]
        %v1438 = vld [vmem:[%s326 + $0x68] sm:$0xff]
        %v1439 = vld [vmem:[%s326 + $0x70] sm:$0xff]
        %v1440 = vld [vmem:[%s326 + $0x88] sm:$0xff]
        %v1441 = vld [vmem:[%s326 + $0x90] sm:$0xff]
        %v1442 = vld [vmem:[%s326 + $0xa8] sm:$0xff]
        %v1443 = vld [vmem:[%s326 + $0xb0] sm:$0xff]
        %v1444 = vld [vmem:[%s326 + $0xc8] sm:$0xff]
        %v1445 = vld [vmem:[%s326 + $0xd0] sm:$0xff]
        %v1446 = vld [vmem:[%s326 + $0xe8] sm:$0xff]
        %v1447 = vld [vmem:[%s326 + $0xf0] sm:$0xff]
        %v1448 = vld [vmem:[%s326 + $0x108] sm:$0xff]
        %v1449 = vld [vmem:[%s326 + $0x110] sm:$0xff]
        %v1450 = vld [vmem:[%s326 + $0x128] sm:$0xff]
        %v1451 = vld [vmem:[%s326 + $0x130] sm:$0xff]
        %v1452 = vld [vmem:[%s326 + $0x148] sm:$0xff]
        %v1453 = vld [vmem:[%s326 + $0x150] sm:$0xff]
        %v1454 = vld [vmem:[%s326 + $0x168] sm:$0xff]
        %v1455 = vld [vmem:[%s326 + $0x170] sm:$0xff]
        %v1456 = vld [vmem:[%s326 + $0x188] sm:$0xff]
        %v1457 = vld [vmem:[%s326 + $0x190] sm:$0xff]
        %v1458 = vld [vmem:[%s326 + $0x1a8] sm:$0xff]
        %v1459 = vld [vmem:[%s326 + $0x1b0] sm:$0xff]
        %v1460 = vld [vmem:[%s326 + $0x1c8] sm:$0xff]
        %v1461 = vld [vmem:[%s326 + $0x1d0] sm:$0xff]
        %v1462 = vld [vmem:[%s326 + $0x1e8] sm:$0xff]
        %v1463 = vld [vmem:[%s326 + $0x1f0] sm:$0xff]
        %v1464 = vpack.c.bf16 %v1433, %v1432
        %v1465 = vpack.c.bf16 %v1435, %v1434
        %v1466 = vpack.c.bf16 %v1437, %v1436
        %v1467 = vpack.c.bf16 %v1439, %v1438
        %v1468 = vpack.c.bf16 %v1441, %v1440
        %v1469 = vpack.c.bf16 %v1443, %v1442
        %v1470 = vpack.c.bf16 %v1445, %v1444
        %v1471 = vpack.c.bf16 %v1447, %v1446
        %v1472 = vpack.c.bf16 %v1449, %v1448
        %v1473 = vpack.c.bf16 %v1451, %v1450
        %v1474 = vpack.c.bf16 %v1453, %v1452
        %v1475 = vpack.c.bf16 %v1455, %v1454
        %v1476 = vpack.c.bf16 %v1457, %v1456
        %v1477 = vpack.c.bf16 %v1459, %v1458
        %v1478 = vpack.c.bf16 %v1461, %v1460
        %v1479 = vpack.c.bf16 %v1463, %v1462
        %v1496 = vunpack.c.l.b16 %v1464
        %v1497 = vunpack.c.h.b16 %v1464
        %v1498 = vunpack.c.l.b16 %v1465
        %v1499 = vunpack.c.h.b16 %v1465
        %v1500 = vunpack.c.l.b16 %v1466
        %v1501 = vunpack.c.h.b16 %v1466
        %v1502 = vunpack.c.l.b16 %v1467
        %v1503 = vunpack.c.h.b16 %v1467
        %v1504 = vunpack.c.l.b16 %v1468
        %v1505 = vunpack.c.h.b16 %v1468
        %v1506 = vunpack.c.l.b16 %v1469
        %v1507 = vunpack.c.h.b16 %v1469
        %v1508 = vunpack.c.l.b16 %v1470
        %v1509 = vunpack.c.h.b16 %v1470
        %v1510 = vunpack.c.l.b16 %v1471
        %v1511 = vunpack.c.h.b16 %v1471
        %v1512 = vunpack.c.l.b16 %v1472
        %v1513 = vunpack.c.h.b16 %v1472
        %v1514 = vunpack.c.l.b16 %v1473
        %v1515 = vunpack.c.h.b16 %v1473
        %v1516 = vunpack.c.l.b16 %v1474
        %v1517 = vunpack.c.h.b16 %v1474
        %v1518 = vunpack.c.l.b16 %v1475
        %v1519 = vunpack.c.h.b16 %v1475
        %v1520 = vunpack.c.l.b16 %v1476
        %v1521 = vunpack.c.h.b16 %v1476
        %v1522 = vunpack.c.l.b16 %v1477
        %v1523 = vunpack.c.h.b16 %v1477
        %v1524 = vunpack.c.l.b16 %v1478
        %v1525 = vunpack.c.h.b16 %v1478
        %v1526 = vunpack.c.l.b16 %v1479
        %v1527 = vunpack.c.h.b16 %v1479
        %v1528 = vpack.c.b16 %v1496, %v1496
        %v1529 = vpack.c.b16 %v1497, %v1497
        %v1530 = vpack.c.b16 %v1498, %v1498
        %v1531 = vpack.c.b16 %v1499, %v1499
        %v1532 = vpack.c.b16 %v1500, %v1500
        %v1533 = vpack.c.b16 %v1501, %v1501
        %v1534 = vpack.c.b16 %v1502, %v1502
        %v1535 = vpack.c.b16 %v1503, %v1503
        %v1536 = vpack.c.b16 %v1504, %v1504
        %v1537 = vpack.c.b16 %v1505, %v1505
        %v1538 = vpack.c.b16 %v1506, %v1506
        %v1539 = vpack.c.b16 %v1507, %v1507
        %v1540 = vpack.c.b16 %v1508, %v1508
        %v1541 = vpack.c.b16 %v1509, %v1509
        %v1542 = vpack.c.b16 %v1510, %v1510
        %v1543 = vpack.c.b16 %v1511, %v1511
        %v1544 = vpack.c.b16 %v1512, %v1512
        %v1545 = vpack.c.b16 %v1513, %v1513
        %v1546 = vpack.c.b16 %v1514, %v1514
        %v1547 = vpack.c.b16 %v1515, %v1515
        %v1548 = vpack.c.b16 %v1516, %v1516
        %v1549 = vpack.c.b16 %v1517, %v1517
        %v1550 = vpack.c.b16 %v1518, %v1518
        %v1551 = vpack.c.b16 %v1519, %v1519
        %v1552 = vpack.c.b16 %v1520, %v1520
        %v1553 = vpack.c.b16 %v1521, %v1521
        %v1554 = vpack.c.b16 %v1522, %v1522
        %v1555 = vpack.c.b16 %v1523, %v1523
        %v1556 = vpack.c.b16 %v1524, %v1524
        %v1557 = vpack.c.b16 %v1525, %v1525
        %v1558 = vpack.c.b16 %v1526, %v1526
        %v1559 = vpack.c.b16 %v1527, %v1527
        %1560 = vrot.lane.b32.xlu0 %v1528, 16
        %v1561 = vpop.permute.xlu0 %1560
        %1562 = vrot.lane.b32.xlu0 %v1529, 16
        %v1563 = vpop.permute.xlu0 %1562
        %1564 = vrot.lane.b32.xlu0 %v1530, 16
        %v1565 = vpop.permute.xlu0 %1564
        %1566 = vrot.lane.b32.xlu0 %v1531, 16
        %v1567 = vpop.permute.xlu0 %1566
        %1568 = vrot.lane.b32.xlu0 %v1532, 16
        %v1569 = vpop.permute.xlu0 %1568
        %1570 = vrot.lane.b32.xlu0 %v1533, 16
        %v1571 = vpop.permute.xlu0 %1570
        %1572 = vrot.lane.b32.xlu0 %v1534, 16
        %v1573 = vpop.permute.xlu0 %1572
        %1574 = vrot.lane.b32.xlu0 %v1535, 16
        %v1575 = vpop.permute.xlu0 %1574
        %1576 = vrot.lane.b32.xlu0 %v1536, 16
        %v1577 = vpop.permute.xlu0 %1576
        %1578 = vrot.lane.b32.xlu0 %v1537, 16
        %v1579 = vpop.permute.xlu0 %1578
        %1580 = vrot.lane.b32.xlu0 %v1538, 16
        %v1581 = vpop.permute.xlu0 %1580
        %1582 = vrot.lane.b32.xlu0 %v1539, 16
        %v1583 = vpop.permute.xlu0 %1582
        %1584 = vrot.lane.b32.xlu0 %v1540, 16
        %v1585 = vpop.permute.xlu0 %1584
        %1586 = vrot.lane.b32.xlu0 %v1541, 16
        %v1587 = vpop.permute.xlu0 %1586
        %1588 = vrot.lane.b32.xlu0 %v1542, 16
        %v1589 = vpop.permute.xlu0 %1588
        %1590 = vrot.lane.b32.xlu0 %v1543, 16
        %v1591 = vpop.permute.xlu0 %1590
        %1592 = vrot.lane.b32.xlu0 %v1544, 16
        %v1593 = vpop.permute.xlu0 %1592
        %1594 = vrot.lane.b32.xlu0 %v1545, 16
        %v1595 = vpop.permute.xlu0 %1594
        %1596 = vrot.lane.b32.xlu0 %v1546, 16
        %v1597 = vpop.permute.xlu0 %1596
        %1598 = vrot.lane.b32.xlu0 %v1547, 16
        %v1599 = vpop.permute.xlu0 %1598
        %1600 = vrot.lane.b32.xlu0 %v1548, 16
        %v1601 = vpop.permute.xlu0 %1600
        %1602 = vrot.lane.b32.xlu0 %v1549, 16
        %v1603 = vpop.permute.xlu0 %1602
        %1604 = vrot.lane.b32.xlu0 %v1550, 16
        %v1605 = vpop.permute.xlu0 %1604
        %1606 = vrot.lane.b32.xlu0 %v1551, 16
        %v1607 = vpop.permute.xlu0 %1606
        %1608 = vrot.lane.b32.xlu0 %v1552, 16
        %v1609 = vpop.permute.xlu0 %1608
        %1610 = vrot.lane.b32.xlu0 %v1553, 16
        %v1611 = vpop.permute.xlu0 %1610
        %1612 = vrot.lane.b32.xlu0 %v1554, 16
        %v1613 = vpop.permute.xlu0 %1612
        %1614 = vrot.lane.b32.xlu0 %v1555, 16
        %v1615 = vpop.permute.xlu0 %1614
        %1616 = vrot.lane.b32.xlu0 %v1556, 16
        %v1617 = vpop.permute.xlu0 %1616
        %1618 = vrot.lane.b32.xlu0 %v1557, 16
        %v1619 = vpop.permute.xlu0 %1618
        %1620 = vrot.lane.b32.xlu0 %v1558, 16
        %v1621 = vpop.permute.xlu0 %1620
        %1622 = vrot.lane.b32.xlu0 %v1559, 16
        %v1623 = vpop.permute.xlu0 %1622
        %vm1656 = vcmask 158848
        %1657 = vst.msk [vmem:[#allocation3] sm:$0xf] %vm1656, %v1561
        %1658 = vst.msk [vmem:[#allocation3 + $0x4] sm:$0xf] %vm1656, %v1563
        %1659 = vst.msk [vmem:[#allocation3 + $0x8] sm:$0xf] %vm1656, %v1565
        %1660 = vst.msk [vmem:[#allocation3 + $0xc] sm:$0xf] %vm1656, %v1567
        %1661 = vst.msk [vmem:[#allocation3 + $0x10] sm:$0xf] %vm1656, %v1569
        %1662 = vst.msk [vmem:[#allocation3 + $0x14] sm:$0xf] %vm1656, %v1571
        %1663 = vst.msk [vmem:[#allocation3 + $0x18] sm:$0xf] %vm1656, %v1573
        %1664 = vst.msk [vmem:[#allocation3 + $0x1c] sm:$0xf] %vm1656, %v1575
        %1665 = vst.msk [vmem:[#allocation3 + $0x20] sm:$0xf] %vm1656, %v1577
        %1666 = vst.msk [vmem:[#allocation3 + $0x24] sm:$0xf] %vm1656, %v1579
        %1667 = vst.msk [vmem:[#allocation3 + $0x28] sm:$0xf] %vm1656, %v1581
        %1668 = vst.msk [vmem:[#allocation3 + $0x2c] sm:$0xf] %vm1656, %v1583
        %1669 = vst.msk [vmem:[#allocation3 + $0x30] sm:$0xf] %vm1656, %v1585
        %1670 = vst.msk [vmem:[#allocation3 + $0x34] sm:$0xf] %vm1656, %v1587
        %1671 = vst.msk [vmem:[#allocation3 + $0x38] sm:$0xf] %vm1656, %v1589
        %1672 = vst.msk [vmem:[#allocation3 + $0x3c] sm:$0xf] %vm1656, %v1591
        %1673 = vst.msk [vmem:[#allocation3 + $0x40] sm:$0xf] %vm1656, %v1593
        %1674 = vst.msk [vmem:[#allocation3 + $0x44] sm:$0xf] %vm1656, %v1595
        %1675 = vst.msk [vmem:[#allocation3 + $0x48] sm:$0xf] %vm1656, %v1597
        %1676 = vst.msk [vmem:[#allocation3 + $0x4c] sm:$0xf] %vm1656, %v1599
        %1677 = vst.msk [vmem:[#allocation3 + $0x50] sm:$0xf] %vm1656, %v1601
        %1678 = vst.msk [vmem:[#allocation3 + $0x54] sm:$0xf] %vm1656, %v1603
        %1679 = vst.msk [vmem:[#allocation3 + $0x58] sm:$0xf] %vm1656, %v1605
        %1680 = vst.msk [vmem:[#allocation3 + $0x5c] sm:$0xf] %vm1656, %v1607
        %1681 = vst.msk [vmem:[#allocation3 + $0x60] sm:$0xf] %vm1656, %v1609
        %1682 = vst.msk [vmem:[#allocation3 + $0x64] sm:$0xf] %vm1656, %v1611
        %1683 = vst.msk [vmem:[#allocation3 + $0x68] sm:$0xf] %vm1656, %v1613
        %1684 = vst.msk [vmem:[#allocation3 + $0x6c] sm:$0xf] %vm1656, %v1615
        %1685 = vst.msk [vmem:[#allocation3 + $0x70] sm:$0xf] %vm1656, %v1617
        %1686 = vst.msk [vmem:[#allocation3 + $0x74] sm:$0xf] %vm1656, %v1619
        %1687 = vst.msk [vmem:[#allocation3 + $0x78] sm:$0xf] %vm1656, %v1621
        %1688 = vst.msk [vmem:[#allocation3 + $0x7c] sm:$0xf] %vm1656, %v1623
        %v1689 = vld [vmem:[%s326 + $0x9] sm:$0xff]
        %v1690 = vld [vmem:[%s326 + $0x11] sm:$0xff]
        %v1691 = vld [vmem:[%s326 + $0x29] sm:$0xff]
        %v1692 = vld [vmem:[%s326 + $0x31] sm:$0xff]
        %v1693 = vld [vmem:[%s326 + $0x49] sm:$0xff]
        %v1694 = vld [vmem:[%s326 + $0x51] sm:$0xff]
        %v1695 = vld [vmem:[%s326 + $0x69] sm:$0xff]
        %v1696 = vld [vmem:[%s326 + $0x71] sm:$0xff]
        %v1697 = vld [vmem:[%s326 + $0x89] sm:$0xff]
        %v1698 = vld [vmem:[%s326 + $0x91] sm:$0xff]
        %v1699 = vld [vmem:[%s326 + $0xa9] sm:$0xff]
        %v1700 = vld [vmem:[%s326 + $0xb1] sm:$0xff]
        %v1701 = vld [vmem:[%s326 + $0xc9] sm:$0xff]
        %v1702 = vld [vmem:[%s326 + $0xd1] sm:$0xff]
        %v1703 = vld [vmem:[%s326 + $0xe9] sm:$0xff]
        %v1704 = vld [vmem:[%s326 + $0xf1] sm:$0xff]
        %v1705 = vld [vmem:[%s326 + $0x109] sm:$0xff]
        %v1706 = vld [vmem:[%s326 + $0x111] sm:$0xff]
        %v1707 = vld [vmem:[%s326 + $0x129] sm:$0xff]
        %v1708 = vld [vmem:[%s326 + $0x131] sm:$0xff]
        %v1709 = vld [vmem:[%s326 + $0x149] sm:$0xff]
        %v1710 = vld [vmem:[%s326 + $0x151] sm:$0xff]
        %v1711 = vld [vmem:[%s326 + $0x169] sm:$0xff]
        %v1712 = vld [vmem:[%s326 + $0x171] sm:$0xff]
        %v1713 = vld [vmem:[%s326 + $0x189] sm:$0xff]
        %v1714 = vld [vmem:[%s326 + $0x191] sm:$0xff]
        %v1715 = vld [vmem:[%s326 + $0x1a9] sm:$0xff]
        %v1716 = vld [vmem:[%s326 + $0x1b1] sm:$0xff]
        %v1717 = vld [vmem:[%s326 + $0x1c9] sm:$0xff]
        %v1718 = vld [vmem:[%s326 + $0x1d1] sm:$0xff]
        %v1719 = vld [vmem:[%s326 + $0x1e9] sm:$0xff]
        %v1720 = vld [vmem:[%s326 + $0x1f1] sm:$0xff]
        %v1721 = vpack.c.bf16 %v1690, %v1689
        %v1722 = vpack.c.bf16 %v1692, %v1691
        %v1723 = vpack.c.bf16 %v1694, %v1693
        %v1724 = vpack.c.bf16 %v1696, %v1695
        %v1725 = vpack.c.bf16 %v1698, %v1697
        %v1726 = vpack.c.bf16 %v1700, %v1699
        %v1727 = vpack.c.bf16 %v1702, %v1701
        %v1728 = vpack.c.bf16 %v1704, %v1703
        %v1729 = vpack.c.bf16 %v1706, %v1705
        %v1730 = vpack.c.bf16 %v1708, %v1707
        %v1731 = vpack.c.bf16 %v1710, %v1709
        %v1732 = vpack.c.bf16 %v1712, %v1711
        %v1733 = vpack.c.bf16 %v1714, %v1713
        %v1734 = vpack.c.bf16 %v1716, %v1715
        %v1735 = vpack.c.bf16 %v1718, %v1717
        %v1736 = vpack.c.bf16 %v1720, %v1719
        %v1753 = vunpack.c.l.b16 %v1721
        %v1754 = vunpack.c.h.b16 %v1721
        %v1755 = vunpack.c.l.b16 %v1722
        %v1756 = vunpack.c.h.b16 %v1722
        %v1757 = vunpack.c.l.b16 %v1723
        %v1758 = vunpack.c.h.b16 %v1723
        %v1759 = vunpack.c.l.b16 %v1724
        %v1760 = vunpack.c.h.b16 %v1724
        %v1761 = vunpack.c.l.b16 %v1725
        %v1762 = vunpack.c.h.b16 %v1725
        %v1763 = vunpack.c.l.b16 %v1726
        %v1764 = vunpack.c.h.b16 %v1726
        %v1765 = vunpack.c.l.b16 %v1727
        %v1766 = vunpack.c.h.b16 %v1727
        %v1767 = vunpack.c.l.b16 %v1728
        %v1768 = vunpack.c.h.b16 %v1728
        %v1769 = vunpack.c.l.b16 %v1729
        %v1770 = vunpack.c.h.b16 %v1729
        %v1771 = vunpack.c.l.b16 %v1730
        %v1772 = vunpack.c.h.b16 %v1730
        %v1773 = vunpack.c.l.b16 %v1731
        %v1774 = vunpack.c.h.b16 %v1731
        %v1775 = vunpack.c.l.b16 %v1732
        %v1776 = vunpack.c.h.b16 %v1732
        %v1777 = vunpack.c.l.b16 %v1733
        %v1778 = vunpack.c.h.b16 %v1733
        %v1779 = vunpack.c.l.b16 %v1734
        %v1780 = vunpack.c.h.b16 %v1734
        %v1781 = vunpack.c.l.b16 %v1735
        %v1782 = vunpack.c.h.b16 %v1735
        %v1783 = vunpack.c.l.b16 %v1736
        %v1784 = vunpack.c.h.b16 %v1736
        %v1785 = vpack.c.b16 %v1753, %v1753
        %v1786 = vpack.c.b16 %v1754, %v1754
        %v1787 = vpack.c.b16 %v1755, %v1755
        %v1788 = vpack.c.b16 %v1756, %v1756
        %v1789 = vpack.c.b16 %v1757, %v1757
        %v1790 = vpack.c.b16 %v1758, %v1758
        %v1791 = vpack.c.b16 %v1759, %v1759
        %v1792 = vpack.c.b16 %v1760, %v1760
        %v1793 = vpack.c.b16 %v1761, %v1761
        %v1794 = vpack.c.b16 %v1762, %v1762
        %v1795 = vpack.c.b16 %v1763, %v1763
        %v1796 = vpack.c.b16 %v1764, %v1764
        %v1797 = vpack.c.b16 %v1765, %v1765
        %v1798 = vpack.c.b16 %v1766, %v1766
        %v1799 = vpack.c.b16 %v1767, %v1767
        %v1800 = vpack.c.b16 %v1768, %v1768
        %v1801 = vpack.c.b16 %v1769, %v1769
        %v1802 = vpack.c.b16 %v1770, %v1770
        %v1803 = vpack.c.b16 %v1771, %v1771
        %v1804 = vpack.c.b16 %v1772, %v1772
        %v1805 = vpack.c.b16 %v1773, %v1773
        %v1806 = vpack.c.b16 %v1774, %v1774
        %v1807 = vpack.c.b16 %v1775, %v1775
        %v1808 = vpack.c.b16 %v1776, %v1776
        %v1809 = vpack.c.b16 %v1777, %v1777
        %v1810 = vpack.c.b16 %v1778, %v1778
        %v1811 = vpack.c.b16 %v1779, %v1779
        %v1812 = vpack.c.b16 %v1780, %v1780
        %v1813 = vpack.c.b16 %v1781, %v1781
        %v1814 = vpack.c.b16 %v1782, %v1782
        %v1815 = vpack.c.b16 %v1783, %v1783
        %v1816 = vpack.c.b16 %v1784, %v1784
        %1817 = vrot.lane.b32.xlu0 %v1785, 20
        %v1818 = vpop.permute.xlu0 %1817
        %1819 = vrot.lane.b32.xlu0 %v1786, 20
        %v1820 = vpop.permute.xlu0 %1819
        %1821 = vrot.lane.b32.xlu0 %v1787, 20
        %v1822 = vpop.permute.xlu0 %1821
        %1823 = vrot.lane.b32.xlu0 %v1788, 20
        %v1824 = vpop.permute.xlu0 %1823
        %1825 = vrot.lane.b32.xlu0 %v1789, 20
        %v1826 = vpop.permute.xlu0 %1825
        %1827 = vrot.lane.b32.xlu0 %v1790, 20
        %v1828 = vpop.permute.xlu0 %1827
        %1829 = vrot.lane.b32.xlu0 %v1791, 20
        %v1830 = vpop.permute.xlu0 %1829
        %1831 = vrot.lane.b32.xlu0 %v1792, 20
        %v1832 = vpop.permute.xlu0 %1831
        %1833 = vrot.lane.b32.xlu0 %v1793, 20
        %v1834 = vpop.permute.xlu0 %1833
        %1835 = vrot.lane.b32.xlu0 %v1794, 20
        %v1836 = vpop.permute.xlu0 %1835
        %1837 = vrot.lane.b32.xlu0 %v1795, 20
        %v1838 = vpop.permute.xlu0 %1837
        %1839 = vrot.lane.b32.xlu0 %v1796, 20
        %v1840 = vpop.permute.xlu0 %1839
        %1841 = vrot.lane.b32.xlu0 %v1797, 20
        %v1842 = vpop.permute.xlu0 %1841
        %1843 = vrot.lane.b32.xlu0 %v1798, 20
        %v1844 = vpop.permute.xlu0 %1843
        %1845 = vrot.lane.b32.xlu0 %v1799, 20
        %v1846 = vpop.permute.xlu0 %1845
        %1847 = vrot.lane.b32.xlu0 %v1800, 20
        %v1848 = vpop.permute.xlu0 %1847
        %1849 = vrot.lane.b32.xlu0 %v1801, 20
        %v1850 = vpop.permute.xlu0 %1849
        %1851 = vrot.lane.b32.xlu0 %v1802, 20
        %v1852 = vpop.permute.xlu0 %1851
        %1853 = vrot.lane.b32.xlu0 %v1803, 20
        %v1854 = vpop.permute.xlu0 %1853
        %1855 = vrot.lane.b32.xlu0 %v1804, 20
        %v1856 = vpop.permute.xlu0 %1855
        %1857 = vrot.lane.b32.xlu0 %v1805, 20
        %v1858 = vpop.permute.xlu0 %1857
        %1859 = vrot.lane.b32.xlu0 %v1806, 20
        %v1860 = vpop.permute.xlu0 %1859
        %1861 = vrot.lane.b32.xlu0 %v1807, 20
        %v1862 = vpop.permute.xlu0 %1861
        %1863 = vrot.lane.b32.xlu0 %v1808, 20
        %v1864 = vpop.permute.xlu0 %1863
        %1865 = vrot.lane.b32.xlu0 %v1809, 20
        %v1866 = vpop.permute.xlu0 %1865
        %1867 = vrot.lane.b32.xlu0 %v1810, 20
        %v1868 = vpop.permute.xlu0 %1867
        %1869 = vrot.lane.b32.xlu0 %v1811, 20
        %v1870 = vpop.permute.xlu0 %1869
        %1871 = vrot.lane.b32.xlu0 %v1812, 20
        %v1872 = vpop.permute.xlu0 %1871
        %1873 = vrot.lane.b32.xlu0 %v1813, 20
        %v1874 = vpop.permute.xlu0 %1873
        %1875 = vrot.lane.b32.xlu0 %v1814, 20
        %v1876 = vpop.permute.xlu0 %1875
        %1877 = vrot.lane.b32.xlu0 %v1815, 20
        %v1878 = vpop.permute.xlu0 %1877
        %1879 = vrot.lane.b32.xlu0 %v1816, 20
        %v1880 = vpop.permute.xlu0 %1879
        %vm1913 = vcmask 191648
        %1914 = vst.msk [vmem:[#allocation3] sm:$0xf] %vm1913, %v1818
        %1915 = vst.msk [vmem:[#allocation3 + $0x4] sm:$0xf] %vm1913, %v1820
        %1916 = vst.msk [vmem:[#allocation3 + $0x8] sm:$0xf] %vm1913, %v1822
        %1917 = vst.msk [vmem:[#allocation3 + $0xc] sm:$0xf] %vm1913, %v1824
        %1918 = vst.msk [vmem:[#allocation3 + $0x10] sm:$0xf] %vm1913, %v1826
        %1919 = vst.msk [vmem:[#allocation3 + $0x14] sm:$0xf] %vm1913, %v1828
        %1920 = vst.msk [vmem:[#allocation3 + $0x18] sm:$0xf] %vm1913, %v1830
        %1921 = vst.msk [vmem:[#allocation3 + $0x1c] sm:$0xf] %vm1913, %v1832
        %1922 = vst.msk [vmem:[#allocation3 + $0x20] sm:$0xf] %vm1913, %v1834
        %1923 = vst.msk [vmem:[#allocation3 + $0x24] sm:$0xf] %vm1913, %v1836
        %1924 = vst.msk [vmem:[#allocation3 + $0x28] sm:$0xf] %vm1913, %v1838
        %1925 = vst.msk [vmem:[#allocation3 + $0x2c] sm:$0xf] %vm1913, %v1840
        %1926 = vst.msk [vmem:[#allocation3 + $0x30] sm:$0xf] %vm1913, %v1842
        %1927 = vst.msk [vmem:[#allocation3 + $0x34] sm:$0xf] %vm1913, %v1844
        %1928 = vst.msk [vmem:[#allocation3 + $0x38] sm:$0xf] %vm1913, %v1846
        %1929 = vst.msk [vmem:[#allocation3 + $0x3c] sm:$0xf] %vm1913, %v1848
        %1930 = vst.msk [vmem:[#allocation3 + $0x40] sm:$0xf] %vm1913, %v1850
        %1931 = vst.msk [vmem:[#allocation3 + $0x44] sm:$0xf] %vm1913, %v1852
        %1932 = vst.msk [vmem:[#allocation3 + $0x48] sm:$0xf] %vm1913, %v1854
        %1933 = vst.msk [vmem:[#allocation3 + $0x4c] sm:$0xf] %vm1913, %v1856
        %1934 = vst.msk [vmem:[#allocation3 + $0x50] sm:$0xf] %vm1913, %v1858
        %1935 = vst.msk [vmem:[#allocation3 + $0x54] sm:$0xf] %vm1913, %v1860
        %1936 = vst.msk [vmem:[#allocation3 + $0x58] sm:$0xf] %vm1913, %v1862
        %1937 = vst.msk [vmem:[#allocation3 + $0x5c] sm:$0xf] %vm1913, %v1864
        %1938 = vst.msk [vmem:[#allocation3 + $0x60] sm:$0xf] %vm1913, %v1866
        %1939 = vst.msk [vmem:[#allocation3 + $0x64] sm:$0xf] %vm1913, %v1868
        %1940 = vst.msk [vmem:[#allocation3 + $0x68] sm:$0xf] %vm1913, %v1870
        %1941 = vst.msk [vmem:[#allocation3 + $0x6c] sm:$0xf] %vm1913, %v1872
        %1942 = vst.msk [vmem:[#allocation3 + $0x70] sm:$0xf] %vm1913, %v1874
        %1943 = vst.msk [vmem:[#allocation3 + $0x74] sm:$0xf] %vm1913, %v1876
        %1944 = vst.msk [vmem:[#allocation3 + $0x78] sm:$0xf] %vm1913, %v1878
        %1945 = vst.msk [vmem:[#allocation3 + $0x7c] sm:$0xf] %vm1913, %v1880
        %s1946 = scalar_lea.vmem [#allocation2], 64
        %v1947 = vld [vmem:[%s1946 + $0x7] sm:$0xff]
        %v1948 = vld [vmem:[%s1946 + $0xf] sm:$0xff]
        %v1949 = vld [vmem:[%s1946 + $0x27] sm:$0xff]
        %v1950 = vld [vmem:[%s1946 + $0x2f] sm:$0xff]
        %v1951 = vld [vmem:[%s1946 + $0x47] sm:$0xff]
        %v1952 = vld [vmem:[%s1946 + $0x4f] sm:$0xff]
        %v1953 = vld [vmem:[%s1946 + $0x67] sm:$0xff]
        %v1954 = vld [vmem:[%s1946 + $0x6f] sm:$0xff]
        %v1955 = vld [vmem:[%s1946 + $0x87] sm:$0xff]
        %v1956 = vld [vmem:[%s1946 + $0x8f] sm:$0xff]
        %v1957 = vld [vmem:[%s1946 + $0xa7] sm:$0xff]
        %v1958 = vld [vmem:[%s1946 + $0xaf] sm:$0xff]
        %v1959 = vld [vmem:[%s1946 + $0xc7] sm:$0xff]
        %v1960 = vld [vmem:[%s1946 + $0xcf] sm:$0xff]
        %v1961 = vld [vmem:[%s1946 + $0xe7] sm:$0xff]
        %v1962 = vld [vmem:[%s1946 + $0xef] sm:$0xff]
        %v1963 = vld [vmem:[%s1946 + $0x107] sm:$0xff]
        %v1964 = vld [vmem:[%s1946 + $0x10f] sm:$0xff]
        %v1965 = vld [vmem:[%s1946 + $0x127] sm:$0xff]
        %v1966 = vld [vmem:[%s1946 + $0x12f] sm:$0xff]
        %v1967 = vld [vmem:[%s1946 + $0x147] sm:$0xff]
        %v1968 = vld [vmem:[%s1946 + $0x14f] sm:$0xff]
        %v1969 = vld [vmem:[%s1946 + $0x167] sm:$0xff]
        %v1970 = vld [vmem:[%s1946 + $0x16f] sm:$0xff]
        %v1971 = vld [vmem:[%s1946 + $0x187] sm:$0xff]
        %v1972 = vld [vmem:[%s1946 + $0x18f] sm:$0xff]
        %v1973 = vld [vmem:[%s1946 + $0x1a7] sm:$0xff]
        %v1974 = vld [vmem:[%s1946 + $0x1af] sm:$0xff]
        %v1975 = vld [vmem:[%s1946 + $0x1c7] sm:$0xff]
        %v1976 = vld [vmem:[%s1946 + $0x1cf] sm:$0xff]
        %v1977 = vld [vmem:[%s1946 + $0x1e7] sm:$0xff]
        %v1978 = vld [vmem:[%s1946 + $0x1ef] sm:$0xff]
        %v1979 = vpack.c.bf16 %v1948, %v1947
        %v1980 = vpack.c.bf16 %v1950, %v1949
        %v1981 = vpack.c.bf16 %v1952, %v1951
        %v1982 = vpack.c.bf16 %v1954, %v1953
        %v1983 = vpack.c.bf16 %v1956, %v1955
        %v1984 = vpack.c.bf16 %v1958, %v1957
        %v1985 = vpack.c.bf16 %v1960, %v1959
        %v1986 = vpack.c.bf16 %v1962, %v1961
        %v1987 = vpack.c.bf16 %v1964, %v1963
        %v1988 = vpack.c.bf16 %v1966, %v1965
        %v1989 = vpack.c.bf16 %v1968, %v1967
        %v1990 = vpack.c.bf16 %v1970, %v1969
        %v1991 = vpack.c.bf16 %v1972, %v1971
        %v1992 = vpack.c.bf16 %v1974, %v1973
        %v1993 = vpack.c.bf16 %v1976, %v1975
        %v1994 = vpack.c.bf16 %v1978, %v1977
        %v2011 = vunpack.c.l.b16 %v1979
        %v2012 = vunpack.c.h.b16 %v1979
        %v2013 = vunpack.c.l.b16 %v1980
        %v2014 = vunpack.c.h.b16 %v1980
        %v2015 = vunpack.c.l.b16 %v1981
        %v2016 = vunpack.c.h.b16 %v1981
        %v2017 = vunpack.c.l.b16 %v1982
        %v2018 = vunpack.c.h.b16 %v1982
        %v2019 = vunpack.c.l.b16 %v1983
        %v2020 = vunpack.c.h.b16 %v1983
        %v2021 = vunpack.c.l.b16 %v1984
        %v2022 = vunpack.c.h.b16 %v1984
        %v2023 = vunpack.c.l.b16 %v1985
        %v2024 = vunpack.c.h.b16 %v1985
        %v2025 = vunpack.c.l.b16 %v1986
        %v2026 = vunpack.c.h.b16 %v1986
        %v2027 = vunpack.c.l.b16 %v1987
        %v2028 = vunpack.c.h.b16 %v1987
        %v2029 = vunpack.c.l.b16 %v1988
        %v2030 = vunpack.c.h.b16 %v1988
        %v2031 = vunpack.c.l.b16 %v1989
        %v2032 = vunpack.c.h.b16 %v1989
        %v2033 = vunpack.c.l.b16 %v1990
        %v2034 = vunpack.c.h.b16 %v1990
        %v2035 = vunpack.c.l.b16 %v1991
        %v2036 = vunpack.c.h.b16 %v1991
        %v2037 = vunpack.c.l.b16 %v1992
        %v2038 = vunpack.c.h.b16 %v1992
        %v2039 = vunpack.c.l.b16 %v1993
        %v2040 = vunpack.c.h.b16 %v1993
        %v2041 = vunpack.c.l.b16 %v1994
        %v2042 = vunpack.c.h.b16 %v1994
        %v2043 = vpack.c.b16 %v2011, %v2011
        %v2044 = vpack.c.b16 %v2012, %v2012
        %v2045 = vpack.c.b16 %v2013, %v2013
        %v2046 = vpack.c.b16 %v2014, %v2014
        %v2047 = vpack.c.b16 %v2015, %v2015
        %v2048 = vpack.c.b16 %v2016, %v2016
        %v2049 = vpack.c.b16 %v2017, %v2017
        %v2050 = vpack.c.b16 %v2018, %v2018
        %v2051 = vpack.c.b16 %v2019, %v2019
        %v2052 = vpack.c.b16 %v2020, %v2020
        %v2053 = vpack.c.b16 %v2021, %v2021
        %v2054 = vpack.c.b16 %v2022, %v2022
        %v2055 = vpack.c.b16 %v2023, %v2023
        %v2056 = vpack.c.b16 %v2024, %v2024
        %v2057 = vpack.c.b16 %v2025, %v2025
        %v2058 = vpack.c.b16 %v2026, %v2026
        %v2059 = vpack.c.b16 %v2027, %v2027
        %v2060 = vpack.c.b16 %v2028, %v2028
        %v2061 = vpack.c.b16 %v2029, %v2029
        %v2062 = vpack.c.b16 %v2030, %v2030
        %v2063 = vpack.c.b16 %v2031, %v2031
        %v2064 = vpack.c.b16 %v2032, %v2032
        %v2065 = vpack.c.b16 %v2033, %v2033
        %v2066 = vpack.c.b16 %v2034, %v2034
        %v2067 = vpack.c.b16 %v2035, %v2035
        %v2068 = vpack.c.b16 %v2036, %v2036
        %v2069 = vpack.c.b16 %v2037, %v2037
        %v2070 = vpack.c.b16 %v2038, %v2038
        %v2071 = vpack.c.b16 %v2039, %v2039
        %v2072 = vpack.c.b16 %v2040, %v2040
        %v2073 = vpack.c.b16 %v2041, %v2041
        %v2074 = vpack.c.b16 %v2042, %v2042
        %2075 = vrot.lane.b32.xlu0 %v2043, 24
        %v2076 = vpop.permute.xlu0 %2075
        %2077 = vrot.lane.b32.xlu0 %v2044, 24
        %v2078 = vpop.permute.xlu0 %2077
        %2079 = vrot.lane.b32.xlu0 %v2045, 24
        %v2080 = vpop.permute.xlu0 %2079
        %2081 = vrot.lane.b32.xlu0 %v2046, 24
        %v2082 = vpop.permute.xlu0 %2081
        %2083 = vrot.lane.b32.xlu0 %v2047, 24
        %v2084 = vpop.permute.xlu0 %2083
        %2085 = vrot.lane.b32.xlu0 %v2048, 24
        %v2086 = vpop.permute.xlu0 %2085
        %2087 = vrot.lane.b32.xlu0 %v2049, 24
        %v2088 = vpop.permute.xlu0 %2087
        %2089 = vrot.lane.b32.xlu0 %v2050, 24
        %v2090 = vpop.permute.xlu0 %2089
        %2091 = vrot.lane.b32.xlu0 %v2051, 24
        %v2092 = vpop.permute.xlu0 %2091
        %2093 = vrot.lane.b32.xlu0 %v2052, 24
        %v2094 = vpop.permute.xlu0 %2093
        %2095 = vrot.lane.b32.xlu0 %v2053, 24
        %v2096 = vpop.permute.xlu0 %2095
        %2097 = vrot.lane.b32.xlu0 %v2054, 24
        %v2098 = vpop.permute.xlu0 %2097
        %2099 = vrot.lane.b32.xlu0 %v2055, 24
        %v2100 = vpop.permute.xlu0 %2099
        %2101 = vrot.lane.b32.xlu0 %v2056, 24
        %v2102 = vpop.permute.xlu0 %2101
        %2103 = vrot.lane.b32.xlu0 %v2057, 24
        %v2104 = vpop.permute.xlu0 %2103
        %2105 = vrot.lane.b32.xlu0 %v2058, 24
        %v2106 = vpop.permute.xlu0 %2105
        %2107 = vrot.lane.b32.xlu0 %v2059, 24
        %v2108 = vpop.permute.xlu0 %2107
        %2109 = vrot.lane.b32.xlu0 %v2060, 24
        %v2110 = vpop.permute.xlu0 %2109
        %2111 = vrot.lane.b32.xlu0 %v2061, 24
        %v2112 = vpop.permute.xlu0 %2111
        %2113 = vrot.lane.b32.xlu0 %v2062, 24
        %v2114 = vpop.permute.xlu0 %2113
        %2115 = vrot.lane.b32.xlu0 %v2063, 24
        %v2116 = vpop.permute.xlu0 %2115
        %2117 = vrot.lane.b32.xlu0 %v2064, 24
        %v2118 = vpop.permute.xlu0 %2117
        %2119 = vrot.lane.b32.xlu0 %v2065, 24
        %v2120 = vpop.permute.xlu0 %2119
        %2121 = vrot.lane.b32.xlu0 %v2066, 24
        %v2122 = vpop.permute.xlu0 %2121
        %2123 = vrot.lane.b32.xlu0 %v2067, 24
        %v2124 = vpop.permute.xlu0 %2123
        %2125 = vrot.lane.b32.xlu0 %v2068, 24
        %v2126 = vpop.permute.xlu0 %2125
        %2127 = vrot.lane.b32.xlu0 %v2069, 24
        %v2128 = vpop.permute.xlu0 %2127
        %2129 = vrot.lane.b32.xlu0 %v2070, 24
        %v2130 = vpop.permute.xlu0 %2129
        %2131 = vrot.lane.b32.xlu0 %v2071, 24
        %v2132 = vpop.permute.xlu0 %2131
        %2133 = vrot.lane.b32.xlu0 %v2072, 24
        %v2134 = vpop.permute.xlu0 %2133
        %2135 = vrot.lane.b32.xlu0 %v2073, 24
        %v2136 = vpop.permute.xlu0 %2135
        %2137 = vrot.lane.b32.xlu0 %v2074, 24
        %v2138 = vpop.permute.xlu0 %2137
        %vm2171 = vcmask 224448
        %2172 = vst.msk [vmem:[#allocation3] sm:$0xf] %vm2171, %v2076
        %2173 = vst.msk [vmem:[#allocation3 + $0x4] sm:$0xf] %vm2171, %v2078
        %2174 = vst.msk [vmem:[#allocation3 + $0x8] sm:$0xf] %vm2171, %v2080
        %2175 = vst.msk [vmem:[#allocation3 + $0xc] sm:$0xf] %vm2171, %v2082
        %2176 = vst.msk [vmem:[#allocation3 + $0x10] sm:$0xf] %vm2171, %v2084
        %2177 = vst.msk [vmem:[#allocation3 + $0x14] sm:$0xf] %vm2171, %v2086
        %2178 = vst.msk [vmem:[#allocation3 + $0x18] sm:$0xf] %vm2171, %v2088
        %2179 = vst.msk [vmem:[#allocation3 + $0x1c] sm:$0xf] %vm2171, %v2090
        %2180 = vst.msk [vmem:[#allocation3 + $0x20] sm:$0xf] %vm2171, %v2092
        %2181 = vst.msk [vmem:[#allocation3 + $0x24] sm:$0xf] %vm2171, %v2094
        %2182 = vst.msk [vmem:[#allocation3 + $0x28] sm:$0xf] %vm2171, %v2096
        %2183 = vst.msk [vmem:[#allocation3 + $0x2c] sm:$0xf] %vm2171, %v2098
        %2184 = vst.msk [vmem:[#allocation3 + $0x30] sm:$0xf] %vm2171, %v2100
        %2185 = vst.msk [vmem:[#allocation3 + $0x34] sm:$0xf] %vm2171, %v2102
        %2186 = vst.msk [vmem:[#allocation3 + $0x38] sm:$0xf] %vm2171, %v2104
        %2187 = vst.msk [vmem:[#allocation3 + $0x3c] sm:$0xf] %vm2171, %v2106
        %2188 = vst.msk [vmem:[#allocation3 + $0x40] sm:$0xf] %vm2171, %v2108
        %2189 = vst.msk [vmem:[#allocation3 + $0x44] sm:$0xf] %vm2171, %v2110
        %2190 = vst.msk [vmem:[#allocation3 + $0x48] sm:$0xf] %vm2171, %v2112
        %2191 = vst.msk [vmem:[#allocation3 + $0x4c] sm:$0xf] %vm2171, %v2114
        %2192 = vst.msk [vmem:[#allocation3 + $0x50] sm:$0xf] %vm2171, %v2116
        %2193 = vst.msk [vmem:[#allocation3 + $0x54] sm:$0xf] %vm2171, %v2118
        %2194 = vst.msk [vmem:[#allocation3 + $0x58] sm:$0xf] %vm2171, %v2120
        %2195 = vst.msk [vmem:[#allocation3 + $0x5c] sm:$0xf] %vm2171, %v2122
        %2196 = vst.msk [vmem:[#allocation3 + $0x60] sm:$0xf] %vm2171, %v2124
        %2197 = vst.msk [vmem:[#allocation3 + $0x64] sm:$0xf] %vm2171, %v2126
        %2198 = vst.msk [vmem:[#allocation3 + $0x68] sm:$0xf] %vm2171, %v2128
        %2199 = vst.msk [vmem:[#allocation3 + $0x6c] sm:$0xf] %vm2171, %v2130
        %2200 = vst.msk [vmem:[#allocation3 + $0x70] sm:$0xf] %vm2171, %v2132
        %2201 = vst.msk [vmem:[#allocation3 + $0x74] sm:$0xf] %vm2171, %v2134
        %2202 = vst.msk [vmem:[#allocation3 + $0x78] sm:$0xf] %vm2171, %v2136
        %2203 = vst.msk [vmem:[#allocation3 + $0x7c] sm:$0xf] %vm2171, %v2138
        %v2204 = vld [vmem:[%s1946 + $0x8] sm:$0xff]
        %v2205 = vld [vmem:[%s1946 + $0x10] sm:$0xff]
        %v2206 = vld [vmem:[%s1946 + $0x28] sm:$0xff]
        %v2207 = vld [vmem:[%s1946 + $0x30] sm:$0xff]
        %v2208 = vld [vmem:[%s1946 + $0x48] sm:$0xff]
        %v2209 = vld [vmem:[%s1946 + $0x50] sm:$0xff]
        %v2210 = vld [vmem:[%s1946 + $0x68] sm:$0xff]
        %v2211 = vld [vmem:[%s1946 + $0x70] sm:$0xff]
        %v2212 = vld [vmem:[%s1946 + $0x88] sm:$0xff]
        %v2213 = vld [vmem:[%s1946 + $0x90] sm:$0xff]
        %v2214 = vld [vmem:[%s1946 + $0xa8] sm:$0xff]
        %v2215 = vld [vmem:[%s1946 + $0xb0] sm:$0xff]
        %v2216 = vld [vmem:[%s1946 + $0xc8] sm:$0xff]
        %v2217 = vld [vmem:[%s1946 + $0xd0] sm:$0xff]
        %v2218 = vld [vmem:[%s1946 + $0xe8] sm:$0xff]
        %v2219 = vld [vmem:[%s1946 + $0xf0] sm:$0xff]
        %v2220 = vld [vmem:[%s1946 + $0x108] sm:$0xff]
        %v2221 = vld [vmem:[%s1946 + $0x110] sm:$0xff]
        %v2222 = vld [vmem:[%s1946 + $0x128] sm:$0xff]
        %v2223 = vld [vmem:[%s1946 + $0x130] sm:$0xff]
        %v2224 = vld [vmem:[%s1946 + $0x148] sm:$0xff]
        %v2225 = vld [vmem:[%s1946 + $0x150] sm:$0xff]
        %v2226 = vld [vmem:[%s1946 + $0x168] sm:$0xff]
        %v2227 = vld [vmem:[%s1946 + $0x170] sm:$0xff]
        %v2228 = vld [vmem:[%s1946 + $0x188] sm:$0xff]
        %v2229 = vld [vmem:[%s1946 + $0x190] sm:$0xff]
        %v2230 = vld [vmem:[%s1946 + $0x1a8] sm:$0xff]
        %v2231 = vld [vmem:[%s1946 + $0x1b0] sm:$0xff]
        %v2232 = vld [vmem:[%s1946 + $0x1c8] sm:$0xff]
        %v2233 = vld [vmem:[%s1946 + $0x1d0] sm:$0xff]
        %v2234 = vld [vmem:[%s1946 + $0x1e8] sm:$0xff]
        %v2235 = vld [vmem:[%s1946 + $0x1f0] sm:$0xff]
        %v2236 = vpack.c.bf16 %v2205, %v2204
        %v2237 = vpack.c.bf16 %v2207, %v2206
        %v2238 = vpack.c.bf16 %v2209, %v2208
        %v2239 = vpack.c.bf16 %v2211, %v2210
        %v2240 = vpack.c.bf16 %v2213, %v2212
        %v2241 = vpack.c.bf16 %v2215, %v2214
        %v2242 = vpack.c.bf16 %v2217, %v2216
        %v2243 = vpack.c.bf16 %v2219, %v2218
        %v2244 = vpack.c.bf16 %v2221, %v2220
        %v2245 = vpack.c.bf16 %v2223, %v2222
        %v2246 = vpack.c.bf16 %v2225, %v2224
        %v2247 = vpack.c.bf16 %v2227, %v2226
        %v2248 = vpack.c.bf16 %v2229, %v2228
        %v2249 = vpack.c.bf16 %v2231, %v2230
        %v2250 = vpack.c.bf16 %v2233, %v2232
        %v2251 = vpack.c.bf16 %v2235, %v2234
        %v2268 = vunpack.c.l.b16 %v2236
        %v2269 = vunpack.c.h.b16 %v2236
        %v2270 = vunpack.c.l.b16 %v2237
        %v2271 = vunpack.c.h.b16 %v2237
        %v2272 = vunpack.c.l.b16 %v2238
        %v2273 = vunpack.c.h.b16 %v2238
        %v2274 = vunpack.c.l.b16 %v2239
        %v2275 = vunpack.c.h.b16 %v2239
        %v2276 = vunpack.c.l.b16 %v2240
        %v2277 = vunpack.c.h.b16 %v2240
        %v2278 = vunpack.c.l.b16 %v2241
        %v2279 = vunpack.c.h.b16 %v2241
        %v2280 = vunpack.c.l.b16 %v2242
        %v2281 = vunpack.c.h.b16 %v2242
        %v2282 = vunpack.c.l.b16 %v2243
        %v2283 = vunpack.c.h.b16 %v2243
        %v2284 = vunpack.c.l.b16 %v2244
        %v2285 = vunpack.c.h.b16 %v2244
        %v2286 = vunpack.c.l.b16 %v2245
        %v2287 = vunpack.c.h.b16 %v2245
        %v2288 = vunpack.c.l.b16 %v2246
        %v2289 = vunpack.c.h.b16 %v2246
        %v2290 = vunpack.c.l.b16 %v2247
        %v2291 = vunpack.c.h.b16 %v2247
        %v2292 = vunpack.c.l.b16 %v2248
        %v2293 = vunpack.c.h.b16 %v2248
        %v2294 = vunpack.c.l.b16 %v2249
        %v2295 = vunpack.c.h.b16 %v2249
        %v2296 = vunpack.c.l.b16 %v2250
        %v2297 = vunpack.c.h.b16 %v2250
        %v2298 = vunpack.c.l.b16 %v2251
        %v2299 = vunpack.c.h.b16 %v2251
        %v2300 = vpack.c.b16 %v2268, %v2268
        %v2301 = vpack.c.b16 %v2269, %v2269
        %v2302 = vpack.c.b16 %v2270, %v2270
        %v2303 = vpack.c.b16 %v2271, %v2271
        %v2304 = vpack.c.b16 %v2272, %v2272
        %v2305 = vpack.c.b16 %v2273, %v2273
        %v2306 = vpack.c.b16 %v2274, %v2274
        %v2307 = vpack.c.b16 %v2275, %v2275
        %v2308 = vpack.c.b16 %v2276, %v2276
        %v2309 = vpack.c.b16 %v2277, %v2277
        %v2310 = vpack.c.b16 %v2278, %v2278
        %v2311 = vpack.c.b16 %v2279, %v2279
        %v2312 = vpack.c.b16 %v2280, %v2280
        %v2313 = vpack.c.b16 %v2281, %v2281
        %v2314 = vpack.c.b16 %v2282, %v2282
        %v2315 = vpack.c.b16 %v2283, %v2283
        %v2316 = vpack.c.b16 %v2284, %v2284
        %v2317 = vpack.c.b16 %v2285, %v2285
        %v2318 = vpack.c.b16 %v2286, %v2286
        %v2319 = vpack.c.b16 %v2287, %v2287
        %v2320 = vpack.c.b16 %v2288, %v2288
        %v2321 = vpack.c.b16 %v2289, %v2289
        %v2322 = vpack.c.b16 %v2290, %v2290
        %v2323 = vpack.c.b16 %v2291, %v2291
        %v2324 = vpack.c.b16 %v2292, %v2292
        %v2325 = vpack.c.b16 %v2293, %v2293
        %v2326 = vpack.c.b16 %v2294, %v2294
        %v2327 = vpack.c.b16 %v2295, %v2295
        %v2328 = vpack.c.b16 %v2296, %v2296
        %v2329 = vpack.c.b16 %v2297, %v2297
        %v2330 = vpack.c.b16 %v2298, %v2298
        %v2331 = vpack.c.b16 %v2299, %v2299
        %2332 = vrot.lane.b32.xlu0 %v2300, 28
        %v2333 = vpop.permute.xlu0 %2332
        %2334 = vrot.lane.b32.xlu0 %v2301, 28
        %v2335 = vpop.permute.xlu0 %2334
        %2336 = vrot.lane.b32.xlu0 %v2302, 28
        %v2337 = vpop.permute.xlu0 %2336
        %2338 = vrot.lane.b32.xlu0 %v2303, 28
        %v2339 = vpop.permute.xlu0 %2338
        %2340 = vrot.lane.b32.xlu0 %v2304, 28
        %v2341 = vpop.permute.xlu0 %2340
        %2342 = vrot.lane.b32.xlu0 %v2305, 28
        %v2343 = vpop.permute.xlu0 %2342
        %2344 = vrot.lane.b32.xlu0 %v2306, 28
        %v2345 = vpop.permute.xlu0 %2344
        %2346 = vrot.lane.b32.xlu0 %v2307, 28
        %v2347 = vpop.permute.xlu0 %2346
        %2348 = vrot.lane.b32.xlu0 %v2308, 28
        %v2349 = vpop.permute.xlu0 %2348
        %2350 = vrot.lane.b32.xlu0 %v2309, 28
        %v2351 = vpop.permute.xlu0 %2350
        %2352 = vrot.lane.b32.xlu0 %v2310, 28
        %v2353 = vpop.permute.xlu0 %2352
        %2354 = vrot.lane.b32.xlu0 %v2311, 28
        %v2355 = vpop.permute.xlu0 %2354
        %2356 = vrot.lane.b32.xlu0 %v2312, 28
        %v2357 = vpop.permute.xlu0 %2356
        %2358 = vrot.lane.b32.xlu0 %v2313, 28
        %v2359 = vpop.permute.xlu0 %2358
        %2360 = vrot.lane.b32.xlu0 %v2314, 28
        %v2361 = vpop.permute.xlu0 %2360
        %2362 = vrot.lane.b32.xlu0 %v2315, 28
        %v2363 = vpop.permute.xlu0 %2362
        %2364 = vrot.lane.b32.xlu0 %v2316, 28
        %v2365 = vpop.permute.xlu0 %2364
        %2366 = vrot.lane.b32.xlu0 %v2317, 28
        %v2367 = vpop.permute.xlu0 %2366
        %2368 = vrot.lane.b32.xlu0 %v2318, 28
        %v2369 = vpop.permute.xlu0 %2368
        %2370 = vrot.lane.b32.xlu0 %v2319, 28
        %v2371 = vpop.permute.xlu0 %2370
        %2372 = vrot.lane.b32.xlu0 %v2320, 28
        %v2373 = vpop.permute.xlu0 %2372
        %2374 = vrot.lane.b32.xlu0 %v2321, 28
        %v2375 = vpop.permute.xlu0 %2374
        %2376 = vrot.lane.b32.xlu0 %v2322, 28
        %v2377 = vpop.permute.xlu0 %2376
        %2378 = vrot.lane.b32.xlu0 %v2323, 28
        %v2379 = vpop.permute.xlu0 %2378
        %2380 = vrot.lane.b32.xlu0 %v2324, 28
        %v2381 = vpop.permute.xlu0 %2380
        %2382 = vrot.lane.b32.xlu0 %v2325, 28
        %v2383 = vpop.permute.xlu0 %2382
        %2384 = vrot.lane.b32.xlu0 %v2326, 28
        %v2385 = vpop.permute.xlu0 %2384
        %2386 = vrot.lane.b32.xlu0 %v2327, 28
        %v2387 = vpop.permute.xlu0 %2386
        %2388 = vrot.lane.b32.xlu0 %v2328, 28
        %v2389 = vpop.permute.xlu0 %2388
        %2390 = vrot.lane.b32.xlu0 %v2329, 28
        %v2391 = vpop.permute.xlu0 %2390
        %2392 = vrot.lane.b32.xlu0 %v2330, 28
        %v2393 = vpop.permute.xlu0 %2392
        %2394 = vrot.lane.b32.xlu0 %v2331, 28
        %v2395 = vpop.permute.xlu0 %2394
        %vm2428 = vcmask 257248
        %2429 = vst.msk [vmem:[#allocation3] sm:$0xf] %vm2428, %v2333
        %2430 = vst.msk [vmem:[#allocation3 + $0x4] sm:$0xf] %vm2428, %v2335
        %2431 = vst.msk [vmem:[#allocation3 + $0x8] sm:$0xf] %vm2428, %v2337
        %2432 = vst.msk [vmem:[#allocation3 + $0xc] sm:$0xf] %vm2428, %v2339
        %2433 = vst.msk [vmem:[#allocation3 + $0x10] sm:$0xf] %vm2428, %v2341
        %2434 = vst.msk [vmem:[#allocation3 + $0x14] sm:$0xf] %vm2428, %v2343
        %2435 = vst.msk [vmem:[#allocation3 + $0x18] sm:$0xf] %vm2428, %v2345
        %2436 = vst.msk [vmem:[#allocation3 + $0x1c] sm:$0xf] %vm2428, %v2347
        %2437 = vst.msk [vmem:[#allocation3 + $0x20] sm:$0xf] %vm2428, %v2349
        %2438 = vst.msk [vmem:[#allocation3 + $0x24] sm:$0xf] %vm2428, %v2351
        %2439 = vst.msk [vmem:[#allocation3 + $0x28] sm:$0xf] %vm2428, %v2353
        %2440 = vst.msk [vmem:[#allocation3 + $0x2c] sm:$0xf] %vm2428, %v2355
        %2441 = vst.msk [vmem:[#allocation3 + $0x30] sm:$0xf] %vm2428, %v2357
        %2442 = vst.msk [vmem:[#allocation3 + $0x34] sm:$0xf] %vm2428, %v2359
        %2443 = vst.msk [vmem:[#allocation3 + $0x38] sm:$0xf] %vm2428, %v2361
        %2444 = vst.msk [vmem:[#allocation3 + $0x3c] sm:$0xf] %vm2428, %v2363
        %2445 = vst.msk [vmem:[#allocation3 + $0x40] sm:$0xf] %vm2428, %v2365
        %2446 = vst.msk [vmem:[#allocation3 + $0x44] sm:$0xf] %vm2428, %v2367
        %2447 = vst.msk [vmem:[#allocation3 + $0x48] sm:$0xf] %vm2428, %v2369
        %2448 = vst.msk [vmem:[#allocation3 + $0x4c] sm:$0xf] %vm2428, %v2371
        %2449 = vst.msk [vmem:[#allocation3 + $0x50] sm:$0xf] %vm2428, %v2373
        %2450 = vst.msk [vmem:[#allocation3 + $0x54] sm:$0xf] %vm2428, %v2375
        %2451 = vst.msk [vmem:[#allocation3 + $0x58] sm:$0xf] %vm2428, %v2377
        %2452 = vst.msk [vmem:[#allocation3 + $0x5c] sm:$0xf] %vm2428, %v2379
        %2453 = vst.msk [vmem:[#allocation3 + $0x60] sm:$0xf] %vm2428, %v2381
        %2454 = vst.msk [vmem:[#allocation3 + $0x64] sm:$0xf] %vm2428, %v2383
        %2455 = vst.msk [vmem:[#allocation3 + $0x68] sm:$0xf] %vm2428, %v2385
        %2456 = vst.msk [vmem:[#allocation3 + $0x6c] sm:$0xf] %vm2428, %v2387
        %2457 = vst.msk [vmem:[#allocation3 + $0x70] sm:$0xf] %vm2428, %v2389
        %2458 = vst.msk [vmem:[#allocation3 + $0x74] sm:$0xf] %vm2428, %v2391
        %2459 = vst.msk [vmem:[#allocation3 + $0x78] sm:$0xf] %vm2428, %v2393
        %2460 = vst.msk [vmem:[#allocation3 + $0x7c] sm:$0xf] %vm2428, %v2395
        %v2461 = vld [vmem:[%s1946 + $0x9] sm:$0xff]
        %v2462 = vld [vmem:[%s1946 + $0x11] sm:$0xff]
        %v2463 = vld [vmem:[%s1946 + $0x29] sm:$0xff]
        %v2464 = vld [vmem:[%s1946 + $0x31] sm:$0xff]
        %v2465 = vld [vmem:[%s1946 + $0x49] sm:$0xff]
        %v2466 = vld [vmem:[%s1946 + $0x51] sm:$0xff]
        %v2467 = vld [vmem:[%s1946 + $0x69] sm:$0xff]
        %v2468 = vld [vmem:[%s1946 + $0x71] sm:$0xff]
        %v2469 = vld [vmem:[%s1946 + $0x89] sm:$0xff]
        %v2470 = vld [vmem:[%s1946 + $0x91] sm:$0xff]
        %v2471 = vld [vmem:[%s1946 + $0xa9] sm:$0xff]
        %v2472 = vld [vmem:[%s1946 + $0xb1] sm:$0xff]
        %v2473 = vld [vmem:[%s1946 + $0xc9] sm:$0xff]
        %v2474 = vld [vmem:[%s1946 + $0xd1] sm:$0xff]
        %v2475 = vld [vmem:[%s1946 + $0xe9] sm:$0xff]
        %v2476 = vld [vmem:[%s1946 + $0xf1] sm:$0xff]
        %v2477 = vld [vmem:[%s1946 + $0x109] sm:$0xff]
        %v2478 = vld [vmem:[%s1946 + $0x111] sm:$0xff]
        %v2479 = vld [vmem:[%s1946 + $0x129] sm:$0xff]
        %v2480 = vld [vmem:[%s1946 + $0x131] sm:$0xff]
        %v2481 = vld [vmem:[%s1946 + $0x149] sm:$0xff]
        %v2482 = vld [vmem:[%s1946 + $0x151] sm:$0xff]
        %v2483 = vld [vmem:[%s1946 + $0x169] sm:$0xff]
        %v2484 = vld [vmem:[%s1946 + $0x171] sm:$0xff]
        %v2485 = vld [vmem:[%s1946 + $0x189] sm:$0xff]
        %v2486 = vld [vmem:[%s1946 + $0x191] sm:$0xff]
        %v2487 = vld [vmem:[%s1946 + $0x1a9] sm:$0xff]
        %v2488 = vld [vmem:[%s1946 + $0x1b1] sm:$0xff]
        %v2489 = vld [vmem:[%s1946 + $0x1c9] sm:$0xff]
        %v2490 = vld [vmem:[%s1946 + $0x1d1] sm:$0xff]
        %v2491 = vld [vmem:[%s1946 + $0x1e9] sm:$0xff]
        %v2492 = vld [vmem:[%s1946 + $0x1f1] sm:$0xff]
        %v2493 = vpack.c.bf16 %v2462, %v2461
        %v2494 = vpack.c.bf16 %v2464, %v2463
        %v2495 = vpack.c.bf16 %v2466, %v2465
        %v2496 = vpack.c.bf16 %v2468, %v2467
        %v2497 = vpack.c.bf16 %v2470, %v2469
        %v2498 = vpack.c.bf16 %v2472, %v2471
        %v2499 = vpack.c.bf16 %v2474, %v2473
        %v2500 = vpack.c.bf16 %v2476, %v2475
        %v2501 = vpack.c.bf16 %v2478, %v2477
        %v2502 = vpack.c.bf16 %v2480, %v2479
        %v2503 = vpack.c.bf16 %v2482, %v2481
        %v2504 = vpack.c.bf16 %v2484, %v2483
        %v2505 = vpack.c.bf16 %v2486, %v2485
        %v2506 = vpack.c.bf16 %v2488, %v2487
        %v2507 = vpack.c.bf16 %v2490, %v2489
        %v2508 = vpack.c.bf16 %v2492, %v2491
        %v2525 = vunpack.c.l.b16 %v2493
        %v2526 = vunpack.c.h.b16 %v2493
        %v2527 = vunpack.c.l.b16 %v2494
        %v2528 = vunpack.c.h.b16 %v2494
        %v2529 = vunpack.c.l.b16 %v2495
        %v2530 = vunpack.c.h.b16 %v2495
        %v2531 = vunpack.c.l.b16 %v2496
        %v2532 = vunpack.c.h.b16 %v2496
        %v2533 = vunpack.c.l.b16 %v2497
        %v2534 = vunpack.c.h.b16 %v2497
        %v2535 = vunpack.c.l.b16 %v2498
        %v2536 = vunpack.c.h.b16 %v2498
        %v2537 = vunpack.c.l.b16 %v2499
        %v2538 = vunpack.c.h.b16 %v2499
        %v2539 = vunpack.c.l.b16 %v2500
        %v2540 = vunpack.c.h.b16 %v2500
        %v2541 = vunpack.c.l.b16 %v2501
        %v2542 = vunpack.c.h.b16 %v2501
        %v2543 = vunpack.c.l.b16 %v2502
        %v2544 = vunpack.c.h.b16 %v2502
        %v2545 = vunpack.c.l.b16 %v2503
        %v2546 = vunpack.c.h.b16 %v2503
        %v2547 = vunpack.c.l.b16 %v2504
        %v2548 = vunpack.c.h.b16 %v2504
        %v2549 = vunpack.c.l.b16 %v2505
        %v2550 = vunpack.c.h.b16 %v2505
        %v2551 = vunpack.c.l.b16 %v2506
        %v2552 = vunpack.c.h.b16 %v2506
        %v2553 = vunpack.c.l.b16 %v2507
        %v2554 = vunpack.c.h.b16 %v2507
        %v2555 = vunpack.c.l.b16 %v2508
        %v2556 = vunpack.c.h.b16 %v2508
        %v2557 = vpack.c.b16 %v2525, %v2525
        %v2558 = vpack.c.b16 %v2526, %v2526
        %v2559 = vpack.c.b16 %v2527, %v2527
        %v2560 = vpack.c.b16 %v2528, %v2528
        %v2561 = vpack.c.b16 %v2529, %v2529
        %v2562 = vpack.c.b16 %v2530, %v2530
        %v2563 = vpack.c.b16 %v2531, %v2531
        %v2564 = vpack.c.b16 %v2532, %v2532
        %v2565 = vpack.c.b16 %v2533, %v2533
        %v2566 = vpack.c.b16 %v2534, %v2534
        %v2567 = vpack.c.b16 %v2535, %v2535
        %v2568 = vpack.c.b16 %v2536, %v2536
        %v2569 = vpack.c.b16 %v2537, %v2537
        %v2570 = vpack.c.b16 %v2538, %v2538
        %v2571 = vpack.c.b16 %v2539, %v2539
        %v2572 = vpack.c.b16 %v2540, %v2540
        %v2573 = vpack.c.b16 %v2541, %v2541
        %v2574 = vpack.c.b16 %v2542, %v2542
        %v2575 = vpack.c.b16 %v2543, %v2543
        %v2576 = vpack.c.b16 %v2544, %v2544
        %v2577 = vpack.c.b16 %v2545, %v2545
        %v2578 = vpack.c.b16 %v2546, %v2546
        %v2579 = vpack.c.b16 %v2547, %v2547
        %v2580 = vpack.c.b16 %v2548, %v2548
        %v2581 = vpack.c.b16 %v2549, %v2549
        %v2582 = vpack.c.b16 %v2550, %v2550
        %v2583 = vpack.c.b16 %v2551, %v2551
        %v2584 = vpack.c.b16 %v2552, %v2552
        %v2585 = vpack.c.b16 %v2553, %v2553
        %v2586 = vpack.c.b16 %v2554, %v2554
        %v2587 = vpack.c.b16 %v2555, %v2555
        %v2588 = vpack.c.b16 %v2556, %v2556
        %2589 = vrot.lane.b32.xlu0 %v2557, 32
        %v2590 = vpop.permute.xlu0 %2589
        %2591 = vrot.lane.b32.xlu0 %v2558, 32
        %v2592 = vpop.permute.xlu0 %2591
        %2593 = vrot.lane.b32.xlu0 %v2559, 32
        %v2594 = vpop.permute.xlu0 %2593
        %2595 = vrot.lane.b32.xlu0 %v2560, 32
        %v2596 = vpop.permute.xlu0 %2595
        %2597 = vrot.lane.b32.xlu0 %v2561, 32
        %v2598 = vpop.permute.xlu0 %2597
        %2599 = vrot.lane.b32.xlu0 %v2562, 32
        %v2600 = vpop.permute.xlu0 %2599
        %2601 = vrot.lane.b32.xlu0 %v2563, 32
        %v2602 = vpop.permute.xlu0 %2601
        %2603 = vrot.lane.b32.xlu0 %v2564, 32
        %v2604 = vpop.permute.xlu0 %2603
        %2605 = vrot.lane.b32.xlu0 %v2565, 32
        %v2606 = vpop.permute.xlu0 %2605
        %2607 = vrot.lane.b32.xlu0 %v2566, 32
        %v2608 = vpop.permute.xlu0 %2607
        %2609 = vrot.lane.b32.xlu0 %v2567, 32
        %v2610 = vpop.permute.xlu0 %2609
        %2611 = vrot.lane.b32.xlu0 %v2568, 32
        %v2612 = vpop.permute.xlu0 %2611
        %2613 = vrot.lane.b32.xlu0 %v2569, 32
        %v2614 = vpop.permute.xlu0 %2613
        %2615 = vrot.lane.b32.xlu0 %v2570, 32
        %v2616 = vpop.permute.xlu0 %2615
        %2617 = vrot.lane.b32.xlu0 %v2571, 32
        %v2618 = vpop.permute.xlu0 %2617
        %2619 = vrot.lane.b32.xlu0 %v2572, 32
        %v2620 = vpop.permute.xlu0 %2619
        %2621 = vrot.lane.b32.xlu0 %v2573, 32
        %v2622 = vpop.permute.xlu0 %2621
        %2623 = vrot.lane.b32.xlu0 %v2574, 32
        %v2624 = vpop.permute.xlu0 %2623
        %2625 = vrot.lane.b32.xlu0 %v2575, 32
        %v2626 = vpop.permute.xlu0 %2625
        %2627 = vrot.lane.b32.xlu0 %v2576, 32
        %v2628 = vpop.permute.xlu0 %2627
        %2629 = vrot.lane.b32.xlu0 %v2577, 32
        %v2630 = vpop.permute.xlu0 %2629
        %2631 = vrot.lane.b32.xlu0 %v2578, 32
        %v2632 = vpop.permute.xlu0 %2631
        %2633 = vrot.lane.b32.xlu0 %v2579, 32
        %v2634 = vpop.permute.xlu0 %2633
        %2635 = vrot.lane.b32.xlu0 %v2580, 32
        %v2636 = vpop.permute.xlu0 %2635
        %2637 = vrot.lane.b32.xlu0 %v2581, 32
        %v2638 = vpop.permute.xlu0 %2637
        %2639 = vrot.lane.b32.xlu0 %v2582, 32
        %v2640 = vpop.permute.xlu0 %2639
        %2641 = vrot.lane.b32.xlu0 %v2583, 32
        %v2642 = vpop.permute.xlu0 %2641
        %2643 = vrot.lane.b32.xlu0 %v2584, 32
        %v2644 = vpop.permute.xlu0 %2643
        %2645 = vrot.lane.b32.xlu0 %v2585, 32
        %v2646 = vpop.permute.xlu0 %2645
        %2647 = vrot.lane.b32.xlu0 %v2586, 32
        %v2648 = vpop.permute.xlu0 %2647
        %2649 = vrot.lane.b32.xlu0 %v2587, 32
        %v2650 = vpop.permute.xlu0 %2649
        %2651 = vrot.lane.b32.xlu0 %v2588, 32
        %v2652 = vpop.permute.xlu0 %2651
        %vm2685 = vcmask 290048
        %2686 = vst.msk [vmem:[#allocation3] sm:$0xf] %vm2685, %v2590
        %2687 = vst.msk [vmem:[#allocation3 + $0x4] sm:$0xf] %vm2685, %v2592
        %2688 = vst.msk [vmem:[#allocation3 + $0x8] sm:$0xf] %vm2685, %v2594
        %2689 = vst.msk [vmem:[#allocation3 + $0xc] sm:$0xf] %vm2685, %v2596
        %2690 = vst.msk [vmem:[#allocation3 + $0x10] sm:$0xf] %vm2685, %v2598
        %2691 = vst.msk [vmem:[#allocation3 + $0x14] sm:$0xf] %vm2685, %v2600
        %2692 = vst.msk [vmem:[#allocation3 + $0x18] sm:$0xf] %vm2685, %v2602
        %2693 = vst.msk [vmem:[#allocation3 + $0x1c] sm:$0xf] %vm2685, %v2604
        %2694 = vst.msk [vmem:[#allocation3 + $0x20] sm:$0xf] %vm2685, %v2606
        %2695 = vst.msk [vmem:[#allocation3 + $0x24] sm:$0xf] %vm2685, %v2608
        %2696 = vst.msk [vmem:[#allocation3 + $0x28] sm:$0xf] %vm2685, %v2610
        %2697 = vst.msk [vmem:[#allocation3 + $0x2c] sm:$0xf] %vm2685, %v2612
        %2698 = vst.msk [vmem:[#allocation3 + $0x30] sm:$0xf] %vm2685, %v2614
        %2699 = vst.msk [vmem:[#allocation3 + $0x34] sm:$0xf] %vm2685, %v2616
        %2700 = vst.msk [vmem:[#allocation3 + $0x38] sm:$0xf] %vm2685, %v2618
        %2701 = vst.msk [vmem:[#allocation3 + $0x3c] sm:$0xf] %vm2685, %v2620
        %2702 = vst.msk [vmem:[#allocation3 + $0x40] sm:$0xf] %vm2685, %v2622
        %2703 = vst.msk [vmem:[#allocation3 + $0x44] sm:$0xf] %vm2685, %v2624
        %2704 = vst.msk [vmem:[#allocation3 + $0x48] sm:$0xf] %vm2685, %v2626
        %2705 = vst.msk [vmem:[#allocation3 + $0x4c] sm:$0xf] %vm2685, %v2628
        %2706 = vst.msk [vmem:[#allocation3 + $0x50] sm:$0xf] %vm2685, %v2630
        %2707 = vst.msk [vmem:[#allocation3 + $0x54] sm:$0xf] %vm2685, %v2632
        %2708 = vst.msk [vmem:[#allocation3 + $0x58] sm:$0xf] %vm2685, %v2634
        %2709 = vst.msk [vmem:[#allocation3 + $0x5c] sm:$0xf] %vm2685, %v2636
        %2710 = vst.msk [vmem:[#allocation3 + $0x60] sm:$0xf] %vm2685, %v2638
        %2711 = vst.msk [vmem:[#allocation3 + $0x64] sm:$0xf] %vm2685, %v2640
        %2712 = vst.msk [vmem:[#allocation3 + $0x68] sm:$0xf] %vm2685, %v2642
        %2713 = vst.msk [vmem:[#allocation3 + $0x6c] sm:$0xf] %vm2685, %v2644
        %2714 = vst.msk [vmem:[#allocation3 + $0x70] sm:$0xf] %vm2685, %v2646
        %2715 = vst.msk [vmem:[#allocation3 + $0x74] sm:$0xf] %vm2685, %v2648
        %2716 = vst.msk [vmem:[#allocation3 + $0x78] sm:$0xf] %vm2685, %v2650
        %2717 = vst.msk [vmem:[#allocation3 + $0x7c] sm:$0xf] %vm2685, %v2652
        %v2718 = vld [vmem:[#allocation3] sm:$0xf]
        %v2719 = vld [vmem:[#allocation3 + $0x4] sm:$0xf]
        %v2720 = vld [vmem:[#allocation3 + $0x8] sm:$0xf]
        %v2721 = vld [vmem:[#allocation3 + $0xc] sm:$0xf]
        %v2722 = vld [vmem:[#allocation3 + $0x10] sm:$0xf]
        %v2723 = vld [vmem:[#allocation3 + $0x14] sm:$0xf]
        %v2724 = vld [vmem:[#allocation3 + $0x18] sm:$0xf]
        %v2725 = vld [vmem:[#allocation3 + $0x1c] sm:$0xf]
        %v2726 = vld [vmem:[#allocation3 + $0x20] sm:$0xf]
        %v2727 = vld [vmem:[#allocation3 + $0x24] sm:$0xf]
        %v2728 = vld [vmem:[#allocation3 + $0x28] sm:$0xf]
        %v2729 = vld [vmem:[#allocation3 + $0x2c] sm:$0xf]
        %v2730 = vld [vmem:[#allocation3 + $0x30] sm:$0xf]
        %v2731 = vld [vmem:[#allocation3 + $0x34] sm:$0xf]
        %v2732 = vld [vmem:[#allocation3 + $0x38] sm:$0xf]
        %v2733 = vld [vmem:[#allocation3 + $0x3c] sm:$0xf]
        %v2734 = vld [vmem:[%s1] sm:$0xf]
        %v2735 = vld [vmem:[%s1 + $0x4] sm:$0xf]
        %v2736 = vld [vmem:[%s1 + $0x8] sm:$0xf]
        %v2737 = vld [vmem:[%s1 + $0xc] sm:$0xf]
        %v2738 = vld [vmem:[%s1 + $0x10] sm:$0x3]
        %v2739 = vld [vmem:[%s2] sm:$0x1]
        %v2741 = vlaneseq
        %v2742 = vshrl.u32 %v2741, 7
        %v2743 = vsub.s32 0, %v2742
        %v2744 = vrot.slane %v2739, %v2743
        %v2762 = vunpack.c.l.b16 %v2718
        %v2763 = vunpack.c.l.b16 %v2719
        %v2764 = vunpack.c.l.b16 %v2720
        %v2765 = vunpack.c.l.b16 %v2721
        %v2766 = vunpack.c.l.b16 %v2722
        %v2767 = vunpack.c.l.b16 %v2723
        %v2768 = vunpack.c.l.b16 %v2724
        %v2769 = vunpack.c.l.b16 %v2725
        %v2770 = vunpack.c.l.b16 %v2726
        %v2771 = vunpack.c.l.b16 %v2727
        %v2772 = vunpack.c.l.b16 %v2728
        %v2773 = vunpack.c.l.b16 %v2729
        %v2774 = vunpack.c.l.b16 %v2730
        %v2775 = vunpack.c.l.b16 %v2731
        %v2776 = vunpack.c.l.b16 %v2732
        %v2777 = vunpack.c.l.b16 %v2733
        %v2778 = vpack.c.b16 %v2763, %v2762
        %v2779 = vpack.c.b16 %v2765, %v2764
        %v2780 = vpack.c.b16 %v2767, %v2766
        %v2781 = vpack.c.b16 %v2769, %v2768
        %v2782 = vpack.c.b16 %v2771, %v2770
        %v2783 = vpack.c.b16 %v2773, %v2772
        %v2784 = vpack.c.b16 %v2775, %v2774
        %v2785 = vpack.c.b16 %v2777, %v2776
        %v2791 = vunpack.c.l.b16 %v2734
        %v2792 = vunpack.c.l.b16 %v2735
        %v2793 = vunpack.c.l.b16 %v2736
        %v2794 = vunpack.c.l.b16 %v2737
        %v2795 = vunpack.c.l.b16 %v2738
        %v2796 = vpack.c.b16 %v2792, %v2791
        %v2797 = vpack.c.b16 %v2794, %v2793
        %v2798 = vpack.c.b16 %v2795, %v2795
        %vm2801 = vcmask 293888
        %v2803 = vsel %vm2801, %v2778, 0
        %v2806 = vsel %vm2801, %v2779, 0
        %v2809 = vsel %vm2801, %v2780, 0
        %v2812 = vsel %vm2801, %v2781, 0
        %v2815 = vsel %vm2801, %v2782, 0
        %v2818 = vsel %vm2801, %v2783, 0
        %v2821 = vsel %vm2801, %v2784, 0
        %v2824 = vsel %vm2801, %v2785, 0
        %vm2826 = vcmask 1041408
        %v2828 = vsel %vm2826, %v2798, 0
        %2830 = vmatprep.subr.bf16.mxu0 0
        %2831 = vmatpush1.bf16.msra.mxu0 0
        %2832 = vmatprep.subr.bf16.mxu0 0
        %2833 = vmatpush1.bf16.msra.mxu0 0
        %2834 = vmatprep.subr.bf16.mxu0 0
        %2835 = vmatpush1.bf16.msra.mxu0 0
        %2836 = vmatprep.subr.bf16.mxu0 0
        %2837 = vmatpush1.bf16.msra.mxu0 0
        %2838 = vmatprep.subr.bf16.mxu0 0
        %2839 = vmatpush1.bf16.msra.mxu0 0
        %2840 = vmatprep.subr.bf16.mxu0 0
        %2841 = vmatpush1.bf16.msra.mxu0 %v2828
        %2842 = vmatprep.subr.bf16.mxu0 0
        %2843 = vmatpush1.bf16.msra.mxu0 %v2797
        %2844 = vmatprep.subr.bf16.mxu0 0
        %2845 = vmatpush1.bf16.msra.mxu0 %v2796
        %2846 = vmatprep.subr.bf16.mxu0 0
        %2847 = vmatpush2.bf16.msra.mxu0 0
        %2848 = vmatprep.subr.bf16.mxu0 0
        %2849 = vmatpush2.bf16.msra.mxu0 0
        %2850 = vmatprep.subr.bf16.mxu0 0
        %2851 = vmatpush2.bf16.msra.mxu0 0
        %2852 = vmatprep.subr.bf16.mxu0 0
        %2853 = vmatpush2.bf16.msra.mxu0 0
        %2854 = vmatprep.subr.bf16.mxu0 0
        %2855 = vmatpush2.bf16.msra.mxu0 0
        %2856 = vmatprep.subr.bf16.mxu0 0
        %2857 = vmatpush2.bf16.msra.mxu0 0
        %2858 = vmatprep.subr.bf16.mxu0 0
        %2859 = vmatpush2.bf16.msra.mxu0 0
        %2860 = vmatprep.subr.bf16.mxu0 0
        %2861 = vmatpush2.bf16.msra.mxu0 0
        %2862 = vmatprep.mubr.bf16.mxu0 0
        %2863 = vmatmul.mubr.bf16.gmra.mxu0 %v2803
        %v2864 = vpop.f32.mrf.mxu0
        %v2865 = vadd.f32 %v2744, %v2864
        %v2866 = vpop.f32.mrf.mxu0
        %v2867 = vpop.f32.mrf.mxu0
        %v2868 = vadd.f32 %v2744, %v2867
        %v2869 = vpop.f32.mrf.mxu0
        %2870 = vmatprep.mubr.bf16.mxu0 0
        %2871 = vmatmul.mubr.bf16.gmra.mxu0 %v2806
        %v2872 = vpop.f32.mrf.mxu0
        %v2873 = vadd.f32 %v2744, %v2872
        %v2874 = vpop.f32.mrf.mxu0
        %v2875 = vpop.f32.mrf.mxu0
        %v2876 = vadd.f32 %v2744, %v2875
        %v2877 = vpop.f32.mrf.mxu0
        %2878 = vmatprep.mubr.bf16.mxu0 0
        %2879 = vmatmul.mubr.bf16.gmra.mxu0 %v2809
        %v2880 = vpop.f32.mrf.mxu0
        %v2881 = vadd.f32 %v2744, %v2880
        %v2882 = vpop.f32.mrf.mxu0
        %v2883 = vpop.f32.mrf.mxu0
        %v2884 = vadd.f32 %v2744, %v2883
        %v2885 = vpop.f32.mrf.mxu0
        %2886 = vmatprep.mubr.bf16.mxu0 0
        %2887 = vmatmul.mubr.bf16.gmra.mxu0 %v2812
        %v2888 = vpop.f32.mrf.mxu0
        %v2889 = vadd.f32 %v2744, %v2888
        %v2890 = vpop.f32.mrf.mxu0
        %v2891 = vpop.f32.mrf.mxu0
        %v2892 = vadd.f32 %v2744, %v2891
        %v2893 = vpop.f32.mrf.mxu0
        %2894 = vmatprep.mubr.bf16.mxu0 0
        %2895 = vmatmul.mubr.bf16.gmra.mxu0 %v2815
        %v2896 = vpop.f32.mrf.mxu0
        %v2897 = vadd.f32 %v2744, %v2896
        %v2898 = vpop.f32.mrf.mxu0
        %v2899 = vpop.f32.mrf.mxu0
        %v2900 = vadd.f32 %v2744, %v2899
        %v2901 = vpop.f32.mrf.mxu0
        %2902 = vmatprep.mubr.bf16.mxu0 0
        %2903 = vmatmul.mubr.bf16.gmra.mxu0 %v2818
        %v2904 = vpop.f32.mrf.mxu0
        %v2905 = vadd.f32 %v2744, %v2904
        %v2906 = vpop.f32.mrf.mxu0
        %v2907 = vpop.f32.mrf.mxu0
        %v2908 = vadd.f32 %v2744, %v2907
        %v2909 = vpop.f32.mrf.mxu0
        %2910 = vmatprep.mubr.bf16.mxu0 0
        %2911 = vmatmul.mubr.bf16.gmra.mxu0 %v2821
        %v2912 = vpop.f32.mrf.mxu0
        %v2913 = vadd.f32 %v2744, %v2912
        %v2914 = vpop.f32.mrf.mxu0
        %v2915 = vpop.f32.mrf.mxu0
        %v2916 = vadd.f32 %v2744, %v2915
        %v2917 = vpop.f32.mrf.mxu0
        %2918 = vmatprep.mubr.bf16.mxu0 0
        %2919 = vmatmul.mubr.bf16.gmra.mxu0 %v2824
        %v2920 = vpop.f32.mrf.mxu0
        %v2921 = vadd.f32 %v2744, %v2920
        %v2922 = vpop.f32.mrf.mxu0
        %v2923 = vpop.f32.mrf.mxu0
        %v2924 = vadd.f32 %v2744, %v2923
        %v2925 = vpop.f32.mrf.mxu0
        %2926 = vdwg.mxu0
        %v2927 = vmax.f32 %v2865, 0.0
        %v2928 = vmax.f32 %v2868, 0.0
        %v2929 = vmax.f32 %v2873, 0.0
        %v2930 = vmax.f32 %v2876, 0.0
        %v2931 = vmax.f32 %v2881, 0.0
        %v2932 = vmax.f32 %v2884, 0.0
        %v2933 = vmax.f32 %v2889, 0.0
        %v2934 = vmax.f32 %v2892, 0.0
        %v2935 = vmax.f32 %v2897, 0.0
        %v2936 = vmax.f32 %v2900, 0.0
        %v2937 = vmax.f32 %v2905, 0.0
        %v2938 = vmax.f32 %v2908, 0.0
        %v2939 = vmax.f32 %v2913, 0.0
        %v2940 = vmax.f32 %v2916, 0.0
        %v2941 = vmax.f32 %v2921, 0.0
        %v2942 = vmax.f32 %v2924, 0.0
        %2943 = vst.msk [vmem:[%s370 + $0x8] sm:$0xff] %vm360, %v2927
        %2944 = vst.msk [vmem:[%s370 + $0x10] sm:$0xff] %vm360, %v2928
        %2945 = vst.msk [vmem:[%s370 + $0x28] sm:$0xff] %vm360, %v2929
        %2946 = vst.msk [vmem:[%s370 + $0x30] sm:$0xff] %vm360, %v2930
        %2947 = vst.msk [vmem:[%s370 + $0x48] sm:$0xff] %vm360, %v2931
        %2948 = vst.msk [vmem:[%s370 + $0x50] sm:$0xff] %vm360, %v2932
        %2949 = vst.msk [vmem:[%s370 + $0x68] sm:$0xff] %vm360, %v2933
        %2950 = vst.msk [vmem:[%s370 + $0x70] sm:$0xff] %vm360, %v2934
        %2951 = vst.msk [vmem:[%s370 + $0x88] sm:$0xff] %vm360, %v2935
        %2952 = vst.msk [vmem:[%s370 + $0x90] sm:$0xff] %vm360, %v2936
        %2953 = vst.msk [vmem:[%s370 + $0xa8] sm:$0xff] %vm360, %v2937
        %2954 = vst.msk [vmem:[%s370 + $0xb0] sm:$0xff] %vm360, %v2938
        %2955 = vst.msk [vmem:[%s370 + $0xc8] sm:$0xff] %vm360, %v2939
        %2956 = vst.msk [vmem:[%s370 + $0xd0] sm:$0xff] %vm360, %v2940
        %2957 = vst.msk [vmem:[%s370 + $0xe8] sm:$0xff] %vm360, %v2941
        %2958 = vst.msk [vmem:[%s370 + $0xf0] sm:$0xff] %vm360, %v2942
        %s2959 = scalar_lea.vmem [#allocation3], 64
        %v2960 = vld [vmem:[%s2959] sm:$0xf]
        %v2961 = vld [vmem:[%s2959 + $0x4] sm:$0xf]
        %v2962 = vld [vmem:[%s2959 + $0x8] sm:$0xf]
        %v2963 = vld [vmem:[%s2959 + $0xc] sm:$0xf]
        %v2964 = vld [vmem:[%s2959 + $0x10] sm:$0xf]
        %v2965 = vld [vmem:[%s2959 + $0x14] sm:$0xf]
        %v2966 = vld [vmem:[%s2959 + $0x18] sm:$0xf]
        %v2967 = vld [vmem:[%s2959 + $0x1c] sm:$0xf]
        %v2968 = vld [vmem:[%s2959 + $0x20] sm:$0xf]
        %v2969 = vld [vmem:[%s2959 + $0x24] sm:$0xf]
        %v2970 = vld [vmem:[%s2959 + $0x28] sm:$0xf]
        %v2971 = vld [vmem:[%s2959 + $0x2c] sm:$0xf]
        %v2972 = vld [vmem:[%s2959 + $0x30] sm:$0xf]
        %v2973 = vld [vmem:[%s2959 + $0x34] sm:$0xf]
        %v2974 = vld [vmem:[%s2959 + $0x38] sm:$0xf]
        %v2975 = vld [vmem:[%s2959 + $0x3c] sm:$0xf]
        %v2976 = vld [vmem:[%s1] sm:$0xf]
        %v2977 = vld [vmem:[%s1 + $0x4] sm:$0xf]
        %v2978 = vld [vmem:[%s1 + $0x8] sm:$0xf]
        %v2979 = vld [vmem:[%s1 + $0xc] sm:$0xf]
        %v2980 = vld [vmem:[%s1 + $0x10] sm:$0x3]
        %v2981 = vld [vmem:[%s2] sm:$0x1]
        %v2983 = vlaneseq
        %v2984 = vshrl.u32 %v2983, 7
        %v2985 = vsub.s32 0, %v2984
        %v2986 = vrot.slane %v2981, %v2985
        %v3004 = vunpack.c.l.b16 %v2960
        %v3005 = vunpack.c.l.b16 %v2961
        %v3006 = vunpack.c.l.b16 %v2962
        %v3007 = vunpack.c.l.b16 %v2963
        %v3008 = vunpack.c.l.b16 %v2964
        %v3009 = vunpack.c.l.b16 %v2965
        %v3010 = vunpack.c.l.b16 %v2966
        %v3011 = vunpack.c.l.b16 %v2967
        %v3012 = vunpack.c.l.b16 %v2968
        %v3013 = vunpack.c.l.b16 %v2969
        %v3014 = vunpack.c.l.b16 %v2970
        %v3015 = vunpack.c.l.b16 %v2971
        %v3016 = vunpack.c.l.b16 %v2972
        %v3017 = vunpack.c.l.b16 %v2973
        %v3018 = vunpack.c.l.b16 %v2974
        %v3019 = vunpack.c.l.b16 %v2975
        %v3020 = vpack.c.b16 %v3005, %v3004
        %v3021 = vpack.c.b16 %v3007, %v3006
        %v3022 = vpack.c.b16 %v3009, %v3008
        %v3023 = vpack.c.b16 %v3011, %v3010
        %v3024 = vpack.c.b16 %v3013, %v3012
        %v3025 = vpack.c.b16 %v3015, %v3014
        %v3026 = vpack.c.b16 %v3017, %v3016
        %v3027 = vpack.c.b16 %v3019, %v3018
        %v3033 = vunpack.c.l.b16 %v2976
        %v3034 = vunpack.c.l.b16 %v2977
        %v3035 = vunpack.c.l.b16 %v2978
        %v3036 = vunpack.c.l.b16 %v2979
        %v3037 = vunpack.c.l.b16 %v2980
        %v3038 = vpack.c.b16 %v3034, %v3033
        %v3039 = vpack.c.b16 %v3036, %v3035
        %v3040 = vpack.c.b16 %v3037, %v3037
        %v3044 = vsel %vm2801, %v3020, 0
        %v3047 = vsel %vm2801, %v3021, 0
        %v3050 = vsel %vm2801, %v3022, 0
        %v3053 = vsel %vm2801, %v3023, 0
        %v3056 = vsel %vm2801, %v3024, 0
        %v3059 = vsel %vm2801, %v3025, 0
        %v3062 = vsel %vm2801, %v3026, 0
        %v3065 = vsel %vm2801, %v3027, 0
        %v3068 = vsel %vm2826, %v3040, 0
        %3070 = vmatprep.subr.bf16.mxu0 0
        %3071 = vmatpush1.bf16.msra.mxu0 0
        %3072 = vmatprep.subr.bf16.mxu0 0
        %3073 = vmatpush1.bf16.msra.mxu0 0
        %3074 = vmatprep.subr.bf16.mxu0 0
        %3075 = vmatpush1.bf16.msra.mxu0 0
        %3076 = vmatprep.subr.bf16.mxu0 0
        %3077 = vmatpush1.bf16.msra.mxu0 0
        %3078 = vmatprep.subr.bf16.mxu0 0
        %3079 = vmatpush1.bf16.msra.mxu0 0
        %3080 = vmatprep.subr.bf16.mxu0 0
        %3081 = vmatpush1.bf16.msra.mxu0 %v3068
        %3082 = vmatprep.subr.bf16.mxu0 0
        %3083 = vmatpush1.bf16.msra.mxu0 %v3039
        %3084 = vmatprep.subr.bf16.mxu0 0
        %3085 = vmatpush1.bf16.msra.mxu0 %v3038
        %3086 = vmatprep.subr.bf16.mxu0 0
        %3087 = vmatpush2.bf16.msra.mxu0 0
        %3088 = vmatprep.subr.bf16.mxu0 0
        %3089 = vmatpush2.bf16.msra.mxu0 0
        %3090 = vmatprep.subr.bf16.mxu0 0
        %3091 = vmatpush2.bf16.msra.mxu0 0
        %3092 = vmatprep.subr.bf16.mxu0 0
        %3093 = vmatpush2.bf16.msra.mxu0 0
        %3094 = vmatprep.subr.bf16.mxu0 0
        %3095 = vmatpush2.bf16.msra.mxu0 0
        %3096 = vmatprep.subr.bf16.mxu0 0
        %3097 = vmatpush2.bf16.msra.mxu0 0
        %3098 = vmatprep.subr.bf16.mxu0 0
        %3099 = vmatpush2.bf16.msra.mxu0 0
        %3100 = vmatprep.subr.bf16.mxu0 0
        %3101 = vmatpush2.bf16.msra.mxu0 0
        %3102 = vmatprep.mubr.bf16.mxu0 0
        %3103 = vmatmul.mubr.bf16.gmra.mxu0 %v3044
        %v3104 = vpop.f32.mrf.mxu0
        %v3105 = vadd.f32 %v2986, %v3104
        %v3106 = vpop.f32.mrf.mxu0
        %v3107 = vpop.f32.mrf.mxu0
        %v3108 = vadd.f32 %v2986, %v3107
        %v3109 = vpop.f32.mrf.mxu0
        %3110 = vmatprep.mubr.bf16.mxu0 0
        %3111 = vmatmul.mubr.bf16.gmra.mxu0 %v3047
        %v3112 = vpop.f32.mrf.mxu0
        %v3113 = vadd.f32 %v2986, %v3112
        %v3114 = vpop.f32.mrf.mxu0
        %v3115 = vpop.f32.mrf.mxu0
        %v3116 = vadd.f32 %v2986, %v3115
        %v3117 = vpop.f32.mrf.mxu0
        %3118 = vmatprep.mubr.bf16.mxu0 0
        %3119 = vmatmul.mubr.bf16.gmra.mxu0 %v3050
        %v3120 = vpop.f32.mrf.mxu0
        %v3121 = vadd.f32 %v2986, %v3120
        %v3122 = vpop.f32.mrf.mxu0
        %v3123 = vpop.f32.mrf.mxu0
        %v3124 = vadd.f32 %v2986, %v3123
        %v3125 = vpop.f32.mrf.mxu0
        %3126 = vmatprep.mubr.bf16.mxu0 0
        %3127 = vmatmul.mubr.bf16.gmra.mxu0 %v3053
        %v3128 = vpop.f32.mrf.mxu0
        %v3129 = vadd.f32 %v2986, %v3128
        %v3130 = vpop.f32.mrf.mxu0
        %v3131 = vpop.f32.mrf.mxu0
        %v3132 = vadd.f32 %v2986, %v3131
        %v3133 = vpop.f32.mrf.mxu0
        %3134 = vmatprep.mubr.bf16.mxu0 0
        %3135 = vmatmul.mubr.bf16.gmra.mxu0 %v3056
        %v3136 = vpop.f32.mrf.mxu0
        %v3137 = vadd.f32 %v2986, %v3136
        %v3138 = vpop.f32.mrf.mxu0
        %v3139 = vpop.f32.mrf.mxu0
        %v3140 = vadd.f32 %v2986, %v3139
        %v3141 = vpop.f32.mrf.mxu0
        %3142 = vmatprep.mubr.bf16.mxu0 0
        %3143 = vmatmul.mubr.bf16.gmra.mxu0 %v3059
        %v3144 = vpop.f32.mrf.mxu0
        %v3145 = vadd.f32 %v2986, %v3144
        %v3146 = vpop.f32.mrf.mxu0
        %v3147 = vpop.f32.mrf.mxu0
        %v3148 = vadd.f32 %v2986, %v3147
        %v3149 = vpop.f32.mrf.mxu0
        %3150 = vmatprep.mubr.bf16.mxu0 0
        %3151 = vmatmul.mubr.bf16.gmra.mxu0 %v3062
        %v3152 = vpop.f32.mrf.mxu0
        %v3153 = vadd.f32 %v2986, %v3152
        %v3154 = vpop.f32.mrf.mxu0
        %v3155 = vpop.f32.mrf.mxu0
        %v3156 = vadd.f32 %v2986, %v3155
        %v3157 = vpop.f32.mrf.mxu0
        %3158 = vmatprep.mubr.bf16.mxu0 0
        %3159 = vmatmul.mubr.bf16.gmra.mxu0 %v3065
        %v3160 = vpop.f32.mrf.mxu0
        %v3161 = vadd.f32 %v2986, %v3160
        %v3162 = vpop.f32.mrf.mxu0
        %v3163 = vpop.f32.mrf.mxu0
        %v3164 = vadd.f32 %v2986, %v3163
        %v3165 = vpop.f32.mrf.mxu0
        %3166 = vdwg.mxu0
        %v3167 = vmax.f32 %v3105, 0.0
        %v3168 = vmax.f32 %v3108, 0.0
        %v3169 = vmax.f32 %v3113, 0.0
        %v3170 = vmax.f32 %v3116, 0.0
        %v3171 = vmax.f32 %v3121, 0.0
        %v3172 = vmax.f32 %v3124, 0.0
        %v3173 = vmax.f32 %v3129, 0.0
        %v3174 = vmax.f32 %v3132, 0.0
        %v3175 = vmax.f32 %v3137, 0.0
        %v3176 = vmax.f32 %v3140, 0.0
        %v3177 = vmax.f32 %v3145, 0.0
        %v3178 = vmax.f32 %v3148, 0.0
        %v3179 = vmax.f32 %v3153, 0.0
        %v3180 = vmax.f32 %v3156, 0.0
        %v3181 = vmax.f32 %v3161, 0.0
        %v3182 = vmax.f32 %v3164, 0.0
        %s3183 = scalar_lea.vmem [#allocation4], 288
        %3184 = vst.msk [vmem:[%s3183 + $0x8] sm:$0xff] %vm360, %v3167
        %3185 = vst.msk [vmem:[%s3183 + $0x10] sm:$0xff] %vm360, %v3168
        %3186 = vst.msk [vmem:[%s3183 + $0x28] sm:$0xff] %vm360, %v3169
        %3187 = vst.msk [vmem:[%s3183 + $0x30] sm:$0xff] %vm360, %v3170
        %3188 = vst.msk [vmem:[%s3183 + $0x48] sm:$0xff] %vm360, %v3171
        %3189 = vst.msk [vmem:[%s3183 + $0x50] sm:$0xff] %vm360, %v3172
        %3190 = vst.msk [vmem:[%s3183 + $0x68] sm:$0xff] %vm360, %v3173
        %3191 = vst.msk [vmem:[%s3183 + $0x70] sm:$0xff] %vm360, %v3174
        %3192 = vst.msk [vmem:[%s3183 + $0x88] sm:$0xff] %vm360, %v3175
        %3193 = vst.msk [vmem:[%s3183 + $0x90] sm:$0xff] %vm360, %v3176
        %3194 = vst.msk [vmem:[%s3183 + $0xa8] sm:$0xff] %vm360, %v3177
        %3195 = vst.msk [vmem:[%s3183 + $0xb0] sm:$0xff] %vm360, %v3178
        %3196 = vst.msk [vmem:[%s3183 + $0xc8] sm:$0xff] %vm360, %v3179
        %3197 = vst.msk [vmem:[%s3183 + $0xd0] sm:$0xff] %vm360, %v3180
        %3198 = vst.msk [vmem:[%s3183 + $0xe8] sm:$0xff] %vm360, %v3181
        %3199 = vst.msk [vmem:[%s3183 + $0xf0] sm:$0xff] %vm360, %v3182
        %v3200 = vld [vmem:[#allocation4 + $0x7] sm:$0xff]
        %v3201 = vld [vmem:[#allocation4 + $0xf] sm:$0xff]
        %v3202 = vld [vmem:[#allocation4 + $0x27] sm:$0xff]
        %v3203 = vld [vmem:[#allocation4 + $0x2f] sm:$0xff]
        %v3204 = vld [vmem:[#allocation4 + $0x47] sm:$0xff]
        %v3205 = vld [vmem:[#allocation4 + $0x4f] sm:$0xff]
        %v3206 = vld [vmem:[#allocation4 + $0x67] sm:$0xff]
        %v3207 = vld [vmem:[#allocation4 + $0x6f] sm:$0xff]
        %v3208 = vld [vmem:[#allocation4 + $0x87] sm:$0xff]
        %v3209 = vld [vmem:[#allocation4 + $0x8f] sm:$0xff]
        %v3210 = vld [vmem:[#allocation4 + $0xa7] sm:$0xff]
        %v3211 = vld [vmem:[#allocation4 + $0xaf] sm:$0xff]
        %v3212 = vld [vmem:[#allocation4 + $0xc7] sm:$0xff]
        %v3213 = vld [vmem:[#allocation4 + $0xcf] sm:$0xff]
        %v3214 = vld [vmem:[#allocation4 + $0xe7] sm:$0xff]
        %v3215 = vld [vmem:[#allocation4 + $0xef] sm:$0xff]
        %v3216 = vld [vmem:[#allocation4 + $0x107] sm:$0xff]
        %v3217 = vld [vmem:[#allocation4 + $0x10f] sm:$0xff]
        %v3218 = vld [vmem:[#allocation4 + $0x127] sm:$0xff]
        %v3219 = vld [vmem:[#allocation4 + $0x12f] sm:$0xff]
        %v3220 = vld [vmem:[#allocation4 + $0x147] sm:$0xff]
        %v3221 = vld [vmem:[#allocation4 + $0x14f] sm:$0xff]
        %v3222 = vld [vmem:[#allocation4 + $0x167] sm:$0xff]
        %v3223 = vld [vmem:[#allocation4 + $0x16f] sm:$0xff]
        %v3224 = vld [vmem:[#allocation4 + $0x187] sm:$0xff]
        %v3225 = vld [vmem:[#allocation4 + $0x18f] sm:$0xff]
        %v3226 = vld [vmem:[#allocation4 + $0x1a7] sm:$0xff]
        %v3227 = vld [vmem:[#allocation4 + $0x1af] sm:$0xff]
        %v3228 = vld [vmem:[#allocation4 + $0x1c7] sm:$0xff]
        %v3229 = vld [vmem:[#allocation4 + $0x1cf] sm:$0xff]
        %v3230 = vld [vmem:[#allocation4 + $0x1e7] sm:$0xff]
        %v3231 = vld [vmem:[#allocation4 + $0x1ef] sm:$0xff]
        %v3232 = vpack.c.bf16 %v3201, %v3200
        %v3233 = vpack.c.bf16 %v3203, %v3202
        %v3234 = vpack.c.bf16 %v3205, %v3204
        %v3235 = vpack.c.bf16 %v3207, %v3206
        %v3236 = vpack.c.bf16 %v3209, %v3208
        %v3237 = vpack.c.bf16 %v3211, %v3210
        %v3238 = vpack.c.bf16 %v3213, %v3212
        %v3239 = vpack.c.bf16 %v3215, %v3214
        %v3240 = vpack.c.bf16 %v3217, %v3216
        %v3241 = vpack.c.bf16 %v3219, %v3218
        %v3242 = vpack.c.bf16 %v3221, %v3220
        %v3243 = vpack.c.bf16 %v3223, %v3222
        %v3244 = vpack.c.bf16 %v3225, %v3224
        %v3245 = vpack.c.bf16 %v3227, %v3226
        %v3246 = vpack.c.bf16 %v3229, %v3228
        %v3247 = vpack.c.bf16 %v3231, %v3230
        %v3264 = vunpack.c.l.b16 %v3232
        %v3265 = vunpack.c.h.b16 %v3232
        %v3266 = vunpack.c.l.b16 %v3233
        %v3267 = vunpack.c.h.b16 %v3233
        %v3268 = vunpack.c.l.b16 %v3234
        %v3269 = vunpack.c.h.b16 %v3234
        %v3270 = vunpack.c.l.b16 %v3235
        %v3271 = vunpack.c.h.b16 %v3235
        %v3272 = vunpack.c.l.b16 %v3236
        %v3273 = vunpack.c.h.b16 %v3236
        %v3274 = vunpack.c.l.b16 %v3237
        %v3275 = vunpack.c.h.b16 %v3237
        %v3276 = vunpack.c.l.b16 %v3238
        %v3277 = vunpack.c.h.b16 %v3238
        %v3278 = vunpack.c.l.b16 %v3239
        %v3279 = vunpack.c.h.b16 %v3239
        %v3280 = vunpack.c.l.b16 %v3240
        %v3281 = vunpack.c.h.b16 %v3240
        %v3282 = vunpack.c.l.b16 %v3241
        %v3283 = vunpack.c.h.b16 %v3241
        %v3284 = vunpack.c.l.b16 %v3242
        %v3285 = vunpack.c.h.b16 %v3242
        %v3286 = vunpack.c.l.b16 %v3243
        %v3287 = vunpack.c.h.b16 %v3243
        %v3288 = vunpack.c.l.b16 %v3244
        %v3289 = vunpack.c.h.b16 %v3244
        %v3290 = vunpack.c.l.b16 %v3245
        %v3291 = vunpack.c.h.b16 %v3245
        %v3292 = vunpack.c.l.b16 %v3246
        %v3293 = vunpack.c.h.b16 %v3246
        %v3294 = vunpack.c.l.b16 %v3247
        %v3295 = vunpack.c.h.b16 %v3247
        %v3296 = vpack.c.b16 %v3264, %v3264
        %v3297 = vpack.c.b16 %v3265, %v3265
        %v3298 = vpack.c.b16 %v3266, %v3266
        %v3299 = vpack.c.b16 %v3267, %v3267
        %v3300 = vpack.c.b16 %v3268, %v3268
        %v3301 = vpack.c.b16 %v3269, %v3269
        %v3302 = vpack.c.b16 %v3270, %v3270
        %v3303 = vpack.c.b16 %v3271, %v3271
        %v3304 = vpack.c.b16 %v3272, %v3272
        %v3305 = vpack.c.b16 %v3273, %v3273
        %v3306 = vpack.c.b16 %v3274, %v3274
        %v3307 = vpack.c.b16 %v3275, %v3275
        %v3308 = vpack.c.b16 %v3276, %v3276
        %v3309 = vpack.c.b16 %v3277, %v3277
        %v3310 = vpack.c.b16 %v3278, %v3278
        %v3311 = vpack.c.b16 %v3279, %v3279
        %v3312 = vpack.c.b16 %v3280, %v3280
        %v3313 = vpack.c.b16 %v3281, %v3281
        %v3314 = vpack.c.b16 %v3282, %v3282
        %v3315 = vpack.c.b16 %v3283, %v3283
        %v3316 = vpack.c.b16 %v3284, %v3284
        %v3317 = vpack.c.b16 %v3285, %v3285
        %v3318 = vpack.c.b16 %v3286, %v3286
        %v3319 = vpack.c.b16 %v3287, %v3287
        %v3320 = vpack.c.b16 %v3288, %v3288
        %v3321 = vpack.c.b16 %v3289, %v3289
        %v3322 = vpack.c.b16 %v3290, %v3290
        %v3323 = vpack.c.b16 %v3291, %v3291
        %v3324 = vpack.c.b16 %v3292, %v3292
        %v3325 = vpack.c.b16 %v3293, %v3293
        %v3326 = vpack.c.b16 %v3294, %v3294
        %v3327 = vpack.c.b16 %v3295, %v3295
        %vm3360 = vcmask 125952
        %3361 = vst.msk [vmem:[#allocation5] sm:$0xf] %vm3360, %v3296
        %3362 = vst.msk [vmem:[#allocation5 + $0x8] sm:$0xf] %vm3360, %v3297
        %3363 = vst.msk [vmem:[#allocation5 + $0x10] sm:$0xf] %vm3360, %v3298
        %3364 = vst.msk [vmem:[#allocation5 + $0x18] sm:$0xf] %vm3360, %v3299
        %3365 = vst.msk [vmem:[#allocation5 + $0x20] sm:$0xf] %vm3360, %v3300
        %3366 = vst.msk [vmem:[#allocation5 + $0x28] sm:$0xf] %vm3360, %v3301
        %3367 = vst.msk [vmem:[#allocation5 + $0x30] sm:$0xf] %vm3360, %v3302
        %3368 = vst.msk [vmem:[#allocation5 + $0x38] sm:$0xf] %vm3360, %v3303
        %3369 = vst.msk [vmem:[#allocation5 + $0x40] sm:$0xf] %vm3360, %v3304
        %3370 = vst.msk [vmem:[#allocation5 + $0x48] sm:$0xf] %vm3360, %v3305
        %3371 = vst.msk [vmem:[#allocation5 + $0x50] sm:$0xf] %vm3360, %v3306
        %3372 = vst.msk [vmem:[#allocation5 + $0x58] sm:$0xf] %vm3360, %v3307
        %3373 = vst.msk [vmem:[#allocation5 + $0x60] sm:$0xf] %vm3360, %v3308
        %3374 = vst.msk [vmem:[#allocation5 + $0x68] sm:$0xf] %vm3360, %v3309
        %3375 = vst.msk [vmem:[#allocation5 + $0x70] sm:$0xf] %vm3360, %v3310
        %3376 = vst.msk [vmem:[#allocation5 + $0x78] sm:$0xf] %vm3360, %v3311
        %3377 = vst.msk [vmem:[#allocation5 + $0x80] sm:$0xf] %vm3360, %v3312
        %3378 = vst.msk [vmem:[#allocation5 + $0x88] sm:$0xf] %vm3360, %v3313
        %3379 = vst.msk [vmem:[#allocation5 + $0x90] sm:$0xf] %vm3360, %v3314
        %3380 = vst.msk [vmem:[#allocation5 + $0x98] sm:$0xf] %vm3360, %v3315
        %3381 = vst.msk [vmem:[#allocation5 + $0xa0] sm:$0xf] %vm3360, %v3316
        %3382 = vst.msk [vmem:[#allocation5 + $0xa8] sm:$0xf] %vm3360, %v3317
        %3383 = vst.msk [vmem:[#allocation5 + $0xb0] sm:$0xf] %vm3360, %v3318
        %3384 = vst.msk [vmem:[#allocation5 + $0xb8] sm:$0xf] %vm3360, %v3319
        %3385 = vst.msk [vmem:[#allocation5 + $0xc0] sm:$0xf] %vm3360, %v3320
        %3386 = vst.msk [vmem:[#allocation5 + $0xc8] sm:$0xf] %vm3360, %v3321
        %3387 = vst.msk [vmem:[#allocation5 + $0xd0] sm:$0xf] %vm3360, %v3322
        %3388 = vst.msk [vmem:[#allocation5 + $0xd8] sm:$0xf] %vm3360, %v3323
        %3389 = vst.msk [vmem:[#allocation5 + $0xe0] sm:$0xf] %vm3360, %v3324
        %3390 = vst.msk [vmem:[#allocation5 + $0xe8] sm:$0xf] %vm3360, %v3325
        %3391 = vst.msk [vmem:[#allocation5 + $0xf0] sm:$0xf] %vm3360, %v3326
        %3392 = vst.msk [vmem:[#allocation5 + $0xf8] sm:$0xf] %vm3360, %v3327
        %v3393 = vld [vmem:[#allocation4 + $0x8] sm:$0xff]
        %v3394 = vld [vmem:[#allocation4 + $0x10] sm:$0xff]
        %v3395 = vld [vmem:[#allocation4 + $0x28] sm:$0xff]
        %v3396 = vld [vmem:[#allocation4 + $0x30] sm:$0xff]
        %v3397 = vld [vmem:[#allocation4 + $0x48] sm:$0xff]
        %v3398 = vld [vmem:[#allocation4 + $0x50] sm:$0xff]
        %v3399 = vld [vmem:[#allocation4 + $0x68] sm:$0xff]
        %v3400 = vld [vmem:[#allocation4 + $0x70] sm:$0xff]
        %v3401 = vld [vmem:[#allocation4 + $0x88] sm:$0xff]
        %v3402 = vld [vmem:[#allocation4 + $0x90] sm:$0xff]
        %v3403 = vld [vmem:[#allocation4 + $0xa8] sm:$0xff]
        %v3404 = vld [vmem:[#allocation4 + $0xb0] sm:$0xff]
        %v3405 = vld [vmem:[#allocation4 + $0xc8] sm:$0xff]
        %v3406 = vld [vmem:[#allocation4 + $0xd0] sm:$0xff]
        %v3407 = vld [vmem:[#allocation4 + $0xe8] sm:$0xff]
        %v3408 = vld [vmem:[#allocation4 + $0xf0] sm:$0xff]
        %v3409 = vld [vmem:[#allocation4 + $0x108] sm:$0xff]
        %v3410 = vld [vmem:[#allocation4 + $0x110] sm:$0xff]
        %v3411 = vld [vmem:[#allocation4 + $0x128] sm:$0xff]
        %v3412 = vld [vmem:[#allocation4 + $0x130] sm:$0xff]
        %v3413 = vld [vmem:[#allocation4 + $0x148] sm:$0xff]
        %v3414 = vld [vmem:[#allocation4 + $0x150] sm:$0xff]
        %v3415 = vld [vmem:[#allocation4 + $0x168] sm:$0xff]
        %v3416 = vld [vmem:[#allocation4 + $0x170] sm:$0xff]
        %v3417 = vld [vmem:[#allocation4 + $0x188] sm:$0xff]
        %v3418 = vld [vmem:[#allocation4 + $0x190] sm:$0xff]
        %v3419 = vld [vmem:[#allocation4 + $0x1a8] sm:$0xff]
        %v3420 = vld [vmem:[#allocation4 + $0x1b0] sm:$0xff]
        %v3421 = vld [vmem:[#allocation4 + $0x1c8] sm:$0xff]
        %v3422 = vld [vmem:[#allocation4 + $0x1d0] sm:$0xff]
        %v3423 = vld [vmem:[#allocation4 + $0x1e8] sm:$0xff]
        %v3424 = vld [vmem:[#allocation4 + $0x1f0] sm:$0xff]
        %v3425 = vpack.c.bf16 %v3394, %v3393
        %v3426 = vpack.c.bf16 %v3396, %v3395
        %v3427 = vpack.c.bf16 %v3398, %v3397
        %v3428 = vpack.c.bf16 %v3400, %v3399
        %v3429 = vpack.c.bf16 %v3402, %v3401
        %v3430 = vpack.c.bf16 %v3404, %v3403
        %v3431 = vpack.c.bf16 %v3406, %v3405
        %v3432 = vpack.c.bf16 %v3408, %v3407
        %v3433 = vpack.c.bf16 %v3410, %v3409
        %v3434 = vpack.c.bf16 %v3412, %v3411
        %v3435 = vpack.c.bf16 %v3414, %v3413
        %v3436 = vpack.c.bf16 %v3416, %v3415
        %v3437 = vpack.c.bf16 %v3418, %v3417
        %v3438 = vpack.c.bf16 %v3420, %v3419
        %v3439 = vpack.c.bf16 %v3422, %v3421
        %v3440 = vpack.c.bf16 %v3424, %v3423
        %v3457 = vunpack.c.l.b16 %v3425
        %v3458 = vunpack.c.h.b16 %v3425
        %v3459 = vunpack.c.l.b16 %v3426
        %v3460 = vunpack.c.h.b16 %v3426
        %v3461 = vunpack.c.l.b16 %v3427
        %v3462 = vunpack.c.h.b16 %v3427
        %v3463 = vunpack.c.l.b16 %v3428
        %v3464 = vunpack.c.h.b16 %v3428
        %v3465 = vunpack.c.l.b16 %v3429
        %v3466 = vunpack.c.h.b16 %v3429
        %v3467 = vunpack.c.l.b16 %v3430
        %v3468 = vunpack.c.h.b16 %v3430
        %v3469 = vunpack.c.l.b16 %v3431
        %v3470 = vunpack.c.h.b16 %v3431
        %v3471 = vunpack.c.l.b16 %v3432
        %v3472 = vunpack.c.h.b16 %v3432
        %v3473 = vunpack.c.l.b16 %v3433
        %v3474 = vunpack.c.h.b16 %v3433
        %v3475 = vunpack.c.l.b16 %v3434
        %v3476 = vunpack.c.h.b16 %v3434
        %v3477 = vunpack.c.l.b16 %v3435
        %v3478 = vunpack.c.h.b16 %v3435
        %v3479 = vunpack.c.l.b16 %v3436
        %v3480 = vunpack.c.h.b16 %v3436
        %v3481 = vunpack.c.l.b16 %v3437
        %v3482 = vunpack.c.h.b16 %v3437
        %v3483 = vunpack.c.l.b16 %v3438
        %v3484 = vunpack.c.h.b16 %v3438
        %v3485 = vunpack.c.l.b16 %v3439
        %v3486 = vunpack.c.h.b16 %v3439
        %v3487 = vunpack.c.l.b16 %v3440
        %v3488 = vunpack.c.h.b16 %v3440
        %v3489 = vpack.c.b16 %v3457, %v3457
        %v3490 = vpack.c.b16 %v3458, %v3458
        %v3491 = vpack.c.b16 %v3459, %v3459
        %v3492 = vpack.c.b16 %v3460, %v3460
        %v3493 = vpack.c.b16 %v3461, %v3461
        %v3494 = vpack.c.b16 %v3462, %v3462
        %v3495 = vpack.c.b16 %v3463, %v3463
        %v3496 = vpack.c.b16 %v3464, %v3464
        %v3497 = vpack.c.b16 %v3465, %v3465
        %v3498 = vpack.c.b16 %v3466, %v3466
        %v3499 = vpack.c.b16 %v3467, %v3467
        %v3500 = vpack.c.b16 %v3468, %v3468
        %v3501 = vpack.c.b16 %v3469, %v3469
        %v3502 = vpack.c.b16 %v3470, %v3470
        %v3503 = vpack.c.b16 %v3471, %v3471
        %v3504 = vpack.c.b16 %v3472, %v3472
        %v3505 = vpack.c.b16 %v3473, %v3473
        %v3506 = vpack.c.b16 %v3474, %v3474
        %v3507 = vpack.c.b16 %v3475, %v3475
        %v3508 = vpack.c.b16 %v3476, %v3476
        %v3509 = vpack.c.b16 %v3477, %v3477
        %v3510 = vpack.c.b16 %v3478, %v3478
        %v3511 = vpack.c.b16 %v3479, %v3479
        %v3512 = vpack.c.b16 %v3480, %v3480
        %v3513 = vpack.c.b16 %v3481, %v3481
        %v3514 = vpack.c.b16 %v3482, %v3482
        %v3515 = vpack.c.b16 %v3483, %v3483
        %v3516 = vpack.c.b16 %v3484, %v3484
        %v3517 = vpack.c.b16 %v3485, %v3485
        %v3518 = vpack.c.b16 %v3486, %v3486
        %v3519 = vpack.c.b16 %v3487, %v3487
        %v3520 = vpack.c.b16 %v3488, %v3488
        %3521 = vrot.lane.b32.xlu0 %v3489, 16
        %v3522 = vpop.permute.xlu0 %3521
        %3523 = vrot.lane.b32.xlu0 %v3490, 16
        %v3524 = vpop.permute.xlu0 %3523
        %3525 = vrot.lane.b32.xlu0 %v3491, 16
        %v3526 = vpop.permute.xlu0 %3525
        %3527 = vrot.lane.b32.xlu0 %v3492, 16
        %v3528 = vpop.permute.xlu0 %3527
        %3529 = vrot.lane.b32.xlu0 %v3493, 16
        %v3530 = vpop.permute.xlu0 %3529
        %3531 = vrot.lane.b32.xlu0 %v3494, 16
        %v3532 = vpop.permute.xlu0 %3531
        %3533 = vrot.lane.b32.xlu0 %v3495, 16
        %v3534 = vpop.permute.xlu0 %3533
        %3535 = vrot.lane.b32.xlu0 %v3496, 16
        %v3536 = vpop.permute.xlu0 %3535
        %3537 = vrot.lane.b32.xlu0 %v3497, 16
        %v3538 = vpop.permute.xlu0 %3537
        %3539 = vrot.lane.b32.xlu0 %v3498, 16
        %v3540 = vpop.permute.xlu0 %3539
        %3541 = vrot.lane.b32.xlu0 %v3499, 16
        %v3542 = vpop.permute.xlu0 %3541
        %3543 = vrot.lane.b32.xlu0 %v3500, 16
        %v3544 = vpop.permute.xlu0 %3543
        %3545 = vrot.lane.b32.xlu0 %v3501, 16
        %v3546 = vpop.permute.xlu0 %3545
        %3547 = vrot.lane.b32.xlu0 %v3502, 16
        %v3548 = vpop.permute.xlu0 %3547
        %3549 = vrot.lane.b32.xlu0 %v3503, 16
        %v3550 = vpop.permute.xlu0 %3549
        %3551 = vrot.lane.b32.xlu0 %v3504, 16
        %v3552 = vpop.permute.xlu0 %3551
        %3553 = vrot.lane.b32.xlu0 %v3505, 16
        %v3554 = vpop.permute.xlu0 %3553
        %3555 = vrot.lane.b32.xlu0 %v3506, 16
        %v3556 = vpop.permute.xlu0 %3555
        %3557 = vrot.lane.b32.xlu0 %v3507, 16
        %v3558 = vpop.permute.xlu0 %3557
        %3559 = vrot.lane.b32.xlu0 %v3508, 16
        %v3560 = vpop.permute.xlu0 %3559
        %3561 = vrot.lane.b32.xlu0 %v3509, 16
        %v3562 = vpop.permute.xlu0 %3561
        %3563 = vrot.lane.b32.xlu0 %v3510, 16
        %v3564 = vpop.permute.xlu0 %3563
        %3565 = vrot.lane.b32.xlu0 %v3511, 16
        %v3566 = vpop.permute.xlu0 %3565
        %3567 = vrot.lane.b32.xlu0 %v3512, 16
        %v3568 = vpop.permute.xlu0 %3567
        %3569 = vrot.lane.b32.xlu0 %v3513, 16
        %v3570 = vpop.permute.xlu0 %3569
        %3571 = vrot.lane.b32.xlu0 %v3514, 16
        %v3572 = vpop.permute.xlu0 %3571
        %3573 = vrot.lane.b32.xlu0 %v3515, 16
        %v3574 = vpop.permute.xlu0 %3573
        %3575 = vrot.lane.b32.xlu0 %v3516, 16
        %v3576 = vpop.permute.xlu0 %3575
        %3577 = vrot.lane.b32.xlu0 %v3517, 16
        %v3578 = vpop.permute.xlu0 %3577
        %3579 = vrot.lane.b32.xlu0 %v3518, 16
        %v3580 = vpop.permute.xlu0 %3579
        %3581 = vrot.lane.b32.xlu0 %v3519, 16
        %v3582 = vpop.permute.xlu0 %3581
        %3583 = vrot.lane.b32.xlu0 %v3520, 16
        %v3584 = vpop.permute.xlu0 %3583
        %vm3617 = vcmask 257152
        %3618 = vst.msk [vmem:[#allocation5] sm:$0xf] %vm3617, %v3522
        %3619 = vst.msk [vmem:[#allocation5 + $0x8] sm:$0xf] %vm3617, %v3524
        %3620 = vst.msk [vmem:[#allocation5 + $0x10] sm:$0xf] %vm3617, %v3526
        %3621 = vst.msk [vmem:[#allocation5 + $0x18] sm:$0xf] %vm3617, %v3528
        %3622 = vst.msk [vmem:[#allocation5 + $0x20] sm:$0xf] %vm3617, %v3530
        %3623 = vst.msk [vmem:[#allocation5 + $0x28] sm:$0xf] %vm3617, %v3532
        %3624 = vst.msk [vmem:[#allocation5 + $0x30] sm:$0xf] %vm3617, %v3534
        %3625 = vst.msk [vmem:[#allocation5 + $0x38] sm:$0xf] %vm3617, %v3536
        %3626 = vst.msk [vmem:[#allocation5 + $0x40] sm:$0xf] %vm3617, %v3538
        %3627 = vst.msk [vmem:[#allocation5 + $0x48] sm:$0xf] %vm3617, %v3540
        %3628 = vst.msk [vmem:[#allocation5 + $0x50] sm:$0xf] %vm3617, %v3542
        %3629 = vst.msk [vmem:[#allocation5 + $0x58] sm:$0xf] %vm3617, %v3544
        %3630 = vst.msk [vmem:[#allocation5 + $0x60] sm:$0xf] %vm3617, %v3546
        %3631 = vst.msk [vmem:[#allocation5 + $0x68] sm:$0xf] %vm3617, %v3548
        %3632 = vst.msk [vmem:[#allocation5 + $0x70] sm:$0xf] %vm3617, %v3550
        %3633 = vst.msk [vmem:[#allocation5 + $0x78] sm:$0xf] %vm3617, %v3552
        %3634 = vst.msk [vmem:[#allocation5 + $0x80] sm:$0xf] %vm3617, %v3554
        %3635 = vst.msk [vmem:[#allocation5 + $0x88] sm:$0xf] %vm3617, %v3556
        %3636 = vst.msk [vmem:[#allocation5 + $0x90] sm:$0xf] %vm3617, %v3558
        %3637 = vst.msk [vmem:[#allocation5 + $0x98] sm:$0xf] %vm3617, %v3560
        %3638 = vst.msk [vmem:[#allocation5 + $0xa0] sm:$0xf] %vm3617, %v3562
        %3639 = vst.msk [vmem:[#allocation5 + $0xa8] sm:$0xf] %vm3617, %v3564
        %3640 = vst.msk [vmem:[#allocation5 + $0xb0] sm:$0xf] %vm3617, %v3566
        %3641 = vst.msk [vmem:[#allocation5 + $0xb8] sm:$0xf] %vm3617, %v3568
        %3642 = vst.msk [vmem:[#allocation5 + $0xc0] sm:$0xf] %vm3617, %v3570
        %3643 = vst.msk [vmem:[#allocation5 + $0xc8] sm:$0xf] %vm3617, %v3572
        %3644 = vst.msk [vmem:[#allocation5 + $0xd0] sm:$0xf] %vm3617, %v3574
        %3645 = vst.msk [vmem:[#allocation5 + $0xd8] sm:$0xf] %vm3617, %v3576
        %3646 = vst.msk [vmem:[#allocation5 + $0xe0] sm:$0xf] %vm3617, %v3578
        %3647 = vst.msk [vmem:[#allocation5 + $0xe8] sm:$0xf] %vm3617, %v3580
        %3648 = vst.msk [vmem:[#allocation5 + $0xf0] sm:$0xf] %vm3617, %v3582
        %3649 = vst.msk [vmem:[#allocation5 + $0xf8] sm:$0xf] %vm3617, %v3584
        %v3650 = vld [vmem:[#allocation4 + $0x9] sm:$0xff]
        %v3651 = vld [vmem:[#allocation4 + $0x11] sm:$0xff]
        %v3652 = vld [vmem:[#allocation4 + $0x29] sm:$0xff]
        %v3653 = vld [vmem:[#allocation4 + $0x31] sm:$0xff]
        %v3654 = vld [vmem:[#allocation4 + $0x49] sm:$0xff]
        %v3655 = vld [vmem:[#allocation4 + $0x51] sm:$0xff]
        %v3656 = vld [vmem:[#allocation4 + $0x69] sm:$0xff]
        %v3657 = vld [vmem:[#allocation4 + $0x71] sm:$0xff]
        %v3658 = vld [vmem:[#allocation4 + $0x89] sm:$0xff]
        %v3659 = vld [vmem:[#allocation4 + $0x91] sm:$0xff]
        %v3660 = vld [vmem:[#allocation4 + $0xa9] sm:$0xff]
        %v3661 = vld [vmem:[#allocation4 + $0xb1] sm:$0xff]
        %v3662 = vld [vmem:[#allocation4 + $0xc9] sm:$0xff]
        %v3663 = vld [vmem:[#allocation4 + $0xd1] sm:$0xff]
        %v3664 = vld [vmem:[#allocation4 + $0xe9] sm:$0xff]
        %v3665 = vld [vmem:[#allocation4 + $0xf1] sm:$0xff]
        %v3666 = vld [vmem:[#allocation4 + $0x109] sm:$0xff]
        %v3667 = vld [vmem:[#allocation4 + $0x111] sm:$0xff]
        %v3668 = vld [vmem:[#allocation4 + $0x129] sm:$0xff]
        %v3669 = vld [vmem:[#allocation4 + $0x131] sm:$0xff]
        %v3670 = vld [vmem:[#allocation4 + $0x149] sm:$0xff]
        %v3671 = vld [vmem:[#allocation4 + $0x151] sm:$0xff]
        %v3672 = vld [vmem:[#allocation4 + $0x169] sm:$0xff]
        %v3673 = vld [vmem:[#allocation4 + $0x171] sm:$0xff]
        %v3674 = vld [vmem:[#allocation4 + $0x189] sm:$0xff]
        %v3675 = vld [vmem:[#allocation4 + $0x191] sm:$0xff]
        %v3676 = vld [vmem:[#allocation4 + $0x1a9] sm:$0xff]
        %v3677 = vld [vmem:[#allocation4 + $0x1b1] sm:$0xff]
        %v3678 = vld [vmem:[#allocation4 + $0x1c9] sm:$0xff]
        %v3679 = vld [vmem:[#allocation4 + $0x1d1] sm:$0xff]
        %v3680 = vld [vmem:[#allocation4 + $0x1e9] sm:$0xff]
        %v3681 = vld [vmem:[#allocation4 + $0x1f1] sm:$0xff]
        %v3682 = vpack.c.bf16 %v3651, %v3650
        %v3683 = vpack.c.bf16 %v3653, %v3652
        %v3684 = vpack.c.bf16 %v3655, %v3654
        %v3685 = vpack.c.bf16 %v3657, %v3656
        %v3686 = vpack.c.bf16 %v3659, %v3658
        %v3687 = vpack.c.bf16 %v3661, %v3660
        %v3688 = vpack.c.bf16 %v3663, %v3662
        %v3689 = vpack.c.bf16 %v3665, %v3664
        %v3690 = vpack.c.bf16 %v3667, %v3666
        %v3691 = vpack.c.bf16 %v3669, %v3668
        %v3692 = vpack.c.bf16 %v3671, %v3670
        %v3693 = vpack.c.bf16 %v3673, %v3672
        %v3694 = vpack.c.bf16 %v3675, %v3674
        %v3695 = vpack.c.bf16 %v3677, %v3676
        %v3696 = vpack.c.bf16 %v3679, %v3678
        %v3697 = vpack.c.bf16 %v3681, %v3680
        %v3714 = vunpack.c.l.b16 %v3682
        %v3715 = vunpack.c.h.b16 %v3682
        %v3716 = vunpack.c.l.b16 %v3683
        %v3717 = vunpack.c.h.b16 %v3683
        %v3718 = vunpack.c.l.b16 %v3684
        %v3719 = vunpack.c.h.b16 %v3684
        %v3720 = vunpack.c.l.b16 %v3685
        %v3721 = vunpack.c.h.b16 %v3685
        %v3722 = vunpack.c.l.b16 %v3686
        %v3723 = vunpack.c.h.b16 %v3686
        %v3724 = vunpack.c.l.b16 %v3687
        %v3725 = vunpack.c.h.b16 %v3687
        %v3726 = vunpack.c.l.b16 %v3688
        %v3727 = vunpack.c.h.b16 %v3688
        %v3728 = vunpack.c.l.b16 %v3689
        %v3729 = vunpack.c.h.b16 %v3689
        %v3730 = vunpack.c.l.b16 %v3690
        %v3731 = vunpack.c.h.b16 %v3690
        %v3732 = vunpack.c.l.b16 %v3691
        %v3733 = vunpack.c.h.b16 %v3691
        %v3734 = vunpack.c.l.b16 %v3692
        %v3735 = vunpack.c.h.b16 %v3692
        %v3736 = vunpack.c.l.b16 %v3693
        %v3737 = vunpack.c.h.b16 %v3693
        %v3738 = vunpack.c.l.b16 %v3694
        %v3739 = vunpack.c.h.b16 %v3694
        %v3740 = vunpack.c.l.b16 %v3695
        %v3741 = vunpack.c.h.b16 %v3695
        %v3742 = vunpack.c.l.b16 %v3696
        %v3743 = vunpack.c.h.b16 %v3696
        %v3744 = vunpack.c.l.b16 %v3697
        %v3745 = vunpack.c.h.b16 %v3697
        %v3746 = vpack.c.b16 %v3714, %v3714
        %v3747 = vpack.c.b16 %v3715, %v3715
        %v3748 = vpack.c.b16 %v3716, %v3716
        %v3749 = vpack.c.b16 %v3717, %v3717
        %v3750 = vpack.c.b16 %v3718, %v3718
        %v3751 = vpack.c.b16 %v3719, %v3719
        %v3752 = vpack.c.b16 %v3720, %v3720
        %v3753 = vpack.c.b16 %v3721, %v3721
        %v3754 = vpack.c.b16 %v3722, %v3722
        %v3755 = vpack.c.b16 %v3723, %v3723
        %v3756 = vpack.c.b16 %v3724, %v3724
        %v3757 = vpack.c.b16 %v3725, %v3725
        %v3758 = vpack.c.b16 %v3726, %v3726
        %v3759 = vpack.c.b16 %v3727, %v3727
        %v3760 = vpack.c.b16 %v3728, %v3728
        %v3761 = vpack.c.b16 %v3729, %v3729
        %v3762 = vpack.c.b16 %v3730, %v3730
        %v3763 = vpack.c.b16 %v3731, %v3731
        %v3764 = vpack.c.b16 %v3732, %v3732
        %v3765 = vpack.c.b16 %v3733, %v3733
        %v3766 = vpack.c.b16 %v3734, %v3734
        %v3767 = vpack.c.b16 %v3735, %v3735
        %v3768 = vpack.c.b16 %v3736, %v3736
        %v3769 = vpack.c.b16 %v3737, %v3737
        %v3770 = vpack.c.b16 %v3738, %v3738
        %v3771 = vpack.c.b16 %v3739, %v3739
        %v3772 = vpack.c.b16 %v3740, %v3740
        %v3773 = vpack.c.b16 %v3741, %v3741
        %v3774 = vpack.c.b16 %v3742, %v3742
        %v3775 = vpack.c.b16 %v3743, %v3743
        %v3776 = vpack.c.b16 %v3744, %v3744
        %v3777 = vpack.c.b16 %v3745, %v3745
        %3778 = vrot.lane.b32.xlu0 %v3746, 32
        %v3779 = vpop.permute.xlu0 %3778
        %3780 = vrot.lane.b32.xlu0 %v3747, 32
        %v3781 = vpop.permute.xlu0 %3780
        %3782 = vrot.lane.b32.xlu0 %v3748, 32
        %v3783 = vpop.permute.xlu0 %3782
        %3784 = vrot.lane.b32.xlu0 %v3749, 32
        %v3785 = vpop.permute.xlu0 %3784
        %3786 = vrot.lane.b32.xlu0 %v3750, 32
        %v3787 = vpop.permute.xlu0 %3786
        %3788 = vrot.lane.b32.xlu0 %v3751, 32
        %v3789 = vpop.permute.xlu0 %3788
        %3790 = vrot.lane.b32.xlu0 %v3752, 32
        %v3791 = vpop.permute.xlu0 %3790
        %3792 = vrot.lane.b32.xlu0 %v3753, 32
        %v3793 = vpop.permute.xlu0 %3792
        %3794 = vrot.lane.b32.xlu0 %v3754, 32
        %v3795 = vpop.permute.xlu0 %3794
        %3796 = vrot.lane.b32.xlu0 %v3755, 32
        %v3797 = vpop.permute.xlu0 %3796
        %3798 = vrot.lane.b32.xlu0 %v3756, 32
        %v3799 = vpop.permute.xlu0 %3798
        %3800 = vrot.lane.b32.xlu0 %v3757, 32
        %v3801 = vpop.permute.xlu0 %3800
        %3802 = vrot.lane.b32.xlu0 %v3758, 32
        %v3803 = vpop.permute.xlu0 %3802
        %3804 = vrot.lane.b32.xlu0 %v3759, 32
        %v3805 = vpop.permute.xlu0 %3804
        %3806 = vrot.lane.b32.xlu0 %v3760, 32
        %v3807 = vpop.permute.xlu0 %3806
        %3808 = vrot.lane.b32.xlu0 %v3761, 32
        %v3809 = vpop.permute.xlu0 %3808
        %3810 = vrot.lane.b32.xlu0 %v3762, 32
        %v3811 = vpop.permute.xlu0 %3810
        %3812 = vrot.lane.b32.xlu0 %v3763, 32
        %v3813 = vpop.permute.xlu0 %3812
        %3814 = vrot.lane.b32.xlu0 %v3764, 32
        %v3815 = vpop.permute.xlu0 %3814
        %3816 = vrot.lane.b32.xlu0 %v3765, 32
        %v3817 = vpop.permute.xlu0 %3816
        %3818 = vrot.lane.b32.xlu0 %v3766, 32
        %v3819 = vpop.permute.xlu0 %3818
        %3820 = vrot.lane.b32.xlu0 %v3767, 32
        %v3821 = vpop.permute.xlu0 %3820
        %3822 = vrot.lane.b32.xlu0 %v3768, 32
        %v3823 = vpop.permute.xlu0 %3822
        %3824 = vrot.lane.b32.xlu0 %v3769, 32
        %v3825 = vpop.permute.xlu0 %3824
        %3826 = vrot.lane.b32.xlu0 %v3770, 32
        %v3827 = vpop.permute.xlu0 %3826
        %3828 = vrot.lane.b32.xlu0 %v3771, 32
        %v3829 = vpop.permute.xlu0 %3828
        %3830 = vrot.lane.b32.xlu0 %v3772, 32
        %v3831 = vpop.permute.xlu0 %3830
        %3832 = vrot.lane.b32.xlu0 %v3773, 32
        %v3833 = vpop.permute.xlu0 %3832
        %3834 = vrot.lane.b32.xlu0 %v3774, 32
        %v3835 = vpop.permute.xlu0 %3834
        %3836 = vrot.lane.b32.xlu0 %v3775, 32
        %v3837 = vpop.permute.xlu0 %3836
        %3838 = vrot.lane.b32.xlu0 %v3776, 32
        %v3839 = vpop.permute.xlu0 %3838
        %3840 = vrot.lane.b32.xlu0 %v3777, 32
        %v3841 = vpop.permute.xlu0 %3840
        %vm3874 = vcmask 388352
        %3875 = vst.msk [vmem:[#allocation5] sm:$0xf] %vm3874, %v3779
        %3876 = vst.msk [vmem:[#allocation5 + $0x8] sm:$0xf] %vm3874, %v3781
        %3877 = vst.msk [vmem:[#allocation5 + $0x10] sm:$0xf] %vm3874, %v3783
        %3878 = vst.msk [vmem:[#allocation5 + $0x18] sm:$0xf] %vm3874, %v3785
        %3879 = vst.msk [vmem:[#allocation5 + $0x20] sm:$0xf] %vm3874, %v3787
        %3880 = vst.msk [vmem:[#allocation5 + $0x28] sm:$0xf] %vm3874, %v3789
        %3881 = vst.msk [vmem:[#allocation5 + $0x30] sm:$0xf] %vm3874, %v3791
        %3882 = vst.msk [vmem:[#allocation5 + $0x38] sm:$0xf] %vm3874, %v3793
        %3883 = vst.msk [vmem:[#allocation5 + $0x40] sm:$0xf] %vm3874, %v3795
        %3884 = vst.msk [vmem:[#allocation5 + $0x48] sm:$0xf] %vm3874, %v3797
        %3885 = vst.msk [vmem:[#allocation5 + $0x50] sm:$0xf] %vm3874, %v3799
        %3886 = vst.msk [vmem:[#allocation5 + $0x58] sm:$0xf] %vm3874, %v3801
        %3887 = vst.msk [vmem:[#allocation5 + $0x60] sm:$0xf] %vm3874, %v3803
        %3888 = vst.msk [vmem:[#allocation5 + $0x68] sm:$0xf] %vm3874, %v3805
        %3889 = vst.msk [vmem:[#allocation5 + $0x70] sm:$0xf] %vm3874, %v3807
        %3890 = vst.msk [vmem:[#allocation5 + $0x78] sm:$0xf] %vm3874, %v3809
        %3891 = vst.msk [vmem:[#allocation5 + $0x80] sm:$0xf] %vm3874, %v3811
        %3892 = vst.msk [vmem:[#allocation5 + $0x88] sm:$0xf] %vm3874, %v3813
        %3893 = vst.msk [vmem:[#allocation5 + $0x90] sm:$0xf] %vm3874, %v3815
        %3894 = vst.msk [vmem:[#allocation5 + $0x98] sm:$0xf] %vm3874, %v3817
        %3895 = vst.msk [vmem:[#allocation5 + $0xa0] sm:$0xf] %vm3874, %v3819
        %3896 = vst.msk [vmem:[#allocation5 + $0xa8] sm:$0xf] %vm3874, %v3821
        %3897 = vst.msk [vmem:[#allocation5 + $0xb0] sm:$0xf] %vm3874, %v3823
        %3898 = vst.msk [vmem:[#allocation5 + $0xb8] sm:$0xf] %vm3874, %v3825
        %3899 = vst.msk [vmem:[#allocation5 + $0xc0] sm:$0xf] %vm3874, %v3827
        %3900 = vst.msk [vmem:[#allocation5 + $0xc8] sm:$0xf] %vm3874, %v3829
        %3901 = vst.msk [vmem:[#allocation5 + $0xd0] sm:$0xf] %vm3874, %v3831
        %3902 = vst.msk [vmem:[#allocation5 + $0xd8] sm:$0xf] %vm3874, %v3833
        %3903 = vst.msk [vmem:[#allocation5 + $0xe0] sm:$0xf] %vm3874, %v3835
        %3904 = vst.msk [vmem:[#allocation5 + $0xe8] sm:$0xf] %vm3874, %v3837
        %3905 = vst.msk [vmem:[#allocation5 + $0xf0] sm:$0xf] %vm3874, %v3839
        %3906 = vst.msk [vmem:[#allocation5 + $0xf8] sm:$0xf] %vm3874, %v3841
        %v3907 = vld [vmem:[%s370 + $0x7] sm:$0xff]
        %v3908 = vld [vmem:[%s370 + $0xf] sm:$0xff]
        %v3909 = vld [vmem:[%s370 + $0x27] sm:$0xff]
        %v3910 = vld [vmem:[%s370 + $0x2f] sm:$0xff]
        %v3911 = vld [vmem:[%s370 + $0x47] sm:$0xff]
        %v3912 = vld [vmem:[%s370 + $0x4f] sm:$0xff]
        %v3913 = vld [vmem:[%s370 + $0x67] sm:$0xff]
        %v3914 = vld [vmem:[%s370 + $0x6f] sm:$0xff]
        %v3915 = vld [vmem:[%s370 + $0x87] sm:$0xff]
        %v3916 = vld [vmem:[%s370 + $0x8f] sm:$0xff]
        %v3917 = vld [vmem:[%s370 + $0xa7] sm:$0xff]
        %v3918 = vld [vmem:[%s370 + $0xaf] sm:$0xff]
        %v3919 = vld [vmem:[%s370 + $0xc7] sm:$0xff]
        %v3920 = vld [vmem:[%s370 + $0xcf] sm:$0xff]
        %v3921 = vld [vmem:[%s370 + $0xe7] sm:$0xff]
        %v3922 = vld [vmem:[%s370 + $0xef] sm:$0xff]
        %v3923 = vld [vmem:[%s370 + $0x107] sm:$0xff]
        %v3924 = vld [vmem:[%s370 + $0x10f] sm:$0xff]
        %v3925 = vld [vmem:[%s370 + $0x127] sm:$0xff]
        %v3926 = vld [vmem:[%s370 + $0x12f] sm:$0xff]
        %v3927 = vld [vmem:[%s370 + $0x147] sm:$0xff]
        %v3928 = vld [vmem:[%s370 + $0x14f] sm:$0xff]
        %v3929 = vld [vmem:[%s370 + $0x167] sm:$0xff]
        %v3930 = vld [vmem:[%s370 + $0x16f] sm:$0xff]
        %v3931 = vld [vmem:[%s370 + $0x187] sm:$0xff]
        %v3932 = vld [vmem:[%s370 + $0x18f] sm:$0xff]
        %v3933 = vld [vmem:[%s370 + $0x1a7] sm:$0xff]
        %v3934 = vld [vmem:[%s370 + $0x1af] sm:$0xff]
        %v3935 = vld [vmem:[%s370 + $0x1c7] sm:$0xff]
        %v3936 = vld [vmem:[%s370 + $0x1cf] sm:$0xff]
        %v3937 = vld [vmem:[%s370 + $0x1e7] sm:$0xff]
        %v3938 = vld [vmem:[%s370 + $0x1ef] sm:$0xff]
        %v3939 = vpack.c.bf16 %v3908, %v3907
        %v3940 = vpack.c.bf16 %v3910, %v3909
        %v3941 = vpack.c.bf16 %v3912, %v3911
        %v3942 = vpack.c.bf16 %v3914, %v3913
        %v3943 = vpack.c.bf16 %v3916, %v3915
        %v3944 = vpack.c.bf16 %v3918, %v3917
        %v3945 = vpack.c.bf16 %v3920, %v3919
        %v3946 = vpack.c.bf16 %v3922, %v3921
        %v3947 = vpack.c.bf16 %v3924, %v3923
        %v3948 = vpack.c.bf16 %v3926, %v3925
        %v3949 = vpack.c.bf16 %v3928, %v3927
        %v3950 = vpack.c.bf16 %v3930, %v3929
        %v3951 = vpack.c.bf16 %v3932, %v3931
        %v3952 = vpack.c.bf16 %v3934, %v3933
        %v3953 = vpack.c.bf16 %v3936, %v3935
        %v3954 = vpack.c.bf16 %v3938, %v3937
        %v3971 = vunpack.c.l.b16 %v3939
        %v3972 = vunpack.c.h.b16 %v3939
        %v3973 = vunpack.c.l.b16 %v3940
        %v3974 = vunpack.c.h.b16 %v3940
        %v3975 = vunpack.c.l.b16 %v3941
        %v3976 = vunpack.c.h.b16 %v3941
        %v3977 = vunpack.c.l.b16 %v3942
        %v3978 = vunpack.c.h.b16 %v3942
        %v3979 = vunpack.c.l.b16 %v3943
        %v3980 = vunpack.c.h.b16 %v3943
        %v3981 = vunpack.c.l.b16 %v3944
        %v3982 = vunpack.c.h.b16 %v3944
        %v3983 = vunpack.c.l.b16 %v3945
        %v3984 = vunpack.c.h.b16 %v3945
        %v3985 = vunpack.c.l.b16 %v3946
        %v3986 = vunpack.c.h.b16 %v3946
        %v3987 = vunpack.c.l.b16 %v3947
        %v3988 = vunpack.c.h.b16 %v3947
        %v3989 = vunpack.c.l.b16 %v3948
        %v3990 = vunpack.c.h.b16 %v3948
        %v3991 = vunpack.c.l.b16 %v3949
        %v3992 = vunpack.c.h.b16 %v3949
        %v3993 = vunpack.c.l.b16 %v3950
        %v3994 = vunpack.c.h.b16 %v3950
        %v3995 = vunpack.c.l.b16 %v3951
        %v3996 = vunpack.c.h.b16 %v3951
        %v3997 = vunpack.c.l.b16 %v3952
        %v3998 = vunpack.c.h.b16 %v3952
        %v3999 = vunpack.c.l.b16 %v3953
        %v4000 = vunpack.c.h.b16 %v3953
        %v4001 = vunpack.c.l.b16 %v3954
        %v4002 = vunpack.c.h.b16 %v3954
        %v4003 = vpack.c.b16 %v3971, %v3971
        %v4004 = vpack.c.b16 %v3972, %v3972
        %v4005 = vpack.c.b16 %v3973, %v3973
        %v4006 = vpack.c.b16 %v3974, %v3974
        %v4007 = vpack.c.b16 %v3975, %v3975
        %v4008 = vpack.c.b16 %v3976, %v3976
        %v4009 = vpack.c.b16 %v3977, %v3977
        %v4010 = vpack.c.b16 %v3978, %v3978
        %v4011 = vpack.c.b16 %v3979, %v3979
        %v4012 = vpack.c.b16 %v3980, %v3980
        %v4013 = vpack.c.b16 %v3981, %v3981
        %v4014 = vpack.c.b16 %v3982, %v3982
        %v4015 = vpack.c.b16 %v3983, %v3983
        %v4016 = vpack.c.b16 %v3984, %v3984
        %v4017 = vpack.c.b16 %v3985, %v3985
        %v4018 = vpack.c.b16 %v3986, %v3986
        %v4019 = vpack.c.b16 %v3987, %v3987
        %v4020 = vpack.c.b16 %v3988, %v3988
        %v4021 = vpack.c.b16 %v3989, %v3989
        %v4022 = vpack.c.b16 %v3990, %v3990
        %v4023 = vpack.c.b16 %v3991, %v3991
        %v4024 = vpack.c.b16 %v3992, %v3992
        %v4025 = vpack.c.b16 %v3993, %v3993
        %v4026 = vpack.c.b16 %v3994, %v3994
        %v4027 = vpack.c.b16 %v3995, %v3995
        %v4028 = vpack.c.b16 %v3996, %v3996
        %v4029 = vpack.c.b16 %v3997, %v3997
        %v4030 = vpack.c.b16 %v3998, %v3998
        %v4031 = vpack.c.b16 %v3999, %v3999
        %v4032 = vpack.c.b16 %v4000, %v4000
        %v4033 = vpack.c.b16 %v4001, %v4001
        %v4034 = vpack.c.b16 %v4002, %v4002
        %4035 = vrot.lane.b32.xlu0 %v4003, 48
        %v4036 = vpop.permute.xlu0 %4035
        %4037 = vrot.lane.b32.xlu0 %v4004, 48
        %v4038 = vpop.permute.xlu0 %4037
        %4039 = vrot.lane.b32.xlu0 %v4005, 48
        %v4040 = vpop.permute.xlu0 %4039
        %4041 = vrot.lane.b32.xlu0 %v4006, 48
        %v4042 = vpop.permute.xlu0 %4041
        %4043 = vrot.lane.b32.xlu0 %v4007, 48
        %v4044 = vpop.permute.xlu0 %4043
        %4045 = vrot.lane.b32.xlu0 %v4008, 48
        %v4046 = vpop.permute.xlu0 %4045
        %4047 = vrot.lane.b32.xlu0 %v4009, 48
        %v4048 = vpop.permute.xlu0 %4047
        %4049 = vrot.lane.b32.xlu0 %v4010, 48
        %v4050 = vpop.permute.xlu0 %4049
        %4051 = vrot.lane.b32.xlu0 %v4011, 48
        %v4052 = vpop.permute.xlu0 %4051
        %4053 = vrot.lane.b32.xlu0 %v4012, 48
        %v4054 = vpop.permute.xlu0 %4053
        %4055 = vrot.lane.b32.xlu0 %v4013, 48
        %v4056 = vpop.permute.xlu0 %4055
        %4057 = vrot.lane.b32.xlu0 %v4014, 48
        %v4058 = vpop.permute.xlu0 %4057
        %4059 = vrot.lane.b32.xlu0 %v4015, 48
        %v4060 = vpop.permute.xlu0 %4059
        %4061 = vrot.lane.b32.xlu0 %v4016, 48
        %v4062 = vpop.permute.xlu0 %4061
        %4063 = vrot.lane.b32.xlu0 %v4017, 48
        %v4064 = vpop.permute.xlu0 %4063
        %4065 = vrot.lane.b32.xlu0 %v4018, 48
        %v4066 = vpop.permute.xlu0 %4065
        %4067 = vrot.lane.b32.xlu0 %v4019, 48
        %v4068 = vpop.permute.xlu0 %4067
        %4069 = vrot.lane.b32.xlu0 %v4020, 48
        %v4070 = vpop.permute.xlu0 %4069
        %4071 = vrot.lane.b32.xlu0 %v4021, 48
        %v4072 = vpop.permute.xlu0 %4071
        %4073 = vrot.lane.b32.xlu0 %v4022, 48
        %v4074 = vpop.permute.xlu0 %4073
        %4075 = vrot.lane.b32.xlu0 %v4023, 48
        %v4076 = vpop.permute.xlu0 %4075
        %4077 = vrot.lane.b32.xlu0 %v4024, 48
        %v4078 = vpop.permute.xlu0 %4077
        %4079 = vrot.lane.b32.xlu0 %v4025, 48
        %v4080 = vpop.permute.xlu0 %4079
        %4081 = vrot.lane.b32.xlu0 %v4026, 48
        %v4082 = vpop.permute.xlu0 %4081
        %4083 = vrot.lane.b32.xlu0 %v4027, 48
        %v4084 = vpop.permute.xlu0 %4083
        %4085 = vrot.lane.b32.xlu0 %v4028, 48
        %v4086 = vpop.permute.xlu0 %4085
        %4087 = vrot.lane.b32.xlu0 %v4029, 48
        %v4088 = vpop.permute.xlu0 %4087
        %4089 = vrot.lane.b32.xlu0 %v4030, 48
        %v4090 = vpop.permute.xlu0 %4089
        %4091 = vrot.lane.b32.xlu0 %v4031, 48
        %v4092 = vpop.permute.xlu0 %4091
        %4093 = vrot.lane.b32.xlu0 %v4032, 48
        %v4094 = vpop.permute.xlu0 %4093
        %4095 = vrot.lane.b32.xlu0 %v4033, 48
        %v4096 = vpop.permute.xlu0 %4095
        %4097 = vrot.lane.b32.xlu0 %v4034, 48
        %v4098 = vpop.permute.xlu0 %4097
        %vm4131 = vcmask 519552
        %4132 = vst.msk [vmem:[#allocation5] sm:$0xf] %vm4131, %v4036
        %4133 = vst.msk [vmem:[#allocation5 + $0x8] sm:$0xf] %vm4131, %v4038
        %4134 = vst.msk [vmem:[#allocation5 + $0x10] sm:$0xf] %vm4131, %v4040
        %4135 = vst.msk [vmem:[#allocation5 + $0x18] sm:$0xf] %vm4131, %v4042
        %4136 = vst.msk [vmem:[#allocation5 + $0x20] sm:$0xf] %vm4131, %v4044
        %4137 = vst.msk [vmem:[#allocation5 + $0x28] sm:$0xf] %vm4131, %v4046
        %4138 = vst.msk [vmem:[#allocation5 + $0x30] sm:$0xf] %vm4131, %v4048
        %4139 = vst.msk [vmem:[#allocation5 + $0x38] sm:$0xf] %vm4131, %v4050
        %4140 = vst.msk [vmem:[#allocation5 + $0x40] sm:$0xf] %vm4131, %v4052
        %4141 = vst.msk [vmem:[#allocation5 + $0x48] sm:$0xf] %vm4131, %v4054
        %4142 = vst.msk [vmem:[#allocation5 + $0x50] sm:$0xf] %vm4131, %v4056
        %4143 = vst.msk [vmem:[#allocation5 + $0x58] sm:$0xf] %vm4131, %v4058
        %4144 = vst.msk [vmem:[#allocation5 + $0x60] sm:$0xf] %vm4131, %v4060
        %4145 = vst.msk [vmem:[#allocation5 + $0x68] sm:$0xf] %vm4131, %v4062
        %4146 = vst.msk [vmem:[#allocation5 + $0x70] sm:$0xf] %vm4131, %v4064
        %4147 = vst.msk [vmem:[#allocation5 + $0x78] sm:$0xf] %vm4131, %v4066
        %4148 = vst.msk [vmem:[#allocation5 + $0x80] sm:$0xf] %vm4131, %v4068
        %4149 = vst.msk [vmem:[#allocation5 + $0x88] sm:$0xf] %vm4131, %v4070
        %4150 = vst.msk [vmem:[#allocation5 + $0x90] sm:$0xf] %vm4131, %v4072
        %4151 = vst.msk [vmem:[#allocation5 + $0x98] sm:$0xf] %vm4131, %v4074
        %4152 = vst.msk [vmem:[#allocation5 + $0xa0] sm:$0xf] %vm4131, %v4076
        %4153 = vst.msk [vmem:[#allocation5 + $0xa8] sm:$0xf] %vm4131, %v4078
        %4154 = vst.msk [vmem:[#allocation5 + $0xb0] sm:$0xf] %vm4131, %v4080
        %4155 = vst.msk [vmem:[#allocation5 + $0xb8] sm:$0xf] %vm4131, %v4082
        %4156 = vst.msk [vmem:[#allocation5 + $0xc0] sm:$0xf] %vm4131, %v4084
        %4157 = vst.msk [vmem:[#allocation5 + $0xc8] sm:$0xf] %vm4131, %v4086
        %4158 = vst.msk [vmem:[#allocation5 + $0xd0] sm:$0xf] %vm4131, %v4088
        %4159 = vst.msk [vmem:[#allocation5 + $0xd8] sm:$0xf] %vm4131, %v4090
        %4160 = vst.msk [vmem:[#allocation5 + $0xe0] sm:$0xf] %vm4131, %v4092
        %4161 = vst.msk [vmem:[#allocation5 + $0xe8] sm:$0xf] %vm4131, %v4094
        %4162 = vst.msk [vmem:[#allocation5 + $0xf0] sm:$0xf] %vm4131, %v4096
        %4163 = vst.msk [vmem:[#allocation5 + $0xf8] sm:$0xf] %vm4131, %v4098
        %v4164 = vld [vmem:[%s370 + $0x8] sm:$0xff]
        %v4165 = vld [vmem:[%s370 + $0x10] sm:$0xff]
        %v4166 = vld [vmem:[%s370 + $0x28] sm:$0xff]
        %v4167 = vld [vmem:[%s370 + $0x30] sm:$0xff]
        %v4168 = vld [vmem:[%s370 + $0x48] sm:$0xff]
        %v4169 = vld [vmem:[%s370 + $0x50] sm:$0xff]
        %v4170 = vld [vmem:[%s370 + $0x68] sm:$0xff]
        %v4171 = vld [vmem:[%s370 + $0x70] sm:$0xff]
        %v4172 = vld [vmem:[%s370 + $0x88] sm:$0xff]
        %v4173 = vld [vmem:[%s370 + $0x90] sm:$0xff]
        %v4174 = vld [vmem:[%s370 + $0xa8] sm:$0xff]
        %v4175 = vld [vmem:[%s370 + $0xb0] sm:$0xff]
        %v4176 = vld [vmem:[%s370 + $0xc8] sm:$0xff]
        %v4177 = vld [vmem:[%s370 + $0xd0] sm:$0xff]
        %v4178 = vld [vmem:[%s370 + $0xe8] sm:$0xff]
        %v4179 = vld [vmem:[%s370 + $0xf0] sm:$0xff]
        %v4180 = vld [vmem:[%s370 + $0x108] sm:$0xff]
        %v4181 = vld [vmem:[%s370 + $0x110] sm:$0xff]
        %v4182 = vld [vmem:[%s370 + $0x128] sm:$0xff]
        %v4183 = vld [vmem:[%s370 + $0x130] sm:$0xff]
        %v4184 = vld [vmem:[%s370 + $0x148] sm:$0xff]
        %v4185 = vld [vmem:[%s370 + $0x150] sm:$0xff]
        %v4186 = vld [vmem:[%s370 + $0x168] sm:$0xff]
        %v4187 = vld [vmem:[%s370 + $0x170] sm:$0xff]
        %v4188 = vld [vmem:[%s370 + $0x188] sm:$0xff]
        %v4189 = vld [vmem:[%s370 + $0x190] sm:$0xff]
        %v4190 = vld [vmem:[%s370 + $0x1a8] sm:$0xff]
        %v4191 = vld [vmem:[%s370 + $0x1b0] sm:$0xff]
        %v4192 = vld [vmem:[%s370 + $0x1c8] sm:$0xff]
        %v4193 = vld [vmem:[%s370 + $0x1d0] sm:$0xff]
        %v4194 = vld [vmem:[%s370 + $0x1e8] sm:$0xff]
        %v4195 = vld [vmem:[%s370 + $0x1f0] sm:$0xff]
        %v4196 = vpack.c.bf16 %v4165, %v4164
        %v4197 = vpack.c.bf16 %v4167, %v4166
        %v4198 = vpack.c.bf16 %v4169, %v4168
        %v4199 = vpack.c.bf16 %v4171, %v4170
        %v4200 = vpack.c.bf16 %v4173, %v4172
        %v4201 = vpack.c.bf16 %v4175, %v4174
        %v4202 = vpack.c.bf16 %v4177, %v4176
        %v4203 = vpack.c.bf16 %v4179, %v4178
        %v4204 = vpack.c.bf16 %v4181, %v4180
        %v4205 = vpack.c.bf16 %v4183, %v4182
        %v4206 = vpack.c.bf16 %v4185, %v4184
        %v4207 = vpack.c.bf16 %v4187, %v4186
        %v4208 = vpack.c.bf16 %v4189, %v4188
        %v4209 = vpack.c.bf16 %v4191, %v4190
        %v4210 = vpack.c.bf16 %v4193, %v4192
        %v4211 = vpack.c.bf16 %v4195, %v4194
        %v4228 = vunpack.c.l.b16 %v4196
        %v4229 = vunpack.c.h.b16 %v4196
        %v4230 = vunpack.c.l.b16 %v4197
        %v4231 = vunpack.c.h.b16 %v4197
        %v4232 = vunpack.c.l.b16 %v4198
        %v4233 = vunpack.c.h.b16 %v4198
        %v4234 = vunpack.c.l.b16 %v4199
        %v4235 = vunpack.c.h.b16 %v4199
        %v4236 = vunpack.c.l.b16 %v4200
        %v4237 = vunpack.c.h.b16 %v4200
        %v4238 = vunpack.c.l.b16 %v4201
        %v4239 = vunpack.c.h.b16 %v4201
        %v4240 = vunpack.c.l.b16 %v4202
        %v4241 = vunpack.c.h.b16 %v4202
        %v4242 = vunpack.c.l.b16 %v4203
        %v4243 = vunpack.c.h.b16 %v4203
        %v4244 = vunpack.c.l.b16 %v4204
        %v4245 = vunpack.c.h.b16 %v4204
        %v4246 = vunpack.c.l.b16 %v4205
        %v4247 = vunpack.c.h.b16 %v4205
        %v4248 = vunpack.c.l.b16 %v4206
        %v4249 = vunpack.c.h.b16 %v4206
        %v4250 = vunpack.c.l.b16 %v4207
        %v4251 = vunpack.c.h.b16 %v4207
        %v4252 = vunpack.c.l.b16 %v4208
        %v4253 = vunpack.c.h.b16 %v4208
        %v4254 = vunpack.c.l.b16 %v4209
        %v4255 = vunpack.c.h.b16 %v4209
        %v4256 = vunpack.c.l.b16 %v4210
        %v4257 = vunpack.c.h.b16 %v4210
        %v4258 = vunpack.c.l.b16 %v4211
        %v4259 = vunpack.c.h.b16 %v4211
        %v4260 = vpack.c.b16 %v4228, %v4228
        %v4261 = vpack.c.b16 %v4229, %v4229
        %v4262 = vpack.c.b16 %v4230, %v4230
        %v4263 = vpack.c.b16 %v4231, %v4231
        %v4264 = vpack.c.b16 %v4232, %v4232
        %v4265 = vpack.c.b16 %v4233, %v4233
        %v4266 = vpack.c.b16 %v4234, %v4234
        %v4267 = vpack.c.b16 %v4235, %v4235
        %v4268 = vpack.c.b16 %v4236, %v4236
        %v4269 = vpack.c.b16 %v4237, %v4237
        %v4270 = vpack.c.b16 %v4238, %v4238
        %v4271 = vpack.c.b16 %v4239, %v4239
        %v4272 = vpack.c.b16 %v4240, %v4240
        %v4273 = vpack.c.b16 %v4241, %v4241
        %v4274 = vpack.c.b16 %v4242, %v4242
        %v4275 = vpack.c.b16 %v4243, %v4243
        %v4276 = vpack.c.b16 %v4244, %v4244
        %v4277 = vpack.c.b16 %v4245, %v4245
        %v4278 = vpack.c.b16 %v4246, %v4246
        %v4279 = vpack.c.b16 %v4247, %v4247
        %v4280 = vpack.c.b16 %v4248, %v4248
        %v4281 = vpack.c.b16 %v4249, %v4249
        %v4282 = vpack.c.b16 %v4250, %v4250
        %v4283 = vpack.c.b16 %v4251, %v4251
        %v4284 = vpack.c.b16 %v4252, %v4252
        %v4285 = vpack.c.b16 %v4253, %v4253
        %v4286 = vpack.c.b16 %v4254, %v4254
        %v4287 = vpack.c.b16 %v4255, %v4255
        %v4288 = vpack.c.b16 %v4256, %v4256
        %v4289 = vpack.c.b16 %v4257, %v4257
        %v4290 = vpack.c.b16 %v4258, %v4258
        %v4291 = vpack.c.b16 %v4259, %v4259
        %4292 = vrot.lane.b32.xlu0 %v4260, 64
        %v4293 = vpop.permute.xlu0 %4292
        %4294 = vrot.lane.b32.xlu0 %v4261, 64
        %v4295 = vpop.permute.xlu0 %4294
        %4296 = vrot.lane.b32.xlu0 %v4262, 64
        %v4297 = vpop.permute.xlu0 %4296
        %4298 = vrot.lane.b32.xlu0 %v4263, 64
        %v4299 = vpop.permute.xlu0 %4298
        %4300 = vrot.lane.b32.xlu0 %v4264, 64
        %v4301 = vpop.permute.xlu0 %4300
        %4302 = vrot.lane.b32.xlu0 %v4265, 64
        %v4303 = vpop.permute.xlu0 %4302
        %4304 = vrot.lane.b32.xlu0 %v4266, 64
        %v4305 = vpop.permute.xlu0 %4304
        %4306 = vrot.lane.b32.xlu0 %v4267, 64
        %v4307 = vpop.permute.xlu0 %4306
        %4308 = vrot.lane.b32.xlu0 %v4268, 64
        %v4309 = vpop.permute.xlu0 %4308
        %4310 = vrot.lane.b32.xlu0 %v4269, 64
        %v4311 = vpop.permute.xlu0 %4310
        %4312 = vrot.lane.b32.xlu0 %v4270, 64
        %v4313 = vpop.permute.xlu0 %4312
        %4314 = vrot.lane.b32.xlu0 %v4271, 64
        %v4315 = vpop.permute.xlu0 %4314
        %4316 = vrot.lane.b32.xlu0 %v4272, 64
        %v4317 = vpop.permute.xlu0 %4316
        %4318 = vrot.lane.b32.xlu0 %v4273, 64
        %v4319 = vpop.permute.xlu0 %4318
        %4320 = vrot.lane.b32.xlu0 %v4274, 64
        %v4321 = vpop.permute.xlu0 %4320
        %4322 = vrot.lane.b32.xlu0 %v4275, 64
        %v4323 = vpop.permute.xlu0 %4322
        %4324 = vrot.lane.b32.xlu0 %v4276, 64
        %v4325 = vpop.permute.xlu0 %4324
        %4326 = vrot.lane.b32.xlu0 %v4277, 64
        %v4327 = vpop.permute.xlu0 %4326
        %4328 = vrot.lane.b32.xlu0 %v4278, 64
        %v4329 = vpop.permute.xlu0 %4328
        %4330 = vrot.lane.b32.xlu0 %v4279, 64
        %v4331 = vpop.permute.xlu0 %4330
        %4332 = vrot.lane.b32.xlu0 %v4280, 64
        %v4333 = vpop.permute.xlu0 %4332
        %4334 = vrot.lane.b32.xlu0 %v4281, 64
        %v4335 = vpop.permute.xlu0 %4334
        %4336 = vrot.lane.b32.xlu0 %v4282, 64
        %v4337 = vpop.permute.xlu0 %4336
        %4338 = vrot.lane.b32.xlu0 %v4283, 64
        %v4339 = vpop.permute.xlu0 %4338
        %4340 = vrot.lane.b32.xlu0 %v4284, 64
        %v4341 = vpop.permute.xlu0 %4340
        %4342 = vrot.lane.b32.xlu0 %v4285, 64
        %v4343 = vpop.permute.xlu0 %4342
        %4344 = vrot.lane.b32.xlu0 %v4286, 64
        %v4345 = vpop.permute.xlu0 %4344
        %4346 = vrot.lane.b32.xlu0 %v4287, 64
        %v4347 = vpop.permute.xlu0 %4346
        %4348 = vrot.lane.b32.xlu0 %v4288, 64
        %v4349 = vpop.permute.xlu0 %4348
        %4350 = vrot.lane.b32.xlu0 %v4289, 64
        %v4351 = vpop.permute.xlu0 %4350
        %4352 = vrot.lane.b32.xlu0 %v4290, 64
        %v4353 = vpop.permute.xlu0 %4352
        %4354 = vrot.lane.b32.xlu0 %v4291, 64
        %v4355 = vpop.permute.xlu0 %4354
        %vm4388 = vcmask 650752
        %4389 = vst.msk [vmem:[#allocation5] sm:$0xf] %vm4388, %v4293
        %4390 = vst.msk [vmem:[#allocation5 + $0x8] sm:$0xf] %vm4388, %v4295
        %4391 = vst.msk [vmem:[#allocation5 + $0x10] sm:$0xf] %vm4388, %v4297
        %4392 = vst.msk [vmem:[#allocation5 + $0x18] sm:$0xf] %vm4388, %v4299
        %4393 = vst.msk [vmem:[#allocation5 + $0x20] sm:$0xf] %vm4388, %v4301
        %4394 = vst.msk [vmem:[#allocation5 + $0x28] sm:$0xf] %vm4388, %v4303
        %4395 = vst.msk [vmem:[#allocation5 + $0x30] sm:$0xf] %vm4388, %v4305
        %4396 = vst.msk [vmem:[#allocation5 + $0x38] sm:$0xf] %vm4388, %v4307
        %4397 = vst.msk [vmem:[#allocation5 + $0x40] sm:$0xf] %vm4388, %v4309
        %4398 = vst.msk [vmem:[#allocation5 + $0x48] sm:$0xf] %vm4388, %v4311
        %4399 = vst.msk [vmem:[#allocation5 + $0x50] sm:$0xf] %vm4388, %v4313
        %4400 = vst.msk [vmem:[#allocation5 + $0x58] sm:$0xf] %vm4388, %v4315
        %4401 = vst.msk [vmem:[#allocation5 + $0x60] sm:$0xf] %vm4388, %v4317
        %4402 = vst.msk [vmem:[#allocation5 + $0x68] sm:$0xf] %vm4388, %v4319
        %4403 = vst.msk [vmem:[#allocation5 + $0x70] sm:$0xf] %vm4388, %v4321
        %4404 = vst.msk [vmem:[#allocation5 + $0x78] sm:$0xf] %vm4388, %v4323
        %4405 = vst.msk [vmem:[#allocation5 + $0x80] sm:$0xf] %vm4388, %v4325
        %4406 = vst.msk [vmem:[#allocation5 + $0x88] sm:$0xf] %vm4388, %v4327
        %4407 = vst.msk [vmem:[#allocation5 + $0x90] sm:$0xf] %vm4388, %v4329
        %4408 = vst.msk [vmem:[#allocation5 + $0x98] sm:$0xf] %vm4388, %v4331
        %4409 = vst.msk [vmem:[#allocation5 + $0xa0] sm:$0xf] %vm4388, %v4333
        %4410 = vst.msk [vmem:[#allocation5 + $0xa8] sm:$0xf] %vm4388, %v4335
        %4411 = vst.msk [vmem:[#allocation5 + $0xb0] sm:$0xf] %vm4388, %v4337
        %4412 = vst.msk [vmem:[#allocation5 + $0xb8] sm:$0xf] %vm4388, %v4339
        %4413 = vst.msk [vmem:[#allocation5 + $0xc0] sm:$0xf] %vm4388, %v4341
        %4414 = vst.msk [vmem:[#allocation5 + $0xc8] sm:$0xf] %vm4388, %v4343
        %4415 = vst.msk [vmem:[#allocation5 + $0xd0] sm:$0xf] %vm4388, %v4345
        %4416 = vst.msk [vmem:[#allocation5 + $0xd8] sm:$0xf] %vm4388, %v4347
        %4417 = vst.msk [vmem:[#allocation5 + $0xe0] sm:$0xf] %vm4388, %v4349
        %4418 = vst.msk [vmem:[#allocation5 + $0xe8] sm:$0xf] %vm4388, %v4351
        %4419 = vst.msk [vmem:[#allocation5 + $0xf0] sm:$0xf] %vm4388, %v4353
        %4420 = vst.msk [vmem:[#allocation5 + $0xf8] sm:$0xf] %vm4388, %v4355
        %v4421 = vld [vmem:[%s370 + $0x9] sm:$0xff]
        %v4422 = vld [vmem:[%s370 + $0x11] sm:$0xff]
        %v4423 = vld [vmem:[%s370 + $0x29] sm:$0xff]
        %v4424 = vld [vmem:[%s370 + $0x31] sm:$0xff]
        %v4425 = vld [vmem:[%s370 + $0x49] sm:$0xff]
        %v4426 = vld [vmem:[%s370 + $0x51] sm:$0xff]
        %v4427 = vld [vmem:[%s370 + $0x69] sm:$0xff]
        %v4428 = vld [vmem:[%s370 + $0x71] sm:$0xff]
        %v4429 = vld [vmem:[%s370 + $0x89] sm:$0xff]
        %v4430 = vld [vmem:[%s370 + $0x91] sm:$0xff]
        %v4431 = vld [vmem:[%s370 + $0xa9] sm:$0xff]
        %v4432 = vld [vmem:[%s370 + $0xb1] sm:$0xff]
        %v4433 = vld [vmem:[%s370 + $0xc9] sm:$0xff]
        %v4434 = vld [vmem:[%s370 + $0xd1] sm:$0xff]
        %v4435 = vld [vmem:[%s370 + $0xe9] sm:$0xff]
        %v4436 = vld [vmem:[%s370 + $0xf1] sm:$0xff]
        %v4437 = vld [vmem:[%s370 + $0x109] sm:$0xff]
        %v4438 = vld [vmem:[%s370 + $0x111] sm:$0xff]
        %v4439 = vld [vmem:[%s370 + $0x129] sm:$0xff]
        %v4440 = vld [vmem:[%s370 + $0x131] sm:$0xff]
        %v4441 = vld [vmem:[%s370 + $0x149] sm:$0xff]
        %v4442 = vld [vmem:[%s370 + $0x151] sm:$0xff]
        %v4443 = vld [vmem:[%s370 + $0x169] sm:$0xff]
        %v4444 = vld [vmem:[%s370 + $0x171] sm:$0xff]
        %v4445 = vld [vmem:[%s370 + $0x189] sm:$0xff]
        %v4446 = vld [vmem:[%s370 + $0x191] sm:$0xff]
        %v4447 = vld [vmem:[%s370 + $0x1a9] sm:$0xff]
        %v4448 = vld [vmem:[%s370 + $0x1b1] sm:$0xff]
        %v4449 = vld [vmem:[%s370 + $0x1c9] sm:$0xff]
        %v4450 = vld [vmem:[%s370 + $0x1d1] sm:$0xff]
        %v4451 = vld [vmem:[%s370 + $0x1e9] sm:$0xff]
        %v4452 = vld [vmem:[%s370 + $0x1f1] sm:$0xff]
        %v4453 = vpack.c.bf16 %v4422, %v4421
        %v4454 = vpack.c.bf16 %v4424, %v4423
        %v4455 = vpack.c.bf16 %v4426, %v4425
        %v4456 = vpack.c.bf16 %v4428, %v4427
        %v4457 = vpack.c.bf16 %v4430, %v4429
        %v4458 = vpack.c.bf16 %v4432, %v4431
        %v4459 = vpack.c.bf16 %v4434, %v4433
        %v4460 = vpack.c.bf16 %v4436, %v4435
        %v4461 = vpack.c.bf16 %v4438, %v4437
        %v4462 = vpack.c.bf16 %v4440, %v4439
        %v4463 = vpack.c.bf16 %v4442, %v4441
        %v4464 = vpack.c.bf16 %v4444, %v4443
        %v4465 = vpack.c.bf16 %v4446, %v4445
        %v4466 = vpack.c.bf16 %v4448, %v4447
        %v4467 = vpack.c.bf16 %v4450, %v4449
        %v4468 = vpack.c.bf16 %v4452, %v4451
        %v4485 = vunpack.c.l.b16 %v4453
        %v4486 = vunpack.c.h.b16 %v4453
        %v4487 = vunpack.c.l.b16 %v4454
        %v4488 = vunpack.c.h.b16 %v4454
        %v4489 = vunpack.c.l.b16 %v4455
        %v4490 = vunpack.c.h.b16 %v4455
        %v4491 = vunpack.c.l.b16 %v4456
        %v4492 = vunpack.c.h.b16 %v4456
        %v4493 = vunpack.c.l.b16 %v4457
        %v4494 = vunpack.c.h.b16 %v4457
        %v4495 = vunpack.c.l.b16 %v4458
        %v4496 = vunpack.c.h.b16 %v4458
        %v4497 = vunpack.c.l.b16 %v4459
        %v4498 = vunpack.c.h.b16 %v4459
        %v4499 = vunpack.c.l.b16 %v4460
        %v4500 = vunpack.c.h.b16 %v4460
        %v4501 = vunpack.c.l.b16 %v4461
        %v4502 = vunpack.c.h.b16 %v4461
        %v4503 = vunpack.c.l.b16 %v4462
        %v4504 = vunpack.c.h.b16 %v4462
        %v4505 = vunpack.c.l.b16 %v4463
        %v4506 = vunpack.c.h.b16 %v4463
        %v4507 = vunpack.c.l.b16 %v4464
        %v4508 = vunpack.c.h.b16 %v4464
        %v4509 = vunpack.c.l.b16 %v4465
        %v4510 = vunpack.c.h.b16 %v4465
        %v4511 = vunpack.c.l.b16 %v4466
        %v4512 = vunpack.c.h.b16 %v4466
        %v4513 = vunpack.c.l.b16 %v4467
        %v4514 = vunpack.c.h.b16 %v4467
        %v4515 = vunpack.c.l.b16 %v4468
        %v4516 = vunpack.c.h.b16 %v4468
        %v4517 = vpack.c.b16 %v4485, %v4485
        %v4518 = vpack.c.b16 %v4486, %v4486
        %v4519 = vpack.c.b16 %v4487, %v4487
        %v4520 = vpack.c.b16 %v4488, %v4488
        %v4521 = vpack.c.b16 %v4489, %v4489
        %v4522 = vpack.c.b16 %v4490, %v4490
        %v4523 = vpack.c.b16 %v4491, %v4491
        %v4524 = vpack.c.b16 %v4492, %v4492
        %v4525 = vpack.c.b16 %v4493, %v4493
        %v4526 = vpack.c.b16 %v4494, %v4494
        %v4527 = vpack.c.b16 %v4495, %v4495
        %v4528 = vpack.c.b16 %v4496, %v4496
        %v4529 = vpack.c.b16 %v4497, %v4497
        %v4530 = vpack.c.b16 %v4498, %v4498
        %v4531 = vpack.c.b16 %v4499, %v4499
        %v4532 = vpack.c.b16 %v4500, %v4500
        %v4533 = vpack.c.b16 %v4501, %v4501
        %v4534 = vpack.c.b16 %v4502, %v4502
        %v4535 = vpack.c.b16 %v4503, %v4503
        %v4536 = vpack.c.b16 %v4504, %v4504
        %v4537 = vpack.c.b16 %v4505, %v4505
        %v4538 = vpack.c.b16 %v4506, %v4506
        %v4539 = vpack.c.b16 %v4507, %v4507
        %v4540 = vpack.c.b16 %v4508, %v4508
        %v4541 = vpack.c.b16 %v4509, %v4509
        %v4542 = vpack.c.b16 %v4510, %v4510
        %v4543 = vpack.c.b16 %v4511, %v4511
        %v4544 = vpack.c.b16 %v4512, %v4512
        %v4545 = vpack.c.b16 %v4513, %v4513
        %v4546 = vpack.c.b16 %v4514, %v4514
        %v4547 = vpack.c.b16 %v4515, %v4515
        %v4548 = vpack.c.b16 %v4516, %v4516
        %4549 = vrot.lane.b32.xlu0 %v4517, 80
        %v4550 = vpop.permute.xlu0 %4549
        %4551 = vrot.lane.b32.xlu0 %v4518, 80
        %v4552 = vpop.permute.xlu0 %4551
        %4553 = vrot.lane.b32.xlu0 %v4519, 80
        %v4554 = vpop.permute.xlu0 %4553
        %4555 = vrot.lane.b32.xlu0 %v4520, 80
        %v4556 = vpop.permute.xlu0 %4555
        %4557 = vrot.lane.b32.xlu0 %v4521, 80
        %v4558 = vpop.permute.xlu0 %4557
        %4559 = vrot.lane.b32.xlu0 %v4522, 80
        %v4560 = vpop.permute.xlu0 %4559
        %4561 = vrot.lane.b32.xlu0 %v4523, 80
        %v4562 = vpop.permute.xlu0 %4561
        %4563 = vrot.lane.b32.xlu0 %v4524, 80
        %v4564 = vpop.permute.xlu0 %4563
        %4565 = vrot.lane.b32.xlu0 %v4525, 80
        %v4566 = vpop.permute.xlu0 %4565
        %4567 = vrot.lane.b32.xlu0 %v4526, 80
        %v4568 = vpop.permute.xlu0 %4567
        %4569 = vrot.lane.b32.xlu0 %v4527, 80
        %v4570 = vpop.permute.xlu0 %4569
        %4571 = vrot.lane.b32.xlu0 %v4528, 80
        %v4572 = vpop.permute.xlu0 %4571
        %4573 = vrot.lane.b32.xlu0 %v4529, 80
        %v4574 = vpop.permute.xlu0 %4573
        %4575 = vrot.lane.b32.xlu0 %v4530, 80
        %v4576 = vpop.permute.xlu0 %4575
        %4577 = vrot.lane.b32.xlu0 %v4531, 80
        %v4578 = vpop.permute.xlu0 %4577
        %4579 = vrot.lane.b32.xlu0 %v4532, 80
        %v4580 = vpop.permute.xlu0 %4579
        %4581 = vrot.lane.b32.xlu0 %v4533, 80
        %v4582 = vpop.permute.xlu0 %4581
        %4583 = vrot.lane.b32.xlu0 %v4534, 80
        %v4584 = vpop.permute.xlu0 %4583
        %4585 = vrot.lane.b32.xlu0 %v4535, 80
        %v4586 = vpop.permute.xlu0 %4585
        %4587 = vrot.lane.b32.xlu0 %v4536, 80
        %v4588 = vpop.permute.xlu0 %4587
        %4589 = vrot.lane.b32.xlu0 %v4537, 80
        %v4590 = vpop.permute.xlu0 %4589
        %4591 = vrot.lane.b32.xlu0 %v4538, 80
        %v4592 = vpop.permute.xlu0 %4591
        %4593 = vrot.lane.b32.xlu0 %v4539, 80
        %v4594 = vpop.permute.xlu0 %4593
        %4595 = vrot.lane.b32.xlu0 %v4540, 80
        %v4596 = vpop.permute.xlu0 %4595
        %4597 = vrot.lane.b32.xlu0 %v4541, 80
        %v4598 = vpop.permute.xlu0 %4597
        %4599 = vrot.lane.b32.xlu0 %v4542, 80
        %v4600 = vpop.permute.xlu0 %4599
        %4601 = vrot.lane.b32.xlu0 %v4543, 80
        %v4602 = vpop.permute.xlu0 %4601
        %4603 = vrot.lane.b32.xlu0 %v4544, 80
        %v4604 = vpop.permute.xlu0 %4603
        %4605 = vrot.lane.b32.xlu0 %v4545, 80
        %v4606 = vpop.permute.xlu0 %4605
        %4607 = vrot.lane.b32.xlu0 %v4546, 80
        %v4608 = vpop.permute.xlu0 %4607
        %4609 = vrot.lane.b32.xlu0 %v4547, 80
        %v4610 = vpop.permute.xlu0 %4609
        %4611 = vrot.lane.b32.xlu0 %v4548, 80
        %v4612 = vpop.permute.xlu0 %4611
        %vm4645 = vcmask 781952
        %4646 = vst.msk [vmem:[#allocation5] sm:$0xf] %vm4645, %v4550
        %4647 = vst.msk [vmem:[#allocation5 + $0x8] sm:$0xf] %vm4645, %v4552
        %4648 = vst.msk [vmem:[#allocation5 + $0x10] sm:$0xf] %vm4645, %v4554
        %4649 = vst.msk [vmem:[#allocation5 + $0x18] sm:$0xf] %vm4645, %v4556
        %4650 = vst.msk [vmem:[#allocation5 + $0x20] sm:$0xf] %vm4645, %v4558
        %4651 = vst.msk [vmem:[#allocation5 + $0x28] sm:$0xf] %vm4645, %v4560
        %4652 = vst.msk [vmem:[#allocation5 + $0x30] sm:$0xf] %vm4645, %v4562
        %4653 = vst.msk [vmem:[#allocation5 + $0x38] sm:$0xf] %vm4645, %v4564
        %4654 = vst.msk [vmem:[#allocation5 + $0x40] sm:$0xf] %vm4645, %v4566
        %4655 = vst.msk [vmem:[#allocation5 + $0x48] sm:$0xf] %vm4645, %v4568
        %4656 = vst.msk [vmem:[#allocation5 + $0x50] sm:$0xf] %vm4645, %v4570
        %4657 = vst.msk [vmem:[#allocation5 + $0x58] sm:$0xf] %vm4645, %v4572
        %4658 = vst.msk [vmem:[#allocation5 + $0x60] sm:$0xf] %vm4645, %v4574
        %4659 = vst.msk [vmem:[#allocation5 + $0x68] sm:$0xf] %vm4645, %v4576
        %4660 = vst.msk [vmem:[#allocation5 + $0x70] sm:$0xf] %vm4645, %v4578
        %4661 = vst.msk [vmem:[#allocation5 + $0x78] sm:$0xf] %vm4645, %v4580
        %4662 = vst.msk [vmem:[#allocation5 + $0x80] sm:$0xf] %vm4645, %v4582
        %4663 = vst.msk [vmem:[#allocation5 + $0x88] sm:$0xf] %vm4645, %v4584
        %4664 = vst.msk [vmem:[#allocation5 + $0x90] sm:$0xf] %vm4645, %v4586
        %4665 = vst.msk [vmem:[#allocation5 + $0x98] sm:$0xf] %vm4645, %v4588
        %4666 = vst.msk [vmem:[#allocation5 + $0xa0] sm:$0xf] %vm4645, %v4590
        %4667 = vst.msk [vmem:[#allocation5 + $0xa8] sm:$0xf] %vm4645, %v4592
        %4668 = vst.msk [vmem:[#allocation5 + $0xb0] sm:$0xf] %vm4645, %v4594
        %4669 = vst.msk [vmem:[#allocation5 + $0xb8] sm:$0xf] %vm4645, %v4596
        %4670 = vst.msk [vmem:[#allocation5 + $0xc0] sm:$0xf] %vm4645, %v4598
        %4671 = vst.msk [vmem:[#allocation5 + $0xc8] sm:$0xf] %vm4645, %v4600
        %4672 = vst.msk [vmem:[#allocation5 + $0xd0] sm:$0xf] %vm4645, %v4602
        %4673 = vst.msk [vmem:[#allocation5 + $0xd8] sm:$0xf] %vm4645, %v4604
        %4674 = vst.msk [vmem:[#allocation5 + $0xe0] sm:$0xf] %vm4645, %v4606
        %4675 = vst.msk [vmem:[#allocation5 + $0xe8] sm:$0xf] %vm4645, %v4608
        %4676 = vst.msk [vmem:[#allocation5 + $0xf0] sm:$0xf] %vm4645, %v4610
        %4677 = vst.msk [vmem:[#allocation5 + $0xf8] sm:$0xf] %vm4645, %v4612
        %s4678 = scalar_lea.vmem [#allocation4], 64
        %v4679 = vld [vmem:[%s4678 + $0x7] sm:$0xff]
        %v4680 = vld [vmem:[%s4678 + $0xf] sm:$0xff]
        %v4681 = vld [vmem:[%s4678 + $0x27] sm:$0xff]
        %v4682 = vld [vmem:[%s4678 + $0x2f] sm:$0xff]
        %v4683 = vld [vmem:[%s4678 + $0x47] sm:$0xff]
        %v4684 = vld [vmem:[%s4678 + $0x4f] sm:$0xff]
        %v4685 = vld [vmem:[%s4678 + $0x67] sm:$0xff]
        %v4686 = vld [vmem:[%s4678 + $0x6f] sm:$0xff]
        %v4687 = vld [vmem:[%s4678 + $0x87] sm:$0xff]
        %v4688 = vld [vmem:[%s4678 + $0x8f] sm:$0xff]
        %v4689 = vld [vmem:[%s4678 + $0xa7] sm:$0xff]
        %v4690 = vld [vmem:[%s4678 + $0xaf] sm:$0xff]
        %v4691 = vld [vmem:[%s4678 + $0xc7] sm:$0xff]
        %v4692 = vld [vmem:[%s4678 + $0xcf] sm:$0xff]
        %v4693 = vld [vmem:[%s4678 + $0xe7] sm:$0xff]
        %v4694 = vld [vmem:[%s4678 + $0xef] sm:$0xff]
        %v4695 = vld [vmem:[%s4678 + $0x107] sm:$0xff]
        %v4696 = vld [vmem:[%s4678 + $0x10f] sm:$0xff]
        %v4697 = vld [vmem:[%s4678 + $0x127] sm:$0xff]
        %v4698 = vld [vmem:[%s4678 + $0x12f] sm:$0xff]
        %v4699 = vld [vmem:[%s4678 + $0x147] sm:$0xff]
        %v4700 = vld [vmem:[%s4678 + $0x14f] sm:$0xff]
        %v4701 = vld [vmem:[%s4678 + $0x167] sm:$0xff]
        %v4702 = vld [vmem:[%s4678 + $0x16f] sm:$0xff]
        %v4703 = vld [vmem:[%s4678 + $0x187] sm:$0xff]
        %v4704 = vld [vmem:[%s4678 + $0x18f] sm:$0xff]
        %v4705 = vld [vmem:[%s4678 + $0x1a7] sm:$0xff]
        %v4706 = vld [vmem:[%s4678 + $0x1af] sm:$0xff]
        %v4707 = vld [vmem:[%s4678 + $0x1c7] sm:$0xff]
        %v4708 = vld [vmem:[%s4678 + $0x1cf] sm:$0xff]
        %v4709 = vld [vmem:[%s4678 + $0x1e7] sm:$0xff]
        %v4710 = vld [vmem:[%s4678 + $0x1ef] sm:$0xff]
        %v4711 = vpack.c.bf16 %v4680, %v4679
        %v4712 = vpack.c.bf16 %v4682, %v4681
        %v4713 = vpack.c.bf16 %v4684, %v4683
        %v4714 = vpack.c.bf16 %v4686, %v4685
        %v4715 = vpack.c.bf16 %v4688, %v4687
        %v4716 = vpack.c.bf16 %v4690, %v4689
        %v4717 = vpack.c.bf16 %v4692, %v4691
        %v4718 = vpack.c.bf16 %v4694, %v4693
        %v4719 = vpack.c.bf16 %v4696, %v4695
        %v4720 = vpack.c.bf16 %v4698, %v4697
        %v4721 = vpack.c.bf16 %v4700, %v4699
        %v4722 = vpack.c.bf16 %v4702, %v4701
        %v4723 = vpack.c.bf16 %v4704, %v4703
        %v4724 = vpack.c.bf16 %v4706, %v4705
        %v4725 = vpack.c.bf16 %v4708, %v4707
        %v4726 = vpack.c.bf16 %v4710, %v4709
        %v4743 = vunpack.c.l.b16 %v4711
        %v4744 = vunpack.c.h.b16 %v4711
        %v4745 = vunpack.c.l.b16 %v4712
        %v4746 = vunpack.c.h.b16 %v4712
        %v4747 = vunpack.c.l.b16 %v4713
        %v4748 = vunpack.c.h.b16 %v4713
        %v4749 = vunpack.c.l.b16 %v4714
        %v4750 = vunpack.c.h.b16 %v4714
        %v4751 = vunpack.c.l.b16 %v4715
        %v4752 = vunpack.c.h.b16 %v4715
        %v4753 = vunpack.c.l.b16 %v4716
        %v4754 = vunpack.c.h.b16 %v4716
        %v4755 = vunpack.c.l.b16 %v4717
        %v4756 = vunpack.c.h.b16 %v4717
        %v4757 = vunpack.c.l.b16 %v4718
        %v4758 = vunpack.c.h.b16 %v4718
        %v4759 = vunpack.c.l.b16 %v4719
        %v4760 = vunpack.c.h.b16 %v4719
        %v4761 = vunpack.c.l.b16 %v4720
        %v4762 = vunpack.c.h.b16 %v4720
        %v4763 = vunpack.c.l.b16 %v4721
        %v4764 = vunpack.c.h.b16 %v4721
        %v4765 = vunpack.c.l.b16 %v4722
        %v4766 = vunpack.c.h.b16 %v4722
        %v4767 = vunpack.c.l.b16 %v4723
        %v4768 = vunpack.c.h.b16 %v4723
        %v4769 = vunpack.c.l.b16 %v4724
        %v4770 = vunpack.c.h.b16 %v4724
        %v4771 = vunpack.c.l.b16 %v4725
        %v4772 = vunpack.c.h.b16 %v4725
        %v4773 = vunpack.c.l.b16 %v4726
        %v4774 = vunpack.c.h.b16 %v4726
        %v4775 = vpack.c.b16 %v4743, %v4743
        %v4776 = vpack.c.b16 %v4744, %v4744
        %v4777 = vpack.c.b16 %v4745, %v4745
        %v4778 = vpack.c.b16 %v4746, %v4746
        %v4779 = vpack.c.b16 %v4747, %v4747
        %v4780 = vpack.c.b16 %v4748, %v4748
        %v4781 = vpack.c.b16 %v4749, %v4749
        %v4782 = vpack.c.b16 %v4750, %v4750
        %v4783 = vpack.c.b16 %v4751, %v4751
        %v4784 = vpack.c.b16 %v4752, %v4752
        %v4785 = vpack.c.b16 %v4753, %v4753
        %v4786 = vpack.c.b16 %v4754, %v4754
        %v4787 = vpack.c.b16 %v4755, %v4755
        %v4788 = vpack.c.b16 %v4756, %v4756
        %v4789 = vpack.c.b16 %v4757, %v4757
        %v4790 = vpack.c.b16 %v4758, %v4758
        %v4791 = vpack.c.b16 %v4759, %v4759
        %v4792 = vpack.c.b16 %v4760, %v4760
        %v4793 = vpack.c.b16 %v4761, %v4761
        %v4794 = vpack.c.b16 %v4762, %v4762
        %v4795 = vpack.c.b16 %v4763, %v4763
        %v4796 = vpack.c.b16 %v4764, %v4764
        %v4797 = vpack.c.b16 %v4765, %v4765
        %v4798 = vpack.c.b16 %v4766, %v4766
        %v4799 = vpack.c.b16 %v4767, %v4767
        %v4800 = vpack.c.b16 %v4768, %v4768
        %v4801 = vpack.c.b16 %v4769, %v4769
        %v4802 = vpack.c.b16 %v4770, %v4770
        %v4803 = vpack.c.b16 %v4771, %v4771
        %v4804 = vpack.c.b16 %v4772, %v4772
        %v4805 = vpack.c.b16 %v4773, %v4773
        %v4806 = vpack.c.b16 %v4774, %v4774
        %4807 = vrot.lane.b32.xlu0 %v4775, 96
        %v4808 = vpop.permute.xlu0 %4807
        %4809 = vrot.lane.b32.xlu0 %v4776, 96
        %v4810 = vpop.permute.xlu0 %4809
        %4811 = vrot.lane.b32.xlu0 %v4777, 96
        %v4812 = vpop.permute.xlu0 %4811
        %4813 = vrot.lane.b32.xlu0 %v4778, 96
        %v4814 = vpop.permute.xlu0 %4813
        %4815 = vrot.lane.b32.xlu0 %v4779, 96
        %v4816 = vpop.permute.xlu0 %4815
        %4817 = vrot.lane.b32.xlu0 %v4780, 96
        %v4818 = vpop.permute.xlu0 %4817
        %4819 = vrot.lane.b32.xlu0 %v4781, 96
        %v4820 = vpop.permute.xlu0 %4819
        %4821 = vrot.lane.b32.xlu0 %v4782, 96
        %v4822 = vpop.permute.xlu0 %4821
        %4823 = vrot.lane.b32.xlu0 %v4783, 96
        %v4824 = vpop.permute.xlu0 %4823
        %4825 = vrot.lane.b32.xlu0 %v4784, 96
        %v4826 = vpop.permute.xlu0 %4825
        %4827 = vrot.lane.b32.xlu0 %v4785, 96
        %v4828 = vpop.permute.xlu0 %4827
        %4829 = vrot.lane.b32.xlu0 %v4786, 96
        %v4830 = vpop.permute.xlu0 %4829
        %4831 = vrot.lane.b32.xlu0 %v4787, 96
        %v4832 = vpop.permute.xlu0 %4831
        %4833 = vrot.lane.b32.xlu0 %v4788, 96
        %v4834 = vpop.permute.xlu0 %4833
        %4835 = vrot.lane.b32.xlu0 %v4789, 96
        %v4836 = vpop.permute.xlu0 %4835
        %4837 = vrot.lane.b32.xlu0 %v4790, 96
        %v4838 = vpop.permute.xlu0 %4837
        %4839 = vrot.lane.b32.xlu0 %v4791, 96
        %v4840 = vpop.permute.xlu0 %4839
        %4841 = vrot.lane.b32.xlu0 %v4792, 96
        %v4842 = vpop.permute.xlu0 %4841
        %4843 = vrot.lane.b32.xlu0 %v4793, 96
        %v4844 = vpop.permute.xlu0 %4843
        %4845 = vrot.lane.b32.xlu0 %v4794, 96
        %v4846 = vpop.permute.xlu0 %4845
        %4847 = vrot.lane.b32.xlu0 %v4795, 96
        %v4848 = vpop.permute.xlu0 %4847
        %4849 = vrot.lane.b32.xlu0 %v4796, 96
        %v4850 = vpop.permute.xlu0 %4849
        %4851 = vrot.lane.b32.xlu0 %v4797, 96
        %v4852 = vpop.permute.xlu0 %4851
        %4853 = vrot.lane.b32.xlu0 %v4798, 96
        %v4854 = vpop.permute.xlu0 %4853
        %4855 = vrot.lane.b32.xlu0 %v4799, 96
        %v4856 = vpop.permute.xlu0 %4855
        %4857 = vrot.lane.b32.xlu0 %v4800, 96
        %v4858 = vpop.permute.xlu0 %4857
        %4859 = vrot.lane.b32.xlu0 %v4801, 96
        %v4860 = vpop.permute.xlu0 %4859
        %4861 = vrot.lane.b32.xlu0 %v4802, 96
        %v4862 = vpop.permute.xlu0 %4861
        %4863 = vrot.lane.b32.xlu0 %v4803, 96
        %v4864 = vpop.permute.xlu0 %4863
        %4865 = vrot.lane.b32.xlu0 %v4804, 96
        %v4866 = vpop.permute.xlu0 %4865
        %4867 = vrot.lane.b32.xlu0 %v4805, 96
        %v4868 = vpop.permute.xlu0 %4867
        %4869 = vrot.lane.b32.xlu0 %v4806, 96
        %v4870 = vpop.permute.xlu0 %4869
        %vm4903 = vcmask 913152
        %4904 = vst.msk [vmem:[#allocation5] sm:$0xf] %vm4903, %v4808
        %4905 = vst.msk [vmem:[#allocation5 + $0x8] sm:$0xf] %vm4903, %v4810
        %4906 = vst.msk [vmem:[#allocation5 + $0x10] sm:$0xf] %vm4903, %v4812
        %4907 = vst.msk [vmem:[#allocation5 + $0x18] sm:$0xf] %vm4903, %v4814
        %4908 = vst.msk [vmem:[#allocation5 + $0x20] sm:$0xf] %vm4903, %v4816
        %4909 = vst.msk [vmem:[#allocation5 + $0x28] sm:$0xf] %vm4903, %v4818
        %4910 = vst.msk [vmem:[#allocation5 + $0x30] sm:$0xf] %vm4903, %v4820
        %4911 = vst.msk [vmem:[#allocation5 + $0x38] sm:$0xf] %vm4903, %v4822
        %4912 = vst.msk [vmem:[#allocation5 + $0x40] sm:$0xf] %vm4903, %v4824
        %4913 = vst.msk [vmem:[#allocation5 + $0x48] sm:$0xf] %vm4903, %v4826
        %4914 = vst.msk [vmem:[#allocation5 + $0x50] sm:$0xf] %vm4903, %v4828
        %4915 = vst.msk [vmem:[#allocation5 + $0x58] sm:$0xf] %vm4903, %v4830
        %4916 = vst.msk [vmem:[#allocation5 + $0x60] sm:$0xf] %vm4903, %v4832
        %4917 = vst.msk [vmem:[#allocation5 + $0x68] sm:$0xf] %vm4903, %v4834
        %4918 = vst.msk [vmem:[#allocation5 + $0x70] sm:$0xf] %vm4903, %v4836
        %4919 = vst.msk [vmem:[#allocation5 + $0x78] sm:$0xf] %vm4903, %v4838
        %4920 = vst.msk [vmem:[#allocation5 + $0x80] sm:$0xf] %vm4903, %v4840
        %4921 = vst.msk [vmem:[#allocation5 + $0x88] sm:$0xf] %vm4903, %v4842
        %4922 = vst.msk [vmem:[#allocation5 + $0x90] sm:$0xf] %vm4903, %v4844
        %4923 = vst.msk [vmem:[#allocation5 + $0x98] sm:$0xf] %vm4903, %v4846
        %4924 = vst.msk [vmem:[#allocation5 + $0xa0] sm:$0xf] %vm4903, %v4848
        %4925 = vst.msk [vmem:[#allocation5 + $0xa8] sm:$0xf] %vm4903, %v4850
        %4926 = vst.msk [vmem:[#allocation5 + $0xb0] sm:$0xf] %vm4903, %v4852
        %4927 = vst.msk [vmem:[#allocation5 + $0xb8] sm:$0xf] %vm4903, %v4854
        %4928 = vst.msk [vmem:[#allocation5 + $0xc0] sm:$0xf] %vm4903, %v4856
        %4929 = vst.msk [vmem:[#allocation5 + $0xc8] sm:$0xf] %vm4903, %v4858
        %4930 = vst.msk [vmem:[#allocation5 + $0xd0] sm:$0xf] %vm4903, %v4860
        %4931 = vst.msk [vmem:[#allocation5 + $0xd8] sm:$0xf] %vm4903, %v4862
        %4932 = vst.msk [vmem:[#allocation5 + $0xe0] sm:$0xf] %vm4903, %v4864
        %4933 = vst.msk [vmem:[#allocation5 + $0xe8] sm:$0xf] %vm4903, %v4866
        %4934 = vst.msk [vmem:[#allocation5 + $0xf0] sm:$0xf] %vm4903, %v4868
        %4935 = vst.msk [vmem:[#allocation5 + $0xf8] sm:$0xf] %vm4903, %v4870
        %v4936 = vld [vmem:[%s4678 + $0x8] sm:$0xff]
        %v4937 = vld [vmem:[%s4678 + $0x10] sm:$0xff]
        %v4938 = vld [vmem:[%s4678 + $0x28] sm:$0xff]
        %v4939 = vld [vmem:[%s4678 + $0x30] sm:$0xff]
        %v4940 = vld [vmem:[%s4678 + $0x48] sm:$0xff]
        %v4941 = vld [vmem:[%s4678 + $0x50] sm:$0xff]
        %v4942 = vld [vmem:[%s4678 + $0x68] sm:$0xff]
        %v4943 = vld [vmem:[%s4678 + $0x70] sm:$0xff]
        %v4944 = vld [vmem:[%s4678 + $0x88] sm:$0xff]
        %v4945 = vld [vmem:[%s4678 + $0x90] sm:$0xff]
        %v4946 = vld [vmem:[%s4678 + $0xa8] sm:$0xff]
        %v4947 = vld [vmem:[%s4678 + $0xb0] sm:$0xff]
        %v4948 = vld [vmem:[%s4678 + $0xc8] sm:$0xff]
        %v4949 = vld [vmem:[%s4678 + $0xd0] sm:$0xff]
        %v4950 = vld [vmem:[%s4678 + $0xe8] sm:$0xff]
        %v4951 = vld [vmem:[%s4678 + $0xf0] sm:$0xff]
        %v4952 = vld [vmem:[%s4678 + $0x108] sm:$0xff]
        %v4953 = vld [vmem:[%s4678 + $0x110] sm:$0xff]
        %v4954 = vld [vmem:[%s4678 + $0x128] sm:$0xff]
        %v4955 = vld [vmem:[%s4678 + $0x130] sm:$0xff]
        %v4956 = vld [vmem:[%s4678 + $0x148] sm:$0xff]
        %v4957 = vld [vmem:[%s4678 + $0x150] sm:$0xff]
        %v4958 = vld [vmem:[%s4678 + $0x168] sm:$0xff]
        %v4959 = vld [vmem:[%s4678 + $0x170] sm:$0xff]
        %v4960 = vld [vmem:[%s4678 + $0x188] sm:$0xff]
        %v4961 = vld [vmem:[%s4678 + $0x190] sm:$0xff]
        %v4962 = vld [vmem:[%s4678 + $0x1a8] sm:$0xff]
        %v4963 = vld [vmem:[%s4678 + $0x1b0] sm:$0xff]
        %v4964 = vld [vmem:[%s4678 + $0x1c8] sm:$0xff]
        %v4965 = vld [vmem:[%s4678 + $0x1d0] sm:$0xff]
        %v4966 = vld [vmem:[%s4678 + $0x1e8] sm:$0xff]
        %v4967 = vld [vmem:[%s4678 + $0x1f0] sm:$0xff]
        %v4968 = vpack.c.bf16 %v4937, %v4936
        %v4969 = vpack.c.bf16 %v4939, %v4938
        %v4970 = vpack.c.bf16 %v4941, %v4940
        %v4971 = vpack.c.bf16 %v4943, %v4942
        %v4972 = vpack.c.bf16 %v4945, %v4944
        %v4973 = vpack.c.bf16 %v4947, %v4946
        %v4974 = vpack.c.bf16 %v4949, %v4948
        %v4975 = vpack.c.bf16 %v4951, %v4950
        %v4976 = vpack.c.bf16 %v4953, %v4952
        %v4977 = vpack.c.bf16 %v4955, %v4954
        %v4978 = vpack.c.bf16 %v4957, %v4956
        %v4979 = vpack.c.bf16 %v4959, %v4958
        %v4980 = vpack.c.bf16 %v4961, %v4960
        %v4981 = vpack.c.bf16 %v4963, %v4962
        %v4982 = vpack.c.bf16 %v4965, %v4964
        %v4983 = vpack.c.bf16 %v4967, %v4966
        %v5000 = vunpack.c.l.b16 %v4968
        %v5001 = vunpack.c.h.b16 %v4968
        %v5002 = vunpack.c.l.b16 %v4969
        %v5003 = vunpack.c.h.b16 %v4969
        %v5004 = vunpack.c.l.b16 %v4970
        %v5005 = vunpack.c.h.b16 %v4970
        %v5006 = vunpack.c.l.b16 %v4971
        %v5007 = vunpack.c.h.b16 %v4971
        %v5008 = vunpack.c.l.b16 %v4972
        %v5009 = vunpack.c.h.b16 %v4972
        %v5010 = vunpack.c.l.b16 %v4973
        %v5011 = vunpack.c.h.b16 %v4973
        %v5012 = vunpack.c.l.b16 %v4974
        %v5013 = vunpack.c.h.b16 %v4974
        %v5014 = vunpack.c.l.b16 %v4975
        %v5015 = vunpack.c.h.b16 %v4975
        %v5016 = vunpack.c.l.b16 %v4976
        %v5017 = vunpack.c.h.b16 %v4976
        %v5018 = vunpack.c.l.b16 %v4977
        %v5019 = vunpack.c.h.b16 %v4977
        %v5020 = vunpack.c.l.b16 %v4978
        %v5021 = vunpack.c.h.b16 %v4978
        %v5022 = vunpack.c.l.b16 %v4979
        %v5023 = vunpack.c.h.b16 %v4979
        %v5024 = vunpack.c.l.b16 %v4980
        %v5025 = vunpack.c.h.b16 %v4980
        %v5026 = vunpack.c.l.b16 %v4981
        %v5027 = vunpack.c.h.b16 %v4981
        %v5028 = vunpack.c.l.b16 %v4982
        %v5029 = vunpack.c.h.b16 %v4982
        %v5030 = vunpack.c.l.b16 %v4983
        %v5031 = vunpack.c.h.b16 %v4983
        %v5032 = vpack.c.b16 %v5000, %v5000
        %v5033 = vpack.c.b16 %v5001, %v5001
        %v5034 = vpack.c.b16 %v5002, %v5002
        %v5035 = vpack.c.b16 %v5003, %v5003
        %v5036 = vpack.c.b16 %v5004, %v5004
        %v5037 = vpack.c.b16 %v5005, %v5005
        %v5038 = vpack.c.b16 %v5006, %v5006
        %v5039 = vpack.c.b16 %v5007, %v5007
        %v5040 = vpack.c.b16 %v5008, %v5008
        %v5041 = vpack.c.b16 %v5009, %v5009
        %v5042 = vpack.c.b16 %v5010, %v5010
        %v5043 = vpack.c.b16 %v5011, %v5011
        %v5044 = vpack.c.b16 %v5012, %v5012
        %v5045 = vpack.c.b16 %v5013, %v5013
        %v5046 = vpack.c.b16 %v5014, %v5014
        %v5047 = vpack.c.b16 %v5015, %v5015
        %v5048 = vpack.c.b16 %v5016, %v5016
        %v5049 = vpack.c.b16 %v5017, %v5017
        %v5050 = vpack.c.b16 %v5018, %v5018
        %v5051 = vpack.c.b16 %v5019, %v5019
        %v5052 = vpack.c.b16 %v5020, %v5020
        %v5053 = vpack.c.b16 %v5021, %v5021
        %v5054 = vpack.c.b16 %v5022, %v5022
        %v5055 = vpack.c.b16 %v5023, %v5023
        %v5056 = vpack.c.b16 %v5024, %v5024
        %v5057 = vpack.c.b16 %v5025, %v5025
        %v5058 = vpack.c.b16 %v5026, %v5026
        %v5059 = vpack.c.b16 %v5027, %v5027
        %v5060 = vpack.c.b16 %v5028, %v5028
        %v5061 = vpack.c.b16 %v5029, %v5029
        %v5062 = vpack.c.b16 %v5030, %v5030
        %v5063 = vpack.c.b16 %v5031, %v5031
        %5064 = vrot.lane.b32.xlu0 %v5032, 112
        %v5065 = vpop.permute.xlu0 %5064
        %5066 = vrot.lane.b32.xlu0 %v5033, 112
        %v5067 = vpop.permute.xlu0 %5066
        %5068 = vrot.lane.b32.xlu0 %v5034, 112
        %v5069 = vpop.permute.xlu0 %5068
        %5070 = vrot.lane.b32.xlu0 %v5035, 112
        %v5071 = vpop.permute.xlu0 %5070
        %5072 = vrot.lane.b32.xlu0 %v5036, 112
        %v5073 = vpop.permute.xlu0 %5072
        %5074 = vrot.lane.b32.xlu0 %v5037, 112
        %v5075 = vpop.permute.xlu0 %5074
        %5076 = vrot.lane.b32.xlu0 %v5038, 112
        %v5077 = vpop.permute.xlu0 %5076
        %5078 = vrot.lane.b32.xlu0 %v5039, 112
        %v5079 = vpop.permute.xlu0 %5078
        %5080 = vrot.lane.b32.xlu0 %v5040, 112
        %v5081 = vpop.permute.xlu0 %5080
        %5082 = vrot.lane.b32.xlu0 %v5041, 112
        %v5083 = vpop.permute.xlu0 %5082
        %5084 = vrot.lane.b32.xlu0 %v5042, 112
        %v5085 = vpop.permute.xlu0 %5084
        %5086 = vrot.lane.b32.xlu0 %v5043, 112
        %v5087 = vpop.permute.xlu0 %5086
        %5088 = vrot.lane.b32.xlu0 %v5044, 112
        %v5089 = vpop.permute.xlu0 %5088
        %5090 = vrot.lane.b32.xlu0 %v5045, 112
        %v5091 = vpop.permute.xlu0 %5090
        %5092 = vrot.lane.b32.xlu0 %v5046, 112
        %v5093 = vpop.permute.xlu0 %5092
        %5094 = vrot.lane.b32.xlu0 %v5047, 112
        %v5095 = vpop.permute.xlu0 %5094
        %5096 = vrot.lane.b32.xlu0 %v5048, 112
        %v5097 = vpop.permute.xlu0 %5096
        %5098 = vrot.lane.b32.xlu0 %v5049, 112
        %v5099 = vpop.permute.xlu0 %5098
        %5100 = vrot.lane.b32.xlu0 %v5050, 112
        %v5101 = vpop.permute.xlu0 %5100
        %5102 = vrot.lane.b32.xlu0 %v5051, 112
        %v5103 = vpop.permute.xlu0 %5102
        %5104 = vrot.lane.b32.xlu0 %v5052, 112
        %v5105 = vpop.permute.xlu0 %5104
        %5106 = vrot.lane.b32.xlu0 %v5053, 112
        %v5107 = vpop.permute.xlu0 %5106
        %5108 = vrot.lane.b32.xlu0 %v5054, 112
        %v5109 = vpop.permute.xlu0 %5108
        %5110 = vrot.lane.b32.xlu0 %v5055, 112
        %v5111 = vpop.permute.xlu0 %5110
        %5112 = vrot.lane.b32.xlu0 %v5056, 112
        %v5113 = vpop.permute.xlu0 %5112
        %5114 = vrot.lane.b32.xlu0 %v5057, 112
        %v5115 = vpop.permute.xlu0 %5114
        %5116 = vrot.lane.b32.xlu0 %v5058, 112
        %v5117 = vpop.permute.xlu0 %5116
        %5118 = vrot.lane.b32.xlu0 %v5059, 112
        %v5119 = vpop.permute.xlu0 %5118
        %5120 = vrot.lane.b32.xlu0 %v5060, 112
        %v5121 = vpop.permute.xlu0 %5120
        %5122 = vrot.lane.b32.xlu0 %v5061, 112
        %v5123 = vpop.permute.xlu0 %5122
        %5124 = vrot.lane.b32.xlu0 %v5062, 112
        %v5125 = vpop.permute.xlu0 %5124
        %5126 = vrot.lane.b32.xlu0 %v5063, 112
        %v5127 = vpop.permute.xlu0 %5126
        %vm5160 = vcmask 1044352
        %5161 = vst.msk [vmem:[#allocation5] sm:$0xf] %vm5160, %v5065
        %5162 = vst.msk [vmem:[#allocation5 + $0x8] sm:$0xf] %vm5160, %v5067
        %5163 = vst.msk [vmem:[#allocation5 + $0x10] sm:$0xf] %vm5160, %v5069
        %5164 = vst.msk [vmem:[#allocation5 + $0x18] sm:$0xf] %vm5160, %v5071
        %5165 = vst.msk [vmem:[#allocation5 + $0x20] sm:$0xf] %vm5160, %v5073
        %5166 = vst.msk [vmem:[#allocation5 + $0x28] sm:$0xf] %vm5160, %v5075
        %5167 = vst.msk [vmem:[#allocation5 + $0x30] sm:$0xf] %vm5160, %v5077
        %5168 = vst.msk [vmem:[#allocation5 + $0x38] sm:$0xf] %vm5160, %v5079
        %5169 = vst.msk [vmem:[#allocation5 + $0x40] sm:$0xf] %vm5160, %v5081
        %5170 = vst.msk [vmem:[#allocation5 + $0x48] sm:$0xf] %vm5160, %v5083
        %5171 = vst.msk [vmem:[#allocation5 + $0x50] sm:$0xf] %vm5160, %v5085
        %5172 = vst.msk [vmem:[#allocation5 + $0x58] sm:$0xf] %vm5160, %v5087
        %5173 = vst.msk [vmem:[#allocation5 + $0x60] sm:$0xf] %vm5160, %v5089
        %5174 = vst.msk [vmem:[#allocation5 + $0x68] sm:$0xf] %vm5160, %v5091
        %5175 = vst.msk [vmem:[#allocation5 + $0x70] sm:$0xf] %vm5160, %v5093
        %5176 = vst.msk [vmem:[#allocation5 + $0x78] sm:$0xf] %vm5160, %v5095
        %5177 = vst.msk [vmem:[#allocation5 + $0x80] sm:$0xf] %vm5160, %v5097
        %5178 = vst.msk [vmem:[#allocation5 + $0x88] sm:$0xf] %vm5160, %v5099
        %5179 = vst.msk [vmem:[#allocation5 + $0x90] sm:$0xf] %vm5160, %v5101
        %5180 = vst.msk [vmem:[#allocation5 + $0x98] sm:$0xf] %vm5160, %v5103
        %5181 = vst.msk [vmem:[#allocation5 + $0xa0] sm:$0xf] %vm5160, %v5105
        %5182 = vst.msk [vmem:[#allocation5 + $0xa8] sm:$0xf] %vm5160, %v5107
        %5183 = vst.msk [vmem:[#allocation5 + $0xb0] sm:$0xf] %vm5160, %v5109
        %5184 = vst.msk [vmem:[#allocation5 + $0xb8] sm:$0xf] %vm5160, %v5111
        %5185 = vst.msk [vmem:[#allocation5 + $0xc0] sm:$0xf] %vm5160, %v5113
        %5186 = vst.msk [vmem:[#allocation5 + $0xc8] sm:$0xf] %vm5160, %v5115
        %5187 = vst.msk [vmem:[#allocation5 + $0xd0] sm:$0xf] %vm5160, %v5117
        %5188 = vst.msk [vmem:[#allocation5 + $0xd8] sm:$0xf] %vm5160, %v5119
        %5189 = vst.msk [vmem:[#allocation5 + $0xe0] sm:$0xf] %vm5160, %v5121
        %5190 = vst.msk [vmem:[#allocation5 + $0xe8] sm:$0xf] %vm5160, %v5123
        %5191 = vst.msk [vmem:[#allocation5 + $0xf0] sm:$0xf] %vm5160, %v5125
        %5192 = vst.msk [vmem:[#allocation5 + $0xf8] sm:$0xf] %vm5160, %v5127
        %v5193 = vld [vmem:[%s4678 + $0x9] sm:$0xff]
        %v5194 = vld [vmem:[%s4678 + $0x11] sm:$0xff]
        %v5195 = vld [vmem:[%s4678 + $0x29] sm:$0xff]
        %v5196 = vld [vmem:[%s4678 + $0x31] sm:$0xff]
        %v5197 = vld [vmem:[%s4678 + $0x49] sm:$0xff]
        %v5198 = vld [vmem:[%s4678 + $0x51] sm:$0xff]
        %v5199 = vld [vmem:[%s4678 + $0x69] sm:$0xff]
        %v5200 = vld [vmem:[%s4678 + $0x71] sm:$0xff]
        %v5201 = vld [vmem:[%s4678 + $0x89] sm:$0xff]
        %v5202 = vld [vmem:[%s4678 + $0x91] sm:$0xff]
        %v5203 = vld [vmem:[%s4678 + $0xa9] sm:$0xff]
        %v5204 = vld [vmem:[%s4678 + $0xb1] sm:$0xff]
        %v5205 = vld [vmem:[%s4678 + $0xc9] sm:$0xff]
        %v5206 = vld [vmem:[%s4678 + $0xd1] sm:$0xff]
        %v5207 = vld [vmem:[%s4678 + $0xe9] sm:$0xff]
        %v5208 = vld [vmem:[%s4678 + $0xf1] sm:$0xff]
        %v5209 = vld [vmem:[%s4678 + $0x109] sm:$0xff]
        %v5210 = vld [vmem:[%s4678 + $0x111] sm:$0xff]
        %v5211 = vld [vmem:[%s4678 + $0x129] sm:$0xff]
        %v5212 = vld [vmem:[%s4678 + $0x131] sm:$0xff]
        %v5213 = vld [vmem:[%s4678 + $0x149] sm:$0xff]
        %v5214 = vld [vmem:[%s4678 + $0x151] sm:$0xff]
        %v5215 = vld [vmem:[%s4678 + $0x169] sm:$0xff]
        %v5216 = vld [vmem:[%s4678 + $0x171] sm:$0xff]
        %v5217 = vld [vmem:[%s4678 + $0x189] sm:$0xff]
        %v5218 = vld [vmem:[%s4678 + $0x191] sm:$0xff]
        %v5219 = vld [vmem:[%s4678 + $0x1a9] sm:$0xff]
        %v5220 = vld [vmem:[%s4678 + $0x1b1] sm:$0xff]
        %v5221 = vld [vmem:[%s4678 + $0x1c9] sm:$0xff]
        %v5222 = vld [vmem:[%s4678 + $0x1d1] sm:$0xff]
        %v5223 = vld [vmem:[%s4678 + $0x1e9] sm:$0xff]
        %v5224 = vld [vmem:[%s4678 + $0x1f1] sm:$0xff]
        %v5225 = vpack.c.bf16 %v5194, %v5193
        %v5226 = vpack.c.bf16 %v5196, %v5195
        %v5227 = vpack.c.bf16 %v5198, %v5197
        %v5228 = vpack.c.bf16 %v5200, %v5199
        %v5229 = vpack.c.bf16 %v5202, %v5201
        %v5230 = vpack.c.bf16 %v5204, %v5203
        %v5231 = vpack.c.bf16 %v5206, %v5205
        %v5232 = vpack.c.bf16 %v5208, %v5207
        %v5233 = vpack.c.bf16 %v5210, %v5209
        %v5234 = vpack.c.bf16 %v5212, %v5211
        %v5235 = vpack.c.bf16 %v5214, %v5213
        %v5236 = vpack.c.bf16 %v5216, %v5215
        %v5237 = vpack.c.bf16 %v5218, %v5217
        %v5238 = vpack.c.bf16 %v5220, %v5219
        %v5239 = vpack.c.bf16 %v5222, %v5221
        %v5240 = vpack.c.bf16 %v5224, %v5223
        %v5257 = vunpack.c.l.b16 %v5225
        %v5258 = vunpack.c.h.b16 %v5225
        %v5259 = vunpack.c.l.b16 %v5226
        %v5260 = vunpack.c.h.b16 %v5226
        %v5261 = vunpack.c.l.b16 %v5227
        %v5262 = vunpack.c.h.b16 %v5227
        %v5263 = vunpack.c.l.b16 %v5228
        %v5264 = vunpack.c.h.b16 %v5228
        %v5265 = vunpack.c.l.b16 %v5229
        %v5266 = vunpack.c.h.b16 %v5229
        %v5267 = vunpack.c.l.b16 %v5230
        %v5268 = vunpack.c.h.b16 %v5230
        %v5269 = vunpack.c.l.b16 %v5231
        %v5270 = vunpack.c.h.b16 %v5231
        %v5271 = vunpack.c.l.b16 %v5232
        %v5272 = vunpack.c.h.b16 %v5232
        %v5273 = vunpack.c.l.b16 %v5233
        %v5274 = vunpack.c.h.b16 %v5233
        %v5275 = vunpack.c.l.b16 %v5234
        %v5276 = vunpack.c.h.b16 %v5234
        %v5277 = vunpack.c.l.b16 %v5235
        %v5278 = vunpack.c.h.b16 %v5235
        %v5279 = vunpack.c.l.b16 %v5236
        %v5280 = vunpack.c.h.b16 %v5236
        %v5281 = vunpack.c.l.b16 %v5237
        %v5282 = vunpack.c.h.b16 %v5237
        %v5283 = vunpack.c.l.b16 %v5238
        %v5284 = vunpack.c.h.b16 %v5238
        %v5285 = vunpack.c.l.b16 %v5239
        %v5286 = vunpack.c.h.b16 %v5239
        %v5287 = vunpack.c.l.b16 %v5240
        %v5288 = vunpack.c.h.b16 %v5240
        %v5289 = vpack.c.b16 %v5257, %v5257
        %v5290 = vpack.c.b16 %v5258, %v5258
        %v5291 = vpack.c.b16 %v5259, %v5259
        %v5292 = vpack.c.b16 %v5260, %v5260
        %v5293 = vpack.c.b16 %v5261, %v5261
        %v5294 = vpack.c.b16 %v5262, %v5262
        %v5295 = vpack.c.b16 %v5263, %v5263
        %v5296 = vpack.c.b16 %v5264, %v5264
        %v5297 = vpack.c.b16 %v5265, %v5265
        %v5298 = vpack.c.b16 %v5266, %v5266
        %v5299 = vpack.c.b16 %v5267, %v5267
        %v5300 = vpack.c.b16 %v5268, %v5268
        %v5301 = vpack.c.b16 %v5269, %v5269
        %v5302 = vpack.c.b16 %v5270, %v5270
        %v5303 = vpack.c.b16 %v5271, %v5271
        %v5304 = vpack.c.b16 %v5272, %v5272
        %v5305 = vpack.c.b16 %v5273, %v5273
        %v5306 = vpack.c.b16 %v5274, %v5274
        %v5307 = vpack.c.b16 %v5275, %v5275
        %v5308 = vpack.c.b16 %v5276, %v5276
        %v5309 = vpack.c.b16 %v5277, %v5277
        %v5310 = vpack.c.b16 %v5278, %v5278
        %v5311 = vpack.c.b16 %v5279, %v5279
        %v5312 = vpack.c.b16 %v5280, %v5280
        %v5313 = vpack.c.b16 %v5281, %v5281
        %v5314 = vpack.c.b16 %v5282, %v5282
        %v5315 = vpack.c.b16 %v5283, %v5283
        %v5316 = vpack.c.b16 %v5284, %v5284
        %v5317 = vpack.c.b16 %v5285, %v5285
        %v5318 = vpack.c.b16 %v5286, %v5286
        %v5319 = vpack.c.b16 %v5287, %v5287
        %v5320 = vpack.c.b16 %v5288, %v5288
        %5353 = vst.msk [vmem:[#allocation5 + $0x4] sm:$0xf] %vm3360, %v5289
        %5354 = vst.msk [vmem:[#allocation5 + $0xc] sm:$0xf] %vm3360, %v5290
        %5355 = vst.msk [vmem:[#allocation5 + $0x14] sm:$0xf] %vm3360, %v5291
        %5356 = vst.msk [vmem:[#allocation5 + $0x1c] sm:$0xf] %vm3360, %v5292
        %5357 = vst.msk [vmem:[#allocation5 + $0x24] sm:$0xf] %vm3360, %v5293
        %5358 = vst.msk [vmem:[#allocation5 + $0x2c] sm:$0xf] %vm3360, %v5294
        %5359 = vst.msk [vmem:[#allocation5 + $0x34] sm:$0xf] %vm3360, %v5295
        %5360 = vst.msk [vmem:[#allocation5 + $0x3c] sm:$0xf] %vm3360, %v5296
        %5361 = vst.msk [vmem:[#allocation5 + $0x44] sm:$0xf] %vm3360, %v5297
        %5362 = vst.msk [vmem:[#allocation5 + $0x4c] sm:$0xf] %vm3360, %v5298
        %5363 = vst.msk [vmem:[#allocation5 + $0x54] sm:$0xf] %vm3360, %v5299
        %5364 = vst.msk [vmem:[#allocation5 + $0x5c] sm:$0xf] %vm3360, %v5300
        %5365 = vst.msk [vmem:[#allocation5 + $0x64] sm:$0xf] %vm3360, %v5301
        %5366 = vst.msk [vmem:[#allocation5 + $0x6c] sm:$0xf] %vm3360, %v5302
        %5367 = vst.msk [vmem:[#allocation5 + $0x74] sm:$0xf] %vm3360, %v5303
        %5368 = vst.msk [vmem:[#allocation5 + $0x7c] sm:$0xf] %vm3360, %v5304
        %5369 = vst.msk [vmem:[#allocation5 + $0x84] sm:$0xf] %vm3360, %v5305
        %5370 = vst.msk [vmem:[#allocation5 + $0x8c] sm:$0xf] %vm3360, %v5306
        %5371 = vst.msk [vmem:[#allocation5 + $0x94] sm:$0xf] %vm3360, %v5307
        %5372 = vst.msk [vmem:[#allocation5 + $0x9c] sm:$0xf] %vm3360, %v5308
        %5373 = vst.msk [vmem:[#allocation5 + $0xa4] sm:$0xf] %vm3360, %v5309
        %5374 = vst.msk [vmem:[#allocation5 + $0xac] sm:$0xf] %vm3360, %v5310
        %5375 = vst.msk [vmem:[#allocation5 + $0xb4] sm:$0xf] %vm3360, %v5311
        %5376 = vst.msk [vmem:[#allocation5 + $0xbc] sm:$0xf] %vm3360, %v5312
        %5377 = vst.msk [vmem:[#allocation5 + $0xc4] sm:$0xf] %vm3360, %v5313
        %5378 = vst.msk [vmem:[#allocation5 + $0xcc] sm:$0xf] %vm3360, %v5314
        %5379 = vst.msk [vmem:[#allocation5 + $0xd4] sm:$0xf] %vm3360, %v5315
        %5380 = vst.msk [vmem:[#allocation5 + $0xdc] sm:$0xf] %vm3360, %v5316
        %5381 = vst.msk [vmem:[#allocation5 + $0xe4] sm:$0xf] %vm3360, %v5317
        %5382 = vst.msk [vmem:[#allocation5 + $0xec] sm:$0xf] %vm3360, %v5318
        %5383 = vst.msk [vmem:[#allocation5 + $0xf4] sm:$0xf] %vm3360, %v5319
        %5384 = vst.msk [vmem:[#allocation5 + $0xfc] sm:$0xf] %vm3360, %v5320
        %v5385 = vld [vmem:[#allocation5] sm:$0xff]
        %v5386 = vld [vmem:[#allocation5 + $0x8] sm:$0xff]
        %v5387 = vld [vmem:[#allocation5 + $0x10] sm:$0xff]
        %v5388 = vld [vmem:[#allocation5 + $0x18] sm:$0xff]
        %v5389 = vld [vmem:[#allocation5 + $0x20] sm:$0xff]
        %v5390 = vld [vmem:[#allocation5 + $0x28] sm:$0xff]
        %v5391 = vld [vmem:[#allocation5 + $0x30] sm:$0xff]
        %v5392 = vld [vmem:[#allocation5 + $0x38] sm:$0xff]
        %v5393 = vld [vmem:[#allocation5 + $0x40] sm:$0xff]
        %v5394 = vld [vmem:[#allocation5 + $0x48] sm:$0xff]
        %v5395 = vld [vmem:[#allocation5 + $0x50] sm:$0xff]
        %v5396 = vld [vmem:[#allocation5 + $0x58] sm:$0xff]
        %v5397 = vld [vmem:[#allocation5 + $0x60] sm:$0xff]
        %v5398 = vld [vmem:[#allocation5 + $0x68] sm:$0xff]
        %v5399 = vld [vmem:[#allocation5 + $0x70] sm:$0xff]
        %v5400 = vld [vmem:[#allocation5 + $0x78] sm:$0xff]
        %v5401 = vld [vmem:[%s3] sm:$0xf]
        %v5402 = vld [vmem:[%s3 + $0x4] sm:$0xf]
        %v5403 = vld [vmem:[%s3 + $0x8] sm:$0xf]
        %v5404 = vld [vmem:[%s3 + $0xc] sm:$0xf]
        %v5405 = vld [vmem:[%s3 + $0x10] sm:$0xf]
        %v5406 = vld [vmem:[%s3 + $0x14] sm:$0xf]
        %v5407 = vld [vmem:[%s3 + $0x18] sm:$0xf]
        %v5408 = vld [vmem:[%s3 + $0x1c] sm:$0xf]
        %v5409 = vld [vmem:[%s3 + $0x20] sm:$0xf]
        %v5410 = vld [vmem:[%s3 + $0x24] sm:$0xf]
        %v5411 = vld [vmem:[%s3 + $0x28] sm:$0xf]
        %v5412 = vld [vmem:[%s3 + $0x2c] sm:$0xf]
        %v5413 = vld [vmem:[%s3 + $0x30] sm:$0xf]
        %v5414 = vld [vmem:[%s3 + $0x34] sm:$0xf]
        %v5415 = vld [vmem:[%s3 + $0x38] sm:$0xf]
        %v5416 = vld [vmem:[%s3 + $0x3c] sm:$0xf]
        %v5417 = vld [vmem:[%s3 + $0x40] sm:$0xf]
        %v5418 = vld [vmem:[%s3 + $0x44] sm:$0xf]
        %v5419 = vld [vmem:[%s4] sm:$0x1]
        %v5421 = vlaneseq
        %v5422 = vshrl.u32 %v5421, 7
        %v5423 = vsub.s32 0, %v5422
        %v5424 = vrot.slane %v5419, %v5423
        %v5442 = vunpack.c.l.b16 %v5385
        %v5443 = vunpack.c.h.b16 %v5385
        %v5444 = vunpack.c.l.b16 %v5386
        %v5445 = vunpack.c.h.b16 %v5386
        %v5446 = vunpack.c.l.b16 %v5387
        %v5447 = vunpack.c.h.b16 %v5387
        %v5448 = vunpack.c.l.b16 %v5388
        %v5449 = vunpack.c.h.b16 %v5388
        %v5450 = vunpack.c.l.b16 %v5389
        %v5451 = vunpack.c.h.b16 %v5389
        %v5452 = vunpack.c.l.b16 %v5390
        %v5453 = vunpack.c.h.b16 %v5390
        %v5454 = vunpack.c.l.b16 %v5391
        %v5455 = vunpack.c.h.b16 %v5391
        %v5456 = vunpack.c.l.b16 %v5392
        %v5457 = vunpack.c.h.b16 %v5392
        %v5458 = vunpack.c.l.b16 %v5393
        %v5459 = vunpack.c.h.b16 %v5393
        %v5460 = vunpack.c.l.b16 %v5394
        %v5461 = vunpack.c.h.b16 %v5394
        %v5462 = vunpack.c.l.b16 %v5395
        %v5463 = vunpack.c.h.b16 %v5395
        %v5464 = vunpack.c.l.b16 %v5396
        %v5465 = vunpack.c.h.b16 %v5396
        %v5466 = vunpack.c.l.b16 %v5397
        %v5467 = vunpack.c.h.b16 %v5397
        %v5468 = vunpack.c.l.b16 %v5398
        %v5469 = vunpack.c.h.b16 %v5398
        %v5470 = vunpack.c.l.b16 %v5399
        %v5471 = vunpack.c.h.b16 %v5399
        %v5472 = vunpack.c.l.b16 %v5400
        %v5473 = vunpack.c.h.b16 %v5400
        %v5474 = vpack.c.b16 %v5444, %v5442
        %v5475 = vpack.c.b16 %v5445, %v5443
        %v5476 = vpack.c.b16 %v5448, %v5446
        %v5477 = vpack.c.b16 %v5449, %v5447
        %v5478 = vpack.c.b16 %v5452, %v5450
        %v5479 = vpack.c.b16 %v5453, %v5451
        %v5480 = vpack.c.b16 %v5456, %v5454
        %v5481 = vpack.c.b16 %v5457, %v5455
        %v5482 = vpack.c.b16 %v5460, %v5458
        %v5483 = vpack.c.b16 %v5461, %v5459
        %v5484 = vpack.c.b16 %v5464, %v5462
        %v5485 = vpack.c.b16 %v5465, %v5463
        %v5486 = vpack.c.b16 %v5468, %v5466
        %v5487 = vpack.c.b16 %v5469, %v5467
        %v5488 = vpack.c.b16 %v5472, %v5470
        %v5489 = vpack.c.b16 %v5473, %v5471
        %v5516 = vunpack.c.l.b16 %v5401
        %v5517 = vunpack.c.l.b16 %v5402
        %v5518 = vunpack.c.l.b16 %v5403
        %v5519 = vunpack.c.l.b16 %v5404
        %v5520 = vunpack.c.l.b16 %v5405
        %v5521 = vunpack.c.l.b16 %v5406
        %v5522 = vunpack.c.l.b16 %v5407
        %v5523 = vunpack.c.l.b16 %v5408
        %v5524 = vunpack.c.l.b16 %v5409
        %v5525 = vunpack.c.l.b16 %v5410
        %v5526 = vunpack.c.l.b16 %v5411
        %v5527 = vunpack.c.l.b16 %v5412
        %v5528 = vunpack.c.l.b16 %v5413
        %v5529 = vunpack.c.l.b16 %v5414
        %v5530 = vunpack.c.l.b16 %v5415
        %v5531 = vunpack.c.l.b16 %v5416
        %v5532 = vunpack.c.l.b16 %v5417
        %v5533 = vunpack.c.l.b16 %v5418
        %v5534 = vpack.c.b16 %v5517, %v5516
        %v5535 = vpack.c.b16 %v5519, %v5518
        %v5536 = vpack.c.b16 %v5521, %v5520
        %v5537 = vpack.c.b16 %v5523, %v5522
        %v5538 = vpack.c.b16 %v5525, %v5524
        %v5539 = vpack.c.b16 %v5527, %v5526
        %v5540 = vpack.c.b16 %v5529, %v5528
        %v5541 = vpack.c.b16 %v5531, %v5530
        %v5542 = vpack.c.b16 %v5533, %v5532
        %v5553 = vsel %vm360, %v5475, 0
        %v5556 = vsel %vm360, %v5477, 0
        %v5559 = vsel %vm360, %v5479, 0
        %v5562 = vsel %vm360, %v5481, 0
        %v5565 = vsel %vm360, %v5483, 0
        %v5568 = vsel %vm360, %v5485, 0
        %v5571 = vsel %vm360, %v5487, 0
        %v5574 = vsel %vm360, %v5489, 0
        %5576 = vmatprep.subr.bf16.mxu0 0
        %5577 = vmatpush1.bf16.msra.mxu0 %v5541
        %5578 = vmatprep.subr.bf16.mxu0 0
        %5579 = vmatpush1.bf16.msra.mxu0 %v5540
        %5580 = vmatprep.subr.bf16.mxu0 0
        %5581 = vmatpush1.bf16.msra.mxu0 %v5539
        %5582 = vmatprep.subr.bf16.mxu0 0
        %5583 = vmatpush1.bf16.msra.mxu0 %v5538
        %5584 = vmatprep.subr.bf16.mxu0 0
        %5585 = vmatpush1.bf16.msra.mxu0 %v5537
        %5586 = vmatprep.subr.bf16.mxu0 0
        %5587 = vmatpush1.bf16.msra.mxu0 %v5536
        %5588 = vmatprep.subr.bf16.mxu0 0
        %5589 = vmatpush1.bf16.msra.mxu0 %v5535
        %5590 = vmatprep.subr.bf16.mxu0 0
        %5591 = vmatpush1.bf16.msra.mxu0 %v5534
        %5592 = vmatprep.subr.bf16.mxu0 0
        %5593 = vmatpush2.bf16.msra.mxu0 0
        %5594 = vmatprep.subr.bf16.mxu0 0
        %5595 = vmatpush2.bf16.msra.mxu0 0
        %5596 = vmatprep.subr.bf16.mxu0 0
        %5597 = vmatpush2.bf16.msra.mxu0 0
        %5598 = vmatprep.subr.bf16.mxu0 0
        %5599 = vmatpush2.bf16.msra.mxu0 0
        %5600 = vmatprep.subr.bf16.mxu0 0
        %5601 = vmatpush2.bf16.msra.mxu0 0
        %5602 = vmatprep.subr.bf16.mxu0 0
        %5603 = vmatpush2.bf16.msra.mxu0 0
        %5604 = vmatprep.subr.bf16.mxu0 0
        %5605 = vmatpush2.bf16.msra.mxu0 0
        %5606 = vmatprep.subr.bf16.mxu0 0
        %5607 = vmatpush2.bf16.msra.mxu0 %v5542
        %5608 = vmatprep.mubr.bf16.mxu0 %v5553
        %5609 = vmatmul.mubr.bf16.gmra.mxu0 %v5474
        %v5610 = vpop.f32.mrf.mxu0
        %v5611 = vadd.f32 %v5424, %v5610
        %v5612 = vpop.f32.mrf.mxu0
        %v5613 = vpop.f32.mrf.mxu0
        %v5614 = vadd.f32 %v5424, %v5613
        %v5615 = vpop.f32.mrf.mxu0
        %5616 = vmatprep.mubr.bf16.mxu0 %v5556
        %5617 = vmatmul.mubr.bf16.gmra.mxu0 %v5476
        %v5618 = vpop.f32.mrf.mxu0
        %v5619 = vadd.f32 %v5424, %v5618
        %v5620 = vpop.f32.mrf.mxu0
        %v5621 = vpop.f32.mrf.mxu0
        %v5622 = vadd.f32 %v5424, %v5621
        %v5623 = vpop.f32.mrf.mxu0
        %5624 = vmatprep.mubr.bf16.mxu0 %v5559
        %5625 = vmatmul.mubr.bf16.gmra.mxu0 %v5478
        %v5626 = vpop.f32.mrf.mxu0
        %v5627 = vadd.f32 %v5424, %v5626
        %v5628 = vpop.f32.mrf.mxu0
        %v5629 = vpop.f32.mrf.mxu0
        %v5630 = vadd.f32 %v5424, %v5629
        %v5631 = vpop.f32.mrf.mxu0
        %5632 = vmatprep.mubr.bf16.mxu0 %v5562
        %5633 = vmatmul.mubr.bf16.gmra.mxu0 %v5480
        %v5634 = vpop.f32.mrf.mxu0
        %v5635 = vadd.f32 %v5424, %v5634
        %v5636 = vpop.f32.mrf.mxu0
        %v5637 = vpop.f32.mrf.mxu0
        %v5638 = vadd.f32 %v5424, %v5637
        %v5639 = vpop.f32.mrf.mxu0
        %5640 = vmatprep.mubr.bf16.mxu0 %v5565
        %5641 = vmatmul.mubr.bf16.gmra.mxu0 %v5482
        %v5642 = vpop.f32.mrf.mxu0
        %v5643 = vadd.f32 %v5424, %v5642
        %v5644 = vpop.f32.mrf.mxu0
        %v5645 = vpop.f32.mrf.mxu0
        %v5646 = vadd.f32 %v5424, %v5645
        %v5647 = vpop.f32.mrf.mxu0
        %5648 = vmatprep.mubr.bf16.mxu0 %v5568
        %5649 = vmatmul.mubr.bf16.gmra.mxu0 %v5484
        %v5650 = vpop.f32.mrf.mxu0
        %v5651 = vadd.f32 %v5424, %v5650
        %v5652 = vpop.f32.mrf.mxu0
        %v5653 = vpop.f32.mrf.mxu0
        %v5654 = vadd.f32 %v5424, %v5653
        %v5655 = vpop.f32.mrf.mxu0
        %5656 = vmatprep.mubr.bf16.mxu0 %v5571
        %5657 = vmatmul.mubr.bf16.gmra.mxu0 %v5486
        %v5658 = vpop.f32.mrf.mxu0
        %v5659 = vadd.f32 %v5424, %v5658
        %v5660 = vpop.f32.mrf.mxu0
        %v5661 = vpop.f32.mrf.mxu0
        %v5662 = vadd.f32 %v5424, %v5661
        %v5663 = vpop.f32.mrf.mxu0
        %5664 = vmatprep.mubr.bf16.mxu0 %v5574
        %5665 = vmatmul.mubr.bf16.gmra.mxu0 %v5488
        %v5666 = vpop.f32.mrf.mxu0
        %v5667 = vadd.f32 %v5424, %v5666
        %v5668 = vpop.f32.mrf.mxu0
        %v5669 = vpop.f32.mrf.mxu0
        %v5670 = vadd.f32 %v5424, %v5669
        %v5671 = vpop.f32.mrf.mxu0
        %5672 = vdwg.mxu0
        %v5673 = vmax.f32 %v5611, 0.0
        %v5674 = vmax.f32 %v5614, 0.0
        %v5675 = vmax.f32 %v5619, 0.0
        %v5676 = vmax.f32 %v5622, 0.0
        %v5677 = vmax.f32 %v5627, 0.0
        %v5678 = vmax.f32 %v5630, 0.0
        %v5679 = vmax.f32 %v5635, 0.0
        %v5680 = vmax.f32 %v5638, 0.0
        %v5681 = vmax.f32 %v5643, 0.0
        %v5682 = vmax.f32 %v5646, 0.0
        %v5683 = vmax.f32 %v5651, 0.0
        %v5684 = vmax.f32 %v5654, 0.0
        %v5685 = vmax.f32 %v5659, 0.0
        %v5686 = vmax.f32 %v5662, 0.0
        %v5687 = vmax.f32 %v5667, 0.0
        %v5688 = vmax.f32 %v5670, 0.0
        %vm5689 = vcmask 261120
        %v5690 = vsel %vm5689, %v5673, -inf
        %v5691 = vsel %vm5689, %v5675, -inf
        %v5692 = vmax.f32 %v5690, %v5691
        %v5693 = vsel %vm5689, %v5674, -inf
        %v5694 = vsel %vm5689, %v5676, -inf
        %v5695 = vmax.f32 %v5693, %v5694
        %v5696 = vsel %vm5689, %v5677, -inf
        %v5697 = vsel %vm5689, %v5679, -inf
        %v5698 = vmax.f32 %v5696, %v5697
        %v5699 = vsel %vm5689, %v5678, -inf
        %v5700 = vsel %vm5689, %v5680, -inf
        %v5701 = vmax.f32 %v5699, %v5700
        %v5702 = vsel %vm5689, %v5681, -inf
        %v5703 = vsel %vm5689, %v5683, -inf
        %v5704 = vmax.f32 %v5702, %v5703
        %v5705 = vsel %vm5689, %v5682, -inf
        %v5706 = vsel %vm5689, %v5684, -inf
        %v5707 = vmax.f32 %v5705, %v5706
        %v5708 = vsel %vm5689, %v5685, -inf
        %v5709 = vsel %vm5689, %v5687, -inf
        %v5710 = vmax.f32 %v5708, %v5709
        %v5711 = vsel %vm5689, %v5686, -inf
        %v5712 = vsel %vm5689, %v5688, -inf
        %v5713 = vmax.f32 %v5711, %v5712
        %5714 = vst.msk [vmem:[#allocation6] sm:$0xff] %vm5689, %v5692
        %5715 = vst.msk [vmem:[#allocation6 + $0x8] sm:$0xff] %vm5689, %v5695
        %5716 = vst.msk [vmem:[#allocation6 + $0x10] sm:$0xff] %vm5689, %v5698
        %5717 = vst.msk [vmem:[#allocation6 + $0x18] sm:$0xff] %vm5689, %v5701
        %5718 = vst.msk [vmem:[#allocation6 + $0x20] sm:$0xff] %vm5689, %v5704
        %5719 = vst.msk [vmem:[#allocation6 + $0x28] sm:$0xff] %vm5689, %v5707
        %5720 = vst.msk [vmem:[#allocation6 + $0x30] sm:$0xff] %vm5689, %v5710
        %5721 = vst.msk [vmem:[#allocation6 + $0x38] sm:$0xff] %vm5689, %v5713
        %s5722 = scalar_lea.vmem [#allocation5], 128
        %v5723 = vld [vmem:[%s5722] sm:$0xff]
        %v5724 = vld [vmem:[%s5722 + $0x8] sm:$0xff]
        %v5725 = vld [vmem:[%s5722 + $0x10] sm:$0xff]
        %v5726 = vld [vmem:[%s5722 + $0x18] sm:$0xff]
        %v5727 = vld [vmem:[%s5722 + $0x20] sm:$0xff]
        %v5728 = vld [vmem:[%s5722 + $0x28] sm:$0xff]
        %v5729 = vld [vmem:[%s5722 + $0x30] sm:$0xff]
        %v5730 = vld [vmem:[%s5722 + $0x38] sm:$0xff]
        %v5731 = vld [vmem:[%s5722 + $0x40] sm:$0xff]
        %v5732 = vld [vmem:[%s5722 + $0x48] sm:$0xff]
        %v5733 = vld [vmem:[%s5722 + $0x50] sm:$0xff]
        %v5734 = vld [vmem:[%s5722 + $0x58] sm:$0xff]
        %v5735 = vld [vmem:[%s5722 + $0x60] sm:$0xff]
        %v5736 = vld [vmem:[%s5722 + $0x68] sm:$0xff]
        %v5737 = vld [vmem:[%s5722 + $0x70] sm:$0xff]
        %v5738 = vld [vmem:[%s5722 + $0x78] sm:$0xff]
        %v5739 = vld [vmem:[%s3] sm:$0xf]
        %v5740 = vld [vmem:[%s3 + $0x4] sm:$0xf]
        %v5741 = vld [vmem:[%s3 + $0x8] sm:$0xf]
        %v5742 = vld [vmem:[%s3 + $0xc] sm:$0xf]
        %v5743 = vld [vmem:[%s3 + $0x10] sm:$0xf]
        %v5744 = vld [vmem:[%s3 + $0x14] sm:$0xf]
        %v5745 = vld [vmem:[%s3 + $0x18] sm:$0xf]
        %v5746 = vld [vmem:[%s3 + $0x1c] sm:$0xf]
        %v5747 = vld [vmem:[%s3 + $0x20] sm:$0xf]
        %v5748 = vld [vmem:[%s3 + $0x24] sm:$0xf]
        %v5749 = vld [vmem:[%s3 + $0x28] sm:$0xf]
        %v5750 = vld [vmem:[%s3 + $0x2c] sm:$0xf]
        %v5751 = vld [vmem:[%s3 + $0x30] sm:$0xf]
        %v5752 = vld [vmem:[%s3 + $0x34] sm:$0xf]
        %v5753 = vld [vmem:[%s3 + $0x38] sm:$0xf]
        %v5754 = vld [vmem:[%s3 + $0x3c] sm:$0xf]
        %v5755 = vld [vmem:[%s3 + $0x40] sm:$0xf]
        %v5756 = vld [vmem:[%s3 + $0x44] sm:$0xf]
        %v5757 = vld [vmem:[%s4] sm:$0x1]
        %v5759 = vlaneseq
        %v5760 = vshrl.u32 %v5759, 7
        %v5761 = vsub.s32 0, %v5760
        %v5762 = vrot.slane %v5757, %v5761
        %v5780 = vunpack.c.l.b16 %v5723
        %v5781 = vunpack.c.h.b16 %v5723
        %v5782 = vunpack.c.l.b16 %v5724
        %v5783 = vunpack.c.h.b16 %v5724
        %v5784 = vunpack.c.l.b16 %v5725
        %v5785 = vunpack.c.h.b16 %v5725
        %v5786 = vunpack.c.l.b16 %v5726
        %v5787 = vunpack.c.h.b16 %v5726
        %v5788 = vunpack.c.l.b16 %v5727
        %v5789 = vunpack.c.h.b16 %v5727
        %v5790 = vunpack.c.l.b16 %v5728
        %v5791 = vunpack.c.h.b16 %v5728
        %v5792 = vunpack.c.l.b16 %v5729
        %v5793 = vunpack.c.h.b16 %v5729
        %v5794 = vunpack.c.l.b16 %v5730
        %v5795 = vunpack.c.h.b16 %v5730
        %v5796 = vunpack.c.l.b16 %v5731
        %v5797 = vunpack.c.h.b16 %v5731
        %v5798 = vunpack.c.l.b16 %v5732
        %v5799 = vunpack.c.h.b16 %v5732
        %v5800 = vunpack.c.l.b16 %v5733
        %v5801 = vunpack.c.h.b16 %v5733
        %v5802 = vunpack.c.l.b16 %v5734
        %v5803 = vunpack.c.h.b16 %v5734
        %v5804 = vunpack.c.l.b16 %v5735
        %v5805 = vunpack.c.h.b16 %v5735
        %v5806 = vunpack.c.l.b16 %v5736
        %v5807 = vunpack.c.h.b16 %v5736
        %v5808 = vunpack.c.l.b16 %v5737
        %v5809 = vunpack.c.h.b16 %v5737
        %v5810 = vunpack.c.l.b16 %v5738
        %v5811 = vunpack.c.h.b16 %v5738
        %v5812 = vpack.c.b16 %v5782, %v5780
        %v5813 = vpack.c.b16 %v5783, %v5781
        %v5814 = vpack.c.b16 %v5786, %v5784
        %v5815 = vpack.c.b16 %v5787, %v5785
        %v5816 = vpack.c.b16 %v5790, %v5788
        %v5817 = vpack.c.b16 %v5791, %v5789
        %v5818 = vpack.c.b16 %v5794, %v5792
        %v5819 = vpack.c.b16 %v5795, %v5793
        %v5820 = vpack.c.b16 %v5798, %v5796
        %v5821 = vpack.c.b16 %v5799, %v5797
        %v5822 = vpack.c.b16 %v5802, %v5800
        %v5823 = vpack.c.b16 %v5803, %v5801
        %v5824 = vpack.c.b16 %v5806, %v5804
        %v5825 = vpack.c.b16 %v5807, %v5805
        %v5826 = vpack.c.b16 %v5810, %v5808
        %v5827 = vpack.c.b16 %v5811, %v5809
        %v5854 = vunpack.c.l.b16 %v5739
        %v5855 = vunpack.c.l.b16 %v5740
        %v5856 = vunpack.c.l.b16 %v5741
        %v5857 = vunpack.c.l.b16 %v5742
        %v5858 = vunpack.c.l.b16 %v5743
        %v5859 = vunpack.c.l.b16 %v5744
        %v5860 = vunpack.c.l.b16 %v5745
        %v5861 = vunpack.c.l.b16 %v5746
        %v5862 = vunpack.c.l.b16 %v5747
        %v5863 = vunpack.c.l.b16 %v5748
        %v5864 = vunpack.c.l.b16 %v5749
        %v5865 = vunpack.c.l.b16 %v5750
        %v5866 = vunpack.c.l.b16 %v5751
        %v5867 = vunpack.c.l.b16 %v5752
        %v5868 = vunpack.c.l.b16 %v5753
        %v5869 = vunpack.c.l.b16 %v5754
        %v5870 = vunpack.c.l.b16 %v5755
        %v5871 = vunpack.c.l.b16 %v5756
        %v5872 = vpack.c.b16 %v5855, %v5854
        %v5873 = vpack.c.b16 %v5857, %v5856
        %v5874 = vpack.c.b16 %v5859, %v5858
        %v5875 = vpack.c.b16 %v5861, %v5860
        %v5876 = vpack.c.b16 %v5863, %v5862
        %v5877 = vpack.c.b16 %v5865, %v5864
        %v5878 = vpack.c.b16 %v5867, %v5866
        %v5879 = vpack.c.b16 %v5869, %v5868
        %v5880 = vpack.c.b16 %v5871, %v5870
        %v5891 = vsel %vm360, %v5813, 0
        %v5894 = vsel %vm360, %v5815, 0
        %v5897 = vsel %vm360, %v5817, 0
        %v5900 = vsel %vm360, %v5819, 0
        %v5903 = vsel %vm360, %v5821, 0
        %v5906 = vsel %vm360, %v5823, 0
        %v5909 = vsel %vm360, %v5825, 0
        %v5912 = vsel %vm360, %v5827, 0
        %5914 = vmatprep.subr.bf16.mxu0 0
        %5915 = vmatpush1.bf16.msra.mxu0 %v5879
        %5916 = vmatprep.subr.bf16.mxu0 0
        %5917 = vmatpush1.bf16.msra.mxu0 %v5878
        %5918 = vmatprep.subr.bf16.mxu0 0
        %5919 = vmatpush1.bf16.msra.mxu0 %v5877
        %5920 = vmatprep.subr.bf16.mxu0 0
        %5921 = vmatpush1.bf16.msra.mxu0 %v5876
        %5922 = vmatprep.subr.bf16.mxu0 0
        %5923 = vmatpush1.bf16.msra.mxu0 %v5875
        %5924 = vmatprep.subr.bf16.mxu0 0
        %5925 = vmatpush1.bf16.msra.mxu0 %v5874
        %5926 = vmatprep.subr.bf16.mxu0 0
        %5927 = vmatpush1.bf16.msra.mxu0 %v5873
        %5928 = vmatprep.subr.bf16.mxu0 0
        %5929 = vmatpush1.bf16.msra.mxu0 %v5872
        %5930 = vmatprep.subr.bf16.mxu0 0
        %5931 = vmatpush2.bf16.msra.mxu0 0
        %5932 = vmatprep.subr.bf16.mxu0 0
        %5933 = vmatpush2.bf16.msra.mxu0 0
        %5934 = vmatprep.subr.bf16.mxu0 0
        %5935 = vmatpush2.bf16.msra.mxu0 0
        %5936 = vmatprep.subr.bf16.mxu0 0
        %5937 = vmatpush2.bf16.msra.mxu0 0
        %5938 = vmatprep.subr.bf16.mxu0 0
        %5939 = vmatpush2.bf16.msra.mxu0 0
        %5940 = vmatprep.subr.bf16.mxu0 0
        %5941 = vmatpush2.bf16.msra.mxu0 0
        %5942 = vmatprep.subr.bf16.mxu0 0
        %5943 = vmatpush2.bf16.msra.mxu0 0
        %5944 = vmatprep.subr.bf16.mxu0 0
        %5945 = vmatpush2.bf16.msra.mxu0 %v5880
        %5946 = vmatprep.mubr.bf16.mxu0 %v5891
        %5947 = vmatmul.mubr.bf16.gmra.mxu0 %v5812
        %v5948 = vpop.f32.mrf.mxu0
        %v5949 = vadd.f32 %v5762, %v5948
        %v5950 = vpop.f32.mrf.mxu0
        %v5951 = vpop.f32.mrf.mxu0
        %v5952 = vadd.f32 %v5762, %v5951
        %v5953 = vpop.f32.mrf.mxu0
        %5954 = vmatprep.mubr.bf16.mxu0 %v5894
        %5955 = vmatmul.mubr.bf16.gmra.mxu0 %v5814
        %v5956 = vpop.f32.mrf.mxu0
        %v5957 = vadd.f32 %v5762, %v5956
        %v5958 = vpop.f32.mrf.mxu0
        %v5959 = vpop.f32.mrf.mxu0
        %v5960 = vadd.f32 %v5762, %v5959
        %v5961 = vpop.f32.mrf.mxu0
        %5962 = vmatprep.mubr.bf16.mxu0 %v5897
        %5963 = vmatmul.mubr.bf16.gmra.mxu0 %v5816
        %v5964 = vpop.f32.mrf.mxu0
        %v5965 = vadd.f32 %v5762, %v5964
        %v5966 = vpop.f32.mrf.mxu0
        %v5967 = vpop.f32.mrf.mxu0
        %v5968 = vadd.f32 %v5762, %v5967
        %v5969 = vpop.f32.mrf.mxu0
        %5970 = vmatprep.mubr.bf16.mxu0 %v5900
        %5971 = vmatmul.mubr.bf16.gmra.mxu0 %v5818
        %v5972 = vpop.f32.mrf.mxu0
        %v5973 = vadd.f32 %v5762, %v5972
        %v5974 = vpop.f32.mrf.mxu0
        %v5975 = vpop.f32.mrf.mxu0
        %v5976 = vadd.f32 %v5762, %v5975
        %v5977 = vpop.f32.mrf.mxu0
        %5978 = vmatprep.mubr.bf16.mxu0 %v5903
        %5979 = vmatmul.mubr.bf16.gmra.mxu0 %v5820
        %v5980 = vpop.f32.mrf.mxu0
        %v5981 = vadd.f32 %v5762, %v5980
        %v5982 = vpop.f32.mrf.mxu0
        %v5983 = vpop.f32.mrf.mxu0
        %v5984 = vadd.f32 %v5762, %v5983
        %v5985 = vpop.f32.mrf.mxu0
        %5986 = vmatprep.mubr.bf16.mxu0 %v5906
        %5987 = vmatmul.mubr.bf16.gmra.mxu0 %v5822
        %v5988 = vpop.f32.mrf.mxu0
        %v5989 = vadd.f32 %v5762, %v5988
        %v5990 = vpop.f32.mrf.mxu0
        %v5991 = vpop.f32.mrf.mxu0
        %v5992 = vadd.f32 %v5762, %v5991
        %v5993 = vpop.f32.mrf.mxu0
        %5994 = vmatprep.mubr.bf16.mxu0 %v5909
        %5995 = vmatmul.mubr.bf16.gmra.mxu0 %v5824
        %v5996 = vpop.f32.mrf.mxu0
        %v5997 = vadd.f32 %v5762, %v5996
        %v5998 = vpop.f32.mrf.mxu0
        %v5999 = vpop.f32.mrf.mxu0
        %v6000 = vadd.f32 %v5762, %v5999
        %v6001 = vpop.f32.mrf.mxu0
        %6002 = vmatprep.mubr.bf16.mxu0 %v5912
        %6003 = vmatmul.mubr.bf16.gmra.mxu0 %v5826
        %v6004 = vpop.f32.mrf.mxu0
        %v6005 = vadd.f32 %v5762, %v6004
        %v6006 = vpop.f32.mrf.mxu0
        %v6007 = vpop.f32.mrf.mxu0
        %v6008 = vadd.f32 %v5762, %v6007
        %v6009 = vpop.f32.mrf.mxu0
        %6010 = vdwg.mxu0
        %v6011 = vmax.f32 %v5949, 0.0
        %v6012 = vmax.f32 %v5952, 0.0
        %v6013 = vmax.f32 %v5957, 0.0
        %v6014 = vmax.f32 %v5960, 0.0
        %v6015 = vmax.f32 %v5965, 0.0
        %v6016 = vmax.f32 %v5968, 0.0
        %v6017 = vmax.f32 %v5973, 0.0
        %v6018 = vmax.f32 %v5976, 0.0
        %v6019 = vmax.f32 %v5981, 0.0
        %v6020 = vmax.f32 %v5984, 0.0
        %v6021 = vmax.f32 %v5989, 0.0
        %v6022 = vmax.f32 %v5992, 0.0
        %v6023 = vmax.f32 %v5997, 0.0
        %v6024 = vmax.f32 %v6000, 0.0
        %v6025 = vmax.f32 %v6005, 0.0
        %v6026 = vmax.f32 %v6008, 0.0
        %v6027 = vsel %vm5689, %v6011, -inf
        %v6028 = vsel %vm5689, %v6013, -inf
        %v6029 = vmax.f32 %v6027, %v6028
        %v6030 = vsel %vm5689, %v6012, -inf
        %v6031 = vsel %vm5689, %v6014, -inf
        %v6032 = vmax.f32 %v6030, %v6031
        %v6033 = vsel %vm5689, %v6015, -inf
        %v6034 = vsel %vm5689, %v6017, -inf
        %v6035 = vmax.f32 %v6033, %v6034
        %v6036 = vsel %vm5689, %v6016, -inf
        %v6037 = vsel %vm5689, %v6018, -inf
        %v6038 = vmax.f32 %v6036, %v6037
        %v6039 = vsel %vm5689, %v6019, -inf
        %v6040 = vsel %vm5689, %v6021, -inf
        %v6041 = vmax.f32 %v6039, %v6040
        %v6042 = vsel %vm5689, %v6020, -inf
        %v6043 = vsel %vm5689, %v6022, -inf
        %v6044 = vmax.f32 %v6042, %v6043
        %v6045 = vsel %vm5689, %v6023, -inf
        %v6046 = vsel %vm5689, %v6025, -inf
        %v6047 = vmax.f32 %v6045, %v6046
        %v6048 = vsel %vm5689, %v6024, -inf
        %v6049 = vsel %vm5689, %v6026, -inf
        %v6050 = vmax.f32 %v6048, %v6049
        %s6051 = scalar_lea.vmem [#allocation6], 64
        %6052 = vst.msk [vmem:[%s6051] sm:$0xff] %vm5689, %v6029
        %6053 = vst.msk [vmem:[%s6051 + $0x8] sm:$0xff] %vm5689, %v6032
        %6054 = vst.msk [vmem:[%s6051 + $0x10] sm:$0xff] %vm5689, %v6035
        %6055 = vst.msk [vmem:[%s6051 + $0x18] sm:$0xff] %vm5689, %v6038
        %6056 = vst.msk [vmem:[%s6051 + $0x20] sm:$0xff] %vm5689, %v6041
        %6057 = vst.msk [vmem:[%s6051 + $0x28] sm:$0xff] %vm5689, %v6044
        %6058 = vst.msk [vmem:[%s6051 + $0x30] sm:$0xff] %vm5689, %v6047
        %6059 = vst.msk [vmem:[%s6051 + $0x38] sm:$0xff] %vm5689, %v6050
        %v6060 = vld [vmem:[#allocation6] ss:$2 sm:$0xff]
        %s6061 = scalar_lea.vmem [#allocation6], 16
        %v6062 = vld [vmem:[%s6061] ss:$2 sm:$0xff]
        %s6063 = scalar_lea.vmem [#allocation6], 32
        %v6064 = vld [vmem:[%s6063] ss:$2 sm:$0xff]
        %s6065 = scalar_lea.vmem [#allocation6], 48
        %v6066 = vld [vmem:[%s6065] ss:$2 sm:$0xff]
        %s6067 = scalar_lea.vmem [#allocation6], 64
        %v6068 = vld [vmem:[%s6067] ss:$2 sm:$0xff]
        %s6069 = scalar_lea.vmem [#allocation6], 80
        %v6070 = vld [vmem:[%s6069] ss:$2 sm:$0xff]
        %s6071 = scalar_lea.vmem [#allocation6], 96
        %v6072 = vld [vmem:[%s6071] ss:$2 sm:$0xff]
        %s6073 = scalar_lea.vmem [#allocation6], 112
        %v6074 = vld [vmem:[%s6073] ss:$2 sm:$0xff]
        %s6075 = scalar_lea.vmem [#allocation6], 1
        %v6076 = vld [vmem:[%s6075] ss:$2 sm:$0xff]
        %s6077 = scalar_lea.vmem [#allocation6], 17
        %v6078 = vld [vmem:[%s6077] ss:$2 sm:$0xff]
        %s6079 = scalar_lea.vmem [#allocation6], 33
        %v6080 = vld [vmem:[%s6079] ss:$2 sm:$0xff]
        %s6081 = scalar_lea.vmem [#allocation6], 49
        %v6082 = vld [vmem:[%s6081] ss:$2 sm:$0xff]
        %s6083 = scalar_lea.vmem [#allocation6], 65
        %v6084 = vld [vmem:[%s6083] ss:$2 sm:$0xff]
        %s6085 = scalar_lea.vmem [#allocation6], 81
        %v6086 = vld [vmem:[%s6085] ss:$2 sm:$0xff]
        %s6087 = scalar_lea.vmem [#allocation6], 97
        %v6088 = vld [vmem:[%s6087] ss:$2 sm:$0xff]
        %s6089 = scalar_lea.vmem [#allocation6], 113
        %v6090 = vld [vmem:[%s6089] ss:$2 sm:$0xff]
        %v6091 = vmax.f32 %v6060, %v6076
        %v6092 = vmax.f32 %v6062, %v6078
        %v6093 = vmax.f32 %v6064, %v6080
        %v6094 = vmax.f32 %v6066, %v6082
        %v6095 = vmax.f32 %v6068, %v6084
        %v6096 = vmax.f32 %v6070, %v6086
        %v6097 = vmax.f32 %v6072, %v6088
        %v6098 = vmax.f32 %v6074, %v6090
        %v6099 = vlaneseq
        %vm6100 = vcmp.ge.s32.totalorder %v6099, 0
        %vm6101 = vcmp.lt.s32.totalorder %v6099, 32
        %vm6102 = vmand %vm6100, %vm6101
        %6103 = vst.msk [vmem:[#allocation7] sm:$0x1] %vm6102, %v6091
        %v6106 = vunpack.c.l.s4 1966171168
        %v6107 = vunpack.c.0.s8 %v6106
        %v6108 = vlaneseq
        %v6109 = vshrl.u32 %v6108, 7
        %v6110 = vsub.s32 %v6107, %v6109
        %v6111 = vrot.slane %v6091, %v6110
        %v6112 = vcombine.high %v6111, %v6111
        %v6114 = vunpack.c.l.s4 1966171168
        %v6115 = vunpack.c.0.s8 %v6114
        %v6116 = vlaneseq
        %v6117 = vshrl.u32 %v6116, 7
        %v6118 = vsub.s32 %v6115, %v6117
        %v6119 = vrot.slane %v6111, %v6118
        %v6121 = vunpack.c.l.s4 1966171168
        %v6122 = vunpack.c.0.s8 %v6121
        %v6123 = vlaneseq
        %v6124 = vshrl.u32 %v6123, 7
        %v6125 = vsub.s32 %v6122, %v6124
        %v6126 = vrot.slane %v6112, %v6125
        %6127 = vrot.lane.b32.xlu0 %v6126, 32
        %v6128 = vpop.permute.xlu0 %6127
        %vm6130 = vcmp.ge.s32.totalorder %v6099, 32
        %vm6131 = vcmp.lt.s32.totalorder %v6099, 64
        %vm6132 = vmand %vm6130, %vm6131
        %6133 = vst.msk [vmem:[#allocation7] sm:$0x1] %vm6132, %v6128
        %v6134 = vcombine.high %v6119, %v6119
        %6135 = vrot.lane.b32.xlu0 %v6134, 64
        %v6136 = vpop.permute.xlu0 %6135
        %vm6138 = vcmp.ge.s32.totalorder %v6099, 64
        %vm6139 = vcmp.lt.s32.totalorder %v6099, 96
        %vm6140 = vmand %vm6138, %vm6139
        %6141 = vst.msk [vmem:[#allocation7] sm:$0x1] %vm6140, %v6136
        %v6142 = vcombine.high %v6126, %v6126
        %6143 = vrot.lane.b32.xlu0 %v6142, 96
        %v6144 = vpop.permute.xlu0 %6143
        %vm6146 = vcmp.ge.s32.totalorder %v6099, 96
        %vm6147 = vcmp.lt.s32.totalorder %v6099, 128
        %vm6148 = vmand %vm6146, %vm6147
        %6149 = vst.msk [vmem:[#allocation7] sm:$0x1] %vm6148, %v6144
        %v6150 = vcombine.high %v6091, %v6091
        %v6152 = vunpack.c.l.s4 1966171168
        %v6153 = vunpack.c.0.s8 %v6152
        %v6154 = vlaneseq
        %v6155 = vshrl.u32 %v6154, 7
        %v6156 = vsub.s32 %v6153, %v6155
        %v6157 = vrot.slane %v6150, %v6156
        %v6159 = vunpack.c.l.s4 1966171168
        %v6160 = vunpack.c.0.s8 %v6159
        %v6161 = vlaneseq
        %v6162 = vshrl.u32 %v6161, 7
        %v6163 = vsub.s32 %v6160, %v6162
        %v6164 = vrot.slane %v6157, %v6163
        %6166 = vst.msk [vmem:[#allocation7 + $0x1] sm:$0x1] %vm6102, %v6164
        %v6167 = vcombine.high %v6157, %v6157
        %v6169 = vunpack.c.l.s4 1966171168
        %v6170 = vunpack.c.0.s8 %v6169
        %v6171 = vlaneseq
        %v6172 = vshrl.u32 %v6171, 7
        %v6173 = vsub.s32 %v6170, %v6172
        %v6174 = vrot.slane %v6167, %v6173
        %6175 = vrot.lane.b32.xlu0 %v6174, 32
        %v6176 = vpop.permute.xlu0 %6175
        %6178 = vst.msk [vmem:[#allocation7 + $0x1] sm:$0x1] %vm6132, %v6176
        %v6179 = vcombine.high %v6164, %v6164
        %6180 = vrot.lane.b32.xlu0 %v6179, 64
        %v6181 = vpop.permute.xlu0 %6180
        %6183 = vst.msk [vmem:[#allocation7 + $0x1] sm:$0x1] %vm6140, %v6181
        %v6184 = vcombine.high %v6174, %v6174
        %6185 = vrot.lane.b32.xlu0 %v6184, 96
        %v6186 = vpop.permute.xlu0 %6185
        %6188 = vst.msk [vmem:[#allocation7 + $0x1] sm:$0x1] %vm6148, %v6186
        %6189 = vst.msk [vmem:[#allocation7 + $0x2] sm:$0x1] %vm6102, %v6092
        %v6192 = vunpack.c.l.s4 1966171168
        %v6193 = vunpack.c.0.s8 %v6192
        %v6194 = vlaneseq
        %v6195 = vshrl.u32 %v6194, 7
        %v6196 = vsub.s32 %v6193, %v6195
        %v6197 = vrot.slane %v6092, %v6196
        %v6198 = vcombine.high %v6197, %v6197
        %v6200 = vunpack.c.l.s4 1966171168
        %v6201 = vunpack.c.0.s8 %v6200
        %v6202 = vlaneseq
        %v6203 = vshrl.u32 %v6202, 7
        %v6204 = vsub.s32 %v6201, %v6203
        %v6205 = vrot.slane %v6197, %v6204
        %v6207 = vunpack.c.l.s4 1966171168
        %v6208 = vunpack.c.0.s8 %v6207
        %v6209 = vlaneseq
        %v6210 = vshrl.u32 %v6209, 7
        %v6211 = vsub.s32 %v6208, %v6210
        %v6212 = vrot.slane %v6198, %v6211
        %6213 = vrot.lane.b32.xlu0 %v6212, 32
        %v6214 = vpop.permute.xlu0 %6213
        %6216 = vst.msk [vmem:[#allocation7 + $0x2] sm:$0x1] %vm6132, %v6214
        %v6217 = vcombine.high %v6205, %v6205
        %6218 = vrot.lane.b32.xlu0 %v6217, 64
        %v6219 = vpop.permute.xlu0 %6218
        %6221 = vst.msk [vmem:[#allocation7 + $0x2] sm:$0x1] %vm6140, %v6219
        %v6222 = vcombine.high %v6212, %v6212
        %6223 = vrot.lane.b32.xlu0 %v6222, 96
        %v6224 = vpop.permute.xlu0 %6223
        %6226 = vst.msk [vmem:[#allocation7 + $0x2] sm:$0x1] %vm6148, %v6224
        %v6227 = vcombine.high %v6092, %v6092
        %v6229 = vunpack.c.l.s4 1966171168
        %v6230 = vunpack.c.0.s8 %v6229
        %v6231 = vlaneseq
        %v6232 = vshrl.u32 %v6231, 7
        %v6233 = vsub.s32 %v6230, %v6232
        %v6234 = vrot.slane %v6227, %v6233
        %v6236 = vunpack.c.l.s4 1966171168
        %v6237 = vunpack.c.0.s8 %v6236
        %v6238 = vlaneseq
        %v6239 = vshrl.u32 %v6238, 7
        %v6240 = vsub.s32 %v6237, %v6239
        %v6241 = vrot.slane %v6234, %v6240
        %6243 = vst.msk [vmem:[#allocation7 + $0x3] sm:$0x1] %vm6102, %v6241
        %v6244 = vcombine.high %v6234, %v6234
        %v6246 = vunpack.c.l.s4 1966171168
        %v6247 = vunpack.c.0.s8 %v6246
        %v6248 = vlaneseq
        %v6249 = vshrl.u32 %v6248, 7
        %v6250 = vsub.s32 %v6247, %v6249
        %v6251 = vrot.slane %v6244, %v6250
        %6252 = vrot.lane.b32.xlu0 %v6251, 32
        %v6253 = vpop.permute.xlu0 %6252
        %6255 = vst.msk [vmem:[#allocation7 + $0x3] sm:$0x1] %vm6132, %v6253
        %v6256 = vcombine.high %v6241, %v6241
        %6257 = vrot.lane.b32.xlu0 %v6256, 64
        %v6258 = vpop.permute.xlu0 %6257
        %6260 = vst.msk [vmem:[#allocation7 + $0x3] sm:$0x1] %vm6140, %v6258
        %v6261 = vcombine.high %v6251, %v6251
        %6262 = vrot.lane.b32.xlu0 %v6261, 96
        %v6263 = vpop.permute.xlu0 %6262
        %6265 = vst.msk [vmem:[#allocation7 + $0x3] sm:$0x1] %vm6148, %v6263
        %6266 = vst.msk [vmem:[#allocation7 + $0x4] sm:$0x1] %vm6102, %v6093
        %v6269 = vunpack.c.l.s4 1966171168
        %v6270 = vunpack.c.0.s8 %v6269
        %v6271 = vlaneseq
        %v6272 = vshrl.u32 %v6271, 7
        %v6273 = vsub.s32 %v6270, %v6272
        %v6274 = vrot.slane %v6093, %v6273
        %v6275 = vcombine.high %v6274, %v6274
        %v6277 = vunpack.c.l.s4 1966171168
        %v6278 = vunpack.c.0.s8 %v6277
        %v6279 = vlaneseq
        %v6280 = vshrl.u32 %v6279, 7
        %v6281 = vsub.s32 %v6278, %v6280
        %v6282 = vrot.slane %v6274, %v6281
        %v6284 = vunpack.c.l.s4 1966171168
        %v6285 = vunpack.c.0.s8 %v6284
        %v6286 = vlaneseq
        %v6287 = vshrl.u32 %v6286, 7
        %v6288 = vsub.s32 %v6285, %v6287
        %v6289 = vrot.slane %v6275, %v6288
        %6290 = vrot.lane.b32.xlu0 %v6289, 32
        %v6291 = vpop.permute.xlu0 %6290
        %6293 = vst.msk [vmem:[#allocation7 + $0x4] sm:$0x1] %vm6132, %v6291
        %v6294 = vcombine.high %v6282, %v6282
        %6295 = vrot.lane.b32.xlu0 %v6294, 64
        %v6296 = vpop.permute.xlu0 %6295
        %6298 = vst.msk [vmem:[#allocation7 + $0x4] sm:$0x1] %vm6140, %v6296
        %v6299 = vcombine.high %v6289, %v6289
        %6300 = vrot.lane.b32.xlu0 %v6299, 96
        %v6301 = vpop.permute.xlu0 %6300
        %6303 = vst.msk [vmem:[#allocation7 + $0x4] sm:$0x1] %vm6148, %v6301
        %v6304 = vcombine.high %v6093, %v6093
        %v6306 = vunpack.c.l.s4 1966171168
        %v6307 = vunpack.c.0.s8 %v6306
        %v6308 = vlaneseq
        %v6309 = vshrl.u32 %v6308, 7
        %v6310 = vsub.s32 %v6307, %v6309
        %v6311 = vrot.slane %v6304, %v6310
        %v6313 = vunpack.c.l.s4 1966171168
        %v6314 = vunpack.c.0.s8 %v6313
        %v6315 = vlaneseq
        %v6316 = vshrl.u32 %v6315, 7
        %v6317 = vsub.s32 %v6314, %v6316
        %v6318 = vrot.slane %v6311, %v6317
        %6320 = vst.msk [vmem:[#allocation7 + $0x5] sm:$0x1] %vm6102, %v6318
        %v6321 = vcombine.high %v6311, %v6311
        %v6323 = vunpack.c.l.s4 1966171168
        %v6324 = vunpack.c.0.s8 %v6323
        %v6325 = vlaneseq
        %v6326 = vshrl.u32 %v6325, 7
        %v6327 = vsub.s32 %v6324, %v6326
        %v6328 = vrot.slane %v6321, %v6327
        %6329 = vrot.lane.b32.xlu0 %v6328, 32
        %v6330 = vpop.permute.xlu0 %6329
        %6332 = vst.msk [vmem:[#allocation7 + $0x5] sm:$0x1] %vm6132, %v6330
        %v6333 = vcombine.high %v6318, %v6318
        %6334 = vrot.lane.b32.xlu0 %v6333, 64
        %v6335 = vpop.permute.xlu0 %6334
        %6337 = vst.msk [vmem:[#allocation7 + $0x5] sm:$0x1] %vm6140, %v6335
        %v6338 = vcombine.high %v6328, %v6328
        %6339 = vrot.lane.b32.xlu0 %v6338, 96
        %v6340 = vpop.permute.xlu0 %6339
        %6342 = vst.msk [vmem:[#allocation7 + $0x5] sm:$0x1] %vm6148, %v6340
        %6343 = vst.msk [vmem:[#allocation7 + $0x6] sm:$0x1] %vm6102, %v6094
        %v6346 = vunpack.c.l.s4 1966171168
        %v6347 = vunpack.c.0.s8 %v6346
        %v6348 = vlaneseq
        %v6349 = vshrl.u32 %v6348, 7
        %v6350 = vsub.s32 %v6347, %v6349
        %v6351 = vrot.slane %v6094, %v6350
        %v6352 = vcombine.high %v6351, %v6351
        %v6354 = vunpack.c.l.s4 1966171168
        %v6355 = vunpack.c.0.s8 %v6354
        %v6356 = vlaneseq
        %v6357 = vshrl.u32 %v6356, 7
        %v6358 = vsub.s32 %v6355, %v6357
        %v6359 = vrot.slane %v6351, %v6358
        %v6361 = vunpack.c.l.s4 1966171168
        %v6362 = vunpack.c.0.s8 %v6361
        %v6363 = vlaneseq
        %v6364 = vshrl.u32 %v6363, 7
        %v6365 = vsub.s32 %v6362, %v6364
        %v6366 = vrot.slane %v6352, %v6365
        %6367 = vrot.lane.b32.xlu0 %v6366, 32
        %v6368 = vpop.permute.xlu0 %6367
        %6370 = vst.msk [vmem:[#allocation7 + $0x6] sm:$0x1] %vm6132, %v6368
        %v6371 = vcombine.high %v6359, %v6359
        %6372 = vrot.lane.b32.xlu0 %v6371, 64
        %v6373 = vpop.permute.xlu0 %6372
        %6375 = vst.msk [vmem:[#allocation7 + $0x6] sm:$0x1] %vm6140, %v6373
        %v6376 = vcombine.high %v6366, %v6366
        %6377 = vrot.lane.b32.xlu0 %v6376, 96
        %v6378 = vpop.permute.xlu0 %6377
        %6380 = vst.msk [vmem:[#allocation7 + $0x6] sm:$0x1] %vm6148, %v6378
        %v6381 = vcombine.high %v6094, %v6094
        %v6383 = vunpack.c.l.s4 1966171168
        %v6384 = vunpack.c.0.s8 %v6383
        %v6385 = vlaneseq
        %v6386 = vshrl.u32 %v6385, 7
        %v6387 = vsub.s32 %v6384, %v6386
        %v6388 = vrot.slane %v6381, %v6387
        %v6390 = vunpack.c.l.s4 1966171168
        %v6391 = vunpack.c.0.s8 %v6390
        %v6392 = vlaneseq
        %v6393 = vshrl.u32 %v6392, 7
        %v6394 = vsub.s32 %v6391, %v6393
        %v6395 = vrot.slane %v6388, %v6394
        %6397 = vst.msk [vmem:[#allocation7 + $0x7] sm:$0x1] %vm6102, %v6395
        %v6398 = vcombine.high %v6388, %v6388
        %v6400 = vunpack.c.l.s4 1966171168
        %v6401 = vunpack.c.0.s8 %v6400
        %v6402 = vlaneseq
        %v6403 = vshrl.u32 %v6402, 7
        %v6404 = vsub.s32 %v6401, %v6403
        %v6405 = vrot.slane %v6398, %v6404
        %6406 = vrot.lane.b32.xlu0 %v6405, 32
        %v6407 = vpop.permute.xlu0 %6406
        %6409 = vst.msk [vmem:[#allocation7 + $0x7] sm:$0x1] %vm6132, %v6407
        %v6410 = vcombine.high %v6395, %v6395
        %6411 = vrot.lane.b32.xlu0 %v6410, 64
        %v6412 = vpop.permute.xlu0 %6411
        %6414 = vst.msk [vmem:[#allocation7 + $0x7] sm:$0x1] %vm6140, %v6412
        %v6415 = vcombine.high %v6405, %v6405
        %6416 = vrot.lane.b32.xlu0 %v6415, 96
        %v6417 = vpop.permute.xlu0 %6416
        %6419 = vst.msk [vmem:[#allocation7 + $0x7] sm:$0x1] %vm6148, %v6417
        %6420 = vst.msk [vmem:[#allocation7 + $0x8] sm:$0x1] %vm6102, %v6095
        %v6423 = vunpack.c.l.s4 1966171168
        %v6424 = vunpack.c.0.s8 %v6423
        %v6425 = vlaneseq
        %v6426 = vshrl.u32 %v6425, 7
        %v6427 = vsub.s32 %v6424, %v6426
        %v6428 = vrot.slane %v6095, %v6427
        %v6429 = vcombine.high %v6428, %v6428
        %v6431 = vunpack.c.l.s4 1966171168
        %v6432 = vunpack.c.0.s8 %v6431
        %v6433 = vlaneseq
        %v6434 = vshrl.u32 %v6433, 7
        %v6435 = vsub.s32 %v6432, %v6434
        %v6436 = vrot.slane %v6428, %v6435
        %v6438 = vunpack.c.l.s4 1966171168
        %v6439 = vunpack.c.0.s8 %v6438
        %v6440 = vlaneseq
        %v6441 = vshrl.u32 %v6440, 7
        %v6442 = vsub.s32 %v6439, %v6441
        %v6443 = vrot.slane %v6429, %v6442
        %6444 = vrot.lane.b32.xlu0 %v6443, 32
        %v6445 = vpop.permute.xlu0 %6444
        %6447 = vst.msk [vmem:[#allocation7 + $0x8] sm:$0x1] %vm6132, %v6445
        %v6448 = vcombine.high %v6436, %v6436
        %6449 = vrot.lane.b32.xlu0 %v6448, 64
        %v6450 = vpop.permute.xlu0 %6449
        %6452 = vst.msk [vmem:[#allocation7 + $0x8] sm:$0x1] %vm6140, %v6450
        %v6453 = vcombine.high %v6443, %v6443
        %6454 = vrot.lane.b32.xlu0 %v6453, 96
        %v6455 = vpop.permute.xlu0 %6454
        %6457 = vst.msk [vmem:[#allocation7 + $0x8] sm:$0x1] %vm6148, %v6455
        %v6458 = vcombine.high %v6095, %v6095
        %v6460 = vunpack.c.l.s4 1966171168
        %v6461 = vunpack.c.0.s8 %v6460
        %v6462 = vlaneseq
        %v6463 = vshrl.u32 %v6462, 7
        %v6464 = vsub.s32 %v6461, %v6463
        %v6465 = vrot.slane %v6458, %v6464
        %v6467 = vunpack.c.l.s4 1966171168
        %v6468 = vunpack.c.0.s8 %v6467
        %v6469 = vlaneseq
        %v6470 = vshrl.u32 %v6469, 7
        %v6471 = vsub.s32 %v6468, %v6470
        %v6472 = vrot.slane %v6465, %v6471
        %6474 = vst.msk [vmem:[#allocation7 + $0x9] sm:$0x1] %vm6102, %v6472
        %v6475 = vcombine.high %v6465, %v6465
        %v6477 = vunpack.c.l.s4 1966171168
        %v6478 = vunpack.c.0.s8 %v6477
        %v6479 = vlaneseq
        %v6480 = vshrl.u32 %v6479, 7
        %v6481 = vsub.s32 %v6478, %v6480
        %v6482 = vrot.slane %v6475, %v6481
        %6483 = vrot.lane.b32.xlu0 %v6482, 32
        %v6484 = vpop.permute.xlu0 %6483
        %6486 = vst.msk [vmem:[#allocation7 + $0x9] sm:$0x1] %vm6132, %v6484
        %v6487 = vcombine.high %v6472, %v6472
        %6488 = vrot.lane.b32.xlu0 %v6487, 64
        %v6489 = vpop.permute.xlu0 %6488
        %6491 = vst.msk [vmem:[#allocation7 + $0x9] sm:$0x1] %vm6140, %v6489
        %v6492 = vcombine.high %v6482, %v6482
        %6493 = vrot.lane.b32.xlu0 %v6492, 96
        %v6494 = vpop.permute.xlu0 %6493
        %6496 = vst.msk [vmem:[#allocation7 + $0x9] sm:$0x1] %vm6148, %v6494
        %6497 = vst.msk [vmem:[#allocation7 + $0xa] sm:$0x1] %vm6102, %v6096
        %v6500 = vunpack.c.l.s4 1966171168
        %v6501 = vunpack.c.0.s8 %v6500
        %v6502 = vlaneseq
        %v6503 = vshrl.u32 %v6502, 7
        %v6504 = vsub.s32 %v6501, %v6503
        %v6505 = vrot.slane %v6096, %v6504
        %v6506 = vcombine.high %v6505, %v6505
        %v6508 = vunpack.c.l.s4 1966171168
        %v6509 = vunpack.c.0.s8 %v6508
        %v6510 = vlaneseq
        %v6511 = vshrl.u32 %v6510, 7
        %v6512 = vsub.s32 %v6509, %v6511
        %v6513 = vrot.slane %v6505, %v6512
        %v6515 = vunpack.c.l.s4 1966171168
        %v6516 = vunpack.c.0.s8 %v6515
        %v6517 = vlaneseq
        %v6518 = vshrl.u32 %v6517, 7
        %v6519 = vsub.s32 %v6516, %v6518
        %v6520 = vrot.slane %v6506, %v6519
        %6521 = vrot.lane.b32.xlu0 %v6520, 32
        %v6522 = vpop.permute.xlu0 %6521
        %6524 = vst.msk [vmem:[#allocation7 + $0xa] sm:$0x1] %vm6132, %v6522
        %v6525 = vcombine.high %v6513, %v6513
        %6526 = vrot.lane.b32.xlu0 %v6525, 64
        %v6527 = vpop.permute.xlu0 %6526
        %6529 = vst.msk [vmem:[#allocation7 + $0xa] sm:$0x1] %vm6140, %v6527
        %v6530 = vcombine.high %v6520, %v6520
        %6531 = vrot.lane.b32.xlu0 %v6530, 96
        %v6532 = vpop.permute.xlu0 %6531
        %6534 = vst.msk [vmem:[#allocation7 + $0xa] sm:$0x1] %vm6148, %v6532
        %v6535 = vcombine.high %v6096, %v6096
        %v6537 = vunpack.c.l.s4 1966171168
        %v6538 = vunpack.c.0.s8 %v6537
        %v6539 = vlaneseq
        %v6540 = vshrl.u32 %v6539, 7
        %v6541 = vsub.s32 %v6538, %v6540
        %v6542 = vrot.slane %v6535, %v6541
        %v6544 = vunpack.c.l.s4 1966171168
        %v6545 = vunpack.c.0.s8 %v6544
        %v6546 = vlaneseq
        %v6547 = vshrl.u32 %v6546, 7
        %v6548 = vsub.s32 %v6545, %v6547
        %v6549 = vrot.slane %v6542, %v6548
        %6551 = vst.msk [vmem:[#allocation7 + $0xb] sm:$0x1] %vm6102, %v6549
        %v6552 = vcombine.high %v6542, %v6542
        %v6554 = vunpack.c.l.s4 1966171168
        %v6555 = vunpack.c.0.s8 %v6554
        %v6556 = vlaneseq
        %v6557 = vshrl.u32 %v6556, 7
        %v6558 = vsub.s32 %v6555, %v6557
        %v6559 = vrot.slane %v6552, %v6558
        %6560 = vrot.lane.b32.xlu0 %v6559, 32
        %v6561 = vpop.permute.xlu0 %6560
        %6563 = vst.msk [vmem:[#allocation7 + $0xb] sm:$0x1] %vm6132, %v6561
        %v6564 = vcombine.high %v6549, %v6549
        %6565 = vrot.lane.b32.xlu0 %v6564, 64
        %v6566 = vpop.permute.xlu0 %6565
        %6568 = vst.msk [vmem:[#allocation7 + $0xb] sm:$0x1] %vm6140, %v6566
        %v6569 = vcombine.high %v6559, %v6559
        %6570 = vrot.lane.b32.xlu0 %v6569, 96
        %v6571 = vpop.permute.xlu0 %6570
        %6573 = vst.msk [vmem:[#allocation7 + $0xb] sm:$0x1] %vm6148, %v6571
        %6574 = vst.msk [vmem:[#allocation7 + $0xc] sm:$0x1] %vm6102, %v6097
        %v6577 = vunpack.c.l.s4 1966171168
        %v6578 = vunpack.c.0.s8 %v6577
        %v6579 = vlaneseq
        %v6580 = vshrl.u32 %v6579, 7
        %v6581 = vsub.s32 %v6578, %v6580
        %v6582 = vrot.slane %v6097, %v6581
        %v6583 = vcombine.high %v6582, %v6582
        %v6585 = vunpack.c.l.s4 1966171168
        %v6586 = vunpack.c.0.s8 %v6585
        %v6587 = vlaneseq
        %v6588 = vshrl.u32 %v6587, 7
        %v6589 = vsub.s32 %v6586, %v6588
        %v6590 = vrot.slane %v6582, %v6589
        %v6592 = vunpack.c.l.s4 1966171168
        %v6593 = vunpack.c.0.s8 %v6592
        %v6594 = vlaneseq
        %v6595 = vshrl.u32 %v6594, 7
        %v6596 = vsub.s32 %v6593, %v6595
        %v6597 = vrot.slane %v6583, %v6596
        %6598 = vrot.lane.b32.xlu0 %v6597, 32
        %v6599 = vpop.permute.xlu0 %6598
        %6601 = vst.msk [vmem:[#allocation7 + $0xc] sm:$0x1] %vm6132, %v6599
        %v6602 = vcombine.high %v6590, %v6590
        %6603 = vrot.lane.b32.xlu0 %v6602, 64
        %v6604 = vpop.permute.xlu0 %6603
        %6606 = vst.msk [vmem:[#allocation7 + $0xc] sm:$0x1] %vm6140, %v6604
        %v6607 = vcombine.high %v6597, %v6597
        %6608 = vrot.lane.b32.xlu0 %v6607, 96
        %v6609 = vpop.permute.xlu0 %6608
        %6611 = vst.msk [vmem:[#allocation7 + $0xc] sm:$0x1] %vm6148, %v6609
        %v6612 = vcombine.high %v6097, %v6097
        %v6614 = vunpack.c.l.s4 1966171168
        %v6615 = vunpack.c.0.s8 %v6614
        %v6616 = vlaneseq
        %v6617 = vshrl.u32 %v6616, 7
        %v6618 = vsub.s32 %v6615, %v6617
        %v6619 = vrot.slane %v6612, %v6618
        %v6621 = vunpack.c.l.s4 1966171168
        %v6622 = vunpack.c.0.s8 %v6621
        %v6623 = vlaneseq
        %v6624 = vshrl.u32 %v6623, 7
        %v6625 = vsub.s32 %v6622, %v6624
        %v6626 = vrot.slane %v6619, %v6625
        %6628 = vst.msk [vmem:[#allocation7 + $0xd] sm:$0x1] %vm6102, %v6626
        %v6629 = vcombine.high %v6619, %v6619
        %v6631 = vunpack.c.l.s4 1966171168
        %v6632 = vunpack.c.0.s8 %v6631
        %v6633 = vlaneseq
        %v6634 = vshrl.u32 %v6633, 7
        %v6635 = vsub.s32 %v6632, %v6634
        %v6636 = vrot.slane %v6629, %v6635
        %6637 = vrot.lane.b32.xlu0 %v6636, 32
        %v6638 = vpop.permute.xlu0 %6637
        %6640 = vst.msk [vmem:[#allocation7 + $0xd] sm:$0x1] %vm6132, %v6638
        %v6641 = vcombine.high %v6626, %v6626
        %6642 = vrot.lane.b32.xlu0 %v6641, 64
        %v6643 = vpop.permute.xlu0 %6642
        %6645 = vst.msk [vmem:[#allocation7 + $0xd] sm:$0x1] %vm6140, %v6643
        %v6646 = vcombine.high %v6636, %v6636
        %6647 = vrot.lane.b32.xlu0 %v6646, 96
        %v6648 = vpop.permute.xlu0 %6647
        %6650 = vst.msk [vmem:[#allocation7 + $0xd] sm:$0x1] %vm6148, %v6648
        %6651 = vst.msk [vmem:[#allocation7 + $0xe] sm:$0x1] %vm6102, %v6098
        %v6654 = vunpack.c.l.s4 1966171168
        %v6655 = vunpack.c.0.s8 %v6654
        %v6656 = vlaneseq
        %v6657 = vshrl.u32 %v6656, 7
        %v6658 = vsub.s32 %v6655, %v6657
        %v6659 = vrot.slane %v6098, %v6658
        %v6660 = vcombine.high %v6659, %v6659
        %v6662 = vunpack.c.l.s4 1966171168
        %v6663 = vunpack.c.0.s8 %v6662
        %v6664 = vlaneseq
        %v6665 = vshrl.u32 %v6664, 7
        %v6666 = vsub.s32 %v6663, %v6665
        %v6667 = vrot.slane %v6659, %v6666
        %v6669 = vunpack.c.l.s4 1966171168
        %v6670 = vunpack.c.0.s8 %v6669
        %v6671 = vlaneseq
        %v6672 = vshrl.u32 %v6671, 7
        %v6673 = vsub.s32 %v6670, %v6672
        %v6674 = vrot.slane %v6660, %v6673
        %6675 = vrot.lane.b32.xlu0 %v6674, 32
        %v6676 = vpop.permute.xlu0 %6675
        %6678 = vst.msk [vmem:[#allocation7 + $0xe] sm:$0x1] %vm6132, %v6676
        %v6679 = vcombine.high %v6667, %v6667
        %6680 = vrot.lane.b32.xlu0 %v6679, 64
        %v6681 = vpop.permute.xlu0 %6680
        %6683 = vst.msk [vmem:[#allocation7 + $0xe] sm:$0x1] %vm6140, %v6681
        %v6684 = vcombine.high %v6674, %v6674
        %6685 = vrot.lane.b32.xlu0 %v6684, 96
        %v6686 = vpop.permute.xlu0 %6685
        %6688 = vst.msk [vmem:[#allocation7 + $0xe] sm:$0x1] %vm6148, %v6686
        %v6689 = vcombine.high %v6098, %v6098
        %v6691 = vunpack.c.l.s4 1966171168
        %v6692 = vunpack.c.0.s8 %v6691
        %v6693 = vlaneseq
        %v6694 = vshrl.u32 %v6693, 7
        %v6695 = vsub.s32 %v6692, %v6694
        %v6696 = vrot.slane %v6689, %v6695
        %v6698 = vunpack.c.l.s4 1966171168
        %v6699 = vunpack.c.0.s8 %v6698
        %v6700 = vlaneseq
        %v6701 = vshrl.u32 %v6700, 7
        %v6702 = vsub.s32 %v6699, %v6701
        %v6703 = vrot.slane %v6696, %v6702
        %6705 = vst.msk [vmem:[#allocation7 + $0xf] sm:$0x1] %vm6102, %v6703
        %v6706 = vcombine.high %v6696, %v6696
        %v6708 = vunpack.c.l.s4 1966171168
        %v6709 = vunpack.c.0.s8 %v6708
        %v6710 = vlaneseq
        %v6711 = vshrl.u32 %v6710, 7
        %v6712 = vsub.s32 %v6709, %v6711
        %v6713 = vrot.slane %v6706, %v6712
        %6714 = vrot.lane.b32.xlu0 %v6713, 32
        %v6715 = vpop.permute.xlu0 %6714
        %6717 = vst.msk [vmem:[#allocation7 + $0xf] sm:$0x1] %vm6132, %v6715
        %v6718 = vcombine.high %v6703, %v6703
        %6719 = vrot.lane.b32.xlu0 %v6718, 64
        %v6720 = vpop.permute.xlu0 %6719
        %6722 = vst.msk [vmem:[#allocation7 + $0xf] sm:$0x1] %vm6140, %v6720
        %v6723 = vcombine.high %v6713, %v6713
        %6724 = vrot.lane.b32.xlu0 %v6723, 96
        %v6725 = vpop.permute.xlu0 %6724
        %6727 = vst.msk [vmem:[#allocation7 + $0xf] sm:$0x1] %vm6148, %v6725
        %s6728 = smul.u32 4, 256
        %s6729 = smul.u32 %s6728, 1
        %s6730 = sshll.u32 %s6729, 4
        %6731 = dma.done [#allocation9], %s6730
        %v6732 = vld [vmem:[#allocation7] sm:$0xff]
        %v6733 = vld [vmem:[#allocation7 + $0x8] sm:$0xff]
        %v6736 = vlaneseq
        %v6737 = vshrl.u32 %v6736, 7
        %v6738 = vsub.s32 0, %v6737
        %v6739 = vrot.slane %v6732, %v6738
        %v6740 = vlaneseq
        %v6741 = vshrl.u32 %v6740, 7
        %v6742 = vsub.s32 1, %v6741
        %v6743 = vrot.slane %v6732, %v6742
        %v6744 = vlaneseq
        %v6745 = vshrl.u32 %v6744, 7
        %v6746 = vsub.s32 2, %v6745
        %v6747 = vrot.slane %v6732, %v6746
        %v6748 = vlaneseq
        %v6749 = vshrl.u32 %v6748, 7
        %v6750 = vsub.s32 3, %v6749
        %v6751 = vrot.slane %v6732, %v6750
        %v6752 = vlaneseq
        %v6753 = vshrl.u32 %v6752, 7
        %v6754 = vsub.s32 4, %v6753
        %v6755 = vrot.slane %v6732, %v6754
        %v6756 = vlaneseq
        %v6757 = vshrl.u32 %v6756, 7
        %v6758 = vsub.s32 5, %v6757
        %v6759 = vrot.slane %v6732, %v6758
        %v6760 = vlaneseq
        %v6761 = vshrl.u32 %v6760, 7
        %v6762 = vsub.s32 6, %v6761
        %v6763 = vrot.slane %v6732, %v6762
        %v6764 = vlaneseq
        %v6765 = vshrl.u32 %v6764, 7
        %v6766 = vsub.s32 7, %v6765
        %v6767 = vrot.slane %v6732, %v6766
        %v6768 = vlaneseq
        %v6769 = vshrl.u32 %v6768, 7
        %v6770 = vsub.s32 0, %v6769
        %v6771 = vrot.slane %v6733, %v6770
        %v6772 = vlaneseq
        %v6773 = vshrl.u32 %v6772, 7
        %v6774 = vsub.s32 1, %v6773
        %v6775 = vrot.slane %v6733, %v6774
        %v6776 = vlaneseq
        %v6777 = vshrl.u32 %v6776, 7
        %v6778 = vsub.s32 2, %v6777
        %v6779 = vrot.slane %v6733, %v6778
        %v6780 = vlaneseq
        %v6781 = vshrl.u32 %v6780, 7
        %v6782 = vsub.s32 3, %v6781
        %v6783 = vrot.slane %v6733, %v6782
        %v6784 = vlaneseq
        %v6785 = vshrl.u32 %v6784, 7
        %v6786 = vsub.s32 4, %v6785
        %v6787 = vrot.slane %v6733, %v6786
        %v6788 = vlaneseq
        %v6789 = vshrl.u32 %v6788, 7
        %v6790 = vsub.s32 5, %v6789
        %v6791 = vrot.slane %v6733, %v6790
        %v6792 = vlaneseq
        %v6793 = vshrl.u32 %v6792, 7
        %v6794 = vsub.s32 6, %v6793
        %v6795 = vrot.slane %v6733, %v6794
        %v6796 = vlaneseq
        %v6797 = vshrl.u32 %v6796, 7
        %v6798 = vsub.s32 7, %v6797
        %v6799 = vrot.slane %v6733, %v6798
        %v6816 = vpack.c.bf16 %v6739, %v6739
        %v6817 = vpack.c.bf16 %v6743, %v6743
        %v6818 = vpack.c.bf16 %v6747, %v6747
        %v6819 = vpack.c.bf16 %v6751, %v6751
        %v6820 = vpack.c.bf16 %v6755, %v6755
        %v6821 = vpack.c.bf16 %v6759, %v6759
        %v6822 = vpack.c.bf16 %v6763, %v6763
        %v6823 = vpack.c.bf16 %v6767, %v6767
        %v6824 = vpack.c.bf16 %v6771, %v6771
        %v6825 = vpack.c.bf16 %v6775, %v6775
        %v6826 = vpack.c.bf16 %v6779, %v6779
        %v6827 = vpack.c.bf16 %v6783, %v6783
        %v6828 = vpack.c.bf16 %v6787, %v6787
        %v6829 = vpack.c.bf16 %v6791, %v6791
        %v6830 = vpack.c.bf16 %v6795, %v6795
        %v6831 = vpack.c.bf16 %v6799, %v6799
        %v6832 = vld [vmem:[#allocation8] sm:$0xf]
        %v6833 = vld [vmem:[#allocation8 + $0x4] sm:$0xf]
        %v6834 = vld [vmem:[#allocation8 + $0x8] sm:$0xf]
        %v6835 = vld [vmem:[#allocation8 + $0xc] sm:$0xf]
        %v6836 = vld [vmem:[#allocation8 + $0x10] sm:$0xf]
        %v6837 = vld [vmem:[#allocation8 + $0x14] sm:$0xf]
        %v6838 = vld [vmem:[#allocation8 + $0x18] sm:$0xf]
        %v6839 = vld [vmem:[#allocation8 + $0x1c] sm:$0xf]
        %v6840 = vld [vmem:[#allocation8 + $0x20] sm:$0xf]
        %v6841 = vld [vmem:[#allocation8 + $0x24] sm:$0xf]
        %v6842 = vld [vmem:[#allocation8 + $0x28] sm:$0xf]
        %v6843 = vld [vmem:[#allocation8 + $0x2c] sm:$0xf]
        %v6844 = vld [vmem:[#allocation8 + $0x30] sm:$0xf]
        %v6845 = vld [vmem:[#allocation8 + $0x34] sm:$0xf]
        %v6846 = vld [vmem:[#allocation8 + $0x38] sm:$0xf]
        %v6847 = vld [vmem:[#allocation8 + $0x3c] sm:$0xf]
        %v6848 = vld [vmem:[#allocation8 + $0x40] sm:$0xf]
        %v6849 = vld [vmem:[#allocation8 + $0x44] sm:$0xf]
        %v6850 = vld [vmem:[#allocation8 + $0x48] sm:$0xf]
        %v6851 = vld [vmem:[#allocation8 + $0x4c] sm:$0xf]
        %v6852 = vld [vmem:[#allocation8 + $0x50] sm:$0xf]
        %v6853 = vld [vmem:[#allocation8 + $0x54] sm:$0xf]
        %v6854 = vld [vmem:[#allocation8 + $0x58] sm:$0xf]
        %v6855 = vld [vmem:[#allocation8 + $0x5c] sm:$0xf]
        %v6856 = vld [vmem:[#allocation8 + $0x60] sm:$0xf]
        %v6857 = vld [vmem:[#allocation8 + $0x64] sm:$0xf]
        %v6858 = vld [vmem:[#allocation8 + $0x68] sm:$0xf]
        %v6859 = vld [vmem:[#allocation8 + $0x6c] sm:$0xf]
        %v6860 = vld [vmem:[#allocation8 + $0x70] sm:$0xf]
        %v6861 = vld [vmem:[#allocation8 + $0x74] sm:$0xf]
        %v6862 = vld [vmem:[#allocation8 + $0x78] sm:$0xf]
        %v6863 = vld [vmem:[#allocation8 + $0x7c] sm:$0xf]
        %v6864 = vld [vmem:[#allocation8 + $0x80] sm:$0xf]
        %v6865 = vld [vmem:[#allocation8 + $0x84] sm:$0xf]
        %v6866 = vld [vmem:[#allocation8 + $0x88] sm:$0xf]
        %v6867 = vld [vmem:[#allocation8 + $0x8c] sm:$0xf]
        %v6868 = vld [vmem:[#allocation8 + $0x90] sm:$0xf]
        %v6869 = vld [vmem:[#allocation8 + $0x94] sm:$0xf]
        %v6870 = vld [vmem:[#allocation8 + $0x98] sm:$0xf]
        %v6871 = vld [vmem:[#allocation8 + $0x9c] sm:$0xf]
        %v6872 = vld [vmem:[#allocation8 + $0xa0] sm:$0xf]
        %v6873 = vld [vmem:[#allocation8 + $0xa4] sm:$0xf]
        %v6874 = vld [vmem:[#allocation8 + $0xa8] sm:$0xf]
        %v6875 = vld [vmem:[#allocation8 + $0xac] sm:$0xf]
        %v6876 = vld [vmem:[#allocation8 + $0xb0] sm:$0xf]
        %v6877 = vld [vmem:[#allocation8 + $0xb4] sm:$0xf]
        %v6878 = vld [vmem:[#allocation8 + $0xb8] sm:$0xf]
        %v6879 = vld [vmem:[#allocation8 + $0xbc] sm:$0xf]
        %v6880 = vld [vmem:[#allocation8 + $0xc0] sm:$0xf]
        %v6881 = vld [vmem:[#allocation8 + $0xc4] sm:$0xf]
        %v6882 = vld [vmem:[#allocation8 + $0xc8] sm:$0xf]
        %v6883 = vld [vmem:[#allocation8 + $0xcc] sm:$0xf]
        %v6884 = vld [vmem:[#allocation8 + $0xd0] sm:$0xf]
        %v6885 = vld [vmem:[#allocation8 + $0xd4] sm:$0xf]
        %v6886 = vld [vmem:[#allocation8 + $0xd8] sm:$0xf]
        %v6887 = vld [vmem:[#allocation8 + $0xdc] sm:$0xf]
        %v6888 = vld [vmem:[#allocation8 + $0xe0] sm:$0xf]
        %v6889 = vld [vmem:[#allocation8 + $0xe4] sm:$0xf]
        %v6890 = vld [vmem:[#allocation8 + $0xe8] sm:$0xf]
        %v6891 = vld [vmem:[#allocation8 + $0xec] sm:$0xf]
        %v6892 = vld [vmem:[#allocation8 + $0xf0] sm:$0xf]
        %v6893 = vld [vmem:[#allocation8 + $0xf4] sm:$0xf]
        %v6894 = vld [vmem:[#allocation8 + $0xf8] sm:$0xf]
        %v6895 = vld [vmem:[#allocation8 + $0xfc] sm:$0xf]
        %v6896 = vld [vmem:[#allocation8 + $0x100] sm:$0xf]
        %v6897 = vld [vmem:[#allocation8 + $0x104] sm:$0xf]
        %v6898 = vld [vmem:[#allocation8 + $0x108] sm:$0xf]
        %v6899 = vld [vmem:[#allocation8 + $0x10c] sm:$0xf]
        %v6900 = vld [vmem:[#allocation8 + $0x110] sm:$0xf]
        %v6901 = vld [vmem:[#allocation8 + $0x114] sm:$0xf]
        %v6902 = vld [vmem:[#allocation8 + $0x118] sm:$0xf]
        %v6903 = vld [vmem:[#allocation8 + $0x11c] sm:$0xf]
        %v6904 = vld [vmem:[#allocation8 + $0x120] sm:$0xf]
        %v6905 = vld [vmem:[#allocation8 + $0x124] sm:$0xf]
        %v6906 = vld [vmem:[#allocation8 + $0x128] sm:$0xf]
        %v6907 = vld [vmem:[#allocation8 + $0x12c] sm:$0xf]
        %v6908 = vld [vmem:[#allocation8 + $0x130] sm:$0xf]
        %v6909 = vld [vmem:[#allocation8 + $0x134] sm:$0xf]
        %v6910 = vld [vmem:[#allocation8 + $0x138] sm:$0xf]
        %v6911 = vld [vmem:[#allocation8 + $0x13c] sm:$0xf]
        %v6912 = vld [vmem:[#allocation8 + $0x140] sm:$0xf]
        %v6913 = vld [vmem:[#allocation8 + $0x144] sm:$0xf]
        %v6914 = vld [vmem:[#allocation8 + $0x148] sm:$0xf]
        %v6915 = vld [vmem:[#allocation8 + $0x14c] sm:$0xf]
        %v6916 = vld [vmem:[#allocation8 + $0x150] sm:$0xf]
        %v6917 = vld [vmem:[#allocation8 + $0x154] sm:$0xf]
        %v6918 = vld [vmem:[#allocation8 + $0x158] sm:$0xf]
        %v6919 = vld [vmem:[#allocation8 + $0x15c] sm:$0xf]
        %v6920 = vld [vmem:[#allocation8 + $0x160] sm:$0xf]
        %v6921 = vld [vmem:[#allocation8 + $0x164] sm:$0xf]
        %v6922 = vld [vmem:[#allocation8 + $0x168] sm:$0xf]
        %v6923 = vld [vmem:[#allocation8 + $0x16c] sm:$0xf]
        %v6924 = vld [vmem:[#allocation8 + $0x170] sm:$0xf]
        %v6925 = vld [vmem:[#allocation8 + $0x174] sm:$0xf]
        %v6926 = vld [vmem:[#allocation8 + $0x178] sm:$0xf]
        %v6927 = vld [vmem:[#allocation8 + $0x17c] sm:$0xf]
        %v6928 = vld [vmem:[#allocation8 + $0x180] sm:$0xf]
        %v6929 = vld [vmem:[#allocation8 + $0x184] sm:$0xf]
        %v6930 = vld [vmem:[#allocation8 + $0x188] sm:$0xf]
        %v6931 = vld [vmem:[#allocation8 + $0x18c] sm:$0xf]
        %v6932 = vld [vmem:[#allocation8 + $0x190] sm:$0xf]
        %v6933 = vld [vmem:[#allocation8 + $0x194] sm:$0xf]
        %v6934 = vld [vmem:[#allocation8 + $0x198] sm:$0xf]
        %v6935 = vld [vmem:[#allocation8 + $0x19c] sm:$0xf]
        %v6936 = vld [vmem:[#allocation8 + $0x1a0] sm:$0xf]
        %v6937 = vld [vmem:[#allocation8 + $0x1a4] sm:$0xf]
        %v6938 = vld [vmem:[#allocation8 + $0x1a8] sm:$0xf]
        %v6939 = vld [vmem:[#allocation8 + $0x1ac] sm:$0xf]
        %v6940 = vld [vmem:[#allocation8 + $0x1b0] sm:$0xf]
        %v6941 = vld [vmem:[#allocation8 + $0x1b4] sm:$0xf]
        %v6942 = vld [vmem:[#allocation8 + $0x1b8] sm:$0xf]
        %v6943 = vld [vmem:[#allocation8 + $0x1bc] sm:$0xf]
        %v6944 = vld [vmem:[#allocation8 + $0x1c0] sm:$0xf]
        %v6945 = vld [vmem:[#allocation8 + $0x1c4] sm:$0xf]
        %v6946 = vld [vmem:[#allocation8 + $0x1c8] sm:$0xf]
        %v6947 = vld [vmem:[#allocation8 + $0x1cc] sm:$0xf]
        %v6948 = vld [vmem:[#allocation8 + $0x1d0] sm:$0xf]
        %v6949 = vld [vmem:[#allocation8 + $0x1d4] sm:$0xf]
        %v6950 = vld [vmem:[#allocation8 + $0x1d8] sm:$0xf]
        %v6951 = vld [vmem:[#allocation8 + $0x1dc] sm:$0xf]
        %v6952 = vld [vmem:[#allocation8 + $0x1e0] sm:$0xf]
        %v6953 = vld [vmem:[#allocation8 + $0x1e4] sm:$0xf]
        %v6954 = vld [vmem:[#allocation8 + $0x1e8] sm:$0xf]
        %v6955 = vld [vmem:[#allocation8 + $0x1ec] sm:$0xf]
        %v6956 = vld [vmem:[#allocation8 + $0x1f0] sm:$0xf]
        %v6957 = vld [vmem:[#allocation8 + $0x1f4] sm:$0xf]
        %v6958 = vld [vmem:[#allocation8 + $0x1f8] sm:$0xf]
        %v6959 = vld [vmem:[#allocation8 + $0x1fc] sm:$0xf]
        %v6960 = vld [vmem:[#allocation8 + $0x200] sm:$0xf]
        %v6961 = vld [vmem:[#allocation8 + $0x204] sm:$0xf]
        %v6962 = vld [vmem:[#allocation8 + $0x208] sm:$0xf]
        %v6963 = vld [vmem:[#allocation8 + $0x20c] sm:$0xf]
        %v6964 = vld [vmem:[#allocation8 + $0x210] sm:$0xf]
        %v6965 = vld [vmem:[#allocation8 + $0x214] sm:$0xf]
        %v6966 = vld [vmem:[#allocation8 + $0x218] sm:$0xf]
        %v6967 = vld [vmem:[#allocation8 + $0x21c] sm:$0xf]
        %v6968 = vld [vmem:[#allocation8 + $0x220] sm:$0xf]
        %v6969 = vld [vmem:[#allocation8 + $0x224] sm:$0xf]
        %v6970 = vld [vmem:[#allocation8 + $0x228] sm:$0xf]
        %v6971 = vld [vmem:[#allocation8 + $0x22c] sm:$0xf]
        %v6972 = vld [vmem:[#allocation8 + $0x230] sm:$0xf]
        %v6973 = vld [vmem:[#allocation8 + $0x234] sm:$0xf]
        %v6974 = vld [vmem:[#allocation8 + $0x238] sm:$0xf]
        %v6975 = vld [vmem:[#allocation8 + $0x23c] sm:$0xf]
        %v6976 = vld [vmem:[#allocation8 + $0x240] sm:$0xf]
        %v6977 = vld [vmem:[#allocation8 + $0x244] sm:$0xf]
        %v6978 = vld [vmem:[#allocation8 + $0x248] sm:$0xf]
        %v6979 = vld [vmem:[#allocation8 + $0x24c] sm:$0xf]
        %v6980 = vld [vmem:[#allocation8 + $0x250] sm:$0xf]
        %v6981 = vld [vmem:[#allocation8 + $0x254] sm:$0xf]
        %v6982 = vld [vmem:[#allocation8 + $0x258] sm:$0xf]
        %v6983 = vld [vmem:[#allocation8 + $0x25c] sm:$0xf]
        %v6984 = vld [vmem:[#allocation8 + $0x260] sm:$0xf]
        %v6985 = vld [vmem:[#allocation8 + $0x264] sm:$0xf]
        %v6986 = vld [vmem:[#allocation8 + $0x268] sm:$0xf]
        %v6987 = vld [vmem:[#allocation8 + $0x26c] sm:$0xf]
        %v6988 = vld [vmem:[#allocation8 + $0x270] sm:$0xf]
        %v6989 = vld [vmem:[#allocation8 + $0x274] sm:$0xf]
        %v6990 = vld [vmem:[#allocation8 + $0x278] sm:$0xf]
        %v6991 = vld [vmem:[#allocation8 + $0x27c] sm:$0xf]
        %v6992 = vld [vmem:[#allocation8 + $0x280] sm:$0xf]
        %v6993 = vld [vmem:[#allocation8 + $0x284] sm:$0xf]
        %v6994 = vld [vmem:[#allocation8 + $0x288] sm:$0xf]
        %v6995 = vld [vmem:[#allocation8 + $0x28c] sm:$0xf]
        %v6996 = vld [vmem:[#allocation8 + $0x290] sm:$0xf]
        %v6997 = vld [vmem:[#allocation8 + $0x294] sm:$0xf]
        %v6998 = vld [vmem:[#allocation8 + $0x298] sm:$0xf]
        %v6999 = vld [vmem:[#allocation8 + $0x29c] sm:$0xf]
        %v7000 = vld [vmem:[#allocation8 + $0x2a0] sm:$0xf]
        %v7001 = vld [vmem:[#allocation8 + $0x2a4] sm:$0xf]
        %v7002 = vld [vmem:[#allocation8 + $0x2a8] sm:$0xf]
        %v7003 = vld [vmem:[#allocation8 + $0x2ac] sm:$0xf]
        %v7004 = vld [vmem:[#allocation8 + $0x2b0] sm:$0xf]
        %v7005 = vld [vmem:[#allocation8 + $0x2b4] sm:$0xf]
        %v7006 = vld [vmem:[#allocation8 + $0x2b8] sm:$0xf]
        %v7007 = vld [vmem:[#allocation8 + $0x2bc] sm:$0xf]
        %v7008 = vld [vmem:[#allocation8 + $0x2c0] sm:$0xf]
        %v7009 = vld [vmem:[#allocation8 + $0x2c4] sm:$0xf]
        %v7010 = vld [vmem:[#allocation8 + $0x2c8] sm:$0xf]
        %v7011 = vld [vmem:[#allocation8 + $0x2cc] sm:$0xf]
        %v7012 = vld [vmem:[#allocation8 + $0x2d0] sm:$0xf]
        %v7013 = vld [vmem:[#allocation8 + $0x2d4] sm:$0xf]
        %v7014 = vld [vmem:[#allocation8 + $0x2d8] sm:$0xf]
        %v7015 = vld [vmem:[#allocation8 + $0x2dc] sm:$0xf]
        %v7016 = vld [vmem:[#allocation8 + $0x2e0] sm:$0xf]
        %v7017 = vld [vmem:[#allocation8 + $0x2e4] sm:$0xf]
        %v7018 = vld [vmem:[#allocation8 + $0x2e8] sm:$0xf]
        %v7019 = vld [vmem:[#allocation8 + $0x2ec] sm:$0xf]
        %v7020 = vld [vmem:[#allocation8 + $0x2f0] sm:$0xf]
        %v7021 = vld [vmem:[#allocation8 + $0x2f4] sm:$0xf]
        %v7022 = vld [vmem:[#allocation8 + $0x2f8] sm:$0xf]
        %v7023 = vld [vmem:[#allocation8 + $0x2fc] sm:$0xf]
        %v7024 = vld [vmem:[#allocation8 + $0x300] sm:$0xf]
        %v7025 = vld [vmem:[#allocation8 + $0x304] sm:$0xf]
        %v7026 = vld [vmem:[#allocation8 + $0x308] sm:$0xf]
        %v7027 = vld [vmem:[#allocation8 + $0x30c] sm:$0xf]
        %v7028 = vld [vmem:[#allocation8 + $0x310] sm:$0xf]
        %v7029 = vld [vmem:[#allocation8 + $0x314] sm:$0xf]
        %v7030 = vld [vmem:[#allocation8 + $0x318] sm:$0xf]
        %v7031 = vld [vmem:[#allocation8 + $0x31c] sm:$0xf]
        %v7032 = vld [vmem:[#allocation8 + $0x320] sm:$0xf]
        %v7033 = vld [vmem:[#allocation8 + $0x324] sm:$0xf]
        %v7034 = vld [vmem:[#allocation8 + $0x328] sm:$0xf]
        %v7035 = vld [vmem:[#allocation8 + $0x32c] sm:$0xf]
        %v7036 = vld [vmem:[#allocation8 + $0x330] sm:$0xf]
        %v7037 = vld [vmem:[#allocation8 + $0x334] sm:$0xf]
        %v7038 = vld [vmem:[#allocation8 + $0x338] sm:$0xf]
        %v7039 = vld [vmem:[#allocation8 + $0x33c] sm:$0xf]
        %v7040 = vld [vmem:[#allocation8 + $0x340] sm:$0xf]
        %v7041 = vld [vmem:[#allocation8 + $0x344] sm:$0xf]
        %v7042 = vld [vmem:[#allocation8 + $0x348] sm:$0xf]
        %v7043 = vld [vmem:[#allocation8 + $0x34c] sm:$0xf]
        %v7044 = vld [vmem:[#allocation8 + $0x350] sm:$0xf]
        %v7045 = vld [vmem:[#allocation8 + $0x354] sm:$0xf]
        %v7046 = vld [vmem:[#allocation8 + $0x358] sm:$0xf]
        %v7047 = vld [vmem:[#allocation8 + $0x35c] sm:$0xf]
        %v7048 = vld [vmem:[#allocation8 + $0x360] sm:$0xf]
        %v7049 = vld [vmem:[#allocation8 + $0x364] sm:$0xf]
        %v7050 = vld [vmem:[#allocation8 + $0x368] sm:$0xf]
        %v7051 = vld [vmem:[#allocation8 + $0x36c] sm:$0xf]
        %v7052 = vld [vmem:[#allocation8 + $0x370] sm:$0xf]
        %v7053 = vld [vmem:[#allocation8 + $0x374] sm:$0xf]
        %v7054 = vld [vmem:[#allocation8 + $0x378] sm:$0xf]
        %v7055 = vld [vmem:[#allocation8 + $0x37c] sm:$0xf]
        %v7056 = vld [vmem:[#allocation8 + $0x380] sm:$0xf]
        %v7057 = vld [vmem:[#allocation8 + $0x384] sm:$0xf]
        %v7058 = vld [vmem:[#allocation8 + $0x388] sm:$0xf]
        %v7059 = vld [vmem:[#allocation8 + $0x38c] sm:$0xf]
        %v7060 = vld [vmem:[#allocation8 + $0x390] sm:$0xf]
        %v7061 = vld [vmem:[#allocation8 + $0x394] sm:$0xf]
        %v7062 = vld [vmem:[#allocation8 + $0x398] sm:$0xf]
        %v7063 = vld [vmem:[#allocation8 + $0x39c] sm:$0xf]
        %v7064 = vld [vmem:[#allocation8 + $0x3a0] sm:$0xf]
        %v7065 = vld [vmem:[#allocation8 + $0x3a4] sm:$0xf]
        %v7066 = vld [vmem:[#allocation8 + $0x3a8] sm:$0xf]
        %v7067 = vld [vmem:[#allocation8 + $0x3ac] sm:$0xf]
        %v7068 = vld [vmem:[#allocation8 + $0x3b0] sm:$0xf]
        %v7069 = vld [vmem:[#allocation8 + $0x3b4] sm:$0xf]
        %v7070 = vld [vmem:[#allocation8 + $0x3b8] sm:$0xf]
        %v7071 = vld [vmem:[#allocation8 + $0x3bc] sm:$0xf]
        %v7072 = vld [vmem:[#allocation8 + $0x3c0] sm:$0xf]
        %v7073 = vld [vmem:[#allocation8 + $0x3c4] sm:$0xf]
        %v7074 = vld [vmem:[#allocation8 + $0x3c8] sm:$0xf]
        %v7075 = vld [vmem:[#allocation8 + $0x3cc] sm:$0xf]
        %v7076 = vld [vmem:[#allocation8 + $0x3d0] sm:$0xf]
        %v7077 = vld [vmem:[#allocation8 + $0x3d4] sm:$0xf]
        %v7078 = vld [vmem:[#allocation8 + $0x3d8] sm:$0xf]
        %v7079 = vld [vmem:[#allocation8 + $0x3dc] sm:$0xf]
        %v7080 = vld [vmem:[#allocation8 + $0x3e0] sm:$0xf]
        %v7081 = vld [vmem:[#allocation8 + $0x3e4] sm:$0xf]
        %v7082 = vld [vmem:[#allocation8 + $0x3e8] sm:$0xf]
        %v7083 = vld [vmem:[#allocation8 + $0x3ec] sm:$0xf]
        %v7084 = vld [vmem:[#allocation8 + $0x3f0] sm:$0xf]
        %v7085 = vld [vmem:[#allocation8 + $0x3f4] sm:$0xf]
        %v7086 = vld [vmem:[#allocation8 + $0x3f8] sm:$0xf]
        %v7087 = vld [vmem:[#allocation8 + $0x3fc] sm:$0xf]
        %v7088 = vld [vmem:[%s6] sm:$0x1]
        %v7345 = vunpack.c.l.b16 %v6832
        %v7346 = vunpack.c.l.b16 %v6833
        %v7347 = vunpack.c.l.b16 %v6834
        %v7348 = vunpack.c.l.b16 %v6835
        %v7349 = vunpack.c.l.b16 %v6836
        %v7350 = vunpack.c.l.b16 %v6837
        %v7351 = vunpack.c.l.b16 %v6838
        %v7352 = vunpack.c.l.b16 %v6839
        %v7353 = vunpack.c.l.b16 %v6840
        %v7354 = vunpack.c.l.b16 %v6841
        %v7355 = vunpack.c.l.b16 %v6842
        %v7356 = vunpack.c.l.b16 %v6843
        %v7357 = vunpack.c.l.b16 %v6844
        %v7358 = vunpack.c.l.b16 %v6845
        %v7359 = vunpack.c.l.b16 %v6846
        %v7360 = vunpack.c.l.b16 %v6847
        %v7361 = vunpack.c.l.b16 %v6848
        %v7362 = vunpack.c.l.b16 %v6849
        %v7363 = vunpack.c.l.b16 %v6850
        %v7364 = vunpack.c.l.b16 %v6851
        %v7365 = vunpack.c.l.b16 %v6852
        %v7366 = vunpack.c.l.b16 %v6853
        %v7367 = vunpack.c.l.b16 %v6854
        %v7368 = vunpack.c.l.b16 %v6855
        %v7369 = vunpack.c.l.b16 %v6856
        %v7370 = vunpack.c.l.b16 %v6857
        %v7371 = vunpack.c.l.b16 %v6858
        %v7372 = vunpack.c.l.b16 %v6859
        %v7373 = vunpack.c.l.b16 %v6860
        %v7374 = vunpack.c.l.b16 %v6861
        %v7375 = vunpack.c.l.b16 %v6862
        %v7376 = vunpack.c.l.b16 %v6863
        %v7377 = vunpack.c.l.b16 %v6864
        %v7378 = vunpack.c.l.b16 %v6865
        %v7379 = vunpack.c.l.b16 %v6866
        %v7380 = vunpack.c.l.b16 %v6867
        %v7381 = vunpack.c.l.b16 %v6868
        %v7382 = vunpack.c.l.b16 %v6869
        %v7383 = vunpack.c.l.b16 %v6870
        %v7384 = vunpack.c.l.b16 %v6871
        %v7385 = vunpack.c.l.b16 %v6872
        %v7386 = vunpack.c.l.b16 %v6873
        %v7387 = vunpack.c.l.b16 %v6874
        %v7388 = vunpack.c.l.b16 %v6875
        %v7389 = vunpack.c.l.b16 %v6876
        %v7390 = vunpack.c.l.b16 %v6877
        %v7391 = vunpack.c.l.b16 %v6878
        %v7392 = vunpack.c.l.b16 %v6879
        %v7393 = vunpack.c.l.b16 %v6880
        %v7394 = vunpack.c.l.b16 %v6881
        %v7395 = vunpack.c.l.b16 %v6882
        %v7396 = vunpack.c.l.b16 %v6883
        %v7397 = vunpack.c.l.b16 %v6884
        %v7398 = vunpack.c.l.b16 %v6885
        %v7399 = vunpack.c.l.b16 %v6886
        %v7400 = vunpack.c.l.b16 %v6887
        %v7401 = vunpack.c.l.b16 %v6888
        %v7402 = vunpack.c.l.b16 %v6889
        %v7403 = vunpack.c.l.b16 %v6890
        %v7404 = vunpack.c.l.b16 %v6891
        %v7405 = vunpack.c.l.b16 %v6892
        %v7406 = vunpack.c.l.b16 %v6893
        %v7407 = vunpack.c.l.b16 %v6894
        %v7408 = vunpack.c.l.b16 %v6895
        %v7409 = vunpack.c.l.b16 %v6896
        %v7410 = vunpack.c.l.b16 %v6897
        %v7411 = vunpack.c.l.b16 %v6898
        %v7412 = vunpack.c.l.b16 %v6899
        %v7413 = vunpack.c.l.b16 %v6900
        %v7414 = vunpack.c.l.b16 %v6901
        %v7415 = vunpack.c.l.b16 %v6902
        %v7416 = vunpack.c.l.b16 %v6903
        %v7417 = vunpack.c.l.b16 %v6904
        %v7418 = vunpack.c.l.b16 %v6905
        %v7419 = vunpack.c.l.b16 %v6906
        %v7420 = vunpack.c.l.b16 %v6907
        %v7421 = vunpack.c.l.b16 %v6908
        %v7422 = vunpack.c.l.b16 %v6909
        %v7423 = vunpack.c.l.b16 %v6910
        %v7424 = vunpack.c.l.b16 %v6911
        %v7425 = vunpack.c.l.b16 %v6912
        %v7426 = vunpack.c.l.b16 %v6913
        %v7427 = vunpack.c.l.b16 %v6914
        %v7428 = vunpack.c.l.b16 %v6915
        %v7429 = vunpack.c.l.b16 %v6916
        %v7430 = vunpack.c.l.b16 %v6917
        %v7431 = vunpack.c.l.b16 %v6918
        %v7432 = vunpack.c.l.b16 %v6919
        %v7433 = vunpack.c.l.b16 %v6920
        %v7434 = vunpack.c.l.b16 %v6921
        %v7435 = vunpack.c.l.b16 %v6922
        %v7436 = vunpack.c.l.b16 %v6923
        %v7437 = vunpack.c.l.b16 %v6924
        %v7438 = vunpack.c.l.b16 %v6925
        %v7439 = vunpack.c.l.b16 %v6926
        %v7440 = vunpack.c.l.b16 %v6927
        %v7441 = vunpack.c.l.b16 %v6928
        %v7442 = vunpack.c.l.b16 %v6929
        %v7443 = vunpack.c.l.b16 %v6930
        %v7444 = vunpack.c.l.b16 %v6931
        %v7445 = vunpack.c.l.b16 %v6932
        %v7446 = vunpack.c.l.b16 %v6933
        %v7447 = vunpack.c.l.b16 %v6934
        %v7448 = vunpack.c.l.b16 %v6935
        %v7449 = vunpack.c.l.b16 %v6936
        %v7450 = vunpack.c.l.b16 %v6937
        %v7451 = vunpack.c.l.b16 %v6938
        %v7452 = vunpack.c.l.b16 %v6939
        %v7453 = vunpack.c.l.b16 %v6940
        %v7454 = vunpack.c.l.b16 %v6941
        %v7455 = vunpack.c.l.b16 %v6942
        %v7456 = vunpack.c.l.b16 %v6943
        %v7457 = vunpack.c.l.b16 %v6944
        %v7458 = vunpack.c.l.b16 %v6945
        %v7459 = vunpack.c.l.b16 %v6946
        %v7460 = vunpack.c.l.b16 %v6947
        %v7461 = vunpack.c.l.b16 %v6948
        %v7462 = vunpack.c.l.b16 %v6949
        %v7463 = vunpack.c.l.b16 %v6950
        %v7464 = vunpack.c.l.b16 %v6951
        %v7465 = vunpack.c.l.b16 %v6952
        %v7466 = vunpack.c.l.b16 %v6953
        %v7467 = vunpack.c.l.b16 %v6954
        %v7468 = vunpack.c.l.b16 %v6955
        %v7469 = vunpack.c.l.b16 %v6956
        %v7470 = vunpack.c.l.b16 %v6957
        %v7471 = vunpack.c.l.b16 %v6958
        %v7472 = vunpack.c.l.b16 %v6959
        %v7473 = vunpack.c.l.b16 %v6960
        %v7474 = vunpack.c.l.b16 %v6961
        %v7475 = vunpack.c.l.b16 %v6962
        %v7476 = vunpack.c.l.b16 %v6963
        %v7477 = vunpack.c.l.b16 %v6964
        %v7478 = vunpack.c.l.b16 %v6965
        %v7479 = vunpack.c.l.b16 %v6966
        %v7480 = vunpack.c.l.b16 %v6967
        %v7481 = vunpack.c.l.b16 %v6968
        %v7482 = vunpack.c.l.b16 %v6969
        %v7483 = vunpack.c.l.b16 %v6970
        %v7484 = vunpack.c.l.b16 %v6971
        %v7485 = vunpack.c.l.b16 %v6972
        %v7486 = vunpack.c.l.b16 %v6973
        %v7487 = vunpack.c.l.b16 %v6974
        %v7488 = vunpack.c.l.b16 %v6975
        %v7489 = vunpack.c.l.b16 %v6976
        %v7490 = vunpack.c.l.b16 %v6977
        %v7491 = vunpack.c.l.b16 %v6978
        %v7492 = vunpack.c.l.b16 %v6979
        %v7493 = vunpack.c.l.b16 %v6980
        %v7494 = vunpack.c.l.b16 %v6981
        %v7495 = vunpack.c.l.b16 %v6982
        %v7496 = vunpack.c.l.b16 %v6983
        %v7497 = vunpack.c.l.b16 %v6984
        %v7498 = vunpack.c.l.b16 %v6985
        %v7499 = vunpack.c.l.b16 %v6986
        %v7500 = vunpack.c.l.b16 %v6987
        %v7501 = vunpack.c.l.b16 %v6988
        %v7502 = vunpack.c.l.b16 %v6989
        %v7503 = vunpack.c.l.b16 %v6990
        %v7504 = vunpack.c.l.b16 %v6991
        %v7505 = vunpack.c.l.b16 %v6992
        %v7506 = vunpack.c.l.b16 %v6993
        %v7507 = vunpack.c.l.b16 %v6994
        %v7508 = vunpack.c.l.b16 %v6995
        %v7509 = vunpack.c.l.b16 %v6996
        %v7510 = vunpack.c.l.b16 %v6997
        %v7511 = vunpack.c.l.b16 %v6998
        %v7512 = vunpack.c.l.b16 %v6999
        %v7513 = vunpack.c.l.b16 %v7000
        %v7514 = vunpack.c.l.b16 %v7001
        %v7515 = vunpack.c.l.b16 %v7002
        %v7516 = vunpack.c.l.b16 %v7003
        %v7517 = vunpack.c.l.b16 %v7004
        %v7518 = vunpack.c.l.b16 %v7005
        %v7519 = vunpack.c.l.b16 %v7006
        %v7520 = vunpack.c.l.b16 %v7007
        %v7521 = vunpack.c.l.b16 %v7008
        %v7522 = vunpack.c.l.b16 %v7009
        %v7523 = vunpack.c.l.b16 %v7010
        %v7524 = vunpack.c.l.b16 %v7011
        %v7525 = vunpack.c.l.b16 %v7012
        %v7526 = vunpack.c.l.b16 %v7013
        %v7527 = vunpack.c.l.b16 %v7014
        %v7528 = vunpack.c.l.b16 %v7015
        %v7529 = vunpack.c.l.b16 %v7016
        %v7530 = vunpack.c.l.b16 %v7017
        %v7531 = vunpack.c.l.b16 %v7018
        %v7532 = vunpack.c.l.b16 %v7019
        %v7533 = vunpack.c.l.b16 %v7020
        %v7534 = vunpack.c.l.b16 %v7021
        %v7535 = vunpack.c.l.b16 %v7022
        %v7536 = vunpack.c.l.b16 %v7023
        %v7537 = vunpack.c.l.b16 %v7024
        %v7538 = vunpack.c.l.b16 %v7025
        %v7539 = vunpack.c.l.b16 %v7026
        %v7540 = vunpack.c.l.b16 %v7027
        %v7541 = vunpack.c.l.b16 %v7028
        %v7542 = vunpack.c.l.b16 %v7029
        %v7543 = vunpack.c.l.b16 %v7030
        %v7544 = vunpack.c.l.b16 %v7031
        %v7545 = vunpack.c.l.b16 %v7032
        %v7546 = vunpack.c.l.b16 %v7033
        %v7547 = vunpack.c.l.b16 %v7034
        %v7548 = vunpack.c.l.b16 %v7035
        %v7549 = vunpack.c.l.b16 %v7036
        %v7550 = vunpack.c.l.b16 %v7037
        %v7551 = vunpack.c.l.b16 %v7038
        %v7552 = vunpack.c.l.b16 %v7039
        %v7553 = vunpack.c.l.b16 %v7040
        %v7554 = vunpack.c.l.b16 %v7041
        %v7555 = vunpack.c.l.b16 %v7042
        %v7556 = vunpack.c.l.b16 %v7043
        %v7557 = vunpack.c.l.b16 %v7044
        %v7558 = vunpack.c.l.b16 %v7045
        %v7559 = vunpack.c.l.b16 %v7046
        %v7560 = vunpack.c.l.b16 %v7047
        %v7561 = vunpack.c.l.b16 %v7048
        %v7562 = vunpack.c.l.b16 %v7049
        %v7563 = vunpack.c.l.b16 %v7050
        %v7564 = vunpack.c.l.b16 %v7051
        %v7565 = vunpack.c.l.b16 %v7052
        %v7566 = vunpack.c.l.b16 %v7053
        %v7567 = vunpack.c.l.b16 %v7054
        %v7568 = vunpack.c.l.b16 %v7055
        %v7569 = vunpack.c.l.b16 %v7056
        %v7570 = vunpack.c.l.b16 %v7057
        %v7571 = vunpack.c.l.b16 %v7058
        %v7572 = vunpack.c.l.b16 %v7059
        %v7573 = vunpack.c.l.b16 %v7060
        %v7574 = vunpack.c.l.b16 %v7061
        %v7575 = vunpack.c.l.b16 %v7062
        %v7576 = vunpack.c.l.b16 %v7063
        %v7577 = vunpack.c.l.b16 %v7064
        %v7578 = vunpack.c.l.b16 %v7065
        %v7579 = vunpack.c.l.b16 %v7066
        %v7580 = vunpack.c.l.b16 %v7067
        %v7581 = vunpack.c.l.b16 %v7068
        %v7582 = vunpack.c.l.b16 %v7069
        %v7583 = vunpack.c.l.b16 %v7070
        %v7584 = vunpack.c.l.b16 %v7071
        %v7585 = vunpack.c.l.b16 %v7072
        %v7586 = vunpack.c.l.b16 %v7073
        %v7587 = vunpack.c.l.b16 %v7074
        %v7588 = vunpack.c.l.b16 %v7075
        %v7589 = vunpack.c.l.b16 %v7076
        %v7590 = vunpack.c.l.b16 %v7077
        %v7591 = vunpack.c.l.b16 %v7078
        %v7592 = vunpack.c.l.b16 %v7079
        %v7593 = vunpack.c.l.b16 %v7080
        %v7594 = vunpack.c.l.b16 %v7081
        %v7595 = vunpack.c.l.b16 %v7082
        %v7596 = vunpack.c.l.b16 %v7083
        %v7597 = vunpack.c.l.b16 %v7084
        %v7598 = vunpack.c.l.b16 %v7085
        %v7599 = vunpack.c.l.b16 %v7086
        %v7600 = vunpack.c.l.b16 %v7087
        %v7601 = vpack.c.b16 %v7346, %v7345
        %v7602 = vpack.c.b16 %v7348, %v7347
        %v7603 = vpack.c.b16 %v7350, %v7349
        %v7604 = vpack.c.b16 %v7352, %v7351
        %v7605 = vpack.c.b16 %v7354, %v7353
        %v7606 = vpack.c.b16 %v7356, %v7355
        %v7607 = vpack.c.b16 %v7358, %v7357
        %v7608 = vpack.c.b16 %v7360, %v7359
        %v7609 = vpack.c.b16 %v7362, %v7361
        %v7610 = vpack.c.b16 %v7364, %v7363
        %v7611 = vpack.c.b16 %v7366, %v7365
        %v7612 = vpack.c.b16 %v7368, %v7367
        %v7613 = vpack.c.b16 %v7370, %v7369
        %v7614 = vpack.c.b16 %v7372, %v7371
        %v7615 = vpack.c.b16 %v7374, %v7373
        %v7616 = vpack.c.b16 %v7376, %v7375
        %v7617 = vpack.c.b16 %v7378, %v7377
        %v7618 = vpack.c.b16 %v7380, %v7379
        %v7619 = vpack.c.b16 %v7382, %v7381
        %v7620 = vpack.c.b16 %v7384, %v7383
        %v7621 = vpack.c.b16 %v7386, %v7385
        %v7622 = vpack.c.b16 %v7388, %v7387
        %v7623 = vpack.c.b16 %v7390, %v7389
        %v7624 = vpack.c.b16 %v7392, %v7391
        %v7625 = vpack.c.b16 %v7394, %v7393
        %v7626 = vpack.c.b16 %v7396, %v7395
        %v7627 = vpack.c.b16 %v7398, %v7397
        %v7628 = vpack.c.b16 %v7400, %v7399
        %v7629 = vpack.c.b16 %v7402, %v7401
        %v7630 = vpack.c.b16 %v7404, %v7403
        %v7631 = vpack.c.b16 %v7406, %v7405
        %v7632 = vpack.c.b16 %v7408, %v7407
        %v7633 = vpack.c.b16 %v7410, %v7409
        %v7634 = vpack.c.b16 %v7412, %v7411
        %v7635 = vpack.c.b16 %v7414, %v7413
        %v7636 = vpack.c.b16 %v7416, %v7415
        %v7637 = vpack.c.b16 %v7418, %v7417
        %v7638 = vpack.c.b16 %v7420, %v7419
        %v7639 = vpack.c.b16 %v7422, %v7421
        %v7640 = vpack.c.b16 %v7424, %v7423
        %v7641 = vpack.c.b16 %v7426, %v7425
        %v7642 = vpack.c.b16 %v7428, %v7427
        %v7643 = vpack.c.b16 %v7430, %v7429
        %v7644 = vpack.c.b16 %v7432, %v7431
        %v7645 = vpack.c.b16 %v7434, %v7433
        %v7646 = vpack.c.b16 %v7436, %v7435
        %v7647 = vpack.c.b16 %v7438, %v7437
        %v7648 = vpack.c.b16 %v7440, %v7439
        %v7649 = vpack.c.b16 %v7442, %v7441
        %v7650 = vpack.c.b16 %v7444, %v7443
        %v7651 = vpack.c.b16 %v7446, %v7445
        %v7652 = vpack.c.b16 %v7448, %v7447
        %v7653 = vpack.c.b16 %v7450, %v7449
        %v7654 = vpack.c.b16 %v7452, %v7451
        %v7655 = vpack.c.b16 %v7454, %v7453
        %v7656 = vpack.c.b16 %v7456, %v7455
        %v7657 = vpack.c.b16 %v7458, %v7457
        %v7658 = vpack.c.b16 %v7460, %v7459
        %v7659 = vpack.c.b16 %v7462, %v7461
        %v7660 = vpack.c.b16 %v7464, %v7463
        %v7661 = vpack.c.b16 %v7466, %v7465
        %v7662 = vpack.c.b16 %v7468, %v7467
        %v7663 = vpack.c.b16 %v7470, %v7469
        %v7664 = vpack.c.b16 %v7472, %v7471
        %v7665 = vpack.c.b16 %v7474, %v7473
        %v7666 = vpack.c.b16 %v7476, %v7475
        %v7667 = vpack.c.b16 %v7478, %v7477
        %v7668 = vpack.c.b16 %v7480, %v7479
        %v7669 = vpack.c.b16 %v7482, %v7481
        %v7670 = vpack.c.b16 %v7484, %v7483
        %v7671 = vpack.c.b16 %v7486, %v7485
        %v7672 = vpack.c.b16 %v7488, %v7487
        %v7673 = vpack.c.b16 %v7490, %v7489
        %v7674 = vpack.c.b16 %v7492, %v7491
        %v7675 = vpack.c.b16 %v7494, %v7493
        %v7676 = vpack.c.b16 %v7496, %v7495
        %v7677 = vpack.c.b16 %v7498, %v7497
        %v7678 = vpack.c.b16 %v7500, %v7499
        %v7679 = vpack.c.b16 %v7502, %v7501
        %v7680 = vpack.c.b16 %v7504, %v7503
        %v7681 = vpack.c.b16 %v7506, %v7505
        %v7682 = vpack.c.b16 %v7508, %v7507
        %v7683 = vpack.c.b16 %v7510, %v7509
        %v7684 = vpack.c.b16 %v7512, %v7511
        %v7685 = vpack.c.b16 %v7514, %v7513
        %v7686 = vpack.c.b16 %v7516, %v7515
        %v7687 = vpack.c.b16 %v7518, %v7517
        %v7688 = vpack.c.b16 %v7520, %v7519
        %v7689 = vpack.c.b16 %v7522, %v7521
        %v7690 = vpack.c.b16 %v7524, %v7523
        %v7691 = vpack.c.b16 %v7526, %v7525
        %v7692 = vpack.c.b16 %v7528, %v7527
        %v7693 = vpack.c.b16 %v7530, %v7529
        %v7694 = vpack.c.b16 %v7532, %v7531
        %v7695 = vpack.c.b16 %v7534, %v7533
        %v7696 = vpack.c.b16 %v7536, %v7535
        %v7697 = vpack.c.b16 %v7538, %v7537
        %v7698 = vpack.c.b16 %v7540, %v7539
        %v7699 = vpack.c.b16 %v7542, %v7541
        %v7700 = vpack.c.b16 %v7544, %v7543
        %v7701 = vpack.c.b16 %v7546, %v7545
        %v7702 = vpack.c.b16 %v7548, %v7547
        %v7703 = vpack.c.b16 %v7550, %v7549
        %v7704 = vpack.c.b16 %v7552, %v7551
        %v7705 = vpack.c.b16 %v7554, %v7553
        %v7706 = vpack.c.b16 %v7556, %v7555
        %v7707 = vpack.c.b16 %v7558, %v7557
        %v7708 = vpack.c.b16 %v7560, %v7559
        %v7709 = vpack.c.b16 %v7562, %v7561
        %v7710 = vpack.c.b16 %v7564, %v7563
        %v7711 = vpack.c.b16 %v7566, %v7565
        %v7712 = vpack.c.b16 %v7568, %v7567
        %v7713 = vpack.c.b16 %v7570, %v7569
        %v7714 = vpack.c.b16 %v7572, %v7571
        %v7715 = vpack.c.b16 %v7574, %v7573
        %v7716 = vpack.c.b16 %v7576, %v7575
        %v7717 = vpack.c.b16 %v7578, %v7577
        %v7718 = vpack.c.b16 %v7580, %v7579
        %v7719 = vpack.c.b16 %v7582, %v7581
        %v7720 = vpack.c.b16 %v7584, %v7583
        %v7721 = vpack.c.b16 %v7586, %v7585
        %v7722 = vpack.c.b16 %v7588, %v7587
        %v7723 = vpack.c.b16 %v7590, %v7589
        %v7724 = vpack.c.b16 %v7592, %v7591
        %v7725 = vpack.c.b16 %v7594, %v7593
        %v7726 = vpack.c.b16 %v7596, %v7595
        %v7727 = vpack.c.b16 %v7598, %v7597
        %v7728 = vpack.c.b16 %v7600, %v7599
        %7857 = vmatprep.subr.bf16.mxu0 0
        %7858 = vmatpush1.bf16.msra.mxu0 %v7608
        %7859 = vmatprep.subr.bf16.mxu0 0
        %7860 = vmatpush1.bf16.msra.mxu0 %v7607
        %7861 = vmatprep.subr.bf16.mxu0 0
        %7862 = vmatpush1.bf16.msra.mxu0 %v7606
        %7863 = vmatprep.subr.bf16.mxu0 0
        %7864 = vmatpush1.bf16.msra.mxu0 %v7605
        %7865 = vmatprep.subr.bf16.mxu0 0
        %7866 = vmatpush1.bf16.msra.mxu0 %v7604
        %7867 = vmatprep.subr.bf16.mxu0 0
        %7868 = vmatpush1.bf16.msra.mxu0 %v7603
        %7869 = vmatprep.subr.bf16.mxu0 0
        %7870 = vmatpush1.bf16.msra.mxu0 %v7602
        %7871 = vmatprep.subr.bf16.mxu0 0
        %7872 = vmatpush1.bf16.msra.mxu0 %v7601
        %7873 = vmatprep.subr.bf16.mxu0 0
        %7874 = vmatpush2.bf16.msra.mxu0 %v7616
        %7875 = vmatprep.subr.bf16.mxu0 0
        %7876 = vmatpush2.bf16.msra.mxu0 %v7615
        %7877 = vmatprep.subr.bf16.mxu0 0
        %7878 = vmatpush2.bf16.msra.mxu0 %v7614
        %7879 = vmatprep.subr.bf16.mxu0 0
        %7880 = vmatpush2.bf16.msra.mxu0 %v7613
        %7881 = vmatprep.subr.bf16.mxu0 0
        %7882 = vmatpush2.bf16.msra.mxu0 %v7612
        %7883 = vmatprep.subr.bf16.mxu0 0
        %7884 = vmatpush2.bf16.msra.mxu0 %v7611
        %7885 = vmatprep.subr.bf16.mxu0 0
        %7886 = vmatpush2.bf16.msra.mxu0 %v7610
        %7887 = vmatprep.subr.bf16.mxu0 0
        %7888 = vmatpush2.bf16.msra.mxu0 %v7609
        %7889 = vmatprep.mubr.bf16.mxu0 %v6817
        %7890 = vmatmul.mubr.bf16.gmra.mxu0 %v6816
        %v7891 = vpop.f32.mrf.mxu0
        %v7892 = vadd.f32 %v7088, %v7891
        %v7893 = vpop.f32.mrf.mxu0
        %v7894 = vpop.f32.mrf.mxu0
        %v7895 = vpop.f32.mrf.mxu0
        %7896 = vdwg.mxu0
        %7897 = vmatprep.subr.bf16.mxu0 0
        %7898 = vmatpush1.bf16.msra.mxu0 %v7624
        %7899 = vmatprep.subr.bf16.mxu0 0
        %7900 = vmatpush1.bf16.msra.mxu0 %v7623
        %7901 = vmatprep.subr.bf16.mxu0 0
        %7902 = vmatpush1.bf16.msra.mxu0 %v7622
        %7903 = vmatprep.subr.bf16.mxu0 0
        %7904 = vmatpush1.bf16.msra.mxu0 %v7621
        %7905 = vmatprep.subr.bf16.mxu0 0
        %7906 = vmatpush1.bf16.msra.mxu0 %v7620
        %7907 = vmatprep.subr.bf16.mxu0 0
        %7908 = vmatpush1.bf16.msra.mxu0 %v7619
        %7909 = vmatprep.subr.bf16.mxu0 0
        %7910 = vmatpush1.bf16.msra.mxu0 %v7618
        %7911 = vmatprep.subr.bf16.mxu0 0
        %7912 = vmatpush1.bf16.msra.mxu0 %v7617
        %7913 = vmatprep.subr.bf16.mxu0 0
        %7914 = vmatpush2.bf16.msra.mxu0 %v7632
        %7915 = vmatprep.subr.bf16.mxu0 0
        %7916 = vmatpush2.bf16.msra.mxu0 %v7631
        %7917 = vmatprep.subr.bf16.mxu0 0
        %7918 = vmatpush2.bf16.msra.mxu0 %v7630
        %7919 = vmatprep.subr.bf16.mxu0 0
        %7920 = vmatpush2.bf16.msra.mxu0 %v7629
        %7921 = vmatprep.subr.bf16.mxu0 0
        %7922 = vmatpush2.bf16.msra.mxu0 %v7628
        %7923 = vmatprep.subr.bf16.mxu0 0
        %7924 = vmatpush2.bf16.msra.mxu0 %v7627
        %7925 = vmatprep.subr.bf16.mxu0 0
        %7926 = vmatpush2.bf16.msra.mxu0 %v7626
        %7927 = vmatprep.subr.bf16.mxu0 0
        %7928 = vmatpush2.bf16.msra.mxu0 %v7625
        %7929 = vmatprep.mubr.bf16.mxu0 %v6819
        %7930 = vmatmul.mubr.bf16.gmra.mxu0 %v6818
        %v7931 = vpop.f32.mrf.mxu0
        %v7932 = vadd.f32 %v7892, %v7931
        %v7933 = vpop.f32.mrf.mxu0
        %v7934 = vpop.f32.mrf.mxu0
        %v7935 = vpop.f32.mrf.mxu0
        %7936 = vdwg.mxu0
        %7937 = vmatprep.subr.bf16.mxu0 0
        %7938 = vmatpush1.bf16.msra.mxu0 %v7640
        %7939 = vmatprep.subr.bf16.mxu0 0
        %7940 = vmatpush1.bf16.msra.mxu0 %v7639
        %7941 = vmatprep.subr.bf16.mxu0 0
        %7942 = vmatpush1.bf16.msra.mxu0 %v7638
        %7943 = vmatprep.subr.bf16.mxu0 0
        %7944 = vmatpush1.bf16.msra.mxu0 %v7637
        %7945 = vmatprep.subr.bf16.mxu0 0
        %7946 = vmatpush1.bf16.msra.mxu0 %v7636
        %7947 = vmatprep.subr.bf16.mxu0 0
        %7948 = vmatpush1.bf16.msra.mxu0 %v7635
        %7949 = vmatprep.subr.bf16.mxu0 0
        %7950 = vmatpush1.bf16.msra.mxu0 %v7634
        %7951 = vmatprep.subr.bf16.mxu0 0
        %7952 = vmatpush1.bf16.msra.mxu0 %v7633
        %7953 = vmatprep.subr.bf16.mxu0 0
        %7954 = vmatpush2.bf16.msra.mxu0 %v7648
        %7955 = vmatprep.subr.bf16.mxu0 0
        %7956 = vmatpush2.bf16.msra.mxu0 %v7647
        %7957 = vmatprep.subr.bf16.mxu0 0
        %7958 = vmatpush2.bf16.msra.mxu0 %v7646
        %7959 = vmatprep.subr.bf16.mxu0 0
        %7960 = vmatpush2.bf16.msra.mxu0 %v7645
        %7961 = vmatprep.subr.bf16.mxu0 0
        %7962 = vmatpush2.bf16.msra.mxu0 %v7644
        %7963 = vmatprep.subr.bf16.mxu0 0
        %7964 = vmatpush2.bf16.msra.mxu0 %v7643
        %7965 = vmatprep.subr.bf16.mxu0 0
        %7966 = vmatpush2.bf16.msra.mxu0 %v7642
        %7967 = vmatprep.subr.bf16.mxu0 0
        %7968 = vmatpush2.bf16.msra.mxu0 %v7641
        %7969 = vmatprep.mubr.bf16.mxu0 %v6821
        %7970 = vmatmul.mubr.bf16.gmra.mxu0 %v6820
        %v7971 = vpop.f32.mrf.mxu0
        %v7972 = vadd.f32 %v7932, %v7971
        %v7973 = vpop.f32.mrf.mxu0
        %v7974 = vpop.f32.mrf.mxu0
        %v7975 = vpop.f32.mrf.mxu0
        %7976 = vdwg.mxu0
        %7977 = vmatprep.subr.bf16.mxu0 0
        %7978 = vmatpush1.bf16.msra.mxu0 %v7656
        %7979 = vmatprep.subr.bf16.mxu0 0
        %7980 = vmatpush1.bf16.msra.mxu0 %v7655
        %7981 = vmatprep.subr.bf16.mxu0 0
        %7982 = vmatpush1.bf16.msra.mxu0 %v7654
        %7983 = vmatprep.subr.bf16.mxu0 0
        %7984 = vmatpush1.bf16.msra.mxu0 %v7653
        %7985 = vmatprep.subr.bf16.mxu0 0
        %7986 = vmatpush1.bf16.msra.mxu0 %v7652
        %7987 = vmatprep.subr.bf16.mxu0 0
        %7988 = vmatpush1.bf16.msra.mxu0 %v7651
        %7989 = vmatprep.subr.bf16.mxu0 0
        %7990 = vmatpush1.bf16.msra.mxu0 %v7650
        %7991 = vmatprep.subr.bf16.mxu0 0
        %7992 = vmatpush1.bf16.msra.mxu0 %v7649
        %7993 = vmatprep.subr.bf16.mxu0 0
        %7994 = vmatpush2.bf16.msra.mxu0 %v7664
        %7995 = vmatprep.subr.bf16.mxu0 0
        %7996 = vmatpush2.bf16.msra.mxu0 %v7663
        %7997 = vmatprep.subr.bf16.mxu0 0
        %7998 = vmatpush2.bf16.msra.mxu0 %v7662
        %7999 = vmatprep.subr.bf16.mxu0 0
        %8000 = vmatpush2.bf16.msra.mxu0 %v7661
        %8001 = vmatprep.subr.bf16.mxu0 0
        %8002 = vmatpush2.bf16.msra.mxu0 %v7660
        %8003 = vmatprep.subr.bf16.mxu0 0
        %8004 = vmatpush2.bf16.msra.mxu0 %v7659
        %8005 = vmatprep.subr.bf16.mxu0 0
        %8006 = vmatpush2.bf16.msra.mxu0 %v7658
        %8007 = vmatprep.subr.bf16.mxu0 0
        %8008 = vmatpush2.bf16.msra.mxu0 %v7657
        %8009 = vmatprep.mubr.bf16.mxu0 %v6823
        %8010 = vmatmul.mubr.bf16.gmra.mxu0 %v6822
        %v8011 = vpop.f32.mrf.mxu0
        %v8012 = vadd.f32 %v7972, %v8011
        %v8013 = vpop.f32.mrf.mxu0
        %v8014 = vpop.f32.mrf.mxu0
        %v8015 = vpop.f32.mrf.mxu0
        %8016 = vdwg.mxu0
        %8017 = vmatprep.subr.bf16.mxu0 0
        %8018 = vmatpush1.bf16.msra.mxu0 %v7672
        %8019 = vmatprep.subr.bf16.mxu0 0
        %8020 = vmatpush1.bf16.msra.mxu0 %v7671
        %8021 = vmatprep.subr.bf16.mxu0 0
        %8022 = vmatpush1.bf16.msra.mxu0 %v7670
        %8023 = vmatprep.subr.bf16.mxu0 0
        %8024 = vmatpush1.bf16.msra.mxu0 %v7669
        %8025 = vmatprep.subr.bf16.mxu0 0
        %8026 = vmatpush1.bf16.msra.mxu0 %v7668
        %8027 = vmatprep.subr.bf16.mxu0 0
        %8028 = vmatpush1.bf16.msra.mxu0 %v7667
        %8029 = vmatprep.subr.bf16.mxu0 0
        %8030 = vmatpush1.bf16.msra.mxu0 %v7666
        %8031 = vmatprep.subr.bf16.mxu0 0
        %8032 = vmatpush1.bf16.msra.mxu0 %v7665
        %8033 = vmatprep.subr.bf16.mxu0 0
        %8034 = vmatpush2.bf16.msra.mxu0 %v7680
        %8035 = vmatprep.subr.bf16.mxu0 0
        %8036 = vmatpush2.bf16.msra.mxu0 %v7679
        %8037 = vmatprep.subr.bf16.mxu0 0
        %8038 = vmatpush2.bf16.msra.mxu0 %v7678
        %8039 = vmatprep.subr.bf16.mxu0 0
        %8040 = vmatpush2.bf16.msra.mxu0 %v7677
        %8041 = vmatprep.subr.bf16.mxu0 0
        %8042 = vmatpush2.bf16.msra.mxu0 %v7676
        %8043 = vmatprep.subr.bf16.mxu0 0
        %8044 = vmatpush2.bf16.msra.mxu0 %v7675
        %8045 = vmatprep.subr.bf16.mxu0 0
        %8046 = vmatpush2.bf16.msra.mxu0 %v7674
        %8047 = vmatprep.subr.bf16.mxu0 0
        %8048 = vmatpush2.bf16.msra.mxu0 %v7673
        %8049 = vmatprep.mubr.bf16.mxu0 %v6825
        %8050 = vmatmul.mubr.bf16.gmra.mxu0 %v6824
        %v8051 = vpop.f32.mrf.mxu0
        %v8052 = vadd.f32 %v8012, %v8051
        %v8053 = vpop.f32.mrf.mxu0
        %v8054 = vpop.f32.mrf.mxu0
        %v8055 = vpop.f32.mrf.mxu0
        %8056 = vdwg.mxu0
        %8057 = vmatprep.subr.bf16.mxu0 0
        %8058 = vmatpush1.bf16.msra.mxu0 %v7688
        %8059 = vmatprep.subr.bf16.mxu0 0
        %8060 = vmatpush1.bf16.msra.mxu0 %v7687
        %8061 = vmatprep.subr.bf16.mxu0 0
        %8062 = vmatpush1.bf16.msra.mxu0 %v7686
        %8063 = vmatprep.subr.bf16.mxu0 0
        %8064 = vmatpush1.bf16.msra.mxu0 %v7685
        %8065 = vmatprep.subr.bf16.mxu0 0
        %8066 = vmatpush1.bf16.msra.mxu0 %v7684
        %8067 = vmatprep.subr.bf16.mxu0 0
        %8068 = vmatpush1.bf16.msra.mxu0 %v7683
        %8069 = vmatprep.subr.bf16.mxu0 0
        %8070 = vmatpush1.bf16.msra.mxu0 %v7682
        %8071 = vmatprep.subr.bf16.mxu0 0
        %8072 = vmatpush1.bf16.msra.mxu0 %v7681
        %8073 = vmatprep.subr.bf16.mxu0 0
        %8074 = vmatpush2.bf16.msra.mxu0 %v7696
        %8075 = vmatprep.subr.bf16.mxu0 0
        %8076 = vmatpush2.bf16.msra.mxu0 %v7695
        %8077 = vmatprep.subr.bf16.mxu0 0
        %8078 = vmatpush2.bf16.msra.mxu0 %v7694
        %8079 = vmatprep.subr.bf16.mxu0 0
        %8080 = vmatpush2.bf16.msra.mxu0 %v7693
        %8081 = vmatprep.subr.bf16.mxu0 0
        %8082 = vmatpush2.bf16.msra.mxu0 %v7692
        %8083 = vmatprep.subr.bf16.mxu0 0
        %8084 = vmatpush2.bf16.msra.mxu0 %v7691
        %8085 = vmatprep.subr.bf16.mxu0 0
        %8086 = vmatpush2.bf16.msra.mxu0 %v7690
        %8087 = vmatprep.subr.bf16.mxu0 0
        %8088 = vmatpush2.bf16.msra.mxu0 %v7689
        %8089 = vmatprep.mubr.bf16.mxu0 %v6827
        %8090 = vmatmul.mubr.bf16.gmra.mxu0 %v6826
        %v8091 = vpop.f32.mrf.mxu0
        %v8092 = vadd.f32 %v8052, %v8091
        %v8093 = vpop.f32.mrf.mxu0
        %v8094 = vpop.f32.mrf.mxu0
        %v8095 = vpop.f32.mrf.mxu0
        %8096 = vdwg.mxu0
        %8097 = vmatprep.subr.bf16.mxu0 0
        %8098 = vmatpush1.bf16.msra.mxu0 %v7704
        %8099 = vmatprep.subr.bf16.mxu0 0
        %8100 = vmatpush1.bf16.msra.mxu0 %v7703
        %8101 = vmatprep.subr.bf16.mxu0 0
        %8102 = vmatpush1.bf16.msra.mxu0 %v7702
        %8103 = vmatprep.subr.bf16.mxu0 0
        %8104 = vmatpush1.bf16.msra.mxu0 %v7701
        %8105 = vmatprep.subr.bf16.mxu0 0
        %8106 = vmatpush1.bf16.msra.mxu0 %v7700
        %8107 = vmatprep.subr.bf16.mxu0 0
        %8108 = vmatpush1.bf16.msra.mxu0 %v7699
        %8109 = vmatprep.subr.bf16.mxu0 0
        %8110 = vmatpush1.bf16.msra.mxu0 %v7698
        %8111 = vmatprep.subr.bf16.mxu0 0
        %8112 = vmatpush1.bf16.msra.mxu0 %v7697
        %8113 = vmatprep.subr.bf16.mxu0 0
        %8114 = vmatpush2.bf16.msra.mxu0 %v7712
        %8115 = vmatprep.subr.bf16.mxu0 0
        %8116 = vmatpush2.bf16.msra.mxu0 %v7711
        %8117 = vmatprep.subr.bf16.mxu0 0
        %8118 = vmatpush2.bf16.msra.mxu0 %v7710
        %8119 = vmatprep.subr.bf16.mxu0 0
        %8120 = vmatpush2.bf16.msra.mxu0 %v7709
        %8121 = vmatprep.subr.bf16.mxu0 0
        %8122 = vmatpush2.bf16.msra.mxu0 %v7708
        %8123 = vmatprep.subr.bf16.mxu0 0
        %8124 = vmatpush2.bf16.msra.mxu0 %v7707
        %8125 = vmatprep.subr.bf16.mxu0 0
        %8126 = vmatpush2.bf16.msra.mxu0 %v7706
        %8127 = vmatprep.subr.bf16.mxu0 0
        %8128 = vmatpush2.bf16.msra.mxu0 %v7705
        %8129 = vmatprep.mubr.bf16.mxu0 %v6829
        %8130 = vmatmul.mubr.bf16.gmra.mxu0 %v6828
        %v8131 = vpop.f32.mrf.mxu0
        %v8132 = vadd.f32 %v8092, %v8131
        %v8133 = vpop.f32.mrf.mxu0
        %v8134 = vpop.f32.mrf.mxu0
        %v8135 = vpop.f32.mrf.mxu0
        %8136 = vdwg.mxu0
        %8137 = vmatprep.subr.bf16.mxu0 0
        %8138 = vmatpush1.bf16.msra.mxu0 %v7720
        %8139 = vmatprep.subr.bf16.mxu0 0
        %8140 = vmatpush1.bf16.msra.mxu0 %v7719
        %8141 = vmatprep.subr.bf16.mxu0 0
        %8142 = vmatpush1.bf16.msra.mxu0 %v7718
        %8143 = vmatprep.subr.bf16.mxu0 0
        %8144 = vmatpush1.bf16.msra.mxu0 %v7717
        %8145 = vmatprep.subr.bf16.mxu0 0
        %8146 = vmatpush1.bf16.msra.mxu0 %v7716
        %8147 = vmatprep.subr.bf16.mxu0 0
        %8148 = vmatpush1.bf16.msra.mxu0 %v7715
        %8149 = vmatprep.subr.bf16.mxu0 0
        %8150 = vmatpush1.bf16.msra.mxu0 %v7714
        %8151 = vmatprep.subr.bf16.mxu0 0
        %8152 = vmatpush1.bf16.msra.mxu0 %v7713
        %8153 = vmatprep.subr.bf16.mxu0 0
        %8154 = vmatpush2.bf16.msra.mxu0 %v7728
        %8155 = vmatprep.subr.bf16.mxu0 0
        %8156 = vmatpush2.bf16.msra.mxu0 %v7727
        %8157 = vmatprep.subr.bf16.mxu0 0
        %8158 = vmatpush2.bf16.msra.mxu0 %v7726
        %8159 = vmatprep.subr.bf16.mxu0 0
        %8160 = vmatpush2.bf16.msra.mxu0 %v7725
        %8161 = vmatprep.subr.bf16.mxu0 0
        %8162 = vmatpush2.bf16.msra.mxu0 %v7724
        %8163 = vmatprep.subr.bf16.mxu0 0
        %8164 = vmatpush2.bf16.msra.mxu0 %v7723
        %8165 = vmatprep.subr.bf16.mxu0 0
        %8166 = vmatpush2.bf16.msra.mxu0 %v7722
        %8167 = vmatprep.subr.bf16.mxu0 0
        %8168 = vmatpush2.bf16.msra.mxu0 %v7721
        %8169 = vmatprep.mubr.bf16.mxu0 %v6831
        %8170 = vmatmul.mubr.bf16.gmra.mxu0 %v6830
        %v8171 = vpop.f32.mrf.mxu0
        %v8172 = vadd.f32 %v8132, %v8171
        %v8173 = vpop.f32.mrf.mxu0
        %v8174 = vpop.f32.mrf.mxu0
        %v8175 = vpop.f32.mrf.mxu0
        %8176 = vdwg.mxu0
        %v8177 = vmax.f32 %v8172, 0.0
        %v8178 = vpack.c.bf16 %v8177, %v8177
        %v8179 = vld [vmem:[%s7] sm:$0xf]
        %v8180 = vld [vmem:[%s7 + $0x4] sm:$0xf]
        %v8181 = vld [vmem:[%s7 + $0x8] sm:$0xf]
        %v8182 = vld [vmem:[%s7 + $0xc] sm:$0xf]
        %v8183 = vld [vmem:[%s7 + $0x10] sm:$0xf]
        %v8184 = vld [vmem:[%s7 + $0x14] sm:$0xf]
        %v8185 = vld [vmem:[%s7 + $0x18] sm:$0xf]
        %v8186 = vld [vmem:[%s7 + $0x1c] sm:$0xf]
        %v8187 = vld [vmem:[%s7 + $0x20] sm:$0xf]
        %v8188 = vld [vmem:[%s7 + $0x24] sm:$0xf]
        %v8189 = vld [vmem:[%s7 + $0x28] sm:$0xf]
        %v8190 = vld [vmem:[%s7 + $0x2c] sm:$0xf]
        %v8191 = vld [vmem:[%s7 + $0x30] sm:$0xf]
        %v8192 = vld [vmem:[%s7 + $0x34] sm:$0xf]
        %v8193 = vld [vmem:[%s7 + $0x38] sm:$0xf]
        %v8194 = vld [vmem:[%s7 + $0x3c] sm:$0xf]
        %v8195 = vld [vmem:[%s8] sm:$0x1]
        %v8212 = vunpack.c.l.b16 %v8179
        %v8213 = vunpack.c.l.b16 %v8180
        %v8214 = vunpack.c.l.b16 %v8181
        %v8215 = vunpack.c.l.b16 %v8182
        %v8216 = vunpack.c.l.b16 %v8183
        %v8217 = vunpack.c.l.b16 %v8184
        %v8218 = vunpack.c.l.b16 %v8185
        %v8219 = vunpack.c.l.b16 %v8186
        %v8220 = vunpack.c.l.b16 %v8187
        %v8221 = vunpack.c.l.b16 %v8188
        %v8222 = vunpack.c.l.b16 %v8189
        %v8223 = vunpack.c.l.b16 %v8190
        %v8224 = vunpack.c.l.b16 %v8191
        %v8225 = vunpack.c.l.b16 %v8192
        %v8226 = vunpack.c.l.b16 %v8193
        %v8227 = vunpack.c.l.b16 %v8194
        %v8228 = vpack.c.b16 %v8213, %v8212
        %v8229 = vpack.c.b16 %v8215, %v8214
        %v8230 = vpack.c.b16 %v8217, %v8216
        %v8231 = vpack.c.b16 %v8219, %v8218
        %v8232 = vpack.c.b16 %v8221, %v8220
        %v8233 = vpack.c.b16 %v8223, %v8222
        %v8234 = vpack.c.b16 %v8225, %v8224
        %v8235 = vpack.c.b16 %v8227, %v8226
        %8244 = vmatprep.subr.bf16.mxu0 0
        %8245 = vmatpush1.bf16.msra.mxu0 %v8235
        %8246 = vmatprep.subr.bf16.mxu0 0
        %8247 = vmatpush1.bf16.msra.mxu0 %v8234
        %8248 = vmatprep.subr.bf16.mxu0 0
        %8249 = vmatpush1.bf16.msra.mxu0 %v8233
        %8250 = vmatprep.subr.bf16.mxu0 0
        %8251 = vmatpush1.bf16.msra.mxu0 %v8232
        %8252 = vmatprep.subr.bf16.mxu0 0
        %8253 = vmatpush1.bf16.msra.mxu0 %v8231
        %8254 = vmatprep.subr.bf16.mxu0 0
        %8255 = vmatpush1.bf16.msra.mxu0 %v8230
        %8256 = vmatprep.subr.bf16.mxu0 0
        %8257 = vmatpush1.bf16.msra.mxu0 %v8229
        %8258 = vmatprep.subr.bf16.mxu0 0
        %8259 = vmatpush1.bf16.msra.mxu0 %v8228
        %8260 = vmatprep.subr.bf16.mxu0 0
        %8261 = vmatpush2.bf16.msra.mxu0 0
        %8262 = vmatprep.subr.bf16.mxu0 0
        %8263 = vmatpush2.bf16.msra.mxu0 0
        %8264 = vmatprep.subr.bf16.mxu0 0
        %8265 = vmatpush2.bf16.msra.mxu0 0
        %8266 = vmatprep.subr.bf16.mxu0 0
        %8267 = vmatpush2.bf16.msra.mxu0 0
        %8268 = vmatprep.subr.bf16.mxu0 0
        %8269 = vmatpush2.bf16.msra.mxu0 0
        %8270 = vmatprep.subr.bf16.mxu0 0
        %8271 = vmatpush2.bf16.msra.mxu0 0
        %8272 = vmatprep.subr.bf16.mxu0 0
        %8273 = vmatpush2.bf16.msra.mxu0 0
        %8274 = vmatprep.subr.bf16.mxu0 0
        %8275 = vmatpush2.bf16.msra.mxu0 0
        %8276 = vmatprep.mubr.bf16.mxu0 0
        %8277 = vmatmul.mubr.bf16.gmra.mxu0 %v8178
        %v8278 = vpop.f32.mrf.mxu0
        %v8279 = vadd.f32 %v8195, %v8278
        %v8280 = vpop.f32.mrf.mxu0
        %v8281 = vpop.f32.mrf.mxu0
        %v8282 = vpop.f32.mrf.mxu0
        %8283 = vdwg.mxu0
        %8284 = vst [vmem:[%s298] sm:$0x1] %v8279
        %s8285 = sand.u32 %s204, 1
        %s8286 = scalar_lea.sflag [#allocation11], %s8285
        %s8287 = sand.u32 %s204, 1
        %s8288 = scalar_lea.vmem [#allocation10], %s8287
        // Predicated region
        $region57: #{simple_conv_model_forward.1} parent=51 // pred_check
          %p8289 = pneg %p214
        $region58: #{simple_conv_model_forward.1} parent=51 // pred_check_branch
          %8291 = sbr.rel (%p8289) target = $region60
        $region59: #{simple_conv_model_forward.1} parent=51 // pred_region
          %s8293 = ssub.s32 16, 16
          %8294 = vsyncadd %s8286, %s8293
          %s8295 = smul.addr %s23, 16
          %s8296 = scalar_lea.hbm %s9, %s8295
          %s8298 = sshll.u32 %s8288, 4
          %s8299 = int_to_ptr.vmem [resolvable:$true] %s8298
          %8301 = dma.vmem_to_hbm [thread:$0]  %s8299, 16, %s8296, %s8286
        $region60: #{simple_conv_model_forward.1} parent=51 // pred_fallthru
          _
      $region52: #{simple_conv_model_forward.1} parent=5 // pred_fallthru
        _
      %p8302 = scmp.le.s32.totalorder 2, %s18
      // Predicated region
      $region61: #{simple_conv_model_forward.1} parent=5 // pred_check
        %p8303 = pneg %p8302
      $region62: #{simple_conv_model_forward.1} parent=5 // pred_check_branch
        %8305 = sbr.rel (%p8303) target = $region64
      $region63: #{simple_conv_model_forward.1} parent=5 // pred_region
        %s8306 = ssub.s32 %s18, 2
        // Predicated region
        $region65: #{simple_conv_model_forward.1} parent=63 // pred_check
          %p8307 = pneg %p220
        $region66: #{simple_conv_model_forward.1} parent=63 // pred_check_branch
          %8309 = sbr.rel (%p8307) target = $region68
        $region67: #{simple_conv_model_forward.1} parent=63 // pred_region
          %s8310 = sand.u32 %s205, 1
          %s8311 = scalar_lea.sflag [#allocation11], %s8310
          %s8312 = sand.u32 %s205, 1
          %s8313 = scalar_lea.vmem [#allocation10], %s8312
          %8314 = dma.done %s8311, 16
        $region68: #{simple_conv_model_forward.1} parent=63 // pred_fallthru
          _
      $region64: #{simple_conv_model_forward.1} parent=5 // pred_fallthru
        _
    $region6: #{simple_conv_model_forward.1} parent=1 // loop_footer
      %s22 = sadd.s32 1, %s18
    $region7: #{simple_conv_model_forward.1} parent=1 // loop_footer_branch
      %17 = sbr.rel target = $region3
    $region8: #{simple_conv_model_forward.1} parent=1 // loop_exit
      _
    %8315 = vsyncpa [#allocation11], 1
    %s8316 = scalar_lea.sflag [#allocation11], 1
    %8317 = vsyncpa %s8316, 1
  %8318 = vsyncmov [#allocation9]
  %s8319 = vpop.sfrf %8318
  %p8320 = scmp.eq.s32.totalorder %s8319, 0
  %p8321 = pneg %p8320
  %8323 = shalt.err (%p8321)

</llo_original>
